<compile_context>
chip_gen: v7x
topology: tpu7x:2x2x1
jax: 0.10.0
libtpu: 0.0.40
codegen_flags: <defaults>
</compile_context>

<pallas_src>
import jax
import jax.numpy as jnp
import numpy as np
from jax import lax
from jax.experimental import pallas as pl
from jax.experimental.pallas import tpu as pltpu

# ---------------- configuration (consistent with the module) -----------------
B, T, J, C = 2, 8, 17, 32          # batch, frames, joints (spatial mode), dim
R = T * J                          # rows per batch element = 136
NUM_HEADS = 8
HEAD_DIM = C // NUM_HEADS          # 4
HR = NUM_HEADS * R                 # 1088 rows in the head-stacked score matrix
MLP_HIDDEN = 4 * C                 # mlp_ratio = 4.0
SCALE = HEAD_DIM ** -0.5           # 0.5 -> folded into W_qkv's Q columns
EPS = 1e-5                         # nn.LayerNorm default eps
LAYER_SCALE_INIT = 1e-5
NEG_INF = -1e30                    # masked score value (exp underflows to 0)

# rows of the packed (8, C) vector-parameter input
_LN1_G, _LN1_B, _BPROJ, _LS1, _LN2_G, _LN2_B, _B2, _LS2 = range(8)


# ----------------------------- Pallas kernel ---------------------------------
def agformer_kernel(x_ref, fid_row_ref, fid_col_ref, hmask_ref, vecs_ref,
                    wqkv_ref, wproj_ref, w1_ref, b1_ref, w2_ref, out_ref):
    """One batch element: x_ref / out_ref are (R, C) = (T*J, C)."""
    x = x_ref[...]                                        # (R, C) f32
    vecs = vecs_ref[...]                                  # (8, C) f32
    ln1_g, ln1_b = vecs[_LN1_G:_LN1_G + 1, :], vecs[_LN1_B:_LN1_B + 1, :]
    bproj, ls1 = vecs[_BPROJ:_BPROJ + 1, :], vecs[_LS1:_LS1 + 1, :]
    ln2_g, ln2_b = vecs[_LN2_G:_LN2_G + 1, :], vecs[_LN2_B:_LN2_B + 1, :]
    b2, ls2 = vecs[_B2:_B2 + 1, :], vecs[_LS2:_LS2 + 1, :]

    # ---- LayerNorm 1 (f32) ----
    mu = jnp.mean(x, axis=-1, keepdims=True)
    var = jnp.mean(jnp.square(x - mu), axis=-1, keepdims=True)
    xn = (x - mu) * lax.rsqrt(var + EPS) * ln1_g + ln1_b

    # ---- QKV projection (softmax scale pre-folded into the Q columns) ----
    qkv = jnp.dot(xn.astype(jnp.bfloat16), wqkv_ref[...],
                  preferred_element_type=jnp.float32)     # (R, 3C) f32
    q = qkv[:, :C]                                        # (R, C), already *0.5
    k = qkv[:, C:2 * C].astype(jnp.bfloat16)              # (R, C)
    v = qkv[:, 2 * C:].astype(jnp.bfloat16)               # (R, C)

    # ---- all-head spatial attention via two MXU matmuls ----
    # Row-stacked block-diagonal Q: head h's row block keeps only channels
    # [4h:4h+4] (zeros elsewhere), so one (H*R,C)x(R,C) dot gives per-head
    # scores stacked along rows.
    hmask = hmask_ref[...]                                # (H, C) 0/1 f32
    qb = jnp.concatenate(
        [q * hmask[h:h + 1, :] for h in range(NUM_HEADS)], axis=0)   # (H*R, C)
    s = lax.dot_general(qb.astype(jnp.bfloat16), k,
                        (((1,), (1,)), ((), ())),
                        preferred_element_type=jnp.float32)          # (H*R, R)

    # frame-block-diagonal mask, built in-kernel from tiny frame-id vectors
    # (applied in f32, before the row-max; every row keeps J=17 entries)
    s = jnp.where(fid_row_ref[...] == fid_col_ref[...], s, NEG_INF)
    s = s - jnp.max(s, axis=-1, keepdims=True)
    p = jnp.exp(s)                                        # (H*R, R) f32
    l = jnp.sum(p, axis=-1, keepdims=True)                # (H*R, 1)
    o = jnp.dot(p.astype(jnp.bfloat16), v,
                preferred_element_type=jnp.float32)       # (H*R, C) f32
    o = o * pl.reciprocal(l, approx=True)                 # normalize after P@V

    # collapse the head-stacked context back to (R, C): head h contributes only
    # its own channel block (0/1 head-column mask folds the concat away)
    attn = jnp.zeros((R, C), jnp.float32)
    for h in range(NUM_HEADS):
        lo = h * R
        attn = attn + o[lo:lo + R, :] * hmask[h:h + 1, :]

    # single output projection matmul
    proj = jnp.dot(attn.astype(jnp.bfloat16), wproj_ref[...],
                   preferred_element_type=jnp.float32) + bproj       # (R, C)
    x1 = x + ls1 * proj                                   # residual + layer_scale_1

    # ---- LayerNorm 2 + MLP (row-batched) ----
    mu2 = jnp.mean(x1, axis=-1, keepdims=True)
    var2 = jnp.mean(jnp.square(x1 - mu2), axis=-1, keepdims=True)
    x2n = (x1 - mu2) * lax.rsqrt(var2 + EPS) * ln2_g + ln2_b

    h1 = jnp.dot(x2n.astype(jnp.bfloat16), w1_ref[...],
                 preferred_element_type=jnp.float32) + b1_ref[...]   # (R, 4C)
    # exact GELU (torch nn.GELU default): 0.5 * x * (1 + erf(x / sqrt(2)))
    h1 = 0.5 * h1 * (1.0 + lax.erf(h1 * (1.0 / np.sqrt(2.0))))
    mlp = jnp.dot(h1.astype(jnp.bfloat16), w2_ref[...],
                  preferred_element_type=jnp.float32) + b2           # (R, C)

    out_ref[...] = x1 + ls2 * mlp                         # residual + layer_scale_2


# --------------------- one-time parameter / constant prep --------------------
def prepare_params(params):
    """Hoisted per-call work: packing, bf16 casts, scale folding, index tables."""
    # fold the softmax scale into the Q columns of W_qkv (0.5 is exact in bf16)
    wqkv = params["wqkv"].astype(jnp.float32).at[:, :C].multiply(SCALE)

    # pack the eight (1, C) vector params into one (8, C) input (fewer DMAs)
    vecs = jnp.concatenate([
        params["ln1_g"], params["ln1_b"], params["bproj"], params["ls1"],
        params["ln2_g"], params["ln2_b"], params["b2"], params["ls2"]], axis=0)

    # frame ids: fid[row] = row // J  (spatial attention is per frame)
    fid = np.repeat(np.arange(T, dtype=np.int32), J)                  # (R,)
    fid_row = np.tile(fid, NUM_HEADS).reshape(HR, 1)                  # (H*R, 1)
    fid_col = fid.reshape(1, R)                                       # (1, R)

    # 0/1 head-column mask: hmask[h, c] = 1 iff channel c belongs to head h
    hmask = (np.arange(C, dtype=np.int32) // HEAD_DIM ==
             np.arange(NUM_HEADS, dtype=np.int32)[:, None]).astype(np.float32)

    return {
        "fid_row": jnp.asarray(fid_row),
        "fid_col": jnp.asarray(fid_col),
        "hmask": jnp.asarray(hmask),
        "vecs": vecs,
        "wqkv": wqkv.astype(jnp.bfloat16),
        "wproj": params["wproj"].astype(jnp.bfloat16),
        "w1": params["w1"].astype(jnp.bfloat16),
        "b1": params["b1"].astype(jnp.float32),
        "w2": params["w2"].astype(jnp.bfloat16),
    }


# ------------------------------- wrapper --------------------------------------
@jax.jit
def agformer_block(x, prep):
    b, t, j, c = x.shape
    assert (t, j, c) == (T, J, C)
    r = t * j

    x2 = x.reshape(b, r, c)                               # free: merges contiguous dims

    others = [prep["fid_row"], prep["fid_col"], prep["hmask"], prep["vecs"],
              prep["wqkv"], prep["wproj"], prep["w1"], prep["b1"], prep["w2"]]

    x_spec = pl.BlockSpec((pl.Squeezed(), r, c), lambda bi: (bi, 0, 0))

    def full_spec(arr):
        zeros = (0,) * arr.ndim
        return pl.BlockSpec(arr.shape, lambda bi, _z=zeros: _z)

    grid_spec = pltpu.PrefetchScalarGridSpec(
        num_scalar_prefetch=0,
        grid=(b,),
        in_specs=[x_spec] + [full_spec(a) for a in others],
        out_specs=x_spec,
    )

    out = pl.pallas_call(
        agformer_kernel,
        out_shape=jax.ShapeDtypeStruct((b, r, c), x.dtype),
        grid_spec=grid_spec,
        compiler_params=pltpu.CompilerParams(
            dimension_semantics=("parallel",)),
    )(x2, *others)
    return out.reshape(b, t, j, c)


# --------------------------- pure-JAX reference -------------------------------
def reference(x, p):
    def ln(v, g, bta):
        mu = v.mean(-1, keepdims=True)
        var = ((v - mu) ** 2).mean(-1, keepdims=True)
        return (v - mu) / jnp.sqrt(var + EPS) * g + bta

    bb, tt, jj, cc = x.shape
    xn = ln(x, p["ln1_g"], p["ln1_b"])
    qkv = xn @ p["wqkv"]                                            # (B,T,J,3C)
    qkv = qkv.reshape(bb, tt, jj, 3, NUM_HEADS, HEAD_DIM)
    qkv = qkv.transpose(3, 0, 1, 4, 2, 5)                           # (3,B,T,H,J,Ch)
    q, k, v = qkv[0], qkv[1], qkv[2]
    attn = jnp.einsum("bthjc,bthkc->bthjk", q, k) * SCALE
    attn = jax.nn.softmax(attn, axis=-1)
    o = jnp.einsum("bthjk,bthkc->bthjc", attn, v)
    o = o.transpose(0, 1, 3, 2, 4).reshape(bb, tt, jj, cc)
    o = o @ p["wproj"] + p["bproj"]
    x1 = x + p["ls1"] * o
    x2n = ln(x1, p["ln2_g"], p["ln2_b"])
    h1 = x2n @ p["w1"] + p["b1"]
    h1 = jax.nn.gelu(h1, approximate=False)
    y = h1 @ p["w2"] + p["b2"]
    return x1 + p["ls2"] * y


# ------------------------------- main ------------------------------------------
if __name__ == "__main__":
    key = jax.random.PRNGKey(0)
    keys = jax.random.split(key, 16)

    def rnd(k, shape, scale=0.02):
        return (scale * jax.random.normal(k, shape)).astype(jnp.float32)

    params = {
        "ln1_g": jnp.ones((1, C), jnp.float32),
        "ln1_b": jnp.zeros((1, C), jnp.float32),
        "wqkv":  rnd(keys[0], (C, 3 * C)),           # qkv_bias=False
        "wproj": rnd(keys[1], (C, C)),
        "bproj": rnd(keys[2], (1, C)),
        "ls1":   jnp.full((1, C), LAYER_SCALE_INIT, jnp.float32),
        "ln2_g": jnp.ones((1, C), jnp.float32),
        "ln2_b": jnp.zeros((1, C), jnp.float32),
        "w1":    rnd(keys[3], (C, MLP_HIDDEN)),
        "b1":    rnd(keys[4], (1, MLP_HIDDEN)),
        "w2":    rnd(keys[5], (MLP_HIDDEN, C)),
        "b2":    rnd(keys[6], (1, C)),
        "ls2":   jnp.full((1, C), LAYER_SCALE_INIT, jnp.float32),
    }

    x = jax.random.normal(keys[7], (B, T, J, C), dtype=jnp.float32)

    prep = prepare_params(params)                 # one-time packing / casting
    out = agformer_block(x, prep)
    out = jax.block_until_ready(out)

    ref = jax.block_until_ready(reference(x, params))
    np.testing.assert_allclose(np.asarray(out), np.asarray(ref),
                               rtol=1e-3, atol=1e-4)

    print("KERNEL_OK")
</pallas_src>

<mosaic_0001>
module attributes {stable_mosaic.version = 11 : i64} {
  func.func @agformer_kernel(%arg0: i32, %arg1: memref<1x136x32xf32, #tpu.memory_space<vmem>>, %arg2: memref<1088x1xi32, #tpu.memory_space<vmem>>, %arg3: memref<1x136xi32, #tpu.memory_space<vmem>>, %arg4: memref<8x32xf32, #tpu.memory_space<vmem>>, %arg5: memref<8x32xf32, #tpu.memory_space<vmem>>, %arg6: memref<32x96xbf16, #tpu.memory_space<vmem>>, %arg7: memref<32x32xbf16, #tpu.memory_space<vmem>>, %arg8: memref<32x128xbf16, #tpu.memory_space<vmem>>, %arg9: memref<1x128xf32, #tpu.memory_space<vmem>>, %arg10: memref<128x32xbf16, #tpu.memory_space<vmem>>, %arg11: memref<1x136x32xf32, #tpu.memory_space<vmem>>) attributes {dimension_semantics = [#tpu.dimension_semantics<parallel>], iteration_bounds = array<i64: 2>, scalar_prefetch = 0 : i64, scratch_operands = 0 : i64, tpu.core_type = #tpu.core_type<tc>, window_params = [{transform_indices = @transform_0, window_bounds = array<i64: 1, 136, 32>}, {pipeline_mode = #tpu.pipeline_mode<synchronous>, transform_indices = @transform_1, window_bounds = array<i64: 1088, 1>}, {pipeline_mode = #tpu.pipeline_mode<synchronous>, transform_indices = @transform_2, window_bounds = array<i64: 1, 136>}, {pipeline_mode = #tpu.pipeline_mode<synchronous>, transform_indices = @transform_3, window_bounds = array<i64: 8, 32>}, {pipeline_mode = #tpu.pipeline_mode<synchronous>, transform_indices = @transform_4, window_bounds = array<i64: 8, 32>}, {pipeline_mode = #tpu.pipeline_mode<synchronous>, transform_indices = @transform_5, window_bounds = array<i64: 32, 96>}, {pipeline_mode = #tpu.pipeline_mode<synchronous>, transform_indices = @transform_6, window_bounds = array<i64: 32, 32>}, {pipeline_mode = #tpu.pipeline_mode<synchronous>, transform_indices = @transform_7, window_bounds = array<i64: 32, 128>}, {pipeline_mode = #tpu.pipeline_mode<synchronous>, transform_indices = @transform_8, window_bounds = array<i64: 1, 128>}, {pipeline_mode = #tpu.pipeline_mode<synchronous>, transform_indices = @transform_9, window_bounds = array<i64: 128, 32>}, {transform_indices = @transform_10, window_bounds = array<i64: 1, 136, 32>}]} {
    %c0 = arith.constant 0 : index
    %c0_0 = arith.constant 0 : index
    %c0_1 = arith.constant 0 : index
    %0 = vector.load %arg1[%c0, %c0_0, %c0_1] : memref<1x136x32xf32, #tpu.memory_space<vmem>>, vector<1x136x32xf32>
    %1 = vector.shape_cast %0 : vector<1x136x32xf32> to vector<136x32xf32>
    %c0_2 = arith.constant 0 : index
    %c0_3 = arith.constant 0 : index
    %2 = vector.load %arg5[%c0_2, %c0_3] : memref<8x32xf32, #tpu.memory_space<vmem>>, vector<8x32xf32>
    %3 = vector.extract_strided_slice %2 {offsets = [0, 0], sizes = [1, 32], strides = [1, 1]} : vector<8x32xf32> to vector<1x32xf32>
    %4 = vector.extract_strided_slice %2 {offsets = [1, 0], sizes = [1, 32], strides = [1, 1]} : vector<8x32xf32> to vector<1x32xf32>
    %5 = vector.extract_strided_slice %2 {offsets = [2, 0], sizes = [1, 32], strides = [1, 1]} : vector<8x32xf32> to vector<1x32xf32>
    %6 = vector.extract_strided_slice %2 {offsets = [3, 0], sizes = [1, 32], strides = [1, 1]} : vector<8x32xf32> to vector<1x32xf32>
    %7 = vector.extract_strided_slice %2 {offsets = [4, 0], sizes = [1, 32], strides = [1, 1]} : vector<8x32xf32> to vector<1x32xf32>
    %8 = vector.extract_strided_slice %2 {offsets = [5, 0], sizes = [1, 32], strides = [1, 1]} : vector<8x32xf32> to vector<1x32xf32>
    %9 = vector.extract_strided_slice %2 {offsets = [6, 0], sizes = [1, 32], strides = [1, 1]} : vector<8x32xf32> to vector<1x32xf32>
    %10 = vector.extract_strided_slice %2 {offsets = [7, 0], sizes = [1, 32], strides = [1, 1]} : vector<8x32xf32> to vector<1x32xf32>
    %cst = arith.constant dense<0.000000e+00> : vector<136xf32>
    %11 = vector.multi_reduction <add>, %1, %cst [1] : vector<136x32xf32> to vector<136xf32>
    %12 = vector.shape_cast %11 : vector<136xf32> to vector<136x1xf32>
    %cst_4 = arith.constant 3.200000e+01 : f32
    %13 = vector.broadcast %cst_4 : f32 to vector<136x1xf32>
    %14 = arith.divf %12, %13 : vector<136x1xf32>
    %15 = vector.broadcast %14 : vector<136x1xf32> to vector<136x32xf32>
    %16 = arith.subf %1, %15 : vector<136x32xf32>
    %17 = arith.mulf %16, %16 : vector<136x32xf32>
    %cst_5 = arith.constant dense<0.000000e+00> : vector<136xf32>
    %18 = vector.multi_reduction <add>, %17, %cst_5 [1] : vector<136x32xf32> to vector<136xf32>
    %19 = vector.shape_cast %18 : vector<136xf32> to vector<136x1xf32>
    %cst_6 = arith.constant 3.200000e+01 : f32
    %20 = vector.broadcast %cst_6 : f32 to vector<136x1xf32>
    %21 = arith.divf %19, %20 : vector<136x1xf32>
    %22 = vector.broadcast %14 : vector<136x1xf32> to vector<136x32xf32>
    %23 = arith.subf %1, %22 : vector<136x32xf32>
    %cst_7 = arith.constant 9.99999974E-6 : f32
    %24 = vector.broadcast %cst_7 : f32 to vector<136x1xf32>
    %25 = arith.addf %21, %24 : vector<136x1xf32>
    %26 = math.rsqrt %25 : vector<136x1xf32>
    %27 = vector.broadcast %26 : vector<136x1xf32> to vector<136x32xf32>
    %28 = arith.mulf %23, %27 : vector<136x32xf32>
    %29 = vector.broadcast %3 : vector<1x32xf32> to vector<136x32xf32>
    %30 = arith.mulf %28, %29 : vector<136x32xf32>
    %31 = vector.broadcast %4 : vector<1x32xf32> to vector<136x32xf32>
    %32 = arith.addf %30, %31 : vector<136x32xf32>
    %33 = arith.truncf %32 : vector<136x32xf32> to vector<136x32xbf16>
    %c0_8 = arith.constant 0 : index
    %c0_9 = arith.constant 0 : index
    %34 = vector.load %arg6[%c0_8, %c0_9] : memref<32x96xbf16, #tpu.memory_space<vmem>>, vector<32x96xbf16>
    %cst_10 = arith.constant dense<0.000000e+00> : vector<136x96xf32>
    %35 = tpu.matmul %33, %34, %cst_10 {dimension_numbers = #tpu.dot_dimension_numbers<[1], [0], [0], [1], [0, 0, 1, 1], [], []>} : vector<136x32xbf16>, vector<32x96xbf16>, vector<136x96xf32> -> vector<136x96xf32>
    %36 = vector.extract_strided_slice %35 {offsets = [0, 0], sizes = [136, 32], strides = [1, 1]} : vector<136x96xf32> to vector<136x32xf32>
    %37 = vector.extract_strided_slice %35 {offsets = [0, 32], sizes = [136, 32], strides = [1, 1]} : vector<136x96xf32> to vector<136x32xf32>
    %38 = arith.truncf %37 : vector<136x32xf32> to vector<136x32xbf16>
    %39 = vector.extract_strided_slice %35 {offsets = [0, 64], sizes = [136, 32], strides = [1, 1]} : vector<136x96xf32> to vector<136x32xf32>
    %40 = arith.truncf %39 : vector<136x32xf32> to vector<136x32xbf16>
    %c0_11 = arith.constant 0 : index
    %c0_12 = arith.constant 0 : index
    %41 = vector.load %arg4[%c0_11, %c0_12] : memref<8x32xf32, #tpu.memory_space<vmem>>, vector<8x32xf32>
    %42 = vector.extract_strided_slice %41 {offsets = [0, 0], sizes = [1, 32], strides = [1, 1]} : vector<8x32xf32> to vector<1x32xf32>
    %43 = vector.broadcast %42 : vector<1x32xf32> to vector<136x32xf32>
    %44 = arith.mulf %36, %43 : vector<136x32xf32>
    %45 = vector.extract_strided_slice %41 {offsets = [1, 0], sizes = [1, 32], strides = [1, 1]} : vector<8x32xf32> to vector<1x32xf32>
    %46 = vector.broadcast %45 : vector<1x32xf32> to vector<136x32xf32>
    %47 = arith.mulf %36, %46 : vector<136x32xf32>
    %48 = vector.extract_strided_slice %41 {offsets = [2, 0], sizes = [1, 32], strides = [1, 1]} : vector<8x32xf32> to vector<1x32xf32>
    %49 = vector.broadcast %48 : vector<1x32xf32> to vector<136x32xf32>
    %50 = arith.mulf %36, %49 : vector<136x32xf32>
    %51 = vector.extract_strided_slice %41 {offsets = [3, 0], sizes = [1, 32], strides = [1, 1]} : vector<8x32xf32> to vector<1x32xf32>
    %52 = vector.broadcast %51 : vector<1x32xf32> to vector<136x32xf32>
    %53 = arith.mulf %36, %52 : vector<136x32xf32>
    %54 = vector.extract_strided_slice %41 {offsets = [4, 0], sizes = [1, 32], strides = [1, 1]} : vector<8x32xf32> to vector<1x32xf32>
    %55 = vector.broadcast %54 : vector<1x32xf32> to vector<136x32xf32>
    %56 = arith.mulf %36, %55 : vector<136x32xf32>
    %57 = vector.extract_strided_slice %41 {offsets = [5, 0], sizes = [1, 32], strides = [1, 1]} : vector<8x32xf32> to vector<1x32xf32>
    %58 = vector.broadcast %57 : vector<1x32xf32> to vector<136x32xf32>
    %59 = arith.mulf %36, %58 : vector<136x32xf32>
    %60 = vector.extract_strided_slice %41 {offsets = [6, 0], sizes = [1, 32], strides = [1, 1]} : vector<8x32xf32> to vector<1x32xf32>
    %61 = vector.broadcast %60 : vector<1x32xf32> to vector<136x32xf32>
    %62 = arith.mulf %36, %61 : vector<136x32xf32>
    %63 = vector.extract_strided_slice %41 {offsets = [7, 0], sizes = [1, 32], strides = [1, 1]} : vector<8x32xf32> to vector<1x32xf32>
    %64 = vector.broadcast %63 : vector<1x32xf32> to vector<136x32xf32>
    %65 = arith.mulf %36, %64 : vector<136x32xf32>
    %66 = tpu.concatenate %44, %47, %50, %53, %56, %59, %62, %65 in 0 : vector<136x32xf32>, vector<136x32xf32>, vector<136x32xf32>, vector<136x32xf32>, vector<136x32xf32>, vector<136x32xf32>, vector<136x32xf32>, vector<136x32xf32> -> vector<1088x32xf32>
    %67 = arith.truncf %66 : vector<1088x32xf32> to vector<1088x32xbf16>
    %cst_13 = arith.constant dense<0.000000e+00> : vector<1088x136xf32>
    %68 = tpu.matmul %67, %38, %cst_13 {dimension_numbers = #tpu.dot_dimension_numbers<[1], [1], [0], [0], [0, 0, 1, 0], [], []>} : vector<1088x32xbf16>, vector<136x32xbf16>, vector<1088x136xf32> -> vector<1088x136xf32>
    %c0_14 = arith.constant 0 : index
    %c0_15 = arith.constant 0 : index
    %69 = vector.load %arg2[%c0_14, %c0_15] : memref<1088x1xi32, #tpu.memory_space<vmem>>, vector<1088x1xi32>
    %c0_16 = arith.constant 0 : index
    %c0_17 = arith.constant 0 : index
    %70 = vector.load %arg3[%c0_16, %c0_17] : memref<1x136xi32, #tpu.memory_space<vmem>>, vector<1x136xi32>
    %71 = vector.broadcast %69 : vector<1088x1xi32> to vector<1088x136xi32>
    %72 = vector.broadcast %70 : vector<1x136xi32> to vector<1088x136xi32>
    %73 = arith.cmpi eq, %71, %72 : vector<1088x136xi32>
    %cst_18 = arith.constant -1.000000e+30 : f32
    %74 = vector.broadcast %cst_18 : f32 to vector<1088x136xf32>
    %75 = arith.select %73, %68, %74 : vector<1088x136xi1>, vector<1088x136xf32>
    %cst_19 = arith.constant dense<0xFF800000> : vector<1088xf32>
    %76 = vector.multi_reduction <maximumf>, %75, %cst_19 [1] : vector<1088x136xf32> to vector<1088xf32>
    %77 = vector.shape_cast %76 : vector<1088xf32> to vector<1088x1xf32>
    %78 = vector.broadcast %77 : vector<1088x1xf32> to vector<1088x136xf32>
    %79 = arith.subf %75, %78 : vector<1088x136xf32>
    %80 = math.exp %79 : vector<1088x136xf32>
    %cst_20 = arith.constant dense<0.000000e+00> : vector<1088xf32>
    %81 = vector.multi_reduction <add>, %80, %cst_20 [1] : vector<1088x136xf32> to vector<1088xf32>
    %82 = vector.shape_cast %81 : vector<1088xf32> to vector<1088x1xf32>
    %83 = arith.truncf %80 : vector<1088x136xf32> to vector<1088x136xbf16>
    %cst_21 = arith.constant dense<0.000000e+00> : vector<1088x32xf32>
    %84 = tpu.matmul %83, %40, %cst_21 {dimension_numbers = #tpu.dot_dimension_numbers<[1], [0], [0], [1], [0, 0, 1, 1], [], []>} : vector<1088x136xbf16>, vector<136x32xbf16>, vector<1088x32xf32> -> vector<1088x32xf32>
    %85 = tpu.reciprocal %82 {approx = true} : vector<1088x1xf32> -> vector<1088x1xf32>
    %86 = vector.broadcast %85 : vector<1088x1xf32> to vector<1088x32xf32>
    %87 = arith.mulf %84, %86 : vector<1088x32xf32>
    %cst_22 = arith.constant 0.000000e+00 : f32
    %88 = vector.broadcast %cst_22 : f32 to vector<136x32xf32>
    %89 = vector.extract_strided_slice %87 {offsets = [0, 0], sizes = [136, 32], strides = [1, 1]} : vector<1088x32xf32> to vector<136x32xf32>
    %90 = vector.extract_strided_slice %41 {offsets = [0, 0], sizes = [1, 32], strides = [1, 1]} : vector<8x32xf32> to vector<1x32xf32>
    %91 = vector.broadcast %90 : vector<1x32xf32> to vector<136x32xf32>
    %92 = arith.mulf %89, %91 : vector<136x32xf32>
    %93 = arith.addf %88, %92 : vector<136x32xf32>
    %94 = vector.extract_strided_slice %87 {offsets = [136, 0], sizes = [136, 32], strides = [1, 1]} : vector<1088x32xf32> to vector<136x32xf32>
    %95 = vector.extract_strided_slice %41 {offsets = [1, 0], sizes = [1, 32], strides = [1, 1]} : vector<8x32xf32> to vector<1x32xf32>
    %96 = vector.broadcast %95 : vector<1x32xf32> to vector<136x32xf32>
    %97 = arith.mulf %94, %96 : vector<136x32xf32>
    %98 = arith.addf %93, %97 : vector<136x32xf32>
    %99 = vector.extract_strided_slice %87 {offsets = [272, 0], sizes = [136, 32], strides = [1, 1]} : vector<1088x32xf32> to vector<136x32xf32>
    %100 = vector.extract_strided_slice %41 {offsets = [2, 0], sizes = [1, 32], strides = [1, 1]} : vector<8x32xf32> to vector<1x32xf32>
    %101 = vector.broadcast %100 : vector<1x32xf32> to vector<136x32xf32>
    %102 = arith.mulf %99, %101 : vector<136x32xf32>
    %103 = arith.addf %98, %102 : vector<136x32xf32>
    %104 = vector.extract_strided_slice %87 {offsets = [408, 0], sizes = [136, 32], strides = [1, 1]} : vector<1088x32xf32> to vector<136x32xf32>
    %105 = vector.extract_strided_slice %41 {offsets = [3, 0], sizes = [1, 32], strides = [1, 1]} : vector<8x32xf32> to vector<1x32xf32>
    %106 = vector.broadcast %105 : vector<1x32xf32> to vector<136x32xf32>
    %107 = arith.mulf %104, %106 : vector<136x32xf32>
    %108 = arith.addf %103, %107 : vector<136x32xf32>
    %109 = vector.extract_strided_slice %87 {offsets = [544, 0], sizes = [136, 32], strides = [1, 1]} : vector<1088x32xf32> to vector<136x32xf32>
    %110 = vector.extract_strided_slice %41 {offsets = [4, 0], sizes = [1, 32], strides = [1, 1]} : vector<8x32xf32> to vector<1x32xf32>
    %111 = vector.broadcast %110 : vector<1x32xf32> to vector<136x32xf32>
    %112 = arith.mulf %109, %111 : vector<136x32xf32>
    %113 = arith.addf %108, %112 : vector<136x32xf32>
    %114 = vector.extract_strided_slice %87 {offsets = [680, 0], sizes = [136, 32], strides = [1, 1]} : vector<1088x32xf32> to vector<136x32xf32>
    %115 = vector.extract_strided_slice %41 {offsets = [5, 0], sizes = [1, 32], strides = [1, 1]} : vector<8x32xf32> to vector<1x32xf32>
    %116 = vector.broadcast %115 : vector<1x32xf32> to vector<136x32xf32>
    %117 = arith.mulf %114, %116 : vector<136x32xf32>
    %118 = arith.addf %113, %117 : vector<136x32xf32>
    %119 = vector.extract_strided_slice %87 {offsets = [816, 0], sizes = [136, 32], strides = [1, 1]} : vector<1088x32xf32> to vector<136x32xf32>
    %120 = vector.extract_strided_slice %41 {offsets = [6, 0], sizes = [1, 32], strides = [1, 1]} : vector<8x32xf32> to vector<1x32xf32>
    %121 = vector.broadcast %120 : vector<1x32xf32> to vector<136x32xf32>
    %122 = arith.mulf %119, %121 : vector<136x32xf32>
    %123 = arith.addf %118, %122 : vector<136x32xf32>
    %124 = vector.extract_strided_slice %87 {offsets = [952, 0], sizes = [136, 32], strides = [1, 1]} : vector<1088x32xf32> to vector<136x32xf32>
    %125 = vector.extract_strided_slice %41 {offsets = [7, 0], sizes = [1, 32], strides = [1, 1]} : vector<8x32xf32> to vector<1x32xf32>
    %126 = vector.broadcast %125 : vector<1x32xf32> to vector<136x32xf32>
    %127 = arith.mulf %124, %126 : vector<136x32xf32>
    %128 = arith.addf %123, %127 : vector<136x32xf32>
    %129 = arith.truncf %128 : vector<136x32xf32> to vector<136x32xbf16>
    %c0_23 = arith.constant 0 : index
    %c0_24 = arith.constant 0 : index
    %130 = vector.load %arg7[%c0_23, %c0_24] : memref<32x32xbf16, #tpu.memory_space<vmem>>, vector<32x32xbf16>
    %cst_25 = arith.constant dense<0.000000e+00> : vector<136x32xf32>
    %131 = tpu.matmul %129, %130, %cst_25 {dimension_numbers = #tpu.dot_dimension_numbers<[1], [0], [0], [1], [0, 0, 1, 1], [], []>} : vector<136x32xbf16>, vector<32x32xbf16>, vector<136x32xf32> -> vector<136x32xf32>
    %132 = vector.broadcast %5 : vector<1x32xf32> to vector<136x32xf32>
    %133 = arith.addf %131, %132 : vector<136x32xf32>
    %134 = vector.broadcast %6 : vector<1x32xf32> to vector<136x32xf32>
    %135 = arith.mulf %134, %133 : vector<136x32xf32>
    %136 = arith.addf %1, %135 : vector<136x32xf32>
    %cst_26 = arith.constant dense<0.000000e+00> : vector<136xf32>
    %137 = vector.multi_reduction <add>, %136, %cst_26 [1] : vector<136x32xf32> to vector<136xf32>
    %138 = vector.shape_cast %137 : vector<136xf32> to vector<136x1xf32>
    %cst_27 = arith.constant 3.200000e+01 : f32
    %139 = vector.broadcast %cst_27 : f32 to vector<136x1xf32>
    %140 = arith.divf %138, %139 : vector<136x1xf32>
    %141 = vector.broadcast %140 : vector<136x1xf32> to vector<136x32xf32>
    %142 = arith.subf %136, %141 : vector<136x32xf32>
    %143 = arith.mulf %142, %142 : vector<136x32xf32>
    %cst_28 = arith.constant dense<0.000000e+00> : vector<136xf32>
    %144 = vector.multi_reduction <add>, %143, %cst_28 [1] : vector<136x32xf32> to vector<136xf32>
    %145 = vector.shape_cast %144 : vector<136xf32> to vector<136x1xf32>
    %cst_29 = arith.constant 3.200000e+01 : f32
    %146 = vector.broadcast %cst_29 : f32 to vector<136x1xf32>
    %147 = arith.divf %145, %146 : vector<136x1xf32>
    %148 = vector.broadcast %140 : vector<136x1xf32> to vector<136x32xf32>
    %149 = arith.subf %136, %148 : vector<136x32xf32>
    %cst_30 = arith.constant 9.99999974E-6 : f32
    %150 = vector.broadcast %cst_30 : f32 to vector<136x1xf32>
    %151 = arith.addf %147, %150 : vector<136x1xf32>
    %152 = math.rsqrt %151 : vector<136x1xf32>
    %153 = vector.broadcast %152 : vector<136x1xf32> to vector<136x32xf32>
    %154 = arith.mulf %149, %153 : vector<136x32xf32>
    %155 = vector.broadcast %7 : vector<1x32xf32> to vector<136x32xf32>
    %156 = arith.mulf %154, %155 : vector<136x32xf32>
    %157 = vector.broadcast %8 : vector<1x32xf32> to vector<136x32xf32>
    %158 = arith.addf %156, %157 : vector<136x32xf32>
    %159 = arith.truncf %158 : vector<136x32xf32> to vector<136x32xbf16>
    %c0_31 = arith.constant 0 : index
    %c0_32 = arith.constant 0 : index
    %160 = vector.load %arg8[%c0_31, %c0_32] : memref<32x128xbf16, #tpu.memory_space<vmem>>, vector<32x128xbf16>
    %cst_33 = arith.constant dense<0.000000e+00> : vector<136x128xf32>
    %161 = tpu.matmul %159, %160, %cst_33 {dimension_numbers = #tpu.dot_dimension_numbers<[1], [0], [0], [1], [0, 0, 1, 1], [], []>} : vector<136x32xbf16>, vector<32x128xbf16>, vector<136x128xf32> -> vector<136x128xf32>
    %c0_34 = arith.constant 0 : index
    %c0_35 = arith.constant 0 : index
    %162 = vector.load %arg9[%c0_34, %c0_35] : memref<1x128xf32, #tpu.memory_space<vmem>>, vector<1x128xf32>
    %163 = vector.broadcast %162 : vector<1x128xf32> to vector<136x128xf32>
    %164 = arith.addf %161, %163 : vector<136x128xf32>
    %cst_36 = arith.constant 5.000000e-01 : f32
    %165 = vector.broadcast %cst_36 : f32 to vector<136x128xf32>
    %166 = arith.mulf %165, %164 : vector<136x128xf32>
    %cst_37 = arith.constant 0.707106769 : f32
    %167 = vector.broadcast %cst_37 : f32 to vector<136x128xf32>
    %168 = arith.mulf %164, %167 : vector<136x128xf32>
    %169 = math.erf %168 : vector<136x128xf32>
    %cst_38 = arith.constant 1.000000e+00 : f32
    %170 = vector.broadcast %cst_38 : f32 to vector<136x128xf32>
    %171 = arith.addf %170, %169 : vector<136x128xf32>
    %172 = arith.mulf %166, %171 : vector<136x128xf32>
    %173 = arith.truncf %172 : vector<136x128xf32> to vector<136x128xbf16>
    %c0_39 = arith.constant 0 : index
    %c0_40 = arith.constant 0 : index
    %174 = vector.load %arg10[%c0_39, %c0_40] : memref<128x32xbf16, #tpu.memory_space<vmem>>, vector<128x32xbf16>
    %cst_41 = arith.constant dense<0.000000e+00> : vector<136x32xf32>
    %175 = tpu.matmul %173, %174, %cst_41 {dimension_numbers = #tpu.dot_dimension_numbers<[1], [0], [0], [1], [0, 0, 1, 1], [], []>} : vector<136x128xbf16>, vector<128x32xbf16>, vector<136x32xf32> -> vector<136x32xf32>
    %176 = vector.broadcast %9 : vector<1x32xf32> to vector<136x32xf32>
    %177 = arith.addf %175, %176 : vector<136x32xf32>
    %178 = vector.broadcast %10 : vector<1x32xf32> to vector<136x32xf32>
    %179 = arith.mulf %178, %177 : vector<136x32xf32>
    %180 = arith.addf %136, %179 : vector<136x32xf32>
    %c0_42 = arith.constant 0 : index
    %c0_43 = arith.constant 0 : index
    %c0_44 = arith.constant 0 : index
    %181 = vector.load %arg11[%c0_42, %c0_43, %c0_44] : memref<1x136x32xf32, #tpu.memory_space<vmem>>, vector<1x136x32xf32>
    %182 = vector.shape_cast %181 : vector<1x136x32xf32> to vector<136x32xf32>
    %183 = vector.shape_cast %180 : vector<136x32xf32> to vector<1x136x32xf32>
    tpu.vector_store %arg11[%c0_42, %c0_43, %c0_44], %183 {strides = array<i32>} : memref<1x136x32xf32, #tpu.memory_space<vmem>>, vector<1x136x32xf32>,
    return
  }
  func.func @transform_0(%arg0: i32) -> (i32, i32, i32) {
    %c0_i32 = arith.constant 0 : i32
    %c0_i32_0 = arith.constant 0 : i32
    %c0_i32_1 = arith.constant 0 : i32
    return %arg0, %c0_i32, %c0_i32_0 : i32, i32, i32
  }
  func.func @transform_1(%arg0: i32) -> (i32, i32) {
    %c0_i32 = arith.constant 0 : i32
    %c0_i32_0 = arith.constant 0 : i32
    %c0_i32_1 = arith.constant 0 : i32
    return %c0_i32, %c0_i32_0 : i32, i32
  }
  func.func @transform_2(%arg0: i32) -> (i32, i32) {
    %c0_i32 = arith.constant 0 : i32
    %c0_i32_0 = arith.constant 0 : i32
    %c0_i32_1 = arith.constant 0 : i32
    return %c0_i32, %c0_i32_0 : i32, i32
  }
  func.func @transform_3(%arg0: i32) -> (i32, i32) {
    %c0_i32 = arith.constant 0 : i32
    %c0_i32_0 = arith.constant 0 : i32
    %c0_i32_1 = arith.constant 0 : i32
    return %c0_i32, %c0_i32_0 : i32, i32
  }
  func.func @transform_4(%arg0: i32) -> (i32, i32) {
    %c0_i32 = arith.constant 0 : i32
    %c0_i32_0 = arith.constant 0 : i32
    %c0_i32_1 = arith.constant 0 : i32
    return %c0_i32, %c0_i32_0 : i32, i32
  }
  func.func @transform_5(%arg0: i32) -> (i32, i32) {
    %c0_i32 = arith.constant 0 : i32
    %c0_i32_0 = arith.constant 0 : i32
    %c0_i32_1 = arith.constant 0 : i32
    return %c0_i32, %c0_i32_0 : i32, i32
  }
  func.func @transform_6(%arg0: i32) -> (i32, i32) {
    %c0_i32 = arith.constant 0 : i32
    %c0_i32_0 = arith.constant 0 : i32
    %c0_i32_1 = arith.constant 0 : i32
    return %c0_i32, %c0_i32_0 : i32, i32
  }
  func.func @transform_7(%arg0: i32) -> (i32, i32) {
    %c0_i32 = arith.constant 0 : i32
    %c0_i32_0 = arith.constant 0 : i32
    %c0_i32_1 = arith.constant 0 : i32
    return %c0_i32, %c0_i32_0 : i32, i32
  }
  func.func @transform_8(%arg0: i32) -> (i32, i32) {
    %c0_i32 = arith.constant 0 : i32
    %c0_i32_0 = arith.constant 0 : i32
    %c0_i32_1 = arith.constant 0 : i32
    return %c0_i32, %c0_i32_0 : i32, i32
  }
  func.func @transform_9(%arg0: i32) -> (i32, i32) {
    %c0_i32 = arith.constant 0 : i32
    %c0_i32_0 = arith.constant 0 : i32
    %c0_i32_1 = arith.constant 0 : i32
    return %c0_i32, %c0_i32_0 : i32, i32
  }
  func.func @transform_10(%arg0: i32) -> (i32, i32, i32) {
    %c0_i32 = arith.constant 0 : i32
    %c0_i32_0 = arith.constant 0 : i32
    %c0_i32_1 = arith.constant 0 : i32
    return %arg0, %c0_i32, %c0_i32_0 : i32, i32, i32
  }
}

</mosaic_0001>

<llo_original>
// kernel: agformer_block.1
$region0: #{agformer_block.1}
  #allocation0 [shape = 'u32[]', space=smem, size = 0x4, offset = 0x4, fixed_abs, tag = 'smem constant byte address 0x4 - core index']
  #allocation1 [shape = 'u32[144,128]{1,0:T(1,128)}', space=vmem, size = 0x12000, scoped, tag = 'internal scratch']
  %s0 = inlined_call_operand.vmem [shape: f32[2,136,32], index: 0, kind: input, shape index: {}]
  %s1 = inlined_call_operand.vmem [shape: s32[1088,1], index: 1, kind: input, shape index: {}]
  %s2 = inlined_call_operand.vmem [shape: s32[1,136], index: 2, kind: input, shape index: {}]
  %s3 = inlined_call_operand.vmem [shape: f32[8,32], index: 3, kind: input, shape index: {}]
  %s4 = inlined_call_operand.vmem [shape: f32[8,32], index: 4, kind: input, shape index: {}]
  %s5 = inlined_call_operand.vmem [shape: bf16[32,96], index: 5, kind: input, shape index: {}]
  %s6 = inlined_call_operand.vmem [shape: bf16[32,32], index: 6, kind: input, shape index: {}]
  %s7 = inlined_call_operand.vmem [shape: bf16[32,128], index: 7, kind: input, shape index: {}]
  %s8 = inlined_call_operand.vmem [shape: f32[1,128], index: 8, kind: input, shape index: {}]
  %s9 = inlined_call_operand.vmem [shape: bf16[128,32], index: 9, kind: input, shape index: {}]
  %s10 = inlined_call_operand.vmem [shape: f32[2,136,32], index: 10, kind: output, shape index: {}]
  %s11 = sld [smem:[#allocation0]]
  $region73: #{agformer_block.1} parent=0
    _
  %s13 = ssub.s32 1, %s11
  %s14 = scalar_select 0, %s13, %s11
  loop: start=0, step=1, limit=4
  $region2: #{agformer_block.1} parent=0 // loop_pre_header
    _
  $region3: #{agformer_block.1} parent=0 // loop_header
    %s16 = sphi 0, %s20
    %p17 = scmp.ge.s32.totalorder %s16, 4
    %s26 = sphi 0, %s28
    %s29 = sphi 0, %s26
    %s30 = sphi 0, %s29
    %s46 = sphi 0, %s30
    %s50 = sphi 0, %s50
    %s52 = sphi 0, %s50
    %s53 = sphi 0, %s52
    %s67 = sphi 0, %s53
    %s71 = sphi 0, %s71
    %s73 = sphi 0, %s71
    %s74 = sphi 0, %s73
    %s88 = sphi 0, %s74
    %s92 = sphi 0, %s92
    %s94 = sphi 0, %s92
    %s95 = sphi 0, %s94
    %s109 = sphi 0, %s95
    %s113 = sphi 0, %s113
    %s115 = sphi 0, %s113
    %s116 = sphi 0, %s115
    %s130 = sphi 0, %s116
    %s134 = sphi 0, %s134
    %s136 = sphi 0, %s134
    %s137 = sphi 0, %s136
    %s151 = sphi 0, %s137
    %s155 = sphi 0, %s155
    %s157 = sphi 0, %s155
    %s158 = sphi 0, %s157
    %s172 = sphi 0, %s158
    %s176 = sphi 0, %s176
    %s178 = sphi 0, %s176
    %s179 = sphi 0, %s178
    %s193 = sphi 0, %s179
    %s197 = sphi 0, %s197
    %s199 = sphi 0, %s197
    %s200 = sphi 0, %s199
    %s214 = sphi 0, %s200
    %s218 = sphi 0, %s218
    %s220 = sphi 0, %s218
    %s221 = sphi 0, %s220
    %s235 = sphi 0, %s221
    %s241 = sphi 0, %s243
    %s244 = sphi 0, %s241
    %s245 = sphi 0, %s244
    %s261 = sphi 0, %s245
  $region4: #{agformer_block.1} parent=0 // loop_header_branch
    %19 = sbr.rel (%p17) target = $region8
  $region5: #{agformer_block.1} parent=0 // loop_body
    %s21 = ssub.s32 %s16, 1
    %s22 = ssub.s32 %s16, 2
    %s23 = sadd.s32 %s16, 1
    %s24 = ssub.s32 %s16, %s23
    %p25 = scmp.eq.s32.totalorder %s24, 0
    %s27 = sadd.s32 %s26, 1
    %s28 = scalar_select %p25, %s26, %s27
    %p31 = pneg %p25
    %p32 = scmp.eq.s32.totalorder %s16, 1
    %p33 = por %p31, %p32
    %p34 = scmp.ne.s32.totalorder %s26, %s29
    %p35 = scmp.eq.s32.totalorder %s16, 0
    %p36 = por %p34, %p35
    %p37 = scmp.ne.s32.totalorder %s26, %s29
    %p38 = scmp.eq.s32.totalorder %s21, 1
    %p39 = por %p37, %p38
    %p40 = scmp.ne.s32.totalorder %s29, %s30
    %p41 = scmp.eq.s32.totalorder %s21, 0
    %p42 = por %p40, %p41
    %p43 = scmp.ne.s32.totalorder %s29, %s30
    %p44 = scmp.eq.s32.totalorder %s22, 1
    %p45 = por %p43, %p44
    %p47 = scmp.ne.s32.totalorder %s30, %s46
    %p48 = scmp.eq.s32.totalorder %s22, 0
    %p49 = por %p47, %p48
    %s51 = sadd.s32 %s50, 1
    %p54 = scmp.eq.s32.totalorder %s16, 1
    %p55 = scmp.ne.s32.totalorder %s50, %s52
    %p56 = scmp.eq.s32.totalorder %s16, 0
    %p57 = por %p55, %p56
    %p58 = scmp.ne.s32.totalorder %s50, %s52
    %p59 = scmp.eq.s32.totalorder %s21, 1
    %p60 = por %p58, %p59
    %p61 = scmp.ne.s32.totalorder %s52, %s53
    %p62 = scmp.eq.s32.totalorder %s21, 0
    %p63 = por %p61, %p62
    %p64 = scmp.ne.s32.totalorder %s52, %s53
    %p65 = scmp.eq.s32.totalorder %s22, 1
    %p66 = por %p64, %p65
    %p68 = scmp.ne.s32.totalorder %s53, %s67
    %p69 = scmp.eq.s32.totalorder %s22, 0
    %p70 = por %p68, %p69
    %s72 = sadd.s32 %s71, 1
    %p75 = scmp.eq.s32.totalorder %s16, 1
    %p76 = scmp.ne.s32.totalorder %s71, %s73
    %p77 = scmp.eq.s32.totalorder %s16, 0
    %p78 = por %p76, %p77
    %p79 = scmp.ne.s32.totalorder %s71, %s73
    %p80 = scmp.eq.s32.totalorder %s21, 1
    %p81 = por %p79, %p80
    %p82 = scmp.ne.s32.totalorder %s73, %s74
    %p83 = scmp.eq.s32.totalorder %s21, 0
    %p84 = por %p82, %p83
    %p85 = scmp.ne.s32.totalorder %s73, %s74
    %p86 = scmp.eq.s32.totalorder %s22, 1
    %p87 = por %p85, %p86
    %p89 = scmp.ne.s32.totalorder %s74, %s88
    %p90 = scmp.eq.s32.totalorder %s22, 0
    %p91 = por %p89, %p90
    %s93 = sadd.s32 %s92, 1
    %p96 = scmp.eq.s32.totalorder %s16, 1
    %p97 = scmp.ne.s32.totalorder %s92, %s94
    %p98 = scmp.eq.s32.totalorder %s16, 0
    %p99 = por %p97, %p98
    %p100 = scmp.ne.s32.totalorder %s92, %s94
    %p101 = scmp.eq.s32.totalorder %s21, 1
    %p102 = por %p100, %p101
    %p103 = scmp.ne.s32.totalorder %s94, %s95
    %p104 = scmp.eq.s32.totalorder %s21, 0
    %p105 = por %p103, %p104
    %p106 = scmp.ne.s32.totalorder %s94, %s95
    %p107 = scmp.eq.s32.totalorder %s22, 1
    %p108 = por %p106, %p107
    %p110 = scmp.ne.s32.totalorder %s95, %s109
    %p111 = scmp.eq.s32.totalorder %s22, 0
    %p112 = por %p110, %p111
    %s114 = sadd.s32 %s113, 1
    %p117 = scmp.eq.s32.totalorder %s16, 1
    %p118 = scmp.ne.s32.totalorder %s113, %s115
    %p119 = scmp.eq.s32.totalorder %s16, 0
    %p120 = por %p118, %p119
    %p121 = scmp.ne.s32.totalorder %s113, %s115
    %p122 = scmp.eq.s32.totalorder %s21, 1
    %p123 = por %p121, %p122
    %p124 = scmp.ne.s32.totalorder %s115, %s116
    %p125 = scmp.eq.s32.totalorder %s21, 0
    %p126 = por %p124, %p125
    %p127 = scmp.ne.s32.totalorder %s115, %s116
    %p128 = scmp.eq.s32.totalorder %s22, 1
    %p129 = por %p127, %p128
    %p131 = scmp.ne.s32.totalorder %s116, %s130
    %p132 = scmp.eq.s32.totalorder %s22, 0
    %p133 = por %p131, %p132
    %s135 = sadd.s32 %s134, 1
    %p138 = scmp.eq.s32.totalorder %s16, 1
    %p139 = scmp.ne.s32.totalorder %s134, %s136
    %p140 = scmp.eq.s32.totalorder %s16, 0
    %p141 = por %p139, %p140
    %p142 = scmp.ne.s32.totalorder %s134, %s136
    %p143 = scmp.eq.s32.totalorder %s21, 1
    %p144 = por %p142, %p143
    %p145 = scmp.ne.s32.totalorder %s136, %s137
    %p146 = scmp.eq.s32.totalorder %s21, 0
    %p147 = por %p145, %p146
    %p148 = scmp.ne.s32.totalorder %s136, %s137
    %p149 = scmp.eq.s32.totalorder %s22, 1
    %p150 = por %p148, %p149
    %p152 = scmp.ne.s32.totalorder %s137, %s151
    %p153 = scmp.eq.s32.totalorder %s22, 0
    %p154 = por %p152, %p153
    %s156 = sadd.s32 %s155, 1
    %p159 = scmp.eq.s32.totalorder %s16, 1
    %p160 = scmp.ne.s32.totalorder %s155, %s157
    %p161 = scmp.eq.s32.totalorder %s16, 0
    %p162 = por %p160, %p161
    %p163 = scmp.ne.s32.totalorder %s155, %s157
    %p164 = scmp.eq.s32.totalorder %s21, 1
    %p165 = por %p163, %p164
    %p166 = scmp.ne.s32.totalorder %s157, %s158
    %p167 = scmp.eq.s32.totalorder %s21, 0
    %p168 = por %p166, %p167
    %p169 = scmp.ne.s32.totalorder %s157, %s158
    %p170 = scmp.eq.s32.totalorder %s22, 1
    %p171 = por %p169, %p170
    %p173 = scmp.ne.s32.totalorder %s158, %s172
    %p174 = scmp.eq.s32.totalorder %s22, 0
    %p175 = por %p173, %p174
    %s177 = sadd.s32 %s176, 1
    %p180 = scmp.eq.s32.totalorder %s16, 1
    %p181 = scmp.ne.s32.totalorder %s176, %s178
    %p182 = scmp.eq.s32.totalorder %s16, 0
    %p183 = por %p181, %p182
    %p184 = scmp.ne.s32.totalorder %s176, %s178
    %p185 = scmp.eq.s32.totalorder %s21, 1
    %p186 = por %p184, %p185
    %p187 = scmp.ne.s32.totalorder %s178, %s179
    %p188 = scmp.eq.s32.totalorder %s21, 0
    %p189 = por %p187, %p188
    %p190 = scmp.ne.s32.totalorder %s178, %s179
    %p191 = scmp.eq.s32.totalorder %s22, 1
    %p192 = por %p190, %p191
    %p194 = scmp.ne.s32.totalorder %s179, %s193
    %p195 = scmp.eq.s32.totalorder %s22, 0
    %p196 = por %p194, %p195
    %s198 = sadd.s32 %s197, 1
    %p201 = scmp.eq.s32.totalorder %s16, 1
    %p202 = scmp.ne.s32.totalorder %s197, %s199
    %p203 = scmp.eq.s32.totalorder %s16, 0
    %p204 = por %p202, %p203
    %p205 = scmp.ne.s32.totalorder %s197, %s199
    %p206 = scmp.eq.s32.totalorder %s21, 1
    %p207 = por %p205, %p206
    %p208 = scmp.ne.s32.totalorder %s199, %s200
    %p209 = scmp.eq.s32.totalorder %s21, 0
    %p210 = por %p208, %p209
    %p211 = scmp.ne.s32.totalorder %s199, %s200
    %p212 = scmp.eq.s32.totalorder %s22, 1
    %p213 = por %p211, %p212
    %p215 = scmp.ne.s32.totalorder %s200, %s214
    %p216 = scmp.eq.s32.totalorder %s22, 0
    %p217 = por %p215, %p216
    %s219 = sadd.s32 %s218, 1
    %p222 = scmp.eq.s32.totalorder %s16, 1
    %p223 = scmp.ne.s32.totalorder %s218, %s220
    %p224 = scmp.eq.s32.totalorder %s16, 0
    %p225 = por %p223, %p224
    %p226 = scmp.ne.s32.totalorder %s218, %s220
    %p227 = scmp.eq.s32.totalorder %s21, 1
    %p228 = por %p226, %p227
    %p229 = scmp.ne.s32.totalorder %s220, %s221
    %p230 = scmp.eq.s32.totalorder %s21, 0
    %p231 = por %p229, %p230
    %p232 = scmp.ne.s32.totalorder %s220, %s221
    %p233 = scmp.eq.s32.totalorder %s22, 1
    %p234 = por %p232, %p233
    %p236 = scmp.ne.s32.totalorder %s221, %s235
    %p237 = scmp.eq.s32.totalorder %s22, 0
    %p238 = por %p236, %p237
    %s239 = ssub.s32 %s16, %s23
    %p240 = scmp.eq.s32.totalorder %s239, 0
    %s242 = sadd.s32 %s241, 1
    %s243 = scalar_select %p240, %s241, %s242
    %p246 = pneg %p240
    %p247 = scmp.eq.s32.totalorder %s16, 1
    %p248 = por %p246, %p247
    %p249 = scmp.ne.s32.totalorder %s241, %s244
    %p250 = scmp.eq.s32.totalorder %s16, 0
    %p251 = por %p249, %p250
    %p252 = scmp.ne.s32.totalorder %s241, %s244
    %p253 = scmp.eq.s32.totalorder %s21, 1
    %p254 = por %p252, %p253
    %p255 = scmp.ne.s32.totalorder %s244, %s245
    %p256 = scmp.eq.s32.totalorder %s21, 0
    %p257 = por %p255, %p256
    %p258 = scmp.ne.s32.totalorder %s244, %s245
    %p259 = scmp.eq.s32.totalorder %s22, 1
    %p260 = por %p258, %p259
    %p262 = scmp.ne.s32.totalorder %s245, %s261
    %p263 = scmp.eq.s32.totalorder %s22, 0
    %p264 = por %p262, %p263
    %p265 = scmp.le.s32.totalorder 1, %s16
    %p266 = scmp.lt.s32.totalorder %s16, 3
    %p267 = pnand %p265, %p266
    %p268 = pneg %p267
    // Predicated region
    $region9: #{agformer_block.1} parent=5 // pred_check
      _
    $region10: #{agformer_block.1} parent=5 // pred_check_branch
      %270 = sbr.rel (%p267) target = $region12
    $region11: #{agformer_block.1} parent=5 // pred_region
      %s271 = ssub.s32 %s16, 1
      // Predicated region
      $region13: #{agformer_block.1} parent=11 // pred_check
        %p272 = pneg %p63
      $region14: #{agformer_block.1} parent=11 // pred_check_branch
        %274 = sbr.rel (%p272) target = $region16
      $region15: #{agformer_block.1} parent=11 // pred_region
        _
      $region16: #{agformer_block.1} parent=11 // pred_fallthru
        _
      // Predicated region
      $region17: #{agformer_block.1} parent=11 // pred_check
        %p275 = pneg %p84
      $region18: #{agformer_block.1} parent=11 // pred_check_branch
        %277 = sbr.rel (%p275) target = $region20
      $region19: #{agformer_block.1} parent=11 // pred_region
        _
      $region20: #{agformer_block.1} parent=11 // pred_fallthru
        _
      // Predicated region
      $region21: #{agformer_block.1} parent=11 // pred_check
        %p278 = pneg %p105
      $region22: #{agformer_block.1} parent=11 // pred_check_branch
        %280 = sbr.rel (%p278) target = $region24
      $region23: #{agformer_block.1} parent=11 // pred_region
        _
      $region24: #{agformer_block.1} parent=11 // pred_fallthru
        _
      // Predicated region
      $region25: #{agformer_block.1} parent=11 // pred_check
        %p281 = pneg %p126
      $region26: #{agformer_block.1} parent=11 // pred_check_branch
        %283 = sbr.rel (%p281) target = $region28
      $region27: #{agformer_block.1} parent=11 // pred_region
        _
      $region28: #{agformer_block.1} parent=11 // pred_fallthru
        _
      // Predicated region
      $region29: #{agformer_block.1} parent=11 // pred_check
        %p284 = pneg %p147
      $region30: #{agformer_block.1} parent=11 // pred_check_branch
        %286 = sbr.rel (%p284) target = $region32
      $region31: #{agformer_block.1} parent=11 // pred_region
        _
      $region32: #{agformer_block.1} parent=11 // pred_fallthru
        _
      // Predicated region
      $region33: #{agformer_block.1} parent=11 // pred_check
        %p287 = pneg %p168
      $region34: #{agformer_block.1} parent=11 // pred_check_branch
        %289 = sbr.rel (%p287) target = $region36
      $region35: #{agformer_block.1} parent=11 // pred_region
        _
      $region36: #{agformer_block.1} parent=11 // pred_fallthru
        _
      // Predicated region
      $region37: #{agformer_block.1} parent=11 // pred_check
        %p290 = pneg %p189
      $region38: #{agformer_block.1} parent=11 // pred_check_branch
        %292 = sbr.rel (%p290) target = $region40
      $region39: #{agformer_block.1} parent=11 // pred_region
        _
      $region40: #{agformer_block.1} parent=11 // pred_fallthru
        _
      // Predicated region
      $region41: #{agformer_block.1} parent=11 // pred_check
        %p293 = pneg %p210
      $region42: #{agformer_block.1} parent=11 // pred_check_branch
        %295 = sbr.rel (%p293) target = $region44
      $region43: #{agformer_block.1} parent=11 // pred_region
        _
      $region44: #{agformer_block.1} parent=11 // pred_fallthru
        _
      // Predicated region
      $region45: #{agformer_block.1} parent=11 // pred_check
        %p296 = pneg %p231
      $region46: #{agformer_block.1} parent=11 // pred_check_branch
        %298 = sbr.rel (%p296) target = $region48
      $region47: #{agformer_block.1} parent=11 // pred_region
        _
      $region48: #{agformer_block.1} parent=11 // pred_fallthru
        _
    $region12: #{agformer_block.1} parent=5 // pred_fallthru
      _
    %p299 = scmp.lt.s32.totalorder %s16, 2
    // Predicated region
    $region49: #{agformer_block.1} parent=5 // pred_check
      %p300 = pneg %p299
    $region50: #{agformer_block.1} parent=5 // pred_check_branch
      %302 = sbr.rel (%p300) target = $region52
    $region51: #{agformer_block.1} parent=5 // pred_region
      // Predicated region
      $region53: #{agformer_block.1} parent=51 // pred_check
        %p303 = pneg %p36
      $region54: #{agformer_block.1} parent=51 // pred_check_branch
        %305 = sbr.rel (%p303) target = $region56
      $region55: #{agformer_block.1} parent=51 // pred_region
        %p306 = scmp.lt.s32.totalorder %s16, 1
        %s307 = scalar_select %p306, %s16, 1
        %s308 = smul.addr %s307, 17
        %s309 = smul.addr %s308, 8
        %s310 = scalar_lea.vmem %s0, %s309
      $region56: #{agformer_block.1} parent=51 // pred_fallthru
        _
    $region52: #{agformer_block.1} parent=5 // pred_fallthru
      _
    %p311 = scmp.le.s32.totalorder 1, %s16
    %p312 = scmp.lt.s32.totalorder %s16, 3
    %p313 = pnand %p311, %p312
    %p314 = pneg %p313
    // Predicated region
    $region57: #{agformer_block.1} parent=5 // pred_check
      _
    $region58: #{agformer_block.1} parent=5 // pred_check_branch
      %316 = sbr.rel (%p313) target = $region60
    $region59: #{agformer_block.1} parent=5 // pred_region
      %s317 = ssub.s32 %s16, 1
      %p318 = scmp.lt.s32.totalorder %s21, 1
      %s319 = scalar_select %p318, %s21, 1
      %s320 = smul.addr %s319, 17
      %s321 = smul.addr %s320, 8
      %s322 = scalar_lea.vmem %s0, %s321
      %p323 = pneg %p42
      %p324 = pneg %p39
      %p325 = pneg %p63
      %p326 = pneg %p60
      %p327 = pneg %p84
      %p328 = pneg %p81
      %p329 = pneg %p105
      %p330 = pneg %p102
      %p331 = pneg %p126
      %p332 = pneg %p123
      %p333 = pneg %p147
      %p334 = pneg %p144
      %p335 = pneg %p168
      %p336 = pneg %p165
      %p337 = pneg %p189
      %p338 = pneg %p186
      %p339 = pneg %p210
      %p340 = pneg %p207
      %p341 = pneg %p231
      %p342 = pneg %p228
      %p343 = pneg %p257
      %p344 = pneg %p254
      %p345 = scmp.lt.s32.totalorder %s21, 1
      %s346 = scalar_select %p345, %s21, 1
      %s347 = smul.addr %s346, 17
      %s348 = smul.addr %s347, 8
      %s349 = scalar_lea.vmem %s10, %s348
      %p350 = scmp.lt.s32.totalorder %s21, 1
      %s351 = scalar_select %p350, %s21, 1
      %s352 = smul.addr %s351, 17
      %s353 = smul.addr %s352, 8
      %s354 = scalar_lea.vmem %s0, %s353
      %p355 = scmp.lt.s32.totalorder %s21, 1
      %s356 = scalar_select %p355, %s21, 1
      %s357 = smul.addr %s356, 17
      %s358 = smul.addr %s357, 8
      %s359 = scalar_lea.vmem %s10, %s358
      %v361 = vld [vmem:[%s354] sm:$0xff]
      %v362 = vld [vmem:[%s354 + $0x8] sm:$0xff]
      %v363 = vld [vmem:[%s354 + $0x10] sm:$0xff]
      %v364 = vld [vmem:[%s354 + $0x18] sm:$0xff]
      %v365 = vld [vmem:[%s354 + $0x20] sm:$0xff]
      %v366 = vld [vmem:[%s354 + $0x28] sm:$0xff]
      %v367 = vld [vmem:[%s354 + $0x30] sm:$0xff]
      %v368 = vld [vmem:[%s354 + $0x38] sm:$0xff]
      %v369 = vld [vmem:[%s354 + $0x40] sm:$0xff]
      %v370 = vld [vmem:[%s354 + $0x48] sm:$0xff]
      %v371 = vld [vmem:[%s354 + $0x50] sm:$0xff]
      %v372 = vld [vmem:[%s354 + $0x58] sm:$0xff]
      %v373 = vld [vmem:[%s354 + $0x60] sm:$0xff]
      %v374 = vld [vmem:[%s354 + $0x68] sm:$0xff]
      %v375 = vld [vmem:[%s354 + $0x70] sm:$0xff]
      %v376 = vld [vmem:[%s354 + $0x78] sm:$0xff]
      %v377 = vld [vmem:[%s354 + $0x80] sm:$0xff]
      %v378 = vld [vmem:[%s4] sm:$0xff]
      %vm379 = vcmask 261120
      %v380 = vsel %vm379, %v361, 0.0
      %381 = vadd.xlane.f32.xlu0 %v380
      %v382 = vpop.xlane.xlu0 %381
      %v383 = vsel %vm379, %v362, 0.0
      %384 = vadd.xlane.f32.xlu0 %v383
      %v385 = vpop.xlane.xlu0 %384
      %v386 = vsel %vm379, %v363, 0.0
      %387 = vadd.xlane.f32.xlu0 %v386
      %v388 = vpop.xlane.xlu0 %387
      %v389 = vsel %vm379, %v364, 0.0
      %390 = vadd.xlane.f32.xlu0 %v389
      %v391 = vpop.xlane.xlu0 %390
      %v392 = vsel %vm379, %v365, 0.0
      %393 = vadd.xlane.f32.xlu0 %v392
      %v394 = vpop.xlane.xlu0 %393
      %v395 = vsel %vm379, %v366, 0.0
      %396 = vadd.xlane.f32.xlu0 %v395
      %v397 = vpop.xlane.xlu0 %396
      %v398 = vsel %vm379, %v367, 0.0
      %399 = vadd.xlane.f32.xlu0 %v398
      %v400 = vpop.xlane.xlu0 %399
      %v401 = vsel %vm379, %v368, 0.0
      %402 = vadd.xlane.f32.xlu0 %v401
      %v403 = vpop.xlane.xlu0 %402
      %v404 = vsel %vm379, %v369, 0.0
      %405 = vadd.xlane.f32.xlu0 %v404
      %v406 = vpop.xlane.xlu0 %405
      %v407 = vsel %vm379, %v370, 0.0
      %408 = vadd.xlane.f32.xlu0 %v407
      %v409 = vpop.xlane.xlu0 %408
      %v410 = vsel %vm379, %v371, 0.0
      %411 = vadd.xlane.f32.xlu0 %v410
      %v412 = vpop.xlane.xlu0 %411
      %v413 = vsel %vm379, %v372, 0.0
      %414 = vadd.xlane.f32.xlu0 %v413
      %v415 = vpop.xlane.xlu0 %414
      %v416 = vsel %vm379, %v373, 0.0
      %417 = vadd.xlane.f32.xlu0 %v416
      %v418 = vpop.xlane.xlu0 %417
      %v419 = vsel %vm379, %v374, 0.0
      %420 = vadd.xlane.f32.xlu0 %v419
      %v421 = vpop.xlane.xlu0 %420
      %v422 = vsel %vm379, %v375, 0.0
      %423 = vadd.xlane.f32.xlu0 %v422
      %v424 = vpop.xlane.xlu0 %423
      %v425 = vsel %vm379, %v376, 0.0
      %426 = vadd.xlane.f32.xlu0 %v425
      %v427 = vpop.xlane.xlu0 %426
      %v428 = vsel %vm379, %v377, 0.0
      %429 = vadd.xlane.f32.xlu0 %v428
      %v430 = vpop.xlane.xlu0 %429
      %v431 = vrcp.pop 32.0
      %v432 = vmul.f32 %v382, %v431
      %v433 = vmul.f32 %v385, %v431
      %v434 = vmul.f32 %v388, %v431
      %v435 = vmul.f32 %v391, %v431
      %v436 = vmul.f32 %v394, %v431
      %v437 = vmul.f32 %v397, %v431
      %v438 = vmul.f32 %v400, %v431
      %v439 = vmul.f32 %v403, %v431
      %v440 = vmul.f32 %v406, %v431
      %v441 = vmul.f32 %v409, %v431
      %v442 = vmul.f32 %v412, %v431
      %v443 = vmul.f32 %v415, %v431
      %v444 = vmul.f32 %v418, %v431
      %v445 = vmul.f32 %v421, %v431
      %v446 = vmul.f32 %v424, %v431
      %v447 = vmul.f32 %v427, %v431
      %v448 = vmul.f32 %v430, %v431
      %v449 = vsub.f32 %v361, %v432
      %v450 = vsub.f32 %v362, %v433
      %v451 = vsub.f32 %v363, %v434
      %v452 = vsub.f32 %v364, %v435
      %v453 = vsub.f32 %v365, %v436
      %v454 = vsub.f32 %v366, %v437
      %v455 = vsub.f32 %v367, %v438
      %v456 = vsub.f32 %v368, %v439
      %v457 = vsub.f32 %v369, %v440
      %v458 = vsub.f32 %v370, %v441
      %v459 = vsub.f32 %v371, %v442
      %v460 = vsub.f32 %v372, %v443
      %v461 = vsub.f32 %v373, %v444
      %v462 = vsub.f32 %v374, %v445
      %v463 = vsub.f32 %v375, %v446
      %v464 = vsub.f32 %v376, %v447
      %v465 = vsub.f32 %v377, %v448
      %v466 = vmul.f32 %v449, %v449
      %v467 = vmul.f32 %v450, %v450
      %v468 = vmul.f32 %v451, %v451
      %v469 = vmul.f32 %v452, %v452
      %v470 = vmul.f32 %v453, %v453
      %v471 = vmul.f32 %v454, %v454
      %v472 = vmul.f32 %v455, %v455
      %v473 = vmul.f32 %v456, %v456
      %v474 = vmul.f32 %v457, %v457
      %v475 = vmul.f32 %v458, %v458
      %v476 = vmul.f32 %v459, %v459
      %v477 = vmul.f32 %v460, %v460
      %v478 = vmul.f32 %v461, %v461
      %v479 = vmul.f32 %v462, %v462
      %v480 = vmul.f32 %v463, %v463
      %v481 = vmul.f32 %v464, %v464
      %v482 = vmul.f32 %v465, %v465
      %v483 = vsel %vm379, %v466, 0.0
      %484 = vadd.xlane.f32.xlu0 %v483
      %v485 = vpop.xlane.xlu0 %484
      %v486 = vsel %vm379, %v467, 0.0
      %487 = vadd.xlane.f32.xlu0 %v486
      %v488 = vpop.xlane.xlu0 %487
      %v489 = vsel %vm379, %v468, 0.0
      %490 = vadd.xlane.f32.xlu0 %v489
      %v491 = vpop.xlane.xlu0 %490
      %v492 = vsel %vm379, %v469, 0.0
      %493 = vadd.xlane.f32.xlu0 %v492
      %v494 = vpop.xlane.xlu0 %493
      %v495 = vsel %vm379, %v470, 0.0
      %496 = vadd.xlane.f32.xlu0 %v495
      %v497 = vpop.xlane.xlu0 %496
      %v498 = vsel %vm379, %v471, 0.0
      %499 = vadd.xlane.f32.xlu0 %v498
      %v500 = vpop.xlane.xlu0 %499
      %v501 = vsel %vm379, %v472, 0.0
      %502 = vadd.xlane.f32.xlu0 %v501
      %v503 = vpop.xlane.xlu0 %502
      %v504 = vsel %vm379, %v473, 0.0
      %505 = vadd.xlane.f32.xlu0 %v504
      %v506 = vpop.xlane.xlu0 %505
      %v507 = vsel %vm379, %v474, 0.0
      %508 = vadd.xlane.f32.xlu0 %v507
      %v509 = vpop.xlane.xlu0 %508
      %v510 = vsel %vm379, %v475, 0.0
      %511 = vadd.xlane.f32.xlu0 %v510
      %v512 = vpop.xlane.xlu0 %511
      %v513 = vsel %vm379, %v476, 0.0
      %514 = vadd.xlane.f32.xlu0 %v513
      %v515 = vpop.xlane.xlu0 %514
      %v516 = vsel %vm379, %v477, 0.0
      %517 = vadd.xlane.f32.xlu0 %v516
      %v518 = vpop.xlane.xlu0 %517
      %v519 = vsel %vm379, %v478, 0.0
      %520 = vadd.xlane.f32.xlu0 %v519
      %v521 = vpop.xlane.xlu0 %520
      %v522 = vsel %vm379, %v479, 0.0
      %523 = vadd.xlane.f32.xlu0 %v522
      %v524 = vpop.xlane.xlu0 %523
      %v525 = vsel %vm379, %v480, 0.0
      %526 = vadd.xlane.f32.xlu0 %v525
      %v527 = vpop.xlane.xlu0 %526
      %v528 = vsel %vm379, %v481, 0.0
      %529 = vadd.xlane.f32.xlu0 %v528
      %v530 = vpop.xlane.xlu0 %529
      %v531 = vsel %vm379, %v482, 0.0
      %532 = vadd.xlane.f32.xlu0 %v531
      %v533 = vpop.xlane.xlu0 %532
      %v534 = vmul.f32 %v485, %v431
      %v535 = vmul.f32 %v488, %v431
      %v536 = vmul.f32 %v491, %v431
      %v537 = vmul.f32 %v494, %v431
      %v538 = vmul.f32 %v497, %v431
      %v539 = vmul.f32 %v500, %v431
      %v540 = vmul.f32 %v503, %v431
      %v541 = vmul.f32 %v506, %v431
      %v542 = vmul.f32 %v509, %v431
      %v543 = vmul.f32 %v512, %v431
      %v544 = vmul.f32 %v515, %v431
      %v545 = vmul.f32 %v518, %v431
      %v546 = vmul.f32 %v521, %v431
      %v547 = vmul.f32 %v524, %v431
      %v548 = vmul.f32 %v527, %v431
      %v549 = vmul.f32 %v530, %v431
      %v550 = vmul.f32 %v533, %v431
      %v551 = vadd.f32 %v534, 1e-05
      %v552 = vadd.f32 %v535, 1e-05
      %v553 = vadd.f32 %v536, 1e-05
      %v554 = vadd.f32 %v537, 1e-05
      %v555 = vadd.f32 %v538, 1e-05
      %v556 = vadd.f32 %v539, 1e-05
      %v557 = vadd.f32 %v540, 1e-05
      %v558 = vadd.f32 %v541, 1e-05
      %v559 = vadd.f32 %v542, 1e-05
      %v560 = vadd.f32 %v543, 1e-05
      %v561 = vadd.f32 %v544, 1e-05
      %v562 = vadd.f32 %v545, 1e-05
      %v563 = vadd.f32 %v546, 1e-05
      %v564 = vadd.f32 %v547, 1e-05
      %v565 = vadd.f32 %v548, 1e-05
      %v566 = vadd.f32 %v549, 1e-05
      %v567 = vadd.f32 %v550, 1e-05
      %v568 = vrsqrt.pop %v551
      %v569 = vrsqrt.pop %v552
      %v570 = vrsqrt.pop %v553
      %v571 = vrsqrt.pop %v554
      %v572 = vrsqrt.pop %v555
      %v573 = vrsqrt.pop %v556
      %v574 = vrsqrt.pop %v557
      %v575 = vrsqrt.pop %v558
      %v576 = vrsqrt.pop %v559
      %v577 = vrsqrt.pop %v560
      %v578 = vrsqrt.pop %v561
      %v579 = vrsqrt.pop %v562
      %v580 = vrsqrt.pop %v563
      %v581 = vrsqrt.pop %v564
      %v582 = vrsqrt.pop %v565
      %v583 = vrsqrt.pop %v566
      %v584 = vrsqrt.pop %v567
      %v585 = vmul.f32 %v449, %v568
      %v586 = vmul.f32 %v450, %v569
      %v587 = vmul.f32 %v451, %v570
      %v588 = vmul.f32 %v452, %v571
      %v589 = vmul.f32 %v453, %v572
      %v590 = vmul.f32 %v454, %v573
      %v591 = vmul.f32 %v455, %v574
      %v592 = vmul.f32 %v456, %v575
      %v593 = vmul.f32 %v457, %v576
      %v594 = vmul.f32 %v458, %v577
      %v595 = vmul.f32 %v459, %v578
      %v596 = vmul.f32 %v460, %v579
      %v597 = vmul.f32 %v461, %v580
      %v598 = vmul.f32 %v462, %v581
      %v599 = vmul.f32 %v463, %v582
      %v600 = vmul.f32 %v464, %v583
      %v601 = vmul.f32 %v465, %v584
      %v602 = vlaneseq
      %v603 = vshrl.u32 %v602, 7
      %v604 = vsub.s32 0, %v603
      %v605 = vrot.slane %v378, %v604
      %v606 = vmul.f32 %v585, %v605
      %v607 = vmul.f32 %v586, %v605
      %v608 = vmul.f32 %v587, %v605
      %v609 = vmul.f32 %v588, %v605
      %v610 = vmul.f32 %v589, %v605
      %v611 = vmul.f32 %v590, %v605
      %v612 = vmul.f32 %v591, %v605
      %v613 = vmul.f32 %v592, %v605
      %v614 = vmul.f32 %v593, %v605
      %v615 = vmul.f32 %v594, %v605
      %v616 = vmul.f32 %v595, %v605
      %v617 = vmul.f32 %v596, %v605
      %v618 = vmul.f32 %v597, %v605
      %v619 = vmul.f32 %v598, %v605
      %v620 = vmul.f32 %v599, %v605
      %v621 = vmul.f32 %v600, %v605
      %v622 = vmul.f32 %v601, %v605
      %v623 = vlaneseq
      %v624 = vshrl.u32 %v623, 7
      %v625 = vsub.s32 1, %v624
      %v626 = vrot.slane %v378, %v625
      %v627 = vadd.f32 %v606, %v626
      %v628 = vadd.f32 %v607, %v626
      %v629 = vadd.f32 %v608, %v626
      %v630 = vadd.f32 %v609, %v626
      %v631 = vadd.f32 %v610, %v626
      %v632 = vadd.f32 %v611, %v626
      %v633 = vadd.f32 %v612, %v626
      %v634 = vadd.f32 %v613, %v626
      %v635 = vadd.f32 %v614, %v626
      %v636 = vadd.f32 %v615, %v626
      %v637 = vadd.f32 %v616, %v626
      %v638 = vadd.f32 %v617, %v626
      %v639 = vadd.f32 %v618, %v626
      %v640 = vadd.f32 %v619, %v626
      %v641 = vadd.f32 %v620, %v626
      %v642 = vadd.f32 %v621, %v626
      %v643 = vadd.f32 %v622, %v626
      %v644 = vpack.c.bf16 %v628, %v627
      %v645 = vpack.c.bf16 %v630, %v629
      %v646 = vpack.c.bf16 %v632, %v631
      %v647 = vpack.c.bf16 %v634, %v633
      %v648 = vpack.c.bf16 %v636, %v635
      %v649 = vpack.c.bf16 %v638, %v637
      %v650 = vpack.c.bf16 %v640, %v639
      %v651 = vpack.c.bf16 %v642, %v641
      %v652 = vpack.c.bf16 %v643, %v643
      %v653 = vld [vmem:[%s5] sm:$0xf]
      %v654 = vld [vmem:[%s5 + $0x4] sm:$0xf]
      %v655 = vld [vmem:[%s5 + $0x8] sm:$0xf]
      %v656 = vld [vmem:[%s5 + $0xc] sm:$0xf]
      %v661 = vunpack.c.l.b16 %v653
      %v662 = vunpack.c.l.b16 %v654
      %v663 = vunpack.c.l.b16 %v655
      %v664 = vunpack.c.l.b16 %v656
      %v665 = vpack.c.b16 %v662, %v661
      %v666 = vpack.c.b16 %v664, %v663
      %v670 = vsel %vm379, %v644, 0
      %v673 = vsel %vm379, %v645, 0
      %v676 = vsel %vm379, %v646, 0
      %v679 = vsel %vm379, %v647, 0
      %v682 = vsel %vm379, %v648, 0
      %v685 = vsel %vm379, %v649, 0
      %v688 = vsel %vm379, %v650, 0
      %v691 = vsel %vm379, %v651, 0
      %v694 = vsel %vm379, %v652, 0
      %696 = vmatprep.subr.bf16.mxu0 0
      %697 = vmatpush1.bf16.msra.mxu0 %v665
      %698 = vmatprep.subr.bf16.mxu0 0
      %699 = vmatpush1.bf16.msra.mxu0 %v666
      %700 = vmatprep.subr.bf16.mxu0 0
      %701 = vmatpush1.bf16.msra.mxu0 0
      %702 = vmatprep.subr.bf16.mxu0 0
      %703 = vmatpush1.bf16.msra.mxu0 0
      %704 = vmatprep.subr.bf16.mxu0 0
      %705 = vmatpush1.bf16.msra.mxu0 0
      %706 = vmatprep.subr.bf16.mxu0 0
      %707 = vmatpush1.bf16.msra.mxu0 0
      %708 = vmatprep.subr.bf16.mxu0 0
      %709 = vmatpush1.bf16.msra.mxu0 0
      %710 = vmatprep.subr.bf16.mxu0 0
      %711 = vmatpush1.bf16.msra.mxu0 0
      %712 = vmatprep.subr.bf16.mxu0 0
      %713 = vmatpush1.bf16.msra.mxu0 0
      %714 = vmatprep.subr.bf16.mxu0 0
      %715 = vmatpush1.bf16.msra.mxu0 0
      %716 = vmatprep.subr.bf16.mxu0 0
      %717 = vmatpush1.bf16.msra.mxu0 0
      %718 = vmatprep.subr.bf16.mxu0 0
      %719 = vmatpush1.bf16.msra.mxu0 0
      %720 = vmatprep.subr.bf16.mxu0 0
      %721 = vmatpush1.bf16.msra.mxu0 0
      %722 = vmatprep.subr.bf16.mxu0 0
      %723 = vmatpush1.bf16.msra.mxu0 0
      %724 = vmatprep.subr.bf16.mxu0 0
      %725 = vmatpush1.bf16.msra.mxu0 0
      %726 = vmatprep.subr.bf16.mxu0 0
      %727 = vmatpush1.bf16.msra.mxu0 0
      %728 = vmatprep.mubr.bf16.mxu0 0
      %729 = vmatmul.mubr.bf16.gmra.mrb[0].mxu0 %v670
      %v730 = vpop.f32.mrb[0].mxu0
      %v731 = vadd.f32 0.0, %v730
      %v732 = vpop.f32.mrb[0].mxu0
      %v733 = vpop.f32.mrb[0].mxu0
      %v734 = vadd.f32 0.0, %v733
      %v735 = vpop.f32.mrb[0].mxu0
      %736 = vmatprep.mubr.bf16.mxu0 0
      %737 = vmatmul.mubr.bf16.gmra.mrb[0].mxu0 %v673
      %v738 = vpop.f32.mrb[0].mxu0
      %v739 = vadd.f32 0.0, %v738
      %v740 = vpop.f32.mrb[0].mxu0
      %v741 = vpop.f32.mrb[0].mxu0
      %v742 = vadd.f32 0.0, %v741
      %v743 = vpop.f32.mrb[0].mxu0
      %744 = vmatprep.mubr.bf16.mxu0 0
      %745 = vmatmul.mubr.bf16.gmra.mrb[0].mxu0 %v676
      %v746 = vpop.f32.mrb[0].mxu0
      %v747 = vadd.f32 0.0, %v746
      %v748 = vpop.f32.mrb[0].mxu0
      %v749 = vpop.f32.mrb[0].mxu0
      %v750 = vadd.f32 0.0, %v749
      %v751 = vpop.f32.mrb[0].mxu0
      %752 = vmatprep.mubr.bf16.mxu0 0
      %753 = vmatmul.mubr.bf16.gmra.mrb[0].mxu0 %v679
      %v754 = vpop.f32.mrb[0].mxu0
      %v755 = vadd.f32 0.0, %v754
      %v756 = vpop.f32.mrb[0].mxu0
      %v757 = vpop.f32.mrb[0].mxu0
      %v758 = vadd.f32 0.0, %v757
      %v759 = vpop.f32.mrb[0].mxu0
      %760 = vmatprep.mubr.bf16.mxu0 0
      %761 = vmatmul.mubr.bf16.gmra.mrb[0].mxu0 %v682
      %v762 = vpop.f32.mrb[0].mxu0
      %v763 = vadd.f32 0.0, %v762
      %v764 = vpop.f32.mrb[0].mxu0
      %v765 = vpop.f32.mrb[0].mxu0
      %v766 = vadd.f32 0.0, %v765
      %v767 = vpop.f32.mrb[0].mxu0
      %768 = vmatprep.mubr.bf16.mxu0 0
      %769 = vmatmul.mubr.bf16.gmra.mrb[0].mxu0 %v685
      %v770 = vpop.f32.mrb[0].mxu0
      %v771 = vadd.f32 0.0, %v770
      %v772 = vpop.f32.mrb[0].mxu0
      %v773 = vpop.f32.mrb[0].mxu0
      %v774 = vadd.f32 0.0, %v773
      %v775 = vpop.f32.mrb[0].mxu0
      %776 = vmatprep.mubr.bf16.mxu0 0
      %777 = vmatmul.mubr.bf16.gmra.mrb[0].mxu0 %v688
      %v778 = vpop.f32.mrb[0].mxu0
      %v779 = vadd.f32 0.0, %v778
      %v780 = vpop.f32.mrb[0].mxu0
      %v781 = vpop.f32.mrb[0].mxu0
      %v782 = vadd.f32 0.0, %v781
      %v783 = vpop.f32.mrb[0].mxu0
      %784 = vmatprep.mubr.bf16.mxu0 0
      %785 = vmatmul.mubr.bf16.gmra.mrb[0].mxu0 %v691
      %v786 = vpop.f32.mrb[0].mxu0
      %v787 = vadd.f32 0.0, %v786
      %v788 = vpop.f32.mrb[0].mxu0
      %v789 = vpop.f32.mrb[0].mxu0
      %v790 = vadd.f32 0.0, %v789
      %v791 = vpop.f32.mrb[0].mxu0
      %792 = vmatprep.mubr.bf16.mxu0 0
      %793 = vmatmul.mubr.bf16.gmra.mrb[0].mxu0 %v694
      %v794 = vpop.f32.mrb[0].mxu0
      %v795 = vadd.f32 0.0, %v794
      %v796 = vpop.f32.mrb[0].mxu0
      %v797 = vpop.f32.mrb[0].mxu0
      %v798 = vpop.f32.mrb[0].mxu0
      %799 = vdwg.mxu0
      %v800 = vpack.c.bf16 %v734, %v731
      %v801 = vpack.c.bf16 %v742, %v739
      %v802 = vpack.c.bf16 %v750, %v747
      %v803 = vpack.c.bf16 %v758, %v755
      %v804 = vpack.c.bf16 %v766, %v763
      %v805 = vpack.c.bf16 %v774, %v771
      %v806 = vpack.c.bf16 %v782, %v779
      %v807 = vpack.c.bf16 %v790, %v787
      %v808 = vpack.c.bf16 %v795, %v795
      %v809 = vld [vmem:[%s3] sm:$0xff]
      %v810 = vlaneseq
      %v811 = vshrl.u32 %v810, 7
      %v812 = vsub.s32 0, %v811
      %v813 = vrot.slane %v809, %v812
      %v814 = vmul.f32 %v731, %v813
      %v815 = vmul.f32 %v734, %v813
      %v816 = vmul.f32 %v739, %v813
      %v817 = vmul.f32 %v742, %v813
      %v818 = vmul.f32 %v747, %v813
      %v819 = vmul.f32 %v750, %v813
      %v820 = vmul.f32 %v755, %v813
      %v821 = vmul.f32 %v758, %v813
      %v822 = vmul.f32 %v763, %v813
      %v823 = vmul.f32 %v766, %v813
      %v824 = vmul.f32 %v771, %v813
      %v825 = vmul.f32 %v774, %v813
      %v826 = vmul.f32 %v779, %v813
      %v827 = vmul.f32 %v782, %v813
      %v828 = vmul.f32 %v787, %v813
      %v829 = vmul.f32 %v790, %v813
      %v830 = vmul.f32 %v795, %v813
      %v831 = vlaneseq
      %v832 = vshrl.u32 %v831, 7
      %v833 = vsub.s32 1, %v832
      %v834 = vrot.slane %v809, %v833
      %v835 = vmul.f32 %v731, %v834
      %v836 = vmul.f32 %v734, %v834
      %v837 = vmul.f32 %v739, %v834
      %v838 = vmul.f32 %v742, %v834
      %v839 = vmul.f32 %v747, %v834
      %v840 = vmul.f32 %v750, %v834
      %v841 = vmul.f32 %v755, %v834
      %v842 = vmul.f32 %v758, %v834
      %v843 = vmul.f32 %v763, %v834
      %v844 = vmul.f32 %v766, %v834
      %v845 = vmul.f32 %v771, %v834
      %v846 = vmul.f32 %v774, %v834
      %v847 = vmul.f32 %v779, %v834
      %v848 = vmul.f32 %v782, %v834
      %v849 = vmul.f32 %v787, %v834
      %v850 = vmul.f32 %v790, %v834
      %v851 = vmul.f32 %v795, %v834
      %v852 = vlaneseq
      %v853 = vshrl.u32 %v852, 7
      %v854 = vsub.s32 2, %v853
      %v855 = vrot.slane %v809, %v854
      %v856 = vmul.f32 %v731, %v855
      %v857 = vmul.f32 %v734, %v855
      %v858 = vmul.f32 %v739, %v855
      %v859 = vmul.f32 %v742, %v855
      %v860 = vmul.f32 %v747, %v855
      %v861 = vmul.f32 %v750, %v855
      %v862 = vmul.f32 %v755, %v855
      %v863 = vmul.f32 %v758, %v855
      %v864 = vmul.f32 %v763, %v855
      %v865 = vmul.f32 %v766, %v855
      %v866 = vmul.f32 %v771, %v855
      %v867 = vmul.f32 %v774, %v855
      %v868 = vmul.f32 %v779, %v855
      %v869 = vmul.f32 %v782, %v855
      %v870 = vmul.f32 %v787, %v855
      %v871 = vmul.f32 %v790, %v855
      %v872 = vmul.f32 %v795, %v855
      %v873 = vlaneseq
      %v874 = vshrl.u32 %v873, 7
      %v875 = vsub.s32 3, %v874
      %v876 = vrot.slane %v809, %v875
      %v877 = vmul.f32 %v731, %v876
      %v878 = vmul.f32 %v734, %v876
      %v879 = vmul.f32 %v739, %v876
      %v880 = vmul.f32 %v742, %v876
      %v881 = vmul.f32 %v747, %v876
      %v882 = vmul.f32 %v750, %v876
      %v883 = vmul.f32 %v755, %v876
      %v884 = vmul.f32 %v758, %v876
      %v885 = vmul.f32 %v763, %v876
      %v886 = vmul.f32 %v766, %v876
      %v887 = vmul.f32 %v771, %v876
      %v888 = vmul.f32 %v774, %v876
      %v889 = vmul.f32 %v779, %v876
      %v890 = vmul.f32 %v782, %v876
      %v891 = vmul.f32 %v787, %v876
      %v892 = vmul.f32 %v790, %v876
      %v893 = vmul.f32 %v795, %v876
      %v894 = vlaneseq
      %v895 = vshrl.u32 %v894, 7
      %v896 = vsub.s32 4, %v895
      %v897 = vrot.slane %v809, %v896
      %v898 = vmul.f32 %v731, %v897
      %v899 = vmul.f32 %v734, %v897
      %v900 = vmul.f32 %v739, %v897
      %v901 = vmul.f32 %v742, %v897
      %v902 = vmul.f32 %v747, %v897
      %v903 = vmul.f32 %v750, %v897
      %v904 = vmul.f32 %v755, %v897
      %v905 = vmul.f32 %v758, %v897
      %v906 = vmul.f32 %v763, %v897
      %v907 = vmul.f32 %v766, %v897
      %v908 = vmul.f32 %v771, %v897
      %v909 = vmul.f32 %v774, %v897
      %v910 = vmul.f32 %v779, %v897
      %v911 = vmul.f32 %v782, %v897
      %v912 = vmul.f32 %v787, %v897
      %v913 = vmul.f32 %v790, %v897
      %v914 = vmul.f32 %v795, %v897
      %v915 = vlaneseq
      %v916 = vshrl.u32 %v915, 7
      %v917 = vsub.s32 5, %v916
      %v918 = vrot.slane %v809, %v917
      %v919 = vmul.f32 %v731, %v918
      %v920 = vmul.f32 %v734, %v918
      %v921 = vmul.f32 %v739, %v918
      %v922 = vmul.f32 %v742, %v918
      %v923 = vmul.f32 %v747, %v918
      %v924 = vmul.f32 %v750, %v918
      %v925 = vmul.f32 %v755, %v918
      %v926 = vmul.f32 %v758, %v918
      %v927 = vmul.f32 %v763, %v918
      %v928 = vmul.f32 %v766, %v918
      %v929 = vmul.f32 %v771, %v918
      %v930 = vmul.f32 %v774, %v918
      %v931 = vmul.f32 %v779, %v918
      %v932 = vmul.f32 %v782, %v918
      %v933 = vmul.f32 %v787, %v918
      %v934 = vmul.f32 %v790, %v918
      %v935 = vmul.f32 %v795, %v918
      %v936 = vlaneseq
      %v937 = vshrl.u32 %v936, 7
      %v938 = vsub.s32 6, %v937
      %v939 = vrot.slane %v809, %v938
      %v940 = vmul.f32 %v731, %v939
      %v941 = vmul.f32 %v734, %v939
      %v942 = vmul.f32 %v739, %v939
      %v943 = vmul.f32 %v742, %v939
      %v944 = vmul.f32 %v747, %v939
      %v945 = vmul.f32 %v750, %v939
      %v946 = vmul.f32 %v755, %v939
      %v947 = vmul.f32 %v758, %v939
      %v948 = vmul.f32 %v763, %v939
      %v949 = vmul.f32 %v766, %v939
      %v950 = vmul.f32 %v771, %v939
      %v951 = vmul.f32 %v774, %v939
      %v952 = vmul.f32 %v779, %v939
      %v953 = vmul.f32 %v782, %v939
      %v954 = vmul.f32 %v787, %v939
      %v955 = vmul.f32 %v790, %v939
      %v956 = vmul.f32 %v795, %v939
      %v957 = vlaneseq
      %v958 = vshrl.u32 %v957, 7
      %v959 = vsub.s32 7, %v958
      %v960 = vrot.slane %v809, %v959
      %v961 = vmul.f32 %v731, %v960
      %v962 = vmul.f32 %v734, %v960
      %v963 = vmul.f32 %v739, %v960
      %v964 = vmul.f32 %v742, %v960
      %v965 = vmul.f32 %v747, %v960
      %v966 = vmul.f32 %v750, %v960
      %v967 = vmul.f32 %v755, %v960
      %v968 = vmul.f32 %v758, %v960
      %v969 = vmul.f32 %v763, %v960
      %v970 = vmul.f32 %v766, %v960
      %v971 = vmul.f32 %v771, %v960
      %v972 = vmul.f32 %v774, %v960
      %v973 = vmul.f32 %v779, %v960
      %v974 = vmul.f32 %v782, %v960
      %v975 = vmul.f32 %v787, %v960
      %v976 = vmul.f32 %v790, %v960
      %v977 = vmul.f32 %v795, %v960
      %v978 = vpack.c.bf16 %v815, %v814
      %v979 = vpack.c.bf16 %v817, %v816
      %v980 = vpack.c.bf16 %v819, %v818
      %v981 = vpack.c.bf16 %v821, %v820
      %v982 = vpack.c.bf16 %v823, %v822
      %v983 = vpack.c.bf16 %v825, %v824
      %v984 = vpack.c.bf16 %v827, %v826
      %v985 = vpack.c.bf16 %v829, %v828
      %v986 = vpack.c.bf16 %v835, %v830
      %v987 = vpack.c.bf16 %v837, %v836
      %v988 = vpack.c.bf16 %v839, %v838
      %v989 = vpack.c.bf16 %v841, %v840
      %v990 = vpack.c.bf16 %v843, %v842
      %v991 = vpack.c.bf16 %v845, %v844
      %v992 = vpack.c.bf16 %v847, %v846
      %v993 = vpack.c.bf16 %v849, %v848
      %v994 = vpack.c.bf16 %v851, %v850
      %v995 = vpack.c.bf16 %v857, %v856
      %v996 = vpack.c.bf16 %v859, %v858
      %v997 = vpack.c.bf16 %v861, %v860
      %v998 = vpack.c.bf16 %v863, %v862
      %v999 = vpack.c.bf16 %v865, %v864
      %v1000 = vpack.c.bf16 %v867, %v866
      %v1001 = vpack.c.bf16 %v869, %v868
      %v1002 = vpack.c.bf16 %v871, %v870
      %v1003 = vpack.c.bf16 %v877, %v872
      %v1004 = vpack.c.bf16 %v879, %v878
      %v1005 = vpack.c.bf16 %v881, %v880
      %v1006 = vpack.c.bf16 %v883, %v882
      %v1007 = vpack.c.bf16 %v885, %v884
      %v1008 = vpack.c.bf16 %v887, %v886
      %v1009 = vpack.c.bf16 %v889, %v888
      %v1010 = vpack.c.bf16 %v891, %v890
      %v1011 = vpack.c.bf16 %v893, %v892
      %v1012 = vpack.c.bf16 %v899, %v898
      %v1013 = vpack.c.bf16 %v901, %v900
      %v1014 = vpack.c.bf16 %v903, %v902
      %v1015 = vpack.c.bf16 %v905, %v904
      %v1016 = vpack.c.bf16 %v907, %v906
      %v1017 = vpack.c.bf16 %v909, %v908
      %v1018 = vpack.c.bf16 %v911, %v910
      %v1019 = vpack.c.bf16 %v913, %v912
      %v1020 = vpack.c.bf16 %v919, %v914
      %v1021 = vpack.c.bf16 %v921, %v920
      %v1022 = vpack.c.bf16 %v923, %v922
      %v1023 = vpack.c.bf16 %v925, %v924
      %v1024 = vpack.c.bf16 %v927, %v926
      %v1025 = vpack.c.bf16 %v929, %v928
      %v1026 = vpack.c.bf16 %v931, %v930
      %v1027 = vpack.c.bf16 %v933, %v932
      %v1028 = vpack.c.bf16 %v935, %v934
      %v1029 = vpack.c.bf16 %v941, %v940
      %v1030 = vpack.c.bf16 %v943, %v942
      %v1031 = vpack.c.bf16 %v945, %v944
      %v1032 = vpack.c.bf16 %v947, %v946
      %v1033 = vpack.c.bf16 %v949, %v948
      %v1034 = vpack.c.bf16 %v951, %v950
      %v1035 = vpack.c.bf16 %v953, %v952
      %v1036 = vpack.c.bf16 %v955, %v954
      %v1037 = vpack.c.bf16 %v961, %v956
      %v1038 = vpack.c.bf16 %v963, %v962
      %v1039 = vpack.c.bf16 %v965, %v964
      %v1040 = vpack.c.bf16 %v967, %v966
      %v1041 = vpack.c.bf16 %v969, %v968
      %v1042 = vpack.c.bf16 %v971, %v970
      %v1043 = vpack.c.bf16 %v973, %v972
      %v1044 = vpack.c.bf16 %v975, %v974
      %v1045 = vpack.c.bf16 %v977, %v976
      %1055 = vrot.lane.b32.xlu0 %v800, 96
      %v1056 = vpop.permute.xlu0 %1055
      %1057 = vrot.lane.b32.xlu0 %v801, 96
      %v1058 = vpop.permute.xlu0 %1057
      %1059 = vrot.lane.b32.xlu0 %v802, 96
      %v1060 = vpop.permute.xlu0 %1059
      %1061 = vrot.lane.b32.xlu0 %v803, 96
      %v1062 = vpop.permute.xlu0 %1061
      %1063 = vrot.lane.b32.xlu0 %v804, 96
      %v1064 = vpop.permute.xlu0 %1063
      %1065 = vrot.lane.b32.xlu0 %v805, 96
      %v1066 = vpop.permute.xlu0 %1065
      %1067 = vrot.lane.b32.xlu0 %v806, 96
      %v1068 = vpop.permute.xlu0 %1067
      %1069 = vrot.lane.b32.xlu0 %v807, 96
      %v1070 = vpop.permute.xlu0 %1069
      %1071 = vrot.lane.b32.xlu0 %v808, 96
      %v1072 = vpop.permute.xlu0 %1071
      %v1074 = vsel %vm379, %v978, 0
      %v1077 = vsel %vm379, %v979, 0
      %v1080 = vsel %vm379, %v980, 0
      %v1083 = vsel %vm379, %v981, 0
      %v1086 = vsel %vm379, %v982, 0
      %v1089 = vsel %vm379, %v983, 0
      %v1092 = vsel %vm379, %v984, 0
      %v1095 = vsel %vm379, %v985, 0
      %v1098 = vsel %vm379, %v986, 0
      %v1101 = vsel %vm379, %v987, 0
      %v1104 = vsel %vm379, %v988, 0
      %v1107 = vsel %vm379, %v989, 0
      %v1110 = vsel %vm379, %v990, 0
      %v1113 = vsel %vm379, %v991, 0
      %v1116 = vsel %vm379, %v992, 0
      %v1119 = vsel %vm379, %v993, 0
      %v1122 = vsel %vm379, %v994, 0
      %v1125 = vsel %vm379, %v995, 0
      %v1128 = vsel %vm379, %v996, 0
      %v1131 = vsel %vm379, %v997, 0
      %v1134 = vsel %vm379, %v998, 0
      %v1137 = vsel %vm379, %v999, 0
      %v1140 = vsel %vm379, %v1000, 0
      %v1143 = vsel %vm379, %v1001, 0
      %v1146 = vsel %vm379, %v1002, 0
      %v1149 = vsel %vm379, %v1003, 0
      %v1152 = vsel %vm379, %v1004, 0
      %v1155 = vsel %vm379, %v1005, 0
      %v1158 = vsel %vm379, %v1006, 0
      %v1161 = vsel %vm379, %v1007, 0
      %v1164 = vsel %vm379, %v1008, 0
      %v1167 = vsel %vm379, %v1009, 0
      %v1170 = vsel %vm379, %v1010, 0
      %v1173 = vsel %vm379, %v1011, 0
      %v1176 = vsel %vm379, %v1012, 0
      %v1179 = vsel %vm379, %v1013, 0
      %v1182 = vsel %vm379, %v1014, 0
      %v1185 = vsel %vm379, %v1015, 0
      %v1188 = vsel %vm379, %v1016, 0
      %v1191 = vsel %vm379, %v1017, 0
      %v1194 = vsel %vm379, %v1018, 0
      %v1197 = vsel %vm379, %v1019, 0
      %v1200 = vsel %vm379, %v1020, 0
      %v1203 = vsel %vm379, %v1021, 0
      %v1206 = vsel %vm379, %v1022, 0
      %v1209 = vsel %vm379, %v1023, 0
      %v1212 = vsel %vm379, %v1024, 0
      %v1215 = vsel %vm379, %v1025, 0
      %v1218 = vsel %vm379, %v1026, 0
      %v1221 = vsel %vm379, %v1027, 0
      %v1224 = vsel %vm379, %v1028, 0
      %v1227 = vsel %vm379, %v1029, 0
      %v1230 = vsel %vm379, %v1030, 0
      %v1233 = vsel %vm379, %v1031, 0
      %v1236 = vsel %vm379, %v1032, 0
      %v1239 = vsel %vm379, %v1033, 0
      %v1242 = vsel %vm379, %v1034, 0
      %v1245 = vsel %vm379, %v1035, 0
      %v1248 = vsel %vm379, %v1036, 0
      %v1251 = vsel %vm379, %v1037, 0
      %v1254 = vsel %vm379, %v1038, 0
      %v1257 = vsel %vm379, %v1039, 0
      %v1260 = vsel %vm379, %v1040, 0
      %v1263 = vsel %vm379, %v1041, 0
      %v1266 = vsel %vm379, %v1042, 0
      %v1269 = vsel %vm379, %v1043, 0
      %v1272 = vsel %vm379, %v1044, 0
      %v1275 = vsel %vm379, %v1045, 0
      %v1278 = vsel %vm379, %v1056, 0
      %v1281 = vsel %vm379, %v1058, 0
      %v1284 = vsel %vm379, %v1060, 0
      %v1287 = vsel %vm379, %v1062, 0
      %v1290 = vsel %vm379, %v1064, 0
      %v1293 = vsel %vm379, %v1066, 0
      %v1296 = vsel %vm379, %v1068, 0
      %v1299 = vsel %vm379, %v1070, 0
      %v1302 = vsel %vm379, %v1072, 0
      %1304 = vmatprep.subr.bf16.mxu0 0
      %1305 = vmatpush1.bf16.xpose.msra.mxu0 %v1278
      %1306 = vmatprep.subr.bf16.mxu0 0
      %1307 = vmatpush1.bf16.xpose.msra.mxu0 %v1281
      %1308 = vmatprep.subr.bf16.mxu0 0
      %1309 = vmatpush1.bf16.xpose.msra.mxu0 %v1284
      %1310 = vmatprep.subr.bf16.mxu0 0
      %1311 = vmatpush1.bf16.xpose.msra.mxu0 %v1287
      %1312 = vmatprep.subr.bf16.mxu0 0
      %1313 = vmatpush1.bf16.xpose.msra.mxu0 %v1290
      %1314 = vmatprep.subr.bf16.mxu0 0
      %1315 = vmatpush1.bf16.xpose.msra.mxu0 %v1293
      %1316 = vmatprep.subr.bf16.mxu0 0
      %1317 = vmatpush1.bf16.xpose.msra.mxu0 %v1296
      %1318 = vmatprep.subr.bf16.mxu0 0
      %1319 = vmatpush1.bf16.xpose.msra.mxu0 %v1299
      %1320 = vmatprep.subr.bf16.mxu0 0
      %1321 = vmatpush1.bf16.xpose.msra.mxu0 %v1302
      %1322 = vmatprep.subr.bf16.mxu0 0
      %1323 = vmatpush1.bf16.xpose.msra.mxu0 0
      %1324 = vmatprep.subr.bf16.mxu0 0
      %1325 = vmatpush1.bf16.xpose.msra.mxu0 0
      %1326 = vmatprep.subr.bf16.mxu0 0
      %1327 = vmatpush1.bf16.xpose.msra.mxu0 0
      %1328 = vmatprep.subr.bf16.mxu0 0
      %1329 = vmatpush1.bf16.xpose.msra.mxu0 0
      %1330 = vmatprep.subr.bf16.mxu0 0
      %1331 = vmatpush1.bf16.xpose.msra.mxu0 0
      %1332 = vmatprep.subr.bf16.mxu0 0
      %1333 = vmatpush1.bf16.xpose.msra.mxu0 0
      %1334 = vmatprep.subr.bf16.mxu0 0
      %1335 = vmatpush1.bf16.xpose.msra.mxu0 0
      %1336 = vmatprep.mubr.bf16.mxu0 0
      %1337 = vmatmul.mubr.bf16.gmra.mrb[0].mxu0 %v1074
      %v1338 = vpop.f32.mrb[0].mxu0
      %v1339 = vadd.f32 0.0, %v1338
      %v1340 = vpop.f32.mrb[0].mxu0
      %v1341 = vadd.f32 0.0, %v1340
      %v1342 = vpop.f32.mrb[0].mxu0
      %v1343 = vadd.f32 0.0, %v1342
      %v1344 = vpop.f32.mrb[0].mxu0
      %v1345 = vadd.f32 0.0, %v1344
      %1346 = vmatprep.mubr.bf16.mxu0 0
      %1347 = vmatmul.mubr.bf16.gmra.mrb[0].mxu0 %v1077
      %v1348 = vpop.f32.mrb[0].mxu0
      %v1349 = vadd.f32 0.0, %v1348
      %v1350 = vpop.f32.mrb[0].mxu0
      %v1351 = vadd.f32 0.0, %v1350
      %v1352 = vpop.f32.mrb[0].mxu0
      %v1353 = vadd.f32 0.0, %v1352
      %v1354 = vpop.f32.mrb[0].mxu0
      %v1355 = vadd.f32 0.0, %v1354
      %1356 = vmatprep.mubr.bf16.mxu0 0
      %1357 = vmatmul.mubr.bf16.gmra.mrb[0].mxu0 %v1080
      %v1358 = vpop.f32.mrb[0].mxu0
      %v1359 = vadd.f32 0.0, %v1358
      %v1360 = vpop.f32.mrb[0].mxu0
      %v1361 = vadd.f32 0.0, %v1360
      %v1362 = vpop.f32.mrb[0].mxu0
      %v1363 = vadd.f32 0.0, %v1362
      %v1364 = vpop.f32.mrb[0].mxu0
      %v1365 = vadd.f32 0.0, %v1364
      %1366 = vmatprep.mubr.bf16.mxu0 0
      %1367 = vmatmul.mubr.bf16.gmra.mrb[0].mxu0 %v1083
      %v1368 = vpop.f32.mrb[0].mxu0
      %v1369 = vadd.f32 0.0, %v1368
      %v1370 = vpop.f32.mrb[0].mxu0
      %v1371 = vadd.f32 0.0, %v1370
      %v1372 = vpop.f32.mrb[0].mxu0
      %v1373 = vadd.f32 0.0, %v1372
      %v1374 = vpop.f32.mrb[0].mxu0
      %v1375 = vadd.f32 0.0, %v1374
      %1376 = vmatprep.mubr.bf16.mxu0 0
      %1377 = vmatmul.mubr.bf16.gmra.mrb[0].mxu0 %v1086
      %v1378 = vpop.f32.mrb[0].mxu0
      %v1379 = vadd.f32 0.0, %v1378
      %v1380 = vpop.f32.mrb[0].mxu0
      %v1381 = vadd.f32 0.0, %v1380
      %v1382 = vpop.f32.mrb[0].mxu0
      %v1383 = vadd.f32 0.0, %v1382
      %v1384 = vpop.f32.mrb[0].mxu0
      %v1385 = vadd.f32 0.0, %v1384
      %1386 = vmatprep.mubr.bf16.mxu0 0
      %1387 = vmatmul.mubr.bf16.gmra.mrb[0].mxu0 %v1089
      %v1388 = vpop.f32.mrb[0].mxu0
      %v1389 = vadd.f32 0.0, %v1388
      %v1390 = vpop.f32.mrb[0].mxu0
      %v1391 = vadd.f32 0.0, %v1390
      %v1392 = vpop.f32.mrb[0].mxu0
      %v1393 = vadd.f32 0.0, %v1392
      %v1394 = vpop.f32.mrb[0].mxu0
      %v1395 = vadd.f32 0.0, %v1394
      %1396 = vmatprep.mubr.bf16.mxu0 0
      %1397 = vmatmul.mubr.bf16.gmra.mrb[0].mxu0 %v1092
      %v1398 = vpop.f32.mrb[0].mxu0
      %v1399 = vadd.f32 0.0, %v1398
      %v1400 = vpop.f32.mrb[0].mxu0
      %v1401 = vadd.f32 0.0, %v1400
      %v1402 = vpop.f32.mrb[0].mxu0
      %v1403 = vadd.f32 0.0, %v1402
      %v1404 = vpop.f32.mrb[0].mxu0
      %v1405 = vadd.f32 0.0, %v1404
      %1406 = vmatprep.mubr.bf16.mxu0 0
      %1407 = vmatmul.mubr.bf16.gmra.mrb[0].mxu0 %v1095
      %v1408 = vpop.f32.mrb[0].mxu0
      %v1409 = vadd.f32 0.0, %v1408
      %v1410 = vpop.f32.mrb[0].mxu0
      %v1411 = vadd.f32 0.0, %v1410
      %v1412 = vpop.f32.mrb[0].mxu0
      %v1413 = vadd.f32 0.0, %v1412
      %v1414 = vpop.f32.mrb[0].mxu0
      %v1415 = vadd.f32 0.0, %v1414
      %1416 = vmatprep.mubr.bf16.mxu0 0
      %1417 = vmatmul.mubr.bf16.gmra.mrb[0].mxu0 %v1098
      %v1418 = vpop.f32.mrb[0].mxu0
      %v1419 = vadd.f32 0.0, %v1418
      %v1420 = vpop.f32.mrb[0].mxu0
      %v1421 = vadd.f32 0.0, %v1420
      %v1422 = vpop.f32.mrb[0].mxu0
      %v1423 = vadd.f32 0.0, %v1422
      %v1424 = vpop.f32.mrb[0].mxu0
      %v1425 = vadd.f32 0.0, %v1424
      %1426 = vmatprep.mubr.bf16.mxu0 0
      %1427 = vmatmul.mubr.bf16.gmra.mrb[0].mxu0 %v1101
      %v1428 = vpop.f32.mrb[0].mxu0
      %v1429 = vadd.f32 0.0, %v1428
      %v1430 = vpop.f32.mrb[0].mxu0
      %v1431 = vadd.f32 0.0, %v1430
      %v1432 = vpop.f32.mrb[0].mxu0
      %v1433 = vadd.f32 0.0, %v1432
      %v1434 = vpop.f32.mrb[0].mxu0
      %v1435 = vadd.f32 0.0, %v1434
      %1436 = vmatprep.mubr.bf16.mxu0 0
      %1437 = vmatmul.mubr.bf16.gmra.mrb[0].mxu0 %v1104
      %v1438 = vpop.f32.mrb[0].mxu0
      %v1439 = vadd.f32 0.0, %v1438
      %v1440 = vpop.f32.mrb[0].mxu0
      %v1441 = vadd.f32 0.0, %v1440
      %v1442 = vpop.f32.mrb[0].mxu0
      %v1443 = vadd.f32 0.0, %v1442
      %v1444 = vpop.f32.mrb[0].mxu0
      %v1445 = vadd.f32 0.0, %v1444
      %1446 = vmatprep.mubr.bf16.mxu0 0
      %1447 = vmatmul.mubr.bf16.gmra.mrb[0].mxu0 %v1107
      %v1448 = vpop.f32.mrb[0].mxu0
      %v1449 = vadd.f32 0.0, %v1448
      %v1450 = vpop.f32.mrb[0].mxu0
      %v1451 = vadd.f32 0.0, %v1450
      %v1452 = vpop.f32.mrb[0].mxu0
      %v1453 = vadd.f32 0.0, %v1452
      %v1454 = vpop.f32.mrb[0].mxu0
      %v1455 = vadd.f32 0.0, %v1454
      %1456 = vmatprep.mubr.bf16.mxu0 0
      %1457 = vmatmul.mubr.bf16.gmra.mrb[0].mxu0 %v1110
      %v1458 = vpop.f32.mrb[0].mxu0
      %v1459 = vadd.f32 0.0, %v1458
      %v1460 = vpop.f32.mrb[0].mxu0
      %v1461 = vadd.f32 0.0, %v1460
      %v1462 = vpop.f32.mrb[0].mxu0
      %v1463 = vadd.f32 0.0, %v1462
      %v1464 = vpop.f32.mrb[0].mxu0
      %v1465 = vadd.f32 0.0, %v1464
      %1466 = vmatprep.mubr.bf16.mxu0 0
      %1467 = vmatmul.mubr.bf16.gmra.mrb[0].mxu0 %v1113
      %v1468 = vpop.f32.mrb[0].mxu0
      %v1469 = vadd.f32 0.0, %v1468
      %v1470 = vpop.f32.mrb[0].mxu0
      %v1471 = vadd.f32 0.0, %v1470
      %v1472 = vpop.f32.mrb[0].mxu0
      %v1473 = vadd.f32 0.0, %v1472
      %v1474 = vpop.f32.mrb[0].mxu0
      %v1475 = vadd.f32 0.0, %v1474
      %1476 = vmatprep.mubr.bf16.mxu0 0
      %1477 = vmatmul.mubr.bf16.gmra.mrb[0].mxu0 %v1116
      %v1478 = vpop.f32.mrb[0].mxu0
      %v1479 = vadd.f32 0.0, %v1478
      %v1480 = vpop.f32.mrb[0].mxu0
      %v1481 = vadd.f32 0.0, %v1480
      %v1482 = vpop.f32.mrb[0].mxu0
      %v1483 = vadd.f32 0.0, %v1482
      %v1484 = vpop.f32.mrb[0].mxu0
      %v1485 = vadd.f32 0.0, %v1484
      %1486 = vmatprep.mubr.bf16.mxu0 0
      %1487 = vmatmul.mubr.bf16.gmra.mrb[0].mxu0 %v1119
      %v1488 = vpop.f32.mrb[0].mxu0
      %v1489 = vadd.f32 0.0, %v1488
      %v1490 = vpop.f32.mrb[0].mxu0
      %v1491 = vadd.f32 0.0, %v1490
      %v1492 = vpop.f32.mrb[0].mxu0
      %v1493 = vadd.f32 0.0, %v1492
      %v1494 = vpop.f32.mrb[0].mxu0
      %v1495 = vadd.f32 0.0, %v1494
      %1496 = vmatprep.mubr.bf16.mxu0 0
      %1497 = vmatmul.mubr.bf16.gmra.mrb[0].mxu0 %v1122
      %v1498 = vpop.f32.mrb[0].mxu0
      %v1499 = vadd.f32 0.0, %v1498
      %v1500 = vpop.f32.mrb[0].mxu0
      %v1501 = vadd.f32 0.0, %v1500
      %v1502 = vpop.f32.mrb[0].mxu0
      %v1503 = vadd.f32 0.0, %v1502
      %v1504 = vpop.f32.mrb[0].mxu0
      %v1505 = vadd.f32 0.0, %v1504
      %1506 = vmatprep.mubr.bf16.mxu0 0
      %1507 = vmatmul.mubr.bf16.gmra.mrb[0].mxu0 %v1125
      %v1508 = vpop.f32.mrb[0].mxu0
      %v1509 = vadd.f32 0.0, %v1508
      %v1510 = vpop.f32.mrb[0].mxu0
      %v1511 = vadd.f32 0.0, %v1510
      %v1512 = vpop.f32.mrb[0].mxu0
      %v1513 = vadd.f32 0.0, %v1512
      %v1514 = vpop.f32.mrb[0].mxu0
      %v1515 = vadd.f32 0.0, %v1514
      %1516 = vmatprep.mubr.bf16.mxu0 0
      %1517 = vmatmul.mubr.bf16.gmra.mrb[0].mxu0 %v1128
      %v1518 = vpop.f32.mrb[0].mxu0
      %v1519 = vadd.f32 0.0, %v1518
      %v1520 = vpop.f32.mrb[0].mxu0
      %v1521 = vadd.f32 0.0, %v1520
      %v1522 = vpop.f32.mrb[0].mxu0
      %v1523 = vadd.f32 0.0, %v1522
      %v1524 = vpop.f32.mrb[0].mxu0
      %v1525 = vadd.f32 0.0, %v1524
      %1526 = vmatprep.mubr.bf16.mxu0 0
      %1527 = vmatmul.mubr.bf16.gmra.mrb[0].mxu0 %v1131
      %v1528 = vpop.f32.mrb[0].mxu0
      %v1529 = vadd.f32 0.0, %v1528
      %v1530 = vpop.f32.mrb[0].mxu0
      %v1531 = vadd.f32 0.0, %v1530
      %v1532 = vpop.f32.mrb[0].mxu0
      %v1533 = vadd.f32 0.0, %v1532
      %v1534 = vpop.f32.mrb[0].mxu0
      %v1535 = vadd.f32 0.0, %v1534
      %1536 = vmatprep.mubr.bf16.mxu0 0
      %1537 = vmatmul.mubr.bf16.gmra.mrb[0].mxu0 %v1134
      %v1538 = vpop.f32.mrb[0].mxu0
      %v1539 = vadd.f32 0.0, %v1538
      %v1540 = vpop.f32.mrb[0].mxu0
      %v1541 = vadd.f32 0.0, %v1540
      %v1542 = vpop.f32.mrb[0].mxu0
      %v1543 = vadd.f32 0.0, %v1542
      %v1544 = vpop.f32.mrb[0].mxu0
      %v1545 = vadd.f32 0.0, %v1544
      %1546 = vmatprep.mubr.bf16.mxu0 0
      %1547 = vmatmul.mubr.bf16.gmra.mrb[0].mxu0 %v1137
      %v1548 = vpop.f32.mrb[0].mxu0
      %v1549 = vadd.f32 0.0, %v1548
      %v1550 = vpop.f32.mrb[0].mxu0
      %v1551 = vadd.f32 0.0, %v1550
      %v1552 = vpop.f32.mrb[0].mxu0
      %v1553 = vadd.f32 0.0, %v1552
      %v1554 = vpop.f32.mrb[0].mxu0
      %v1555 = vadd.f32 0.0, %v1554
      %1556 = vmatprep.mubr.bf16.mxu0 0
      %1557 = vmatmul.mubr.bf16.gmra.mrb[0].mxu0 %v1140
      %v1558 = vpop.f32.mrb[0].mxu0
      %v1559 = vadd.f32 0.0, %v1558
      %v1560 = vpop.f32.mrb[0].mxu0
      %v1561 = vadd.f32 0.0, %v1560
      %v1562 = vpop.f32.mrb[0].mxu0
      %v1563 = vadd.f32 0.0, %v1562
      %v1564 = vpop.f32.mrb[0].mxu0
      %v1565 = vadd.f32 0.0, %v1564
      %1566 = vmatprep.mubr.bf16.mxu0 0
      %1567 = vmatmul.mubr.bf16.gmra.mrb[0].mxu0 %v1143
      %v1568 = vpop.f32.mrb[0].mxu0
      %v1569 = vadd.f32 0.0, %v1568
      %v1570 = vpop.f32.mrb[0].mxu0
      %v1571 = vadd.f32 0.0, %v1570
      %v1572 = vpop.f32.mrb[0].mxu0
      %v1573 = vadd.f32 0.0, %v1572
      %v1574 = vpop.f32.mrb[0].mxu0
      %v1575 = vadd.f32 0.0, %v1574
      %1576 = vmatprep.mubr.bf16.mxu0 0
      %1577 = vmatmul.mubr.bf16.gmra.mrb[0].mxu0 %v1146
      %v1578 = vpop.f32.mrb[0].mxu0
      %v1579 = vadd.f32 0.0, %v1578
      %v1580 = vpop.f32.mrb[0].mxu0
      %v1581 = vadd.f32 0.0, %v1580
      %v1582 = vpop.f32.mrb[0].mxu0
      %v1583 = vadd.f32 0.0, %v1582
      %v1584 = vpop.f32.mrb[0].mxu0
      %v1585 = vadd.f32 0.0, %v1584
      %1586 = vmatprep.mubr.bf16.mxu0 0
      %1587 = vmatmul.mubr.bf16.gmra.mrb[0].mxu0 %v1149
      %v1588 = vpop.f32.mrb[0].mxu0
      %v1589 = vadd.f32 0.0, %v1588
      %v1590 = vpop.f32.mrb[0].mxu0
      %v1591 = vadd.f32 0.0, %v1590
      %v1592 = vpop.f32.mrb[0].mxu0
      %v1593 = vadd.f32 0.0, %v1592
      %v1594 = vpop.f32.mrb[0].mxu0
      %v1595 = vadd.f32 0.0, %v1594
      %1596 = vmatprep.mubr.bf16.mxu0 0
      %1597 = vmatmul.mubr.bf16.gmra.mrb[0].mxu0 %v1152
      %v1598 = vpop.f32.mrb[0].mxu0
      %v1599 = vadd.f32 0.0, %v1598
      %v1600 = vpop.f32.mrb[0].mxu0
      %v1601 = vadd.f32 0.0, %v1600
      %v1602 = vpop.f32.mrb[0].mxu0
      %v1603 = vadd.f32 0.0, %v1602
      %v1604 = vpop.f32.mrb[0].mxu0
      %v1605 = vadd.f32 0.0, %v1604
      %1606 = vmatprep.mubr.bf16.mxu0 0
      %1607 = vmatmul.mubr.bf16.gmra.mrb[0].mxu0 %v1155
      %v1608 = vpop.f32.mrb[0].mxu0
      %v1609 = vadd.f32 0.0, %v1608
      %v1610 = vpop.f32.mrb[0].mxu0
      %v1611 = vadd.f32 0.0, %v1610
      %v1612 = vpop.f32.mrb[0].mxu0
      %v1613 = vadd.f32 0.0, %v1612
      %v1614 = vpop.f32.mrb[0].mxu0
      %v1615 = vadd.f32 0.0, %v1614
      %1616 = vmatprep.mubr.bf16.mxu0 0
      %1617 = vmatmul.mubr.bf16.gmra.mrb[0].mxu0 %v1158
      %v1618 = vpop.f32.mrb[0].mxu0
      %v1619 = vadd.f32 0.0, %v1618
      %v1620 = vpop.f32.mrb[0].mxu0
      %v1621 = vadd.f32 0.0, %v1620
      %v1622 = vpop.f32.mrb[0].mxu0
      %v1623 = vadd.f32 0.0, %v1622
      %v1624 = vpop.f32.mrb[0].mxu0
      %v1625 = vadd.f32 0.0, %v1624
      %1626 = vmatprep.mubr.bf16.mxu0 0
      %1627 = vmatmul.mubr.bf16.gmra.mrb[0].mxu0 %v1161
      %v1628 = vpop.f32.mrb[0].mxu0
      %v1629 = vadd.f32 0.0, %v1628
      %v1630 = vpop.f32.mrb[0].mxu0
      %v1631 = vadd.f32 0.0, %v1630
      %v1632 = vpop.f32.mrb[0].mxu0
      %v1633 = vadd.f32 0.0, %v1632
      %v1634 = vpop.f32.mrb[0].mxu0
      %v1635 = vadd.f32 0.0, %v1634
      %1636 = vmatprep.mubr.bf16.mxu0 0
      %1637 = vmatmul.mubr.bf16.gmra.mrb[0].mxu0 %v1164
      %v1638 = vpop.f32.mrb[0].mxu0
      %v1639 = vadd.f32 0.0, %v1638
      %v1640 = vpop.f32.mrb[0].mxu0
      %v1641 = vadd.f32 0.0, %v1640
      %v1642 = vpop.f32.mrb[0].mxu0
      %v1643 = vadd.f32 0.0, %v1642
      %v1644 = vpop.f32.mrb[0].mxu0
      %v1645 = vadd.f32 0.0, %v1644
      %1646 = vmatprep.mubr.bf16.mxu0 0
      %1647 = vmatmul.mubr.bf16.gmra.mrb[0].mxu0 %v1167
      %v1648 = vpop.f32.mrb[0].mxu0
      %v1649 = vadd.f32 0.0, %v1648
      %v1650 = vpop.f32.mrb[0].mxu0
      %v1651 = vadd.f32 0.0, %v1650
      %v1652 = vpop.f32.mrb[0].mxu0
      %v1653 = vadd.f32 0.0, %v1652
      %v1654 = vpop.f32.mrb[0].mxu0
      %v1655 = vadd.f32 0.0, %v1654
      %1656 = vmatprep.mubr.bf16.mxu0 0
      %1657 = vmatmul.mubr.bf16.gmra.mrb[0].mxu0 %v1170
      %v1658 = vpop.f32.mrb[0].mxu0
      %v1659 = vadd.f32 0.0, %v1658
      %v1660 = vpop.f32.mrb[0].mxu0
      %v1661 = vadd.f32 0.0, %v1660
      %v1662 = vpop.f32.mrb[0].mxu0
      %v1663 = vadd.f32 0.0, %v1662
      %v1664 = vpop.f32.mrb[0].mxu0
      %v1665 = vadd.f32 0.0, %v1664
      %1666 = vmatprep.mubr.bf16.mxu0 0
      %1667 = vmatmul.mubr.bf16.gmra.mrb[0].mxu0 %v1173
      %v1668 = vpop.f32.mrb[0].mxu0
      %v1669 = vadd.f32 0.0, %v1668
      %v1670 = vpop.f32.mrb[0].mxu0
      %v1671 = vadd.f32 0.0, %v1670
      %v1672 = vpop.f32.mrb[0].mxu0
      %v1673 = vadd.f32 0.0, %v1672
      %v1674 = vpop.f32.mrb[0].mxu0
      %v1675 = vadd.f32 0.0, %v1674
      %1676 = vmatprep.mubr.bf16.mxu0 0
      %1677 = vmatmul.mubr.bf16.gmra.mrb[0].mxu0 %v1176
      %v1678 = vpop.f32.mrb[0].mxu0
      %v1679 = vadd.f32 0.0, %v1678
      %v1680 = vpop.f32.mrb[0].mxu0
      %v1681 = vadd.f32 0.0, %v1680
      %v1682 = vpop.f32.mrb[0].mxu0
      %v1683 = vadd.f32 0.0, %v1682
      %v1684 = vpop.f32.mrb[0].mxu0
      %v1685 = vadd.f32 0.0, %v1684
      %1686 = vmatprep.mubr.bf16.mxu0 0
      %1687 = vmatmul.mubr.bf16.gmra.mrb[0].mxu0 %v1179
      %v1688 = vpop.f32.mrb[0].mxu0
      %v1689 = vadd.f32 0.0, %v1688
      %v1690 = vpop.f32.mrb[0].mxu0
      %v1691 = vadd.f32 0.0, %v1690
      %v1692 = vpop.f32.mrb[0].mxu0
      %v1693 = vadd.f32 0.0, %v1692
      %v1694 = vpop.f32.mrb[0].mxu0
      %v1695 = vadd.f32 0.0, %v1694
      %1696 = vmatprep.mubr.bf16.mxu0 0
      %1697 = vmatmul.mubr.bf16.gmra.mrb[0].mxu0 %v1182
      %v1698 = vpop.f32.mrb[0].mxu0
      %v1699 = vadd.f32 0.0, %v1698
      %v1700 = vpop.f32.mrb[0].mxu0
      %v1701 = vadd.f32 0.0, %v1700
      %v1702 = vpop.f32.mrb[0].mxu0
      %v1703 = vadd.f32 0.0, %v1702
      %v1704 = vpop.f32.mrb[0].mxu0
      %v1705 = vadd.f32 0.0, %v1704
      %1706 = vmatprep.mubr.bf16.mxu0 0
      %1707 = vmatmul.mubr.bf16.gmra.mrb[0].mxu0 %v1185
      %v1708 = vpop.f32.mrb[0].mxu0
      %v1709 = vadd.f32 0.0, %v1708
      %v1710 = vpop.f32.mrb[0].mxu0
      %v1711 = vadd.f32 0.0, %v1710
      %v1712 = vpop.f32.mrb[0].mxu0
      %v1713 = vadd.f32 0.0, %v1712
      %v1714 = vpop.f32.mrb[0].mxu0
      %v1715 = vadd.f32 0.0, %v1714
      %1716 = vmatprep.mubr.bf16.mxu0 0
      %1717 = vmatmul.mubr.bf16.gmra.mrb[0].mxu0 %v1188
      %v1718 = vpop.f32.mrb[0].mxu0
      %v1719 = vadd.f32 0.0, %v1718
      %v1720 = vpop.f32.mrb[0].mxu0
      %v1721 = vadd.f32 0.0, %v1720
      %v1722 = vpop.f32.mrb[0].mxu0
      %v1723 = vadd.f32 0.0, %v1722
      %v1724 = vpop.f32.mrb[0].mxu0
      %v1725 = vadd.f32 0.0, %v1724
      %1726 = vmatprep.mubr.bf16.mxu0 0
      %1727 = vmatmul.mubr.bf16.gmra.mrb[0].mxu0 %v1191
      %v1728 = vpop.f32.mrb[0].mxu0
      %v1729 = vadd.f32 0.0, %v1728
      %v1730 = vpop.f32.mrb[0].mxu0
      %v1731 = vadd.f32 0.0, %v1730
      %v1732 = vpop.f32.mrb[0].mxu0
      %v1733 = vadd.f32 0.0, %v1732
      %v1734 = vpop.f32.mrb[0].mxu0
      %v1735 = vadd.f32 0.0, %v1734
      %1736 = vmatprep.mubr.bf16.mxu0 0
      %1737 = vmatmul.mubr.bf16.gmra.mrb[0].mxu0 %v1194
      %v1738 = vpop.f32.mrb[0].mxu0
      %v1739 = vadd.f32 0.0, %v1738
      %v1740 = vpop.f32.mrb[0].mxu0
      %v1741 = vadd.f32 0.0, %v1740
      %v1742 = vpop.f32.mrb[0].mxu0
      %v1743 = vadd.f32 0.0, %v1742
      %v1744 = vpop.f32.mrb[0].mxu0
      %v1745 = vadd.f32 0.0, %v1744
      %1746 = vmatprep.mubr.bf16.mxu0 0
      %1747 = vmatmul.mubr.bf16.gmra.mrb[0].mxu0 %v1197
      %v1748 = vpop.f32.mrb[0].mxu0
      %v1749 = vadd.f32 0.0, %v1748
      %v1750 = vpop.f32.mrb[0].mxu0
      %v1751 = vadd.f32 0.0, %v1750
      %v1752 = vpop.f32.mrb[0].mxu0
      %v1753 = vadd.f32 0.0, %v1752
      %v1754 = vpop.f32.mrb[0].mxu0
      %v1755 = vadd.f32 0.0, %v1754
      %1756 = vmatprep.mubr.bf16.mxu0 0
      %1757 = vmatmul.mubr.bf16.gmra.mrb[0].mxu0 %v1200
      %v1758 = vpop.f32.mrb[0].mxu0
      %v1759 = vadd.f32 0.0, %v1758
      %v1760 = vpop.f32.mrb[0].mxu0
      %v1761 = vadd.f32 0.0, %v1760
      %v1762 = vpop.f32.mrb[0].mxu0
      %v1763 = vadd.f32 0.0, %v1762
      %v1764 = vpop.f32.mrb[0].mxu0
      %v1765 = vadd.f32 0.0, %v1764
      %1766 = vmatprep.mubr.bf16.mxu0 0
      %1767 = vmatmul.mubr.bf16.gmra.mrb[0].mxu0 %v1203
      %v1768 = vpop.f32.mrb[0].mxu0
      %v1769 = vadd.f32 0.0, %v1768
      %v1770 = vpop.f32.mrb[0].mxu0
      %v1771 = vadd.f32 0.0, %v1770
      %v1772 = vpop.f32.mrb[0].mxu0
      %v1773 = vadd.f32 0.0, %v1772
      %v1774 = vpop.f32.mrb[0].mxu0
      %v1775 = vadd.f32 0.0, %v1774
      %1776 = vmatprep.mubr.bf16.mxu0 0
      %1777 = vmatmul.mubr.bf16.gmra.mrb[0].mxu0 %v1206
      %v1778 = vpop.f32.mrb[0].mxu0
      %v1779 = vadd.f32 0.0, %v1778
      %v1780 = vpop.f32.mrb[0].mxu0
      %v1781 = vadd.f32 0.0, %v1780
      %v1782 = vpop.f32.mrb[0].mxu0
      %v1783 = vadd.f32 0.0, %v1782
      %v1784 = vpop.f32.mrb[0].mxu0
      %v1785 = vadd.f32 0.0, %v1784
      %1786 = vmatprep.mubr.bf16.mxu0 0
      %1787 = vmatmul.mubr.bf16.gmra.mrb[0].mxu0 %v1209
      %v1788 = vpop.f32.mrb[0].mxu0
      %v1789 = vadd.f32 0.0, %v1788
      %v1790 = vpop.f32.mrb[0].mxu0
      %v1791 = vadd.f32 0.0, %v1790
      %v1792 = vpop.f32.mrb[0].mxu0
      %v1793 = vadd.f32 0.0, %v1792
      %v1794 = vpop.f32.mrb[0].mxu0
      %v1795 = vadd.f32 0.0, %v1794
      %1796 = vmatprep.mubr.bf16.mxu0 0
      %1797 = vmatmul.mubr.bf16.gmra.mrb[0].mxu0 %v1212
      %v1798 = vpop.f32.mrb[0].mxu0
      %v1799 = vadd.f32 0.0, %v1798
      %v1800 = vpop.f32.mrb[0].mxu0
      %v1801 = vadd.f32 0.0, %v1800
      %v1802 = vpop.f32.mrb[0].mxu0
      %v1803 = vadd.f32 0.0, %v1802
      %v1804 = vpop.f32.mrb[0].mxu0
      %v1805 = vadd.f32 0.0, %v1804
      %1806 = vmatprep.mubr.bf16.mxu0 0
      %1807 = vmatmul.mubr.bf16.gmra.mrb[0].mxu0 %v1215
      %v1808 = vpop.f32.mrb[0].mxu0
      %v1809 = vadd.f32 0.0, %v1808
      %v1810 = vpop.f32.mrb[0].mxu0
      %v1811 = vadd.f32 0.0, %v1810
      %v1812 = vpop.f32.mrb[0].mxu0
      %v1813 = vadd.f32 0.0, %v1812
      %v1814 = vpop.f32.mrb[0].mxu0
      %v1815 = vadd.f32 0.0, %v1814
      %1816 = vmatprep.mubr.bf16.mxu0 0
      %1817 = vmatmul.mubr.bf16.gmra.mrb[0].mxu0 %v1218
      %v1818 = vpop.f32.mrb[0].mxu0
      %v1819 = vadd.f32 0.0, %v1818
      %v1820 = vpop.f32.mrb[0].mxu0
      %v1821 = vadd.f32 0.0, %v1820
      %v1822 = vpop.f32.mrb[0].mxu0
      %v1823 = vadd.f32 0.0, %v1822
      %v1824 = vpop.f32.mrb[0].mxu0
      %v1825 = vadd.f32 0.0, %v1824
      %1826 = vmatprep.mubr.bf16.mxu0 0
      %1827 = vmatmul.mubr.bf16.gmra.mrb[0].mxu0 %v1221
      %v1828 = vpop.f32.mrb[0].mxu0
      %v1829 = vadd.f32 0.0, %v1828
      %v1830 = vpop.f32.mrb[0].mxu0
      %v1831 = vadd.f32 0.0, %v1830
      %v1832 = vpop.f32.mrb[0].mxu0
      %v1833 = vadd.f32 0.0, %v1832
      %v1834 = vpop.f32.mrb[0].mxu0
      %v1835 = vadd.f32 0.0, %v1834
      %1836 = vmatprep.mubr.bf16.mxu0 0
      %1837 = vmatmul.mubr.bf16.gmra.mrb[0].mxu0 %v1224
      %v1838 = vpop.f32.mrb[0].mxu0
      %v1839 = vadd.f32 0.0, %v1838
      %v1840 = vpop.f32.mrb[0].mxu0
      %v1841 = vadd.f32 0.0, %v1840
      %v1842 = vpop.f32.mrb[0].mxu0
      %v1843 = vadd.f32 0.0, %v1842
      %v1844 = vpop.f32.mrb[0].mxu0
      %v1845 = vadd.f32 0.0, %v1844
      %1846 = vmatprep.mubr.bf16.mxu0 0
      %1847 = vmatmul.mubr.bf16.gmra.mrb[0].mxu0 %v1227
      %v1848 = vpop.f32.mrb[0].mxu0
      %v1849 = vadd.f32 0.0, %v1848
      %v1850 = vpop.f32.mrb[0].mxu0
      %v1851 = vadd.f32 0.0, %v1850
      %v1852 = vpop.f32.mrb[0].mxu0
      %v1853 = vadd.f32 0.0, %v1852
      %v1854 = vpop.f32.mrb[0].mxu0
      %v1855 = vadd.f32 0.0, %v1854
      %1856 = vmatprep.mubr.bf16.mxu0 0
      %1857 = vmatmul.mubr.bf16.gmra.mrb[0].mxu0 %v1230
      %v1858 = vpop.f32.mrb[0].mxu0
      %v1859 = vadd.f32 0.0, %v1858
      %v1860 = vpop.f32.mrb[0].mxu0
      %v1861 = vadd.f32 0.0, %v1860
      %v1862 = vpop.f32.mrb[0].mxu0
      %v1863 = vadd.f32 0.0, %v1862
      %v1864 = vpop.f32.mrb[0].mxu0
      %v1865 = vadd.f32 0.0, %v1864
      %1866 = vmatprep.mubr.bf16.mxu0 0
      %1867 = vmatmul.mubr.bf16.gmra.mrb[0].mxu0 %v1233
      %v1868 = vpop.f32.mrb[0].mxu0
      %v1869 = vadd.f32 0.0, %v1868
      %v1870 = vpop.f32.mrb[0].mxu0
      %v1871 = vadd.f32 0.0, %v1870
      %v1872 = vpop.f32.mrb[0].mxu0
      %v1873 = vadd.f32 0.0, %v1872
      %v1874 = vpop.f32.mrb[0].mxu0
      %v1875 = vadd.f32 0.0, %v1874
      %1876 = vmatprep.mubr.bf16.mxu0 0
      %1877 = vmatmul.mubr.bf16.gmra.mrb[0].mxu0 %v1236
      %v1878 = vpop.f32.mrb[0].mxu0
      %v1879 = vadd.f32 0.0, %v1878
      %v1880 = vpop.f32.mrb[0].mxu0
      %v1881 = vadd.f32 0.0, %v1880
      %v1882 = vpop.f32.mrb[0].mxu0
      %v1883 = vadd.f32 0.0, %v1882
      %v1884 = vpop.f32.mrb[0].mxu0
      %v1885 = vadd.f32 0.0, %v1884
      %1886 = vmatprep.mubr.bf16.mxu0 0
      %1887 = vmatmul.mubr.bf16.gmra.mrb[0].mxu0 %v1239
      %v1888 = vpop.f32.mrb[0].mxu0
      %v1889 = vadd.f32 0.0, %v1888
      %v1890 = vpop.f32.mrb[0].mxu0
      %v1891 = vadd.f32 0.0, %v1890
      %v1892 = vpop.f32.mrb[0].mxu0
      %v1893 = vadd.f32 0.0, %v1892
      %v1894 = vpop.f32.mrb[0].mxu0
      %v1895 = vadd.f32 0.0, %v1894
      %1896 = vmatprep.mubr.bf16.mxu0 0
      %1897 = vmatmul.mubr.bf16.gmra.mrb[0].mxu0 %v1242
      %v1898 = vpop.f32.mrb[0].mxu0
      %v1899 = vadd.f32 0.0, %v1898
      %v1900 = vpop.f32.mrb[0].mxu0
      %v1901 = vadd.f32 0.0, %v1900
      %v1902 = vpop.f32.mrb[0].mxu0
      %v1903 = vadd.f32 0.0, %v1902
      %v1904 = vpop.f32.mrb[0].mxu0
      %v1905 = vadd.f32 0.0, %v1904
      %1906 = vmatprep.mubr.bf16.mxu0 0
      %1907 = vmatmul.mubr.bf16.gmra.mrb[0].mxu0 %v1245
      %v1908 = vpop.f32.mrb[0].mxu0
      %v1909 = vadd.f32 0.0, %v1908
      %v1910 = vpop.f32.mrb[0].mxu0
      %v1911 = vadd.f32 0.0, %v1910
      %v1912 = vpop.f32.mrb[0].mxu0
      %v1913 = vadd.f32 0.0, %v1912
      %v1914 = vpop.f32.mrb[0].mxu0
      %v1915 = vadd.f32 0.0, %v1914
      %1916 = vmatprep.mubr.bf16.mxu0 0
      %1917 = vmatmul.mubr.bf16.gmra.mrb[0].mxu0 %v1248
      %v1918 = vpop.f32.mrb[0].mxu0
      %v1919 = vadd.f32 0.0, %v1918
      %v1920 = vpop.f32.mrb[0].mxu0
      %v1921 = vadd.f32 0.0, %v1920
      %v1922 = vpop.f32.mrb[0].mxu0
      %v1923 = vadd.f32 0.0, %v1922
      %v1924 = vpop.f32.mrb[0].mxu0
      %v1925 = vadd.f32 0.0, %v1924
      %1926 = vmatprep.mubr.bf16.mxu0 0
      %1927 = vmatmul.mubr.bf16.gmra.mrb[0].mxu0 %v1251
      %v1928 = vpop.f32.mrb[0].mxu0
      %v1929 = vadd.f32 0.0, %v1928
      %v1930 = vpop.f32.mrb[0].mxu0
      %v1931 = vadd.f32 0.0, %v1930
      %v1932 = vpop.f32.mrb[0].mxu0
      %v1933 = vadd.f32 0.0, %v1932
      %v1934 = vpop.f32.mrb[0].mxu0
      %v1935 = vadd.f32 0.0, %v1934
      %1936 = vmatprep.mubr.bf16.mxu0 0
      %1937 = vmatmul.mubr.bf16.gmra.mrb[0].mxu0 %v1254
      %v1938 = vpop.f32.mrb[0].mxu0
      %v1939 = vadd.f32 0.0, %v1938
      %v1940 = vpop.f32.mrb[0].mxu0
      %v1941 = vadd.f32 0.0, %v1940
      %v1942 = vpop.f32.mrb[0].mxu0
      %v1943 = vadd.f32 0.0, %v1942
      %v1944 = vpop.f32.mrb[0].mxu0
      %v1945 = vadd.f32 0.0, %v1944
      %1946 = vmatprep.mubr.bf16.mxu0 0
      %1947 = vmatmul.mubr.bf16.gmra.mrb[0].mxu0 %v1257
      %v1948 = vpop.f32.mrb[0].mxu0
      %v1949 = vadd.f32 0.0, %v1948
      %v1950 = vpop.f32.mrb[0].mxu0
      %v1951 = vadd.f32 0.0, %v1950
      %v1952 = vpop.f32.mrb[0].mxu0
      %v1953 = vadd.f32 0.0, %v1952
      %v1954 = vpop.f32.mrb[0].mxu0
      %v1955 = vadd.f32 0.0, %v1954
      %1956 = vmatprep.mubr.bf16.mxu0 0
      %1957 = vmatmul.mubr.bf16.gmra.mrb[0].mxu0 %v1260
      %v1958 = vpop.f32.mrb[0].mxu0
      %v1959 = vadd.f32 0.0, %v1958
      %v1960 = vpop.f32.mrb[0].mxu0
      %v1961 = vadd.f32 0.0, %v1960
      %v1962 = vpop.f32.mrb[0].mxu0
      %v1963 = vadd.f32 0.0, %v1962
      %v1964 = vpop.f32.mrb[0].mxu0
      %v1965 = vadd.f32 0.0, %v1964
      %1966 = vmatprep.mubr.bf16.mxu0 0
      %1967 = vmatmul.mubr.bf16.gmra.mrb[0].mxu0 %v1263
      %v1968 = vpop.f32.mrb[0].mxu0
      %v1969 = vadd.f32 0.0, %v1968
      %v1970 = vpop.f32.mrb[0].mxu0
      %v1971 = vadd.f32 0.0, %v1970
      %v1972 = vpop.f32.mrb[0].mxu0
      %v1973 = vadd.f32 0.0, %v1972
      %v1974 = vpop.f32.mrb[0].mxu0
      %v1975 = vadd.f32 0.0, %v1974
      %1976 = vmatprep.mubr.bf16.mxu0 0
      %1977 = vmatmul.mubr.bf16.gmra.mrb[0].mxu0 %v1266
      %v1978 = vpop.f32.mrb[0].mxu0
      %v1979 = vadd.f32 0.0, %v1978
      %v1980 = vpop.f32.mrb[0].mxu0
      %v1981 = vadd.f32 0.0, %v1980
      %v1982 = vpop.f32.mrb[0].mxu0
      %v1983 = vadd.f32 0.0, %v1982
      %v1984 = vpop.f32.mrb[0].mxu0
      %v1985 = vadd.f32 0.0, %v1984
      %1986 = vmatprep.mubr.bf16.mxu0 0
      %1987 = vmatmul.mubr.bf16.gmra.mrb[0].mxu0 %v1269
      %v1988 = vpop.f32.mrb[0].mxu0
      %v1989 = vadd.f32 0.0, %v1988
      %v1990 = vpop.f32.mrb[0].mxu0
      %v1991 = vadd.f32 0.0, %v1990
      %v1992 = vpop.f32.mrb[0].mxu0
      %v1993 = vadd.f32 0.0, %v1992
      %v1994 = vpop.f32.mrb[0].mxu0
      %v1995 = vadd.f32 0.0, %v1994
      %1996 = vmatprep.mubr.bf16.mxu0 0
      %1997 = vmatmul.mubr.bf16.gmra.mrb[0].mxu0 %v1272
      %v1998 = vpop.f32.mrb[0].mxu0
      %v1999 = vadd.f32 0.0, %v1998
      %v2000 = vpop.f32.mrb[0].mxu0
      %v2001 = vadd.f32 0.0, %v2000
      %v2002 = vpop.f32.mrb[0].mxu0
      %v2003 = vadd.f32 0.0, %v2002
      %v2004 = vpop.f32.mrb[0].mxu0
      %v2005 = vadd.f32 0.0, %v2004
      %2006 = vmatprep.mubr.bf16.mxu0 0
      %2007 = vmatmul.mubr.bf16.gmra.mrb[0].mxu0 %v1275
      %v2008 = vpop.f32.mrb[0].mxu0
      %v2009 = vadd.f32 0.0, %v2008
      %v2010 = vpop.f32.mrb[0].mxu0
      %v2011 = vadd.f32 0.0, %v2010
      %v2012 = vpop.f32.mrb[0].mxu0
      %v2013 = vadd.f32 0.0, %v2012
      %v2014 = vpop.f32.mrb[0].mxu0
      %v2015 = vadd.f32 0.0, %v2014
      %2016 = vdwg.mxu0
      %v2017 = vld [vmem:[%s1] sm:$0xff]
      %v2018 = vld [vmem:[%s1 + $0x8] sm:$0xff]
      %v2019 = vld [vmem:[%s1 + $0x10] sm:$0xff]
      %v2020 = vld [vmem:[%s1 + $0x18] sm:$0xff]
      %v2021 = vld [vmem:[%s1 + $0x20] sm:$0xff]
      %v2022 = vld [vmem:[%s1 + $0x28] sm:$0xff]
      %v2023 = vld [vmem:[%s1 + $0x30] sm:$0xff]
      %v2024 = vld [vmem:[%s1 + $0x38] sm:$0xff]
      %v2025 = vld [vmem:[%s1 + $0x40] sm:$0xff]
      %v2026 = vld [vmem:[%s1 + $0x48] sm:$0xff]
      %v2027 = vld [vmem:[%s1 + $0x50] sm:$0xff]
      %v2028 = vld [vmem:[%s1 + $0x58] sm:$0xff]
      %v2029 = vld [vmem:[%s1 + $0x60] sm:$0xff]
      %v2030 = vld [vmem:[%s1 + $0x68] sm:$0xff]
      %v2031 = vld [vmem:[%s1 + $0x70] sm:$0xff]
      %v2032 = vld [vmem:[%s1 + $0x78] sm:$0xff]
      %v2033 = vld [vmem:[%s1 + $0x80] sm:$0xff]
      %v2034 = vld [vmem:[%s1 + $0x88] sm:$0xff]
      %v2035 = vld [vmem:[%s1 + $0x90] sm:$0xff]
      %v2036 = vld [vmem:[%s1 + $0x98] sm:$0xff]
      %v2037 = vld [vmem:[%s1 + $0xa0] sm:$0xff]
      %v2038 = vld [vmem:[%s1 + $0xa8] sm:$0xff]
      %v2039 = vld [vmem:[%s1 + $0xb0] sm:$0xff]
      %v2040 = vld [vmem:[%s1 + $0xb8] sm:$0xff]
      %v2041 = vld [vmem:[%s1 + $0xc0] sm:$0xff]
      %v2042 = vld [vmem:[%s1 + $0xc8] sm:$0xff]
      %v2043 = vld [vmem:[%s1 + $0xd0] sm:$0xff]
      %v2044 = vld [vmem:[%s1 + $0xd8] sm:$0xff]
      %v2045 = vld [vmem:[%s1 + $0xe0] sm:$0xff]
      %v2046 = vld [vmem:[%s1 + $0xe8] sm:$0xff]
      %v2047 = vld [vmem:[%s1 + $0xf0] sm:$0xff]
      %v2048 = vld [vmem:[%s1 + $0xf8] sm:$0xff]
      %v2049 = vld [vmem:[%s1 + $0x100] sm:$0xff]
      %v2050 = vld [vmem:[%s1 + $0x108] sm:$0xff]
      %v2051 = vld [vmem:[%s1 + $0x110] sm:$0xff]
      %v2052 = vld [vmem:[%s1 + $0x118] sm:$0xff]
      %v2053 = vld [vmem:[%s1 + $0x120] sm:$0xff]
      %v2054 = vld [vmem:[%s1 + $0x128] sm:$0xff]
      %v2055 = vld [vmem:[%s1 + $0x130] sm:$0xff]
      %v2056 = vld [vmem:[%s1 + $0x138] sm:$0xff]
      %v2057 = vld [vmem:[%s1 + $0x140] sm:$0xff]
      %v2058 = vld [vmem:[%s1 + $0x148] sm:$0xff]
      %v2059 = vld [vmem:[%s1 + $0x150] sm:$0xff]
      %v2060 = vld [vmem:[%s1 + $0x158] sm:$0xff]
      %v2061 = vld [vmem:[%s1 + $0x160] sm:$0xff]
      %v2062 = vld [vmem:[%s1 + $0x168] sm:$0xff]
      %v2063 = vld [vmem:[%s1 + $0x170] sm:$0xff]
      %v2064 = vld [vmem:[%s1 + $0x178] sm:$0xff]
      %v2065 = vld [vmem:[%s1 + $0x180] sm:$0xff]
      %v2066 = vld [vmem:[%s1 + $0x188] sm:$0xff]
      %v2067 = vld [vmem:[%s1 + $0x190] sm:$0xff]
      %v2068 = vld [vmem:[%s1 + $0x198] sm:$0xff]
      %v2069 = vld [vmem:[%s1 + $0x1a0] sm:$0xff]
      %v2070 = vld [vmem:[%s1 + $0x1a8] sm:$0xff]
      %v2071 = vld [vmem:[%s1 + $0x1b0] sm:$0xff]
      %v2072 = vld [vmem:[%s1 + $0x1b8] sm:$0xff]
      %v2073 = vld [vmem:[%s1 + $0x1c0] sm:$0xff]
      %v2074 = vld [vmem:[%s1 + $0x1c8] sm:$0xff]
      %v2075 = vld [vmem:[%s1 + $0x1d0] sm:$0xff]
      %v2076 = vld [vmem:[%s1 + $0x1d8] sm:$0xff]
      %v2077 = vld [vmem:[%s1 + $0x1e0] sm:$0xff]
      %v2078 = vld [vmem:[%s1 + $0x1e8] sm:$0xff]
      %v2079 = vld [vmem:[%s1 + $0x1f0] sm:$0xff]
      %v2080 = vld [vmem:[%s1 + $0x1f8] sm:$0xff]
      %v2081 = vld [vmem:[%s1 + $0x200] sm:$0xff]
      %v2082 = vld [vmem:[%s1 + $0x208] sm:$0xff]
      %v2083 = vld [vmem:[%s1 + $0x210] sm:$0xff]
      %v2084 = vld [vmem:[%s1 + $0x218] sm:$0xff]
      %v2085 = vld [vmem:[%s1 + $0x220] sm:$0xff]
      %v2086 = vld [vmem:[%s1 + $0x228] sm:$0xff]
      %v2087 = vld [vmem:[%s1 + $0x230] sm:$0xff]
      %v2088 = vld [vmem:[%s1 + $0x238] sm:$0xff]
      %v2089 = vld [vmem:[%s1 + $0x240] sm:$0xff]
      %v2090 = vld [vmem:[%s1 + $0x248] sm:$0xff]
      %v2091 = vld [vmem:[%s1 + $0x250] sm:$0xff]
      %v2092 = vld [vmem:[%s1 + $0x258] sm:$0xff]
      %v2093 = vld [vmem:[%s1 + $0x260] sm:$0xff]
      %v2094 = vld [vmem:[%s1 + $0x268] sm:$0xff]
      %v2095 = vld [vmem:[%s1 + $0x270] sm:$0xff]
      %v2096 = vld [vmem:[%s1 + $0x278] sm:$0xff]
      %v2097 = vld [vmem:[%s1 + $0x280] sm:$0xff]
      %v2098 = vld [vmem:[%s1 + $0x288] sm:$0xff]
      %v2099 = vld [vmem:[%s1 + $0x290] sm:$0xff]
      %v2100 = vld [vmem:[%s1 + $0x298] sm:$0xff]
      %v2101 = vld [vmem:[%s1 + $0x2a0] sm:$0xff]
      %v2102 = vld [vmem:[%s1 + $0x2a8] sm:$0xff]
      %v2103 = vld [vmem:[%s1 + $0x2b0] sm:$0xff]
      %v2104 = vld [vmem:[%s1 + $0x2b8] sm:$0xff]
      %v2105 = vld [vmem:[%s1 + $0x2c0] sm:$0xff]
      %v2106 = vld [vmem:[%s1 + $0x2c8] sm:$0xff]
      %v2107 = vld [vmem:[%s1 + $0x2d0] sm:$0xff]
      %v2108 = vld [vmem:[%s1 + $0x2d8] sm:$0xff]
      %v2109 = vld [vmem:[%s1 + $0x2e0] sm:$0xff]
      %v2110 = vld [vmem:[%s1 + $0x2e8] sm:$0xff]
      %v2111 = vld [vmem:[%s1 + $0x2f0] sm:$0xff]
      %v2112 = vld [vmem:[%s1 + $0x2f8] sm:$0xff]
      %v2113 = vld [vmem:[%s1 + $0x300] sm:$0xff]
      %v2114 = vld [vmem:[%s1 + $0x308] sm:$0xff]
      %v2115 = vld [vmem:[%s1 + $0x310] sm:$0xff]
      %v2116 = vld [vmem:[%s1 + $0x318] sm:$0xff]
      %v2117 = vld [vmem:[%s1 + $0x320] sm:$0xff]
      %v2118 = vld [vmem:[%s1 + $0x328] sm:$0xff]
      %v2119 = vld [vmem:[%s1 + $0x330] sm:$0xff]
      %v2120 = vld [vmem:[%s1 + $0x338] sm:$0xff]
      %v2121 = vld [vmem:[%s1 + $0x340] sm:$0xff]
      %v2122 = vld [vmem:[%s1 + $0x348] sm:$0xff]
      %v2123 = vld [vmem:[%s1 + $0x350] sm:$0xff]
      %v2124 = vld [vmem:[%s1 + $0x358] sm:$0xff]
      %v2125 = vld [vmem:[%s1 + $0x360] sm:$0xff]
      %v2126 = vld [vmem:[%s1 + $0x368] sm:$0xff]
      %v2127 = vld [vmem:[%s1 + $0x370] sm:$0xff]
      %v2128 = vld [vmem:[%s1 + $0x378] sm:$0xff]
      %v2129 = vld [vmem:[%s1 + $0x380] sm:$0xff]
      %v2130 = vld [vmem:[%s1 + $0x388] sm:$0xff]
      %v2131 = vld [vmem:[%s1 + $0x390] sm:$0xff]
      %v2132 = vld [vmem:[%s1 + $0x398] sm:$0xff]
      %v2133 = vld [vmem:[%s1 + $0x3a0] sm:$0xff]
      %v2134 = vld [vmem:[%s1 + $0x3a8] sm:$0xff]
      %v2135 = vld [vmem:[%s1 + $0x3b0] sm:$0xff]
      %v2136 = vld [vmem:[%s1 + $0x3b8] sm:$0xff]
      %v2137 = vld [vmem:[%s1 + $0x3c0] sm:$0xff]
      %v2138 = vld [vmem:[%s1 + $0x3c8] sm:$0xff]
      %v2139 = vld [vmem:[%s1 + $0x3d0] sm:$0xff]
      %v2140 = vld [vmem:[%s1 + $0x3d8] sm:$0xff]
      %v2141 = vld [vmem:[%s1 + $0x3e0] sm:$0xff]
      %v2142 = vld [vmem:[%s1 + $0x3e8] sm:$0xff]
      %v2143 = vld [vmem:[%s1 + $0x3f0] sm:$0xff]
      %v2144 = vld [vmem:[%s1 + $0x3f8] sm:$0xff]
      %v2145 = vld [vmem:[%s1 + $0x400] sm:$0xff]
      %v2146 = vld [vmem:[%s1 + $0x408] sm:$0xff]
      %v2147 = vld [vmem:[%s1 + $0x410] sm:$0xff]
      %v2148 = vld [vmem:[%s1 + $0x418] sm:$0xff]
      %v2149 = vld [vmem:[%s1 + $0x420] sm:$0xff]
      %v2150 = vld [vmem:[%s1 + $0x428] sm:$0xff]
      %v2151 = vld [vmem:[%s1 + $0x430] sm:$0xff]
      %v2152 = vld [vmem:[%s1 + $0x438] sm:$0xff]
      %v2153 = vld [vmem:[%s2] sm:$0x3]
      %2154 = vset.pattern.permute.xlu0 0
      %2155 = vperm.xlu0 %2154, %v2017
      %v2156 = vpop.permute.xlu0 %2155
      %2157 = vset.pattern.permute.xlu0 0
      %2158 = vperm.xlu0 %2157, %v2018
      %v2159 = vpop.permute.xlu0 %2158
      %2160 = vset.pattern.permute.xlu0 0
      %2161 = vperm.xlu0 %2160, %v2019
      %v2162 = vpop.permute.xlu0 %2161
      %2163 = vset.pattern.permute.xlu0 0
      %2164 = vperm.xlu0 %2163, %v2020
      %v2165 = vpop.permute.xlu0 %2164
      %2166 = vset.pattern.permute.xlu0 0
      %2167 = vperm.xlu0 %2166, %v2021
      %v2168 = vpop.permute.xlu0 %2167
      %2169 = vset.pattern.permute.xlu0 0
      %2170 = vperm.xlu0 %2169, %v2022
      %v2171 = vpop.permute.xlu0 %2170
      %2172 = vset.pattern.permute.xlu0 0
      %2173 = vperm.xlu0 %2172, %v2023
      %v2174 = vpop.permute.xlu0 %2173
      %2175 = vset.pattern.permute.xlu0 0
      %2176 = vperm.xlu0 %2175, %v2024
      %v2177 = vpop.permute.xlu0 %2176
      %2178 = vset.pattern.permute.xlu0 0
      %2179 = vperm.xlu0 %2178, %v2025
      %v2180 = vpop.permute.xlu0 %2179
      %2181 = vset.pattern.permute.xlu0 0
      %2182 = vperm.xlu0 %2181, %v2026
      %v2183 = vpop.permute.xlu0 %2182
      %2184 = vset.pattern.permute.xlu0 0
      %2185 = vperm.xlu0 %2184, %v2027
      %v2186 = vpop.permute.xlu0 %2185
      %2187 = vset.pattern.permute.xlu0 0
      %2188 = vperm.xlu0 %2187, %v2028
      %v2189 = vpop.permute.xlu0 %2188
      %2190 = vset.pattern.permute.xlu0 0
      %2191 = vperm.xlu0 %2190, %v2029
      %v2192 = vpop.permute.xlu0 %2191
      %2193 = vset.pattern.permute.xlu0 0
      %2194 = vperm.xlu0 %2193, %v2030
      %v2195 = vpop.permute.xlu0 %2194
      %2196 = vset.pattern.permute.xlu0 0
      %2197 = vperm.xlu0 %2196, %v2031
      %v2198 = vpop.permute.xlu0 %2197
      %2199 = vset.pattern.permute.xlu0 0
      %2200 = vperm.xlu0 %2199, %v2032
      %v2201 = vpop.permute.xlu0 %2200
      %2202 = vset.pattern.permute.xlu0 0
      %2203 = vperm.xlu0 %2202, %v2033
      %v2204 = vpop.permute.xlu0 %2203
      %2205 = vset.pattern.permute.xlu0 0
      %2206 = vperm.xlu0 %2205, %v2034
      %v2207 = vpop.permute.xlu0 %2206
      %2208 = vset.pattern.permute.xlu0 0
      %2209 = vperm.xlu0 %2208, %v2035
      %v2210 = vpop.permute.xlu0 %2209
      %2211 = vset.pattern.permute.xlu0 0
      %2212 = vperm.xlu0 %2211, %v2036
      %v2213 = vpop.permute.xlu0 %2212
      %2214 = vset.pattern.permute.xlu0 0
      %2215 = vperm.xlu0 %2214, %v2037
      %v2216 = vpop.permute.xlu0 %2215
      %2217 = vset.pattern.permute.xlu0 0
      %2218 = vperm.xlu0 %2217, %v2038
      %v2219 = vpop.permute.xlu0 %2218
      %2220 = vset.pattern.permute.xlu0 0
      %2221 = vperm.xlu0 %2220, %v2039
      %v2222 = vpop.permute.xlu0 %2221
      %2223 = vset.pattern.permute.xlu0 0
      %2224 = vperm.xlu0 %2223, %v2040
      %v2225 = vpop.permute.xlu0 %2224
      %2226 = vset.pattern.permute.xlu0 0
      %2227 = vperm.xlu0 %2226, %v2041
      %v2228 = vpop.permute.xlu0 %2227
      %2229 = vset.pattern.permute.xlu0 0
      %2230 = vperm.xlu0 %2229, %v2042
      %v2231 = vpop.permute.xlu0 %2230
      %2232 = vset.pattern.permute.xlu0 0
      %2233 = vperm.xlu0 %2232, %v2043
      %v2234 = vpop.permute.xlu0 %2233
      %2235 = vset.pattern.permute.xlu0 0
      %2236 = vperm.xlu0 %2235, %v2044
      %v2237 = vpop.permute.xlu0 %2236
      %2238 = vset.pattern.permute.xlu0 0
      %2239 = vperm.xlu0 %2238, %v2045
      %v2240 = vpop.permute.xlu0 %2239
      %2241 = vset.pattern.permute.xlu0 0
      %2242 = vperm.xlu0 %2241, %v2046
      %v2243 = vpop.permute.xlu0 %2242
      %2244 = vset.pattern.permute.xlu0 0
      %2245 = vperm.xlu0 %2244, %v2047
      %v2246 = vpop.permute.xlu0 %2245
      %2247 = vset.pattern.permute.xlu0 0
      %2248 = vperm.xlu0 %2247, %v2048
      %v2249 = vpop.permute.xlu0 %2248
      %2250 = vset.pattern.permute.xlu0 0
      %2251 = vperm.xlu0 %2250, %v2049
      %v2252 = vpop.permute.xlu0 %2251
      %2253 = vset.pattern.permute.xlu0 0
      %2254 = vperm.xlu0 %2253, %v2050
      %v2255 = vpop.permute.xlu0 %2254
      %2256 = vset.pattern.permute.xlu0 0
      %2257 = vperm.xlu0 %2256, %v2051
      %v2258 = vpop.permute.xlu0 %2257
      %2259 = vset.pattern.permute.xlu0 0
      %2260 = vperm.xlu0 %2259, %v2052
      %v2261 = vpop.permute.xlu0 %2260
      %2262 = vset.pattern.permute.xlu0 0
      %2263 = vperm.xlu0 %2262, %v2053
      %v2264 = vpop.permute.xlu0 %2263
      %2265 = vset.pattern.permute.xlu0 0
      %2266 = vperm.xlu0 %2265, %v2054
      %v2267 = vpop.permute.xlu0 %2266
      %2268 = vset.pattern.permute.xlu0 0
      %2269 = vperm.xlu0 %2268, %v2055
      %v2270 = vpop.permute.xlu0 %2269
      %2271 = vset.pattern.permute.xlu0 0
      %2272 = vperm.xlu0 %2271, %v2056
      %v2273 = vpop.permute.xlu0 %2272
      %2274 = vset.pattern.permute.xlu0 0
      %2275 = vperm.xlu0 %2274, %v2057
      %v2276 = vpop.permute.xlu0 %2275
      %2277 = vset.pattern.permute.xlu0 0
      %2278 = vperm.xlu0 %2277, %v2058
      %v2279 = vpop.permute.xlu0 %2278
      %2280 = vset.pattern.permute.xlu0 0
      %2281 = vperm.xlu0 %2280, %v2059
      %v2282 = vpop.permute.xlu0 %2281
      %2283 = vset.pattern.permute.xlu0 0
      %2284 = vperm.xlu0 %2283, %v2060
      %v2285 = vpop.permute.xlu0 %2284
      %2286 = vset.pattern.permute.xlu0 0
      %2287 = vperm.xlu0 %2286, %v2061
      %v2288 = vpop.permute.xlu0 %2287
      %2289 = vset.pattern.permute.xlu0 0
      %2290 = vperm.xlu0 %2289, %v2062
      %v2291 = vpop.permute.xlu0 %2290
      %2292 = vset.pattern.permute.xlu0 0
      %2293 = vperm.xlu0 %2292, %v2063
      %v2294 = vpop.permute.xlu0 %2293
      %2295 = vset.pattern.permute.xlu0 0
      %2296 = vperm.xlu0 %2295, %v2064
      %v2297 = vpop.permute.xlu0 %2296
      %2298 = vset.pattern.permute.xlu0 0
      %2299 = vperm.xlu0 %2298, %v2065
      %v2300 = vpop.permute.xlu0 %2299
      %2301 = vset.pattern.permute.xlu0 0
      %2302 = vperm.xlu0 %2301, %v2066
      %v2303 = vpop.permute.xlu0 %2302
      %2304 = vset.pattern.permute.xlu0 0
      %2305 = vperm.xlu0 %2304, %v2067
      %v2306 = vpop.permute.xlu0 %2305
      %2307 = vset.pattern.permute.xlu0 0
      %2308 = vperm.xlu0 %2307, %v2068
      %v2309 = vpop.permute.xlu0 %2308
      %2310 = vset.pattern.permute.xlu0 0
      %2311 = vperm.xlu0 %2310, %v2069
      %v2312 = vpop.permute.xlu0 %2311
      %2313 = vset.pattern.permute.xlu0 0
      %2314 = vperm.xlu0 %2313, %v2070
      %v2315 = vpop.permute.xlu0 %2314
      %2316 = vset.pattern.permute.xlu0 0
      %2317 = vperm.xlu0 %2316, %v2071
      %v2318 = vpop.permute.xlu0 %2317
      %2319 = vset.pattern.permute.xlu0 0
      %2320 = vperm.xlu0 %2319, %v2072
      %v2321 = vpop.permute.xlu0 %2320
      %2322 = vset.pattern.permute.xlu0 0
      %2323 = vperm.xlu0 %2322, %v2073
      %v2324 = vpop.permute.xlu0 %2323
      %2325 = vset.pattern.permute.xlu0 0
      %2326 = vperm.xlu0 %2325, %v2074
      %v2327 = vpop.permute.xlu0 %2326
      %2328 = vset.pattern.permute.xlu0 0
      %2329 = vperm.xlu0 %2328, %v2075
      %v2330 = vpop.permute.xlu0 %2329
      %2331 = vset.pattern.permute.xlu0 0
      %2332 = vperm.xlu0 %2331, %v2076
      %v2333 = vpop.permute.xlu0 %2332
      %2334 = vset.pattern.permute.xlu0 0
      %2335 = vperm.xlu0 %2334, %v2077
      %v2336 = vpop.permute.xlu0 %2335
      %2337 = vset.pattern.permute.xlu0 0
      %2338 = vperm.xlu0 %2337, %v2078
      %v2339 = vpop.permute.xlu0 %2338
      %2340 = vset.pattern.permute.xlu0 0
      %2341 = vperm.xlu0 %2340, %v2079
      %v2342 = vpop.permute.xlu0 %2341
      %2343 = vset.pattern.permute.xlu0 0
      %2344 = vperm.xlu0 %2343, %v2080
      %v2345 = vpop.permute.xlu0 %2344
      %2346 = vset.pattern.permute.xlu0 0
      %2347 = vperm.xlu0 %2346, %v2081
      %v2348 = vpop.permute.xlu0 %2347
      %2349 = vset.pattern.permute.xlu0 0
      %2350 = vperm.xlu0 %2349, %v2082
      %v2351 = vpop.permute.xlu0 %2350
      %2352 = vset.pattern.permute.xlu0 0
      %2353 = vperm.xlu0 %2352, %v2083
      %v2354 = vpop.permute.xlu0 %2353
      %2355 = vset.pattern.permute.xlu0 0
      %2356 = vperm.xlu0 %2355, %v2084
      %v2357 = vpop.permute.xlu0 %2356
      %2358 = vset.pattern.permute.xlu0 0
      %2359 = vperm.xlu0 %2358, %v2085
      %v2360 = vpop.permute.xlu0 %2359
      %2361 = vset.pattern.permute.xlu0 0
      %2362 = vperm.xlu0 %2361, %v2086
      %v2363 = vpop.permute.xlu0 %2362
      %2364 = vset.pattern.permute.xlu0 0
      %2365 = vperm.xlu0 %2364, %v2087
      %v2366 = vpop.permute.xlu0 %2365
      %2367 = vset.pattern.permute.xlu0 0
      %2368 = vperm.xlu0 %2367, %v2088
      %v2369 = vpop.permute.xlu0 %2368
      %2370 = vset.pattern.permute.xlu0 0
      %2371 = vperm.xlu0 %2370, %v2089
      %v2372 = vpop.permute.xlu0 %2371
      %2373 = vset.pattern.permute.xlu0 0
      %2374 = vperm.xlu0 %2373, %v2090
      %v2375 = vpop.permute.xlu0 %2374
      %2376 = vset.pattern.permute.xlu0 0
      %2377 = vperm.xlu0 %2376, %v2091
      %v2378 = vpop.permute.xlu0 %2377
      %2379 = vset.pattern.permute.xlu0 0
      %2380 = vperm.xlu0 %2379, %v2092
      %v2381 = vpop.permute.xlu0 %2380
      %2382 = vset.pattern.permute.xlu0 0
      %2383 = vperm.xlu0 %2382, %v2093
      %v2384 = vpop.permute.xlu0 %2383
      %2385 = vset.pattern.permute.xlu0 0
      %2386 = vperm.xlu0 %2385, %v2094
      %v2387 = vpop.permute.xlu0 %2386
      %2388 = vset.pattern.permute.xlu0 0
      %2389 = vperm.xlu0 %2388, %v2095
      %v2390 = vpop.permute.xlu0 %2389
      %2391 = vset.pattern.permute.xlu0 0
      %2392 = vperm.xlu0 %2391, %v2096
      %v2393 = vpop.permute.xlu0 %2392
      %2394 = vset.pattern.permute.xlu0 0
      %2395 = vperm.xlu0 %2394, %v2097
      %v2396 = vpop.permute.xlu0 %2395
      %2397 = vset.pattern.permute.xlu0 0
      %2398 = vperm.xlu0 %2397, %v2098
      %v2399 = vpop.permute.xlu0 %2398
      %2400 = vset.pattern.permute.xlu0 0
      %2401 = vperm.xlu0 %2400, %v2099
      %v2402 = vpop.permute.xlu0 %2401
      %2403 = vset.pattern.permute.xlu0 0
      %2404 = vperm.xlu0 %2403, %v2100
      %v2405 = vpop.permute.xlu0 %2404
      %2406 = vset.pattern.permute.xlu0 0
      %2407 = vperm.xlu0 %2406, %v2101
      %v2408 = vpop.permute.xlu0 %2407
      %2409 = vset.pattern.permute.xlu0 0
      %2410 = vperm.xlu0 %2409, %v2102
      %v2411 = vpop.permute.xlu0 %2410
      %2412 = vset.pattern.permute.xlu0 0
      %2413 = vperm.xlu0 %2412, %v2103
      %v2414 = vpop.permute.xlu0 %2413
      %2415 = vset.pattern.permute.xlu0 0
      %2416 = vperm.xlu0 %2415, %v2104
      %v2417 = vpop.permute.xlu0 %2416
      %2418 = vset.pattern.permute.xlu0 0
      %2419 = vperm.xlu0 %2418, %v2105
      %v2420 = vpop.permute.xlu0 %2419
      %2421 = vset.pattern.permute.xlu0 0
      %2422 = vperm.xlu0 %2421, %v2106
      %v2423 = vpop.permute.xlu0 %2422
      %2424 = vset.pattern.permute.xlu0 0
      %2425 = vperm.xlu0 %2424, %v2107
      %v2426 = vpop.permute.xlu0 %2425
      %2427 = vset.pattern.permute.xlu0 0
      %2428 = vperm.xlu0 %2427, %v2108
      %v2429 = vpop.permute.xlu0 %2428
      %2430 = vset.pattern.permute.xlu0 0
      %2431 = vperm.xlu0 %2430, %v2109
      %v2432 = vpop.permute.xlu0 %2431
      %2433 = vset.pattern.permute.xlu0 0
      %2434 = vperm.xlu0 %2433, %v2110
      %v2435 = vpop.permute.xlu0 %2434
      %2436 = vset.pattern.permute.xlu0 0
      %2437 = vperm.xlu0 %2436, %v2111
      %v2438 = vpop.permute.xlu0 %2437
      %2439 = vset.pattern.permute.xlu0 0
      %2440 = vperm.xlu0 %2439, %v2112
      %v2441 = vpop.permute.xlu0 %2440
      %2442 = vset.pattern.permute.xlu0 0
      %2443 = vperm.xlu0 %2442, %v2113
      %v2444 = vpop.permute.xlu0 %2443
      %2445 = vset.pattern.permute.xlu0 0
      %2446 = vperm.xlu0 %2445, %v2114
      %v2447 = vpop.permute.xlu0 %2446
      %2448 = vset.pattern.permute.xlu0 0
      %2449 = vperm.xlu0 %2448, %v2115
      %v2450 = vpop.permute.xlu0 %2449
      %2451 = vset.pattern.permute.xlu0 0
      %2452 = vperm.xlu0 %2451, %v2116
      %v2453 = vpop.permute.xlu0 %2452
      %2454 = vset.pattern.permute.xlu0 0
      %2455 = vperm.xlu0 %2454, %v2117
      %v2456 = vpop.permute.xlu0 %2455
      %2457 = vset.pattern.permute.xlu0 0
      %2458 = vperm.xlu0 %2457, %v2118
      %v2459 = vpop.permute.xlu0 %2458
      %2460 = vset.pattern.permute.xlu0 0
      %2461 = vperm.xlu0 %2460, %v2119
      %v2462 = vpop.permute.xlu0 %2461
      %2463 = vset.pattern.permute.xlu0 0
      %2464 = vperm.xlu0 %2463, %v2120
      %v2465 = vpop.permute.xlu0 %2464
      %2466 = vset.pattern.permute.xlu0 0
      %2467 = vperm.xlu0 %2466, %v2121
      %v2468 = vpop.permute.xlu0 %2467
      %2469 = vset.pattern.permute.xlu0 0
      %2470 = vperm.xlu0 %2469, %v2122
      %v2471 = vpop.permute.xlu0 %2470
      %2472 = vset.pattern.permute.xlu0 0
      %2473 = vperm.xlu0 %2472, %v2123
      %v2474 = vpop.permute.xlu0 %2473
      %2475 = vset.pattern.permute.xlu0 0
      %2476 = vperm.xlu0 %2475, %v2124
      %v2477 = vpop.permute.xlu0 %2476
      %2478 = vset.pattern.permute.xlu0 0
      %2479 = vperm.xlu0 %2478, %v2125
      %v2480 = vpop.permute.xlu0 %2479
      %2481 = vset.pattern.permute.xlu0 0
      %2482 = vperm.xlu0 %2481, %v2126
      %v2483 = vpop.permute.xlu0 %2482
      %2484 = vset.pattern.permute.xlu0 0
      %2485 = vperm.xlu0 %2484, %v2127
      %v2486 = vpop.permute.xlu0 %2485
      %2487 = vset.pattern.permute.xlu0 0
      %2488 = vperm.xlu0 %2487, %v2128
      %v2489 = vpop.permute.xlu0 %2488
      %2490 = vset.pattern.permute.xlu0 0
      %2491 = vperm.xlu0 %2490, %v2129
      %v2492 = vpop.permute.xlu0 %2491
      %2493 = vset.pattern.permute.xlu0 0
      %2494 = vperm.xlu0 %2493, %v2130
      %v2495 = vpop.permute.xlu0 %2494
      %2496 = vset.pattern.permute.xlu0 0
      %2497 = vperm.xlu0 %2496, %v2131
      %v2498 = vpop.permute.xlu0 %2497
      %2499 = vset.pattern.permute.xlu0 0
      %2500 = vperm.xlu0 %2499, %v2132
      %v2501 = vpop.permute.xlu0 %2500
      %2502 = vset.pattern.permute.xlu0 0
      %2503 = vperm.xlu0 %2502, %v2133
      %v2504 = vpop.permute.xlu0 %2503
      %2505 = vset.pattern.permute.xlu0 0
      %2506 = vperm.xlu0 %2505, %v2134
      %v2507 = vpop.permute.xlu0 %2506
      %2508 = vset.pattern.permute.xlu0 0
      %2509 = vperm.xlu0 %2508, %v2135
      %v2510 = vpop.permute.xlu0 %2509
      %2511 = vset.pattern.permute.xlu0 0
      %2512 = vperm.xlu0 %2511, %v2136
      %v2513 = vpop.permute.xlu0 %2512
      %2514 = vset.pattern.permute.xlu0 0
      %2515 = vperm.xlu0 %2514, %v2137
      %v2516 = vpop.permute.xlu0 %2515
      %2517 = vset.pattern.permute.xlu0 0
      %2518 = vperm.xlu0 %2517, %v2138
      %v2519 = vpop.permute.xlu0 %2518
      %2520 = vset.pattern.permute.xlu0 0
      %2521 = vperm.xlu0 %2520, %v2139
      %v2522 = vpop.permute.xlu0 %2521
      %2523 = vset.pattern.permute.xlu0 0
      %2524 = vperm.xlu0 %2523, %v2140
      %v2525 = vpop.permute.xlu0 %2524
      %2526 = vset.pattern.permute.xlu0 0
      %2527 = vperm.xlu0 %2526, %v2141
      %v2528 = vpop.permute.xlu0 %2527
      %2529 = vset.pattern.permute.xlu0 0
      %2530 = vperm.xlu0 %2529, %v2142
      %v2531 = vpop.permute.xlu0 %2530
      %2532 = vset.pattern.permute.xlu0 0
      %2533 = vperm.xlu0 %2532, %v2143
      %v2534 = vpop.permute.xlu0 %2533
      %2535 = vset.pattern.permute.xlu0 0
      %2536 = vperm.xlu0 %2535, %v2144
      %v2537 = vpop.permute.xlu0 %2536
      %2538 = vset.pattern.permute.xlu0 0
      %2539 = vperm.xlu0 %2538, %v2145
      %v2540 = vpop.permute.xlu0 %2539
      %2541 = vset.pattern.permute.xlu0 0
      %2542 = vperm.xlu0 %2541, %v2146
      %v2543 = vpop.permute.xlu0 %2542
      %2544 = vset.pattern.permute.xlu0 0
      %2545 = vperm.xlu0 %2544, %v2147
      %v2546 = vpop.permute.xlu0 %2545
      %2547 = vset.pattern.permute.xlu0 0
      %2548 = vperm.xlu0 %2547, %v2148
      %v2549 = vpop.permute.xlu0 %2548
      %2550 = vset.pattern.permute.xlu0 0
      %2551 = vperm.xlu0 %2550, %v2149
      %v2552 = vpop.permute.xlu0 %2551
      %2553 = vset.pattern.permute.xlu0 0
      %2554 = vperm.xlu0 %2553, %v2150
      %v2555 = vpop.permute.xlu0 %2554
      %2556 = vset.pattern.permute.xlu0 0
      %2557 = vperm.xlu0 %2556, %v2151
      %v2558 = vpop.permute.xlu0 %2557
      %2559 = vset.pattern.permute.xlu0 0
      %2560 = vperm.xlu0 %2559, %v2152
      %v2561 = vpop.permute.xlu0 %2560
      %v2562 = vlaneseq
      %v2563 = vshrl.u32 %v2562, 7
      %v2564 = vsub.s32 0, %v2563
      %v2565 = vrot.slane %v2153, %v2564
      %v2566 = vlaneseq
      %v2567 = vshrl.u32 %v2566, 7
      %v2568 = vsub.s32 1, %v2567
      %v2569 = vrot.slane %v2153, %v2568
      %vm2570 = vcmp.eq.s32.totalorder %v2156, %v2565
      %vm2571 = vcmp.eq.s32.totalorder %v2156, %v2569
      %vm2572 = vcmp.eq.s32.totalorder %v2159, %v2565
      %vm2573 = vcmp.eq.s32.totalorder %v2159, %v2569
      %vm2574 = vcmp.eq.s32.totalorder %v2162, %v2565
      %vm2575 = vcmp.eq.s32.totalorder %v2162, %v2569
      %vm2576 = vcmp.eq.s32.totalorder %v2165, %v2565
      %vm2577 = vcmp.eq.s32.totalorder %v2165, %v2569
      %vm2578 = vcmp.eq.s32.totalorder %v2168, %v2565
      %vm2579 = vcmp.eq.s32.totalorder %v2168, %v2569
      %vm2580 = vcmp.eq.s32.totalorder %v2171, %v2565
      %vm2581 = vcmp.eq.s32.totalorder %v2171, %v2569
      %vm2582 = vcmp.eq.s32.totalorder %v2174, %v2565
      %vm2583 = vcmp.eq.s32.totalorder %v2174, %v2569
      %vm2584 = vcmp.eq.s32.totalorder %v2177, %v2565
      %vm2585 = vcmp.eq.s32.totalorder %v2177, %v2569
      %vm2586 = vcmp.eq.s32.totalorder %v2180, %v2565
      %vm2587 = vcmp.eq.s32.totalorder %v2180, %v2569
      %vm2588 = vcmp.eq.s32.totalorder %v2183, %v2565
      %vm2589 = vcmp.eq.s32.totalorder %v2183, %v2569
      %vm2590 = vcmp.eq.s32.totalorder %v2186, %v2565
      %vm2591 = vcmp.eq.s32.totalorder %v2186, %v2569
      %vm2592 = vcmp.eq.s32.totalorder %v2189, %v2565
      %vm2593 = vcmp.eq.s32.totalorder %v2189, %v2569
      %vm2594 = vcmp.eq.s32.totalorder %v2192, %v2565
      %vm2595 = vcmp.eq.s32.totalorder %v2192, %v2569
      %vm2596 = vcmp.eq.s32.totalorder %v2195, %v2565
      %vm2597 = vcmp.eq.s32.totalorder %v2195, %v2569
      %vm2598 = vcmp.eq.s32.totalorder %v2198, %v2565
      %vm2599 = vcmp.eq.s32.totalorder %v2198, %v2569
      %vm2600 = vcmp.eq.s32.totalorder %v2201, %v2565
      %vm2601 = vcmp.eq.s32.totalorder %v2201, %v2569
      %vm2602 = vcmp.eq.s32.totalorder %v2204, %v2565
      %vm2603 = vcmp.eq.s32.totalorder %v2204, %v2569
      %vm2604 = vcmp.eq.s32.totalorder %v2207, %v2565
      %vm2605 = vcmp.eq.s32.totalorder %v2207, %v2569
      %vm2606 = vcmp.eq.s32.totalorder %v2210, %v2565
      %vm2607 = vcmp.eq.s32.totalorder %v2210, %v2569
      %vm2608 = vcmp.eq.s32.totalorder %v2213, %v2565
      %vm2609 = vcmp.eq.s32.totalorder %v2213, %v2569
      %vm2610 = vcmp.eq.s32.totalorder %v2216, %v2565
      %vm2611 = vcmp.eq.s32.totalorder %v2216, %v2569
      %vm2612 = vcmp.eq.s32.totalorder %v2219, %v2565
      %vm2613 = vcmp.eq.s32.totalorder %v2219, %v2569
      %vm2614 = vcmp.eq.s32.totalorder %v2222, %v2565
      %vm2615 = vcmp.eq.s32.totalorder %v2222, %v2569
      %vm2616 = vcmp.eq.s32.totalorder %v2225, %v2565
      %vm2617 = vcmp.eq.s32.totalorder %v2225, %v2569
      %vm2618 = vcmp.eq.s32.totalorder %v2228, %v2565
      %vm2619 = vcmp.eq.s32.totalorder %v2228, %v2569
      %vm2620 = vcmp.eq.s32.totalorder %v2231, %v2565
      %vm2621 = vcmp.eq.s32.totalorder %v2231, %v2569
      %vm2622 = vcmp.eq.s32.totalorder %v2234, %v2565
      %vm2623 = vcmp.eq.s32.totalorder %v2234, %v2569
      %vm2624 = vcmp.eq.s32.totalorder %v2237, %v2565
      %vm2625 = vcmp.eq.s32.totalorder %v2237, %v2569
      %vm2626 = vcmp.eq.s32.totalorder %v2240, %v2565
      %vm2627 = vcmp.eq.s32.totalorder %v2240, %v2569
      %vm2628 = vcmp.eq.s32.totalorder %v2243, %v2565
      %vm2629 = vcmp.eq.s32.totalorder %v2243, %v2569
      %vm2630 = vcmp.eq.s32.totalorder %v2246, %v2565
      %vm2631 = vcmp.eq.s32.totalorder %v2246, %v2569
      %vm2632 = vcmp.eq.s32.totalorder %v2249, %v2565
      %vm2633 = vcmp.eq.s32.totalorder %v2249, %v2569
      %vm2634 = vcmp.eq.s32.totalorder %v2252, %v2565
      %vm2635 = vcmp.eq.s32.totalorder %v2252, %v2569
      %vm2636 = vcmp.eq.s32.totalorder %v2255, %v2565
      %vm2637 = vcmp.eq.s32.totalorder %v2255, %v2569
      %vm2638 = vcmp.eq.s32.totalorder %v2258, %v2565
      %vm2639 = vcmp.eq.s32.totalorder %v2258, %v2569
      %vm2640 = vcmp.eq.s32.totalorder %v2261, %v2565
      %vm2641 = vcmp.eq.s32.totalorder %v2261, %v2569
      %vm2642 = vcmp.eq.s32.totalorder %v2264, %v2565
      %vm2643 = vcmp.eq.s32.totalorder %v2264, %v2569
      %vm2644 = vcmp.eq.s32.totalorder %v2267, %v2565
      %vm2645 = vcmp.eq.s32.totalorder %v2267, %v2569
      %vm2646 = vcmp.eq.s32.totalorder %v2270, %v2565
      %vm2647 = vcmp.eq.s32.totalorder %v2270, %v2569
      %vm2648 = vcmp.eq.s32.totalorder %v2273, %v2565
      %vm2649 = vcmp.eq.s32.totalorder %v2273, %v2569
      %vm2650 = vcmp.eq.s32.totalorder %v2276, %v2565
      %vm2651 = vcmp.eq.s32.totalorder %v2276, %v2569
      %vm2652 = vcmp.eq.s32.totalorder %v2279, %v2565
      %vm2653 = vcmp.eq.s32.totalorder %v2279, %v2569
      %vm2654 = vcmp.eq.s32.totalorder %v2282, %v2565
      %vm2655 = vcmp.eq.s32.totalorder %v2282, %v2569
      %vm2656 = vcmp.eq.s32.totalorder %v2285, %v2565
      %vm2657 = vcmp.eq.s32.totalorder %v2285, %v2569
      %vm2658 = vcmp.eq.s32.totalorder %v2288, %v2565
      %vm2659 = vcmp.eq.s32.totalorder %v2288, %v2569
      %vm2660 = vcmp.eq.s32.totalorder %v2291, %v2565
      %vm2661 = vcmp.eq.s32.totalorder %v2291, %v2569
      %vm2662 = vcmp.eq.s32.totalorder %v2294, %v2565
      %vm2663 = vcmp.eq.s32.totalorder %v2294, %v2569
      %vm2664 = vcmp.eq.s32.totalorder %v2297, %v2565
      %vm2665 = vcmp.eq.s32.totalorder %v2297, %v2569
      %vm2666 = vcmp.eq.s32.totalorder %v2300, %v2565
      %vm2667 = vcmp.eq.s32.totalorder %v2300, %v2569
      %vm2668 = vcmp.eq.s32.totalorder %v2303, %v2565
      %vm2669 = vcmp.eq.s32.totalorder %v2303, %v2569
      %vm2670 = vcmp.eq.s32.totalorder %v2306, %v2565
      %vm2671 = vcmp.eq.s32.totalorder %v2306, %v2569
      %vm2672 = vcmp.eq.s32.totalorder %v2309, %v2565
      %vm2673 = vcmp.eq.s32.totalorder %v2309, %v2569
      %vm2674 = vcmp.eq.s32.totalorder %v2312, %v2565
      %vm2675 = vcmp.eq.s32.totalorder %v2312, %v2569
      %vm2676 = vcmp.eq.s32.totalorder %v2315, %v2565
      %vm2677 = vcmp.eq.s32.totalorder %v2315, %v2569
      %vm2678 = vcmp.eq.s32.totalorder %v2318, %v2565
      %vm2679 = vcmp.eq.s32.totalorder %v2318, %v2569
      %vm2680 = vcmp.eq.s32.totalorder %v2321, %v2565
      %vm2681 = vcmp.eq.s32.totalorder %v2321, %v2569
      %vm2682 = vcmp.eq.s32.totalorder %v2324, %v2565
      %vm2683 = vcmp.eq.s32.totalorder %v2324, %v2569
      %vm2684 = vcmp.eq.s32.totalorder %v2327, %v2565
      %vm2685 = vcmp.eq.s32.totalorder %v2327, %v2569
      %vm2686 = vcmp.eq.s32.totalorder %v2330, %v2565
      %vm2687 = vcmp.eq.s32.totalorder %v2330, %v2569
      %vm2688 = vcmp.eq.s32.totalorder %v2333, %v2565
      %vm2689 = vcmp.eq.s32.totalorder %v2333, %v2569
      %vm2690 = vcmp.eq.s32.totalorder %v2336, %v2565
      %vm2691 = vcmp.eq.s32.totalorder %v2336, %v2569
      %vm2692 = vcmp.eq.s32.totalorder %v2339, %v2565
      %vm2693 = vcmp.eq.s32.totalorder %v2339, %v2569
      %vm2694 = vcmp.eq.s32.totalorder %v2342, %v2565
      %vm2695 = vcmp.eq.s32.totalorder %v2342, %v2569
      %vm2696 = vcmp.eq.s32.totalorder %v2345, %v2565
      %vm2697 = vcmp.eq.s32.totalorder %v2345, %v2569
      %vm2698 = vcmp.eq.s32.totalorder %v2348, %v2565
      %vm2699 = vcmp.eq.s32.totalorder %v2348, %v2569
      %vm2700 = vcmp.eq.s32.totalorder %v2351, %v2565
      %vm2701 = vcmp.eq.s32.totalorder %v2351, %v2569
      %vm2702 = vcmp.eq.s32.totalorder %v2354, %v2565
      %vm2703 = vcmp.eq.s32.totalorder %v2354, %v2569
      %vm2704 = vcmp.eq.s32.totalorder %v2357, %v2565
      %vm2705 = vcmp.eq.s32.totalorder %v2357, %v2569
      %vm2706 = vcmp.eq.s32.totalorder %v2360, %v2565
      %vm2707 = vcmp.eq.s32.totalorder %v2360, %v2569
      %vm2708 = vcmp.eq.s32.totalorder %v2363, %v2565
      %vm2709 = vcmp.eq.s32.totalorder %v2363, %v2569
      %vm2710 = vcmp.eq.s32.totalorder %v2366, %v2565
      %vm2711 = vcmp.eq.s32.totalorder %v2366, %v2569
      %vm2712 = vcmp.eq.s32.totalorder %v2369, %v2565
      %vm2713 = vcmp.eq.s32.totalorder %v2369, %v2569
      %vm2714 = vcmp.eq.s32.totalorder %v2372, %v2565
      %vm2715 = vcmp.eq.s32.totalorder %v2372, %v2569
      %vm2716 = vcmp.eq.s32.totalorder %v2375, %v2565
      %vm2717 = vcmp.eq.s32.totalorder %v2375, %v2569
      %vm2718 = vcmp.eq.s32.totalorder %v2378, %v2565
      %vm2719 = vcmp.eq.s32.totalorder %v2378, %v2569
      %vm2720 = vcmp.eq.s32.totalorder %v2381, %v2565
      %vm2721 = vcmp.eq.s32.totalorder %v2381, %v2569
      %vm2722 = vcmp.eq.s32.totalorder %v2384, %v2565
      %vm2723 = vcmp.eq.s32.totalorder %v2384, %v2569
      %vm2724 = vcmp.eq.s32.totalorder %v2387, %v2565
      %vm2725 = vcmp.eq.s32.totalorder %v2387, %v2569
      %vm2726 = vcmp.eq.s32.totalorder %v2390, %v2565
      %vm2727 = vcmp.eq.s32.totalorder %v2390, %v2569
      %vm2728 = vcmp.eq.s32.totalorder %v2393, %v2565
      %vm2729 = vcmp.eq.s32.totalorder %v2393, %v2569
      %vm2730 = vcmp.eq.s32.totalorder %v2396, %v2565
      %vm2731 = vcmp.eq.s32.totalorder %v2396, %v2569
      %vm2732 = vcmp.eq.s32.totalorder %v2399, %v2565
      %vm2733 = vcmp.eq.s32.totalorder %v2399, %v2569
      %vm2734 = vcmp.eq.s32.totalorder %v2402, %v2565
      %vm2735 = vcmp.eq.s32.totalorder %v2402, %v2569
      %vm2736 = vcmp.eq.s32.totalorder %v2405, %v2565
      %vm2737 = vcmp.eq.s32.totalorder %v2405, %v2569
      %vm2738 = vcmp.eq.s32.totalorder %v2408, %v2565
      %vm2739 = vcmp.eq.s32.totalorder %v2408, %v2569
      %vm2740 = vcmp.eq.s32.totalorder %v2411, %v2565
      %vm2741 = vcmp.eq.s32.totalorder %v2411, %v2569
      %vm2742 = vcmp.eq.s32.totalorder %v2414, %v2565
      %vm2743 = vcmp.eq.s32.totalorder %v2414, %v2569
      %vm2744 = vcmp.eq.s32.totalorder %v2417, %v2565
      %vm2745 = vcmp.eq.s32.totalorder %v2417, %v2569
      %vm2746 = vcmp.eq.s32.totalorder %v2420, %v2565
      %vm2747 = vcmp.eq.s32.totalorder %v2420, %v2569
      %vm2748 = vcmp.eq.s32.totalorder %v2423, %v2565
      %vm2749 = vcmp.eq.s32.totalorder %v2423, %v2569
      %vm2750 = vcmp.eq.s32.totalorder %v2426, %v2565
      %vm2751 = vcmp.eq.s32.totalorder %v2426, %v2569
      %vm2752 = vcmp.eq.s32.totalorder %v2429, %v2565
      %vm2753 = vcmp.eq.s32.totalorder %v2429, %v2569
      %vm2754 = vcmp.eq.s32.totalorder %v2432, %v2565
      %vm2755 = vcmp.eq.s32.totalorder %v2432, %v2569
      %vm2756 = vcmp.eq.s32.totalorder %v2435, %v2565
      %vm2757 = vcmp.eq.s32.totalorder %v2435, %v2569
      %vm2758 = vcmp.eq.s32.totalorder %v2438, %v2565
      %vm2759 = vcmp.eq.s32.totalorder %v2438, %v2569
      %vm2760 = vcmp.eq.s32.totalorder %v2441, %v2565
      %vm2761 = vcmp.eq.s32.totalorder %v2441, %v2569
      %vm2762 = vcmp.eq.s32.totalorder %v2444, %v2565
      %vm2763 = vcmp.eq.s32.totalorder %v2444, %v2569
      %vm2764 = vcmp.eq.s32.totalorder %v2447, %v2565
      %vm2765 = vcmp.eq.s32.totalorder %v2447, %v2569
      %vm2766 = vcmp.eq.s32.totalorder %v2450, %v2565
      %vm2767 = vcmp.eq.s32.totalorder %v2450, %v2569
      %vm2768 = vcmp.eq.s32.totalorder %v2453, %v2565
      %vm2769 = vcmp.eq.s32.totalorder %v2453, %v2569
      %vm2770 = vcmp.eq.s32.totalorder %v2456, %v2565
      %vm2771 = vcmp.eq.s32.totalorder %v2456, %v2569
      %vm2772 = vcmp.eq.s32.totalorder %v2459, %v2565
      %vm2773 = vcmp.eq.s32.totalorder %v2459, %v2569
      %vm2774 = vcmp.eq.s32.totalorder %v2462, %v2565
      %vm2775 = vcmp.eq.s32.totalorder %v2462, %v2569
      %vm2776 = vcmp.eq.s32.totalorder %v2465, %v2565
      %vm2777 = vcmp.eq.s32.totalorder %v2465, %v2569
      %vm2778 = vcmp.eq.s32.totalorder %v2468, %v2565
      %vm2779 = vcmp.eq.s32.totalorder %v2468, %v2569
      %vm2780 = vcmp.eq.s32.totalorder %v2471, %v2565
      %vm2781 = vcmp.eq.s32.totalorder %v2471, %v2569
      %vm2782 = vcmp.eq.s32.totalorder %v2474, %v2565
      %vm2783 = vcmp.eq.s32.totalorder %v2474, %v2569
      %vm2784 = vcmp.eq.s32.totalorder %v2477, %v2565
      %vm2785 = vcmp.eq.s32.totalorder %v2477, %v2569
      %vm2786 = vcmp.eq.s32.totalorder %v2480, %v2565
      %vm2787 = vcmp.eq.s32.totalorder %v2480, %v2569
      %vm2788 = vcmp.eq.s32.totalorder %v2483, %v2565
      %vm2789 = vcmp.eq.s32.totalorder %v2483, %v2569
      %vm2790 = vcmp.eq.s32.totalorder %v2486, %v2565
      %vm2791 = vcmp.eq.s32.totalorder %v2486, %v2569
      %vm2792 = vcmp.eq.s32.totalorder %v2489, %v2565
      %vm2793 = vcmp.eq.s32.totalorder %v2489, %v2569
      %vm2794 = vcmp.eq.s32.totalorder %v2492, %v2565
      %vm2795 = vcmp.eq.s32.totalorder %v2492, %v2569
      %vm2796 = vcmp.eq.s32.totalorder %v2495, %v2565
      %vm2797 = vcmp.eq.s32.totalorder %v2495, %v2569
      %vm2798 = vcmp.eq.s32.totalorder %v2498, %v2565
      %vm2799 = vcmp.eq.s32.totalorder %v2498, %v2569
      %vm2800 = vcmp.eq.s32.totalorder %v2501, %v2565
      %vm2801 = vcmp.eq.s32.totalorder %v2501, %v2569
      %vm2802 = vcmp.eq.s32.totalorder %v2504, %v2565
      %vm2803 = vcmp.eq.s32.totalorder %v2504, %v2569
      %vm2804 = vcmp.eq.s32.totalorder %v2507, %v2565
      %vm2805 = vcmp.eq.s32.totalorder %v2507, %v2569
      %vm2806 = vcmp.eq.s32.totalorder %v2510, %v2565
      %vm2807 = vcmp.eq.s32.totalorder %v2510, %v2569
      %vm2808 = vcmp.eq.s32.totalorder %v2513, %v2565
      %vm2809 = vcmp.eq.s32.totalorder %v2513, %v2569
      %vm2810 = vcmp.eq.s32.totalorder %v2516, %v2565
      %vm2811 = vcmp.eq.s32.totalorder %v2516, %v2569
      %vm2812 = vcmp.eq.s32.totalorder %v2519, %v2565
      %vm2813 = vcmp.eq.s32.totalorder %v2519, %v2569
      %vm2814 = vcmp.eq.s32.totalorder %v2522, %v2565
      %vm2815 = vcmp.eq.s32.totalorder %v2522, %v2569
      %vm2816 = vcmp.eq.s32.totalorder %v2525, %v2565
      %vm2817 = vcmp.eq.s32.totalorder %v2525, %v2569
      %vm2818 = vcmp.eq.s32.totalorder %v2528, %v2565
      %vm2819 = vcmp.eq.s32.totalorder %v2528, %v2569
      %vm2820 = vcmp.eq.s32.totalorder %v2531, %v2565
      %vm2821 = vcmp.eq.s32.totalorder %v2531, %v2569
      %vm2822 = vcmp.eq.s32.totalorder %v2534, %v2565
      %vm2823 = vcmp.eq.s32.totalorder %v2534, %v2569
      %vm2824 = vcmp.eq.s32.totalorder %v2537, %v2565
      %vm2825 = vcmp.eq.s32.totalorder %v2537, %v2569
      %vm2826 = vcmp.eq.s32.totalorder %v2540, %v2565
      %vm2827 = vcmp.eq.s32.totalorder %v2540, %v2569
      %vm2828 = vcmp.eq.s32.totalorder %v2543, %v2565
      %vm2829 = vcmp.eq.s32.totalorder %v2543, %v2569
      %vm2830 = vcmp.eq.s32.totalorder %v2546, %v2565
      %vm2831 = vcmp.eq.s32.totalorder %v2546, %v2569
      %vm2832 = vcmp.eq.s32.totalorder %v2549, %v2565
      %vm2833 = vcmp.eq.s32.totalorder %v2549, %v2569
      %vm2834 = vcmp.eq.s32.totalorder %v2552, %v2565
      %vm2835 = vcmp.eq.s32.totalorder %v2552, %v2569
      %vm2836 = vcmp.eq.s32.totalorder %v2555, %v2565
      %vm2837 = vcmp.eq.s32.totalorder %v2555, %v2569
      %vm2838 = vcmp.eq.s32.totalorder %v2558, %v2565
      %vm2839 = vcmp.eq.s32.totalorder %v2558, %v2569
      %vm2840 = vcmp.eq.s32.totalorder %v2561, %v2565
      %vm2841 = vcmp.eq.s32.totalorder %v2561, %v2569
      %v2842 = vsel %vm2570, %v1339, -1e+30
      %v2843 = vsel %vm2571, %v1341, -1e+30
      %v2844 = vsel %vm2572, %v1343, -1e+30
      %v2845 = vsel %vm2573, %v1345, -1e+30
      %v2846 = vsel %vm2574, %v1349, -1e+30
      %v2847 = vsel %vm2575, %v1351, -1e+30
      %v2848 = vsel %vm2576, %v1353, -1e+30
      %v2849 = vsel %vm2577, %v1355, -1e+30
      %v2850 = vsel %vm2578, %v1359, -1e+30
      %v2851 = vsel %vm2579, %v1361, -1e+30
      %v2852 = vsel %vm2580, %v1363, -1e+30
      %v2853 = vsel %vm2581, %v1365, -1e+30
      %v2854 = vsel %vm2582, %v1369, -1e+30
      %v2855 = vsel %vm2583, %v1371, -1e+30
      %v2856 = vsel %vm2584, %v1373, -1e+30
      %v2857 = vsel %vm2585, %v1375, -1e+30
      %v2858 = vsel %vm2586, %v1379, -1e+30
      %v2859 = vsel %vm2587, %v1381, -1e+30
      %v2860 = vsel %vm2588, %v1383, -1e+30
      %v2861 = vsel %vm2589, %v1385, -1e+30
      %v2862 = vsel %vm2590, %v1389, -1e+30
      %v2863 = vsel %vm2591, %v1391, -1e+30
      %v2864 = vsel %vm2592, %v1393, -1e+30
      %v2865 = vsel %vm2593, %v1395, -1e+30
      %v2866 = vsel %vm2594, %v1399, -1e+30
      %v2867 = vsel %vm2595, %v1401, -1e+30
      %v2868 = vsel %vm2596, %v1403, -1e+30
      %v2869 = vsel %vm2597, %v1405, -1e+30
      %v2870 = vsel %vm2598, %v1409, -1e+30
      %v2871 = vsel %vm2599, %v1411, -1e+30
      %v2872 = vsel %vm2600, %v1413, -1e+30
      %v2873 = vsel %vm2601, %v1415, -1e+30
      %v2874 = vsel %vm2602, %v1419, -1e+30
      %v2875 = vsel %vm2603, %v1421, -1e+30
      %v2876 = vsel %vm2604, %v1423, -1e+30
      %v2877 = vsel %vm2605, %v1425, -1e+30
      %v2878 = vsel %vm2606, %v1429, -1e+30
      %v2879 = vsel %vm2607, %v1431, -1e+30
      %v2880 = vsel %vm2608, %v1433, -1e+30
      %v2881 = vsel %vm2609, %v1435, -1e+30
      %v2882 = vsel %vm2610, %v1439, -1e+30
      %v2883 = vsel %vm2611, %v1441, -1e+30
      %v2884 = vsel %vm2612, %v1443, -1e+30
      %v2885 = vsel %vm2613, %v1445, -1e+30
      %v2886 = vsel %vm2614, %v1449, -1e+30
      %v2887 = vsel %vm2615, %v1451, -1e+30
      %v2888 = vsel %vm2616, %v1453, -1e+30
      %v2889 = vsel %vm2617, %v1455, -1e+30
      %v2890 = vsel %vm2618, %v1459, -1e+30
      %v2891 = vsel %vm2619, %v1461, -1e+30
      %v2892 = vsel %vm2620, %v1463, -1e+30
      %v2893 = vsel %vm2621, %v1465, -1e+30
      %v2894 = vsel %vm2622, %v1469, -1e+30
      %v2895 = vsel %vm2623, %v1471, -1e+30
      %v2896 = vsel %vm2624, %v1473, -1e+30
      %v2897 = vsel %vm2625, %v1475, -1e+30
      %v2898 = vsel %vm2626, %v1479, -1e+30
      %v2899 = vsel %vm2627, %v1481, -1e+30
      %v2900 = vsel %vm2628, %v1483, -1e+30
      %v2901 = vsel %vm2629, %v1485, -1e+30
      %v2902 = vsel %vm2630, %v1489, -1e+30
      %v2903 = vsel %vm2631, %v1491, -1e+30
      %v2904 = vsel %vm2632, %v1493, -1e+30
      %v2905 = vsel %vm2633, %v1495, -1e+30
      %v2906 = vsel %vm2634, %v1499, -1e+30
      %v2907 = vsel %vm2635, %v1501, -1e+30
      %v2908 = vsel %vm2636, %v1503, -1e+30
      %v2909 = vsel %vm2637, %v1505, -1e+30
      %v2910 = vsel %vm2638, %v1509, -1e+30
      %v2911 = vsel %vm2639, %v1511, -1e+30
      %v2912 = vsel %vm2640, %v1513, -1e+30
      %v2913 = vsel %vm2641, %v1515, -1e+30
      %v2914 = vsel %vm2642, %v1519, -1e+30
      %v2915 = vsel %vm2643, %v1521, -1e+30
      %v2916 = vsel %vm2644, %v1523, -1e+30
      %v2917 = vsel %vm2645, %v1525, -1e+30
      %v2918 = vsel %vm2646, %v1529, -1e+30
      %v2919 = vsel %vm2647, %v1531, -1e+30
      %v2920 = vsel %vm2648, %v1533, -1e+30
      %v2921 = vsel %vm2649, %v1535, -1e+30
      %v2922 = vsel %vm2650, %v1539, -1e+30
      %v2923 = vsel %vm2651, %v1541, -1e+30
      %v2924 = vsel %vm2652, %v1543, -1e+30
      %v2925 = vsel %vm2653, %v1545, -1e+30
      %v2926 = vsel %vm2654, %v1549, -1e+30
      %v2927 = vsel %vm2655, %v1551, -1e+30
      %v2928 = vsel %vm2656, %v1553, -1e+30
      %v2929 = vsel %vm2657, %v1555, -1e+30
      %v2930 = vsel %vm2658, %v1559, -1e+30
      %v2931 = vsel %vm2659, %v1561, -1e+30
      %v2932 = vsel %vm2660, %v1563, -1e+30
      %v2933 = vsel %vm2661, %v1565, -1e+30
      %v2934 = vsel %vm2662, %v1569, -1e+30
      %v2935 = vsel %vm2663, %v1571, -1e+30
      %v2936 = vsel %vm2664, %v1573, -1e+30
      %v2937 = vsel %vm2665, %v1575, -1e+30
      %v2938 = vsel %vm2666, %v1579, -1e+30
      %v2939 = vsel %vm2667, %v1581, -1e+30
      %v2940 = vsel %vm2668, %v1583, -1e+30
      %v2941 = vsel %vm2669, %v1585, -1e+30
      %v2942 = vsel %vm2670, %v1589, -1e+30
      %v2943 = vsel %vm2671, %v1591, -1e+30
      %v2944 = vsel %vm2672, %v1593, -1e+30
      %v2945 = vsel %vm2673, %v1595, -1e+30
      %v2946 = vsel %vm2674, %v1599, -1e+30
      %v2947 = vsel %vm2675, %v1601, -1e+30
      %v2948 = vsel %vm2676, %v1603, -1e+30
      %v2949 = vsel %vm2677, %v1605, -1e+30
      %v2950 = vsel %vm2678, %v1609, -1e+30
      %v2951 = vsel %vm2679, %v1611, -1e+30
      %v2952 = vsel %vm2680, %v1613, -1e+30
      %v2953 = vsel %vm2681, %v1615, -1e+30
      %v2954 = vsel %vm2682, %v1619, -1e+30
      %v2955 = vsel %vm2683, %v1621, -1e+30
      %v2956 = vsel %vm2684, %v1623, -1e+30
      %v2957 = vsel %vm2685, %v1625, -1e+30
      %v2958 = vsel %vm2686, %v1629, -1e+30
      %v2959 = vsel %vm2687, %v1631, -1e+30
      %v2960 = vsel %vm2688, %v1633, -1e+30
      %v2961 = vsel %vm2689, %v1635, -1e+30
      %v2962 = vsel %vm2690, %v1639, -1e+30
      %v2963 = vsel %vm2691, %v1641, -1e+30
      %v2964 = vsel %vm2692, %v1643, -1e+30
      %v2965 = vsel %vm2693, %v1645, -1e+30
      %v2966 = vsel %vm2694, %v1649, -1e+30
      %v2967 = vsel %vm2695, %v1651, -1e+30
      %v2968 = vsel %vm2696, %v1653, -1e+30
      %v2969 = vsel %vm2697, %v1655, -1e+30
      %v2970 = vsel %vm2698, %v1659, -1e+30
      %v2971 = vsel %vm2699, %v1661, -1e+30
      %v2972 = vsel %vm2700, %v1663, -1e+30
      %v2973 = vsel %vm2701, %v1665, -1e+30
      %v2974 = vsel %vm2702, %v1669, -1e+30
      %v2975 = vsel %vm2703, %v1671, -1e+30
      %v2976 = vsel %vm2704, %v1673, -1e+30
      %v2977 = vsel %vm2705, %v1675, -1e+30
      %v2978 = vsel %vm2706, %v1679, -1e+30
      %v2979 = vsel %vm2707, %v1681, -1e+30
      %v2980 = vsel %vm2708, %v1683, -1e+30
      %v2981 = vsel %vm2709, %v1685, -1e+30
      %v2982 = vsel %vm2710, %v1689, -1e+30
      %v2983 = vsel %vm2711, %v1691, -1e+30
      %v2984 = vsel %vm2712, %v1693, -1e+30
      %v2985 = vsel %vm2713, %v1695, -1e+30
      %v2986 = vsel %vm2714, %v1699, -1e+30
      %v2987 = vsel %vm2715, %v1701, -1e+30
      %v2988 = vsel %vm2716, %v1703, -1e+30
      %v2989 = vsel %vm2717, %v1705, -1e+30
      %v2990 = vsel %vm2718, %v1709, -1e+30
      %v2991 = vsel %vm2719, %v1711, -1e+30
      %v2992 = vsel %vm2720, %v1713, -1e+30
      %v2993 = vsel %vm2721, %v1715, -1e+30
      %v2994 = vsel %vm2722, %v1719, -1e+30
      %v2995 = vsel %vm2723, %v1721, -1e+30
      %v2996 = vsel %vm2724, %v1723, -1e+30
      %v2997 = vsel %vm2725, %v1725, -1e+30
      %v2998 = vsel %vm2726, %v1729, -1e+30
      %v2999 = vsel %vm2727, %v1731, -1e+30
      %v3000 = vsel %vm2728, %v1733, -1e+30
      %v3001 = vsel %vm2729, %v1735, -1e+30
      %v3002 = vsel %vm2730, %v1739, -1e+30
      %v3003 = vsel %vm2731, %v1741, -1e+30
      %v3004 = vsel %vm2732, %v1743, -1e+30
      %v3005 = vsel %vm2733, %v1745, -1e+30
      %v3006 = vsel %vm2734, %v1749, -1e+30
      %v3007 = vsel %vm2735, %v1751, -1e+30
      %v3008 = vsel %vm2736, %v1753, -1e+30
      %v3009 = vsel %vm2737, %v1755, -1e+30
      %v3010 = vsel %vm2738, %v1759, -1e+30
      %v3011 = vsel %vm2739, %v1761, -1e+30
      %v3012 = vsel %vm2740, %v1763, -1e+30
      %v3013 = vsel %vm2741, %v1765, -1e+30
      %v3014 = vsel %vm2742, %v1769, -1e+30
      %v3015 = vsel %vm2743, %v1771, -1e+30
      %v3016 = vsel %vm2744, %v1773, -1e+30
      %v3017 = vsel %vm2745, %v1775, -1e+30
      %v3018 = vsel %vm2746, %v1779, -1e+30
      %v3019 = vsel %vm2747, %v1781, -1e+30
      %v3020 = vsel %vm2748, %v1783, -1e+30
      %v3021 = vsel %vm2749, %v1785, -1e+30
      %v3022 = vsel %vm2750, %v1789, -1e+30
      %v3023 = vsel %vm2751, %v1791, -1e+30
      %v3024 = vsel %vm2752, %v1793, -1e+30
      %v3025 = vsel %vm2753, %v1795, -1e+30
      %v3026 = vsel %vm2754, %v1799, -1e+30
      %v3027 = vsel %vm2755, %v1801, -1e+30
      %v3028 = vsel %vm2756, %v1803, -1e+30
      %v3029 = vsel %vm2757, %v1805, -1e+30
      %v3030 = vsel %vm2758, %v1809, -1e+30
      %v3031 = vsel %vm2759, %v1811, -1e+30
      %v3032 = vsel %vm2760, %v1813, -1e+30
      %v3033 = vsel %vm2761, %v1815, -1e+30
      %v3034 = vsel %vm2762, %v1819, -1e+30
      %v3035 = vsel %vm2763, %v1821, -1e+30
      %v3036 = vsel %vm2764, %v1823, -1e+30
      %v3037 = vsel %vm2765, %v1825, -1e+30
      %v3038 = vsel %vm2766, %v1829, -1e+30
      %v3039 = vsel %vm2767, %v1831, -1e+30
      %v3040 = vsel %vm2768, %v1833, -1e+30
      %v3041 = vsel %vm2769, %v1835, -1e+30
      %v3042 = vsel %vm2770, %v1839, -1e+30
      %v3043 = vsel %vm2771, %v1841, -1e+30
      %v3044 = vsel %vm2772, %v1843, -1e+30
      %v3045 = vsel %vm2773, %v1845, -1e+30
      %v3046 = vsel %vm2774, %v1849, -1e+30
      %v3047 = vsel %vm2775, %v1851, -1e+30
      %v3048 = vsel %vm2776, %v1853, -1e+30
      %v3049 = vsel %vm2777, %v1855, -1e+30
      %v3050 = vsel %vm2778, %v1859, -1e+30
      %v3051 = vsel %vm2779, %v1861, -1e+30
      %v3052 = vsel %vm2780, %v1863, -1e+30
      %v3053 = vsel %vm2781, %v1865, -1e+30
      %v3054 = vsel %vm2782, %v1869, -1e+30
      %v3055 = vsel %vm2783, %v1871, -1e+30
      %v3056 = vsel %vm2784, %v1873, -1e+30
      %v3057 = vsel %vm2785, %v1875, -1e+30
      %v3058 = vsel %vm2786, %v1879, -1e+30
      %v3059 = vsel %vm2787, %v1881, -1e+30
      %v3060 = vsel %vm2788, %v1883, -1e+30
      %v3061 = vsel %vm2789, %v1885, -1e+30
      %v3062 = vsel %vm2790, %v1889, -1e+30
      %v3063 = vsel %vm2791, %v1891, -1e+30
      %v3064 = vsel %vm2792, %v1893, -1e+30
      %v3065 = vsel %vm2793, %v1895, -1e+30
      %v3066 = vsel %vm2794, %v1899, -1e+30
      %v3067 = vsel %vm2795, %v1901, -1e+30
      %v3068 = vsel %vm2796, %v1903, -1e+30
      %v3069 = vsel %vm2797, %v1905, -1e+30
      %v3070 = vsel %vm2798, %v1909, -1e+30
      %v3071 = vsel %vm2799, %v1911, -1e+30
      %v3072 = vsel %vm2800, %v1913, -1e+30
      %v3073 = vsel %vm2801, %v1915, -1e+30
      %v3074 = vsel %vm2802, %v1919, -1e+30
      %v3075 = vsel %vm2803, %v1921, -1e+30
      %v3076 = vsel %vm2804, %v1923, -1e+30
      %v3077 = vsel %vm2805, %v1925, -1e+30
      %v3078 = vsel %vm2806, %v1929, -1e+30
      %v3079 = vsel %vm2807, %v1931, -1e+30
      %v3080 = vsel %vm2808, %v1933, -1e+30
      %v3081 = vsel %vm2809, %v1935, -1e+30
      %v3082 = vsel %vm2810, %v1939, -1e+30
      %v3083 = vsel %vm2811, %v1941, -1e+30
      %v3084 = vsel %vm2812, %v1943, -1e+30
      %v3085 = vsel %vm2813, %v1945, -1e+30
      %v3086 = vsel %vm2814, %v1949, -1e+30
      %v3087 = vsel %vm2815, %v1951, -1e+30
      %v3088 = vsel %vm2816, %v1953, -1e+30
      %v3089 = vsel %vm2817, %v1955, -1e+30
      %v3090 = vsel %vm2818, %v1959, -1e+30
      %v3091 = vsel %vm2819, %v1961, -1e+30
      %v3092 = vsel %vm2820, %v1963, -1e+30
      %v3093 = vsel %vm2821, %v1965, -1e+30
      %v3094 = vsel %vm2822, %v1969, -1e+30
      %v3095 = vsel %vm2823, %v1971, -1e+30
      %v3096 = vsel %vm2824, %v1973, -1e+30
      %v3097 = vsel %vm2825, %v1975, -1e+30
      %v3098 = vsel %vm2826, %v1979, -1e+30
      %v3099 = vsel %vm2827, %v1981, -1e+30
      %v3100 = vsel %vm2828, %v1983, -1e+30
      %v3101 = vsel %vm2829, %v1985, -1e+30
      %v3102 = vsel %vm2830, %v1989, -1e+30
      %v3103 = vsel %vm2831, %v1991, -1e+30
      %v3104 = vsel %vm2832, %v1993, -1e+30
      %v3105 = vsel %vm2833, %v1995, -1e+30
      %v3106 = vsel %vm2834, %v1999, -1e+30
      %v3107 = vsel %vm2835, %v2001, -1e+30
      %v3108 = vsel %vm2836, %v2003, -1e+30
      %v3109 = vsel %vm2837, %v2005, -1e+30
      %v3110 = vsel %vm2838, %v2009, -1e+30
      %v3111 = vsel %vm2839, %v2011, -1e+30
      %v3112 = vsel %vm2840, %v2013, -1e+30
      %v3113 = vsel %vm2841, %v2015, -1e+30
      %vm3114 = vcmask 64512
      %v3115 = vsel %vm3114, %v2843, -inf
      %v3116 = vmax.f32 %v2842, %v3115
      %3117 = vmax.xlane.f32.xlu0 %v3116
      %v3118 = vpop.xlane.xlu0 %3117
      %v3119 = vsel %vm3114, %v2845, -inf
      %v3120 = vmax.f32 %v2844, %v3119
      %3121 = vmax.xlane.f32.xlu0 %v3120
      %v3122 = vpop.xlane.xlu0 %3121
      %v3123 = vsel %vm3114, %v2847, -inf
      %v3124 = vmax.f32 %v2846, %v3123
      %3125 = vmax.xlane.f32.xlu0 %v3124
      %v3126 = vpop.xlane.xlu0 %3125
      %v3127 = vsel %vm3114, %v2849, -inf
      %v3128 = vmax.f32 %v2848, %v3127
      %3129 = vmax.xlane.f32.xlu0 %v3128
      %v3130 = vpop.xlane.xlu0 %3129
      %v3131 = vsel %vm3114, %v2851, -inf
      %v3132 = vmax.f32 %v2850, %v3131
      %3133 = vmax.xlane.f32.xlu0 %v3132
      %v3134 = vpop.xlane.xlu0 %3133
      %v3135 = vsel %vm3114, %v2853, -inf
      %v3136 = vmax.f32 %v2852, %v3135
      %3137 = vmax.xlane.f32.xlu0 %v3136
      %v3138 = vpop.xlane.xlu0 %3137
      %v3139 = vsel %vm3114, %v2855, -inf
      %v3140 = vmax.f32 %v2854, %v3139
      %3141 = vmax.xlane.f32.xlu0 %v3140
      %v3142 = vpop.xlane.xlu0 %3141
      %v3143 = vsel %vm3114, %v2857, -inf
      %v3144 = vmax.f32 %v2856, %v3143
      %3145 = vmax.xlane.f32.xlu0 %v3144
      %v3146 = vpop.xlane.xlu0 %3145
      %v3147 = vsel %vm3114, %v2859, -inf
      %v3148 = vmax.f32 %v2858, %v3147
      %3149 = vmax.xlane.f32.xlu0 %v3148
      %v3150 = vpop.xlane.xlu0 %3149
      %v3151 = vsel %vm3114, %v2861, -inf
      %v3152 = vmax.f32 %v2860, %v3151
      %3153 = vmax.xlane.f32.xlu0 %v3152
      %v3154 = vpop.xlane.xlu0 %3153
      %v3155 = vsel %vm3114, %v2863, -inf
      %v3156 = vmax.f32 %v2862, %v3155
      %3157 = vmax.xlane.f32.xlu0 %v3156
      %v3158 = vpop.xlane.xlu0 %3157
      %v3159 = vsel %vm3114, %v2865, -inf
      %v3160 = vmax.f32 %v2864, %v3159
      %3161 = vmax.xlane.f32.xlu0 %v3160
      %v3162 = vpop.xlane.xlu0 %3161
      %v3163 = vsel %vm3114, %v2867, -inf
      %v3164 = vmax.f32 %v2866, %v3163
      %3165 = vmax.xlane.f32.xlu0 %v3164
      %v3166 = vpop.xlane.xlu0 %3165
      %v3167 = vsel %vm3114, %v2869, -inf
      %v3168 = vmax.f32 %v2868, %v3167
      %3169 = vmax.xlane.f32.xlu0 %v3168
      %v3170 = vpop.xlane.xlu0 %3169
      %v3171 = vsel %vm3114, %v2871, -inf
      %v3172 = vmax.f32 %v2870, %v3171
      %3173 = vmax.xlane.f32.xlu0 %v3172
      %v3174 = vpop.xlane.xlu0 %3173
      %v3175 = vsel %vm3114, %v2873, -inf
      %v3176 = vmax.f32 %v2872, %v3175
      %3177 = vmax.xlane.f32.xlu0 %v3176
      %v3178 = vpop.xlane.xlu0 %3177
      %v3179 = vsel %vm3114, %v2875, -inf
      %v3180 = vmax.f32 %v2874, %v3179
      %3181 = vmax.xlane.f32.xlu0 %v3180
      %v3182 = vpop.xlane.xlu0 %3181
      %v3183 = vsel %vm3114, %v2877, -inf
      %v3184 = vmax.f32 %v2876, %v3183
      %3185 = vmax.xlane.f32.xlu0 %v3184
      %v3186 = vpop.xlane.xlu0 %3185
      %v3187 = vsel %vm3114, %v2879, -inf
      %v3188 = vmax.f32 %v2878, %v3187
      %3189 = vmax.xlane.f32.xlu0 %v3188
      %v3190 = vpop.xlane.xlu0 %3189
      %v3191 = vsel %vm3114, %v2881, -inf
      %v3192 = vmax.f32 %v2880, %v3191
      %3193 = vmax.xlane.f32.xlu0 %v3192
      %v3194 = vpop.xlane.xlu0 %3193
      %v3195 = vsel %vm3114, %v2883, -inf
      %v3196 = vmax.f32 %v2882, %v3195
      %3197 = vmax.xlane.f32.xlu0 %v3196
      %v3198 = vpop.xlane.xlu0 %3197
      %v3199 = vsel %vm3114, %v2885, -inf
      %v3200 = vmax.f32 %v2884, %v3199
      %3201 = vmax.xlane.f32.xlu0 %v3200
      %v3202 = vpop.xlane.xlu0 %3201
      %v3203 = vsel %vm3114, %v2887, -inf
      %v3204 = vmax.f32 %v2886, %v3203
      %3205 = vmax.xlane.f32.xlu0 %v3204
      %v3206 = vpop.xlane.xlu0 %3205
      %v3207 = vsel %vm3114, %v2889, -inf
      %v3208 = vmax.f32 %v2888, %v3207
      %3209 = vmax.xlane.f32.xlu0 %v3208
      %v3210 = vpop.xlane.xlu0 %3209
      %v3211 = vsel %vm3114, %v2891, -inf
      %v3212 = vmax.f32 %v2890, %v3211
      %3213 = vmax.xlane.f32.xlu0 %v3212
      %v3214 = vpop.xlane.xlu0 %3213
      %v3215 = vsel %vm3114, %v2893, -inf
      %v3216 = vmax.f32 %v2892, %v3215
      %3217 = vmax.xlane.f32.xlu0 %v3216
      %v3218 = vpop.xlane.xlu0 %3217
      %v3219 = vsel %vm3114, %v2895, -inf
      %v3220 = vmax.f32 %v2894, %v3219
      %3221 = vmax.xlane.f32.xlu0 %v3220
      %v3222 = vpop.xlane.xlu0 %3221
      %v3223 = vsel %vm3114, %v2897, -inf
      %v3224 = vmax.f32 %v2896, %v3223
      %3225 = vmax.xlane.f32.xlu0 %v3224
      %v3226 = vpop.xlane.xlu0 %3225
      %v3227 = vsel %vm3114, %v2899, -inf
      %v3228 = vmax.f32 %v2898, %v3227
      %3229 = vmax.xlane.f32.xlu0 %v3228
      %v3230 = vpop.xlane.xlu0 %3229
      %v3231 = vsel %vm3114, %v2901, -inf
      %v3232 = vmax.f32 %v2900, %v3231
      %3233 = vmax.xlane.f32.xlu0 %v3232
      %v3234 = vpop.xlane.xlu0 %3233
      %v3235 = vsel %vm3114, %v2903, -inf
      %v3236 = vmax.f32 %v2902, %v3235
      %3237 = vmax.xlane.f32.xlu0 %v3236
      %v3238 = vpop.xlane.xlu0 %3237
      %v3239 = vsel %vm3114, %v2905, -inf
      %v3240 = vmax.f32 %v2904, %v3239
      %3241 = vmax.xlane.f32.xlu0 %v3240
      %v3242 = vpop.xlane.xlu0 %3241
      %v3243 = vsel %vm3114, %v2907, -inf
      %v3244 = vmax.f32 %v2906, %v3243
      %3245 = vmax.xlane.f32.xlu0 %v3244
      %v3246 = vpop.xlane.xlu0 %3245
      %v3247 = vsel %vm3114, %v2909, -inf
      %v3248 = vmax.f32 %v2908, %v3247
      %3249 = vmax.xlane.f32.xlu0 %v3248
      %v3250 = vpop.xlane.xlu0 %3249
      %v3251 = vsel %vm3114, %v2911, -inf
      %v3252 = vmax.f32 %v2910, %v3251
      %3253 = vmax.xlane.f32.xlu0 %v3252
      %v3254 = vpop.xlane.xlu0 %3253
      %v3255 = vsel %vm3114, %v2913, -inf
      %v3256 = vmax.f32 %v2912, %v3255
      %3257 = vmax.xlane.f32.xlu0 %v3256
      %v3258 = vpop.xlane.xlu0 %3257
      %v3259 = vsel %vm3114, %v2915, -inf
      %v3260 = vmax.f32 %v2914, %v3259
      %3261 = vmax.xlane.f32.xlu0 %v3260
      %v3262 = vpop.xlane.xlu0 %3261
      %v3263 = vsel %vm3114, %v2917, -inf
      %v3264 = vmax.f32 %v2916, %v3263
      %3265 = vmax.xlane.f32.xlu0 %v3264
      %v3266 = vpop.xlane.xlu0 %3265
      %v3267 = vsel %vm3114, %v2919, -inf
      %v3268 = vmax.f32 %v2918, %v3267
      %3269 = vmax.xlane.f32.xlu0 %v3268
      %v3270 = vpop.xlane.xlu0 %3269
      %v3271 = vsel %vm3114, %v2921, -inf
      %v3272 = vmax.f32 %v2920, %v3271
      %3273 = vmax.xlane.f32.xlu0 %v3272
      %v3274 = vpop.xlane.xlu0 %3273
      %v3275 = vsel %vm3114, %v2923, -inf
      %v3276 = vmax.f32 %v2922, %v3275
      %3277 = vmax.xlane.f32.xlu0 %v3276
      %v3278 = vpop.xlane.xlu0 %3277
      %v3279 = vsel %vm3114, %v2925, -inf
      %v3280 = vmax.f32 %v2924, %v3279
      %3281 = vmax.xlane.f32.xlu0 %v3280
      %v3282 = vpop.xlane.xlu0 %3281
      %v3283 = vsel %vm3114, %v2927, -inf
      %v3284 = vmax.f32 %v2926, %v3283
      %3285 = vmax.xlane.f32.xlu0 %v3284
      %v3286 = vpop.xlane.xlu0 %3285
      %v3287 = vsel %vm3114, %v2929, -inf
      %v3288 = vmax.f32 %v2928, %v3287
      %3289 = vmax.xlane.f32.xlu0 %v3288
      %v3290 = vpop.xlane.xlu0 %3289
      %v3291 = vsel %vm3114, %v2931, -inf
      %v3292 = vmax.f32 %v2930, %v3291
      %3293 = vmax.xlane.f32.xlu0 %v3292
      %v3294 = vpop.xlane.xlu0 %3293
      %v3295 = vsel %vm3114, %v2933, -inf
      %v3296 = vmax.f32 %v2932, %v3295
      %3297 = vmax.xlane.f32.xlu0 %v3296
      %v3298 = vpop.xlane.xlu0 %3297
      %v3299 = vsel %vm3114, %v2935, -inf
      %v3300 = vmax.f32 %v2934, %v3299
      %3301 = vmax.xlane.f32.xlu0 %v3300
      %v3302 = vpop.xlane.xlu0 %3301
      %v3303 = vsel %vm3114, %v2937, -inf
      %v3304 = vmax.f32 %v2936, %v3303
      %3305 = vmax.xlane.f32.xlu0 %v3304
      %v3306 = vpop.xlane.xlu0 %3305
      %v3307 = vsel %vm3114, %v2939, -inf
      %v3308 = vmax.f32 %v2938, %v3307
      %3309 = vmax.xlane.f32.xlu0 %v3308
      %v3310 = vpop.xlane.xlu0 %3309
      %v3311 = vsel %vm3114, %v2941, -inf
      %v3312 = vmax.f32 %v2940, %v3311
      %3313 = vmax.xlane.f32.xlu0 %v3312
      %v3314 = vpop.xlane.xlu0 %3313
      %v3315 = vsel %vm3114, %v2943, -inf
      %v3316 = vmax.f32 %v2942, %v3315
      %3317 = vmax.xlane.f32.xlu0 %v3316
      %v3318 = vpop.xlane.xlu0 %3317
      %v3319 = vsel %vm3114, %v2945, -inf
      %v3320 = vmax.f32 %v2944, %v3319
      %3321 = vmax.xlane.f32.xlu0 %v3320
      %v3322 = vpop.xlane.xlu0 %3321
      %v3323 = vsel %vm3114, %v2947, -inf
      %v3324 = vmax.f32 %v2946, %v3323
      %3325 = vmax.xlane.f32.xlu0 %v3324
      %v3326 = vpop.xlane.xlu0 %3325
      %v3327 = vsel %vm3114, %v2949, -inf
      %v3328 = vmax.f32 %v2948, %v3327
      %3329 = vmax.xlane.f32.xlu0 %v3328
      %v3330 = vpop.xlane.xlu0 %3329
      %v3331 = vsel %vm3114, %v2951, -inf
      %v3332 = vmax.f32 %v2950, %v3331
      %3333 = vmax.xlane.f32.xlu0 %v3332
      %v3334 = vpop.xlane.xlu0 %3333
      %v3335 = vsel %vm3114, %v2953, -inf
      %v3336 = vmax.f32 %v2952, %v3335
      %3337 = vmax.xlane.f32.xlu0 %v3336
      %v3338 = vpop.xlane.xlu0 %3337
      %v3339 = vsel %vm3114, %v2955, -inf
      %v3340 = vmax.f32 %v2954, %v3339
      %3341 = vmax.xlane.f32.xlu0 %v3340
      %v3342 = vpop.xlane.xlu0 %3341
      %v3343 = vsel %vm3114, %v2957, -inf
      %v3344 = vmax.f32 %v2956, %v3343
      %3345 = vmax.xlane.f32.xlu0 %v3344
      %v3346 = vpop.xlane.xlu0 %3345
      %v3347 = vsel %vm3114, %v2959, -inf
      %v3348 = vmax.f32 %v2958, %v3347
      %3349 = vmax.xlane.f32.xlu0 %v3348
      %v3350 = vpop.xlane.xlu0 %3349
      %v3351 = vsel %vm3114, %v2961, -inf
      %v3352 = vmax.f32 %v2960, %v3351
      %3353 = vmax.xlane.f32.xlu0 %v3352
      %v3354 = vpop.xlane.xlu0 %3353
      %v3355 = vsel %vm3114, %v2963, -inf
      %v3356 = vmax.f32 %v2962, %v3355
      %3357 = vmax.xlane.f32.xlu0 %v3356
      %v3358 = vpop.xlane.xlu0 %3357
      %v3359 = vsel %vm3114, %v2965, -inf
      %v3360 = vmax.f32 %v2964, %v3359
      %3361 = vmax.xlane.f32.xlu0 %v3360
      %v3362 = vpop.xlane.xlu0 %3361
      %v3363 = vsel %vm3114, %v2967, -inf
      %v3364 = vmax.f32 %v2966, %v3363
      %3365 = vmax.xlane.f32.xlu0 %v3364
      %v3366 = vpop.xlane.xlu0 %3365
      %v3367 = vsel %vm3114, %v2969, -inf
      %v3368 = vmax.f32 %v2968, %v3367
      %3369 = vmax.xlane.f32.xlu0 %v3368
      %v3370 = vpop.xlane.xlu0 %3369
      %v3371 = vsel %vm3114, %v2971, -inf
      %v3372 = vmax.f32 %v2970, %v3371
      %3373 = vmax.xlane.f32.xlu0 %v3372
      %v3374 = vpop.xlane.xlu0 %3373
      %v3375 = vsel %vm3114, %v2973, -inf
      %v3376 = vmax.f32 %v2972, %v3375
      %3377 = vmax.xlane.f32.xlu0 %v3376
      %v3378 = vpop.xlane.xlu0 %3377
      %v3379 = vsel %vm3114, %v2975, -inf
      %v3380 = vmax.f32 %v2974, %v3379
      %3381 = vmax.xlane.f32.xlu0 %v3380
      %v3382 = vpop.xlane.xlu0 %3381
      %v3383 = vsel %vm3114, %v2977, -inf
      %v3384 = vmax.f32 %v2976, %v3383
      %3385 = vmax.xlane.f32.xlu0 %v3384
      %v3386 = vpop.xlane.xlu0 %3385
      %v3387 = vsel %vm3114, %v2979, -inf
      %v3388 = vmax.f32 %v2978, %v3387
      %3389 = vmax.xlane.f32.xlu0 %v3388
      %v3390 = vpop.xlane.xlu0 %3389
      %v3391 = vsel %vm3114, %v2981, -inf
      %v3392 = vmax.f32 %v2980, %v3391
      %3393 = vmax.xlane.f32.xlu0 %v3392
      %v3394 = vpop.xlane.xlu0 %3393
      %v3395 = vsel %vm3114, %v2983, -inf
      %v3396 = vmax.f32 %v2982, %v3395
      %3397 = vmax.xlane.f32.xlu0 %v3396
      %v3398 = vpop.xlane.xlu0 %3397
      %v3399 = vsel %vm3114, %v2985, -inf
      %v3400 = vmax.f32 %v2984, %v3399
      %3401 = vmax.xlane.f32.xlu0 %v3400
      %v3402 = vpop.xlane.xlu0 %3401
      %v3403 = vsel %vm3114, %v2987, -inf
      %v3404 = vmax.f32 %v2986, %v3403
      %3405 = vmax.xlane.f32.xlu0 %v3404
      %v3406 = vpop.xlane.xlu0 %3405
      %v3407 = vsel %vm3114, %v2989, -inf
      %v3408 = vmax.f32 %v2988, %v3407
      %3409 = vmax.xlane.f32.xlu0 %v3408
      %v3410 = vpop.xlane.xlu0 %3409
      %v3411 = vsel %vm3114, %v2991, -inf
      %v3412 = vmax.f32 %v2990, %v3411
      %3413 = vmax.xlane.f32.xlu0 %v3412
      %v3414 = vpop.xlane.xlu0 %3413
      %v3415 = vsel %vm3114, %v2993, -inf
      %v3416 = vmax.f32 %v2992, %v3415
      %3417 = vmax.xlane.f32.xlu0 %v3416
      %v3418 = vpop.xlane.xlu0 %3417
      %v3419 = vsel %vm3114, %v2995, -inf
      %v3420 = vmax.f32 %v2994, %v3419
      %3421 = vmax.xlane.f32.xlu0 %v3420
      %v3422 = vpop.xlane.xlu0 %3421
      %v3423 = vsel %vm3114, %v2997, -inf
      %v3424 = vmax.f32 %v2996, %v3423
      %3425 = vmax.xlane.f32.xlu0 %v3424
      %v3426 = vpop.xlane.xlu0 %3425
      %v3427 = vsel %vm3114, %v2999, -inf
      %v3428 = vmax.f32 %v2998, %v3427
      %3429 = vmax.xlane.f32.xlu0 %v3428
      %v3430 = vpop.xlane.xlu0 %3429
      %v3431 = vsel %vm3114, %v3001, -inf
      %v3432 = vmax.f32 %v3000, %v3431
      %3433 = vmax.xlane.f32.xlu0 %v3432
      %v3434 = vpop.xlane.xlu0 %3433
      %v3435 = vsel %vm3114, %v3003, -inf
      %v3436 = vmax.f32 %v3002, %v3435
      %3437 = vmax.xlane.f32.xlu0 %v3436
      %v3438 = vpop.xlane.xlu0 %3437
      %v3439 = vsel %vm3114, %v3005, -inf
      %v3440 = vmax.f32 %v3004, %v3439
      %3441 = vmax.xlane.f32.xlu0 %v3440
      %v3442 = vpop.xlane.xlu0 %3441
      %v3443 = vsel %vm3114, %v3007, -inf
      %v3444 = vmax.f32 %v3006, %v3443
      %3445 = vmax.xlane.f32.xlu0 %v3444
      %v3446 = vpop.xlane.xlu0 %3445
      %v3447 = vsel %vm3114, %v3009, -inf
      %v3448 = vmax.f32 %v3008, %v3447
      %3449 = vmax.xlane.f32.xlu0 %v3448
      %v3450 = vpop.xlane.xlu0 %3449
      %v3451 = vsel %vm3114, %v3011, -inf
      %v3452 = vmax.f32 %v3010, %v3451
      %3453 = vmax.xlane.f32.xlu0 %v3452
      %v3454 = vpop.xlane.xlu0 %3453
      %v3455 = vsel %vm3114, %v3013, -inf
      %v3456 = vmax.f32 %v3012, %v3455
      %3457 = vmax.xlane.f32.xlu0 %v3456
      %v3458 = vpop.xlane.xlu0 %3457
      %v3459 = vsel %vm3114, %v3015, -inf
      %v3460 = vmax.f32 %v3014, %v3459
      %3461 = vmax.xlane.f32.xlu0 %v3460
      %v3462 = vpop.xlane.xlu0 %3461
      %v3463 = vsel %vm3114, %v3017, -inf
      %v3464 = vmax.f32 %v3016, %v3463
      %3465 = vmax.xlane.f32.xlu0 %v3464
      %v3466 = vpop.xlane.xlu0 %3465
      %v3467 = vsel %vm3114, %v3019, -inf
      %v3468 = vmax.f32 %v3018, %v3467
      %3469 = vmax.xlane.f32.xlu0 %v3468
      %v3470 = vpop.xlane.xlu0 %3469
      %v3471 = vsel %vm3114, %v3021, -inf
      %v3472 = vmax.f32 %v3020, %v3471
      %3473 = vmax.xlane.f32.xlu0 %v3472
      %v3474 = vpop.xlane.xlu0 %3473
      %v3475 = vsel %vm3114, %v3023, -inf
      %v3476 = vmax.f32 %v3022, %v3475
      %3477 = vmax.xlane.f32.xlu0 %v3476
      %v3478 = vpop.xlane.xlu0 %3477
      %v3479 = vsel %vm3114, %v3025, -inf
      %v3480 = vmax.f32 %v3024, %v3479
      %3481 = vmax.xlane.f32.xlu0 %v3480
      %v3482 = vpop.xlane.xlu0 %3481
      %v3483 = vsel %vm3114, %v3027, -inf
      %v3484 = vmax.f32 %v3026, %v3483
      %3485 = vmax.xlane.f32.xlu0 %v3484
      %v3486 = vpop.xlane.xlu0 %3485
      %v3487 = vsel %vm3114, %v3029, -inf
      %v3488 = vmax.f32 %v3028, %v3487
      %3489 = vmax.xlane.f32.xlu0 %v3488
      %v3490 = vpop.xlane.xlu0 %3489
      %v3491 = vsel %vm3114, %v3031, -inf
      %v3492 = vmax.f32 %v3030, %v3491
      %3493 = vmax.xlane.f32.xlu0 %v3492
      %v3494 = vpop.xlane.xlu0 %3493
      %v3495 = vsel %vm3114, %v3033, -inf
      %v3496 = vmax.f32 %v3032, %v3495
      %3497 = vmax.xlane.f32.xlu0 %v3496
      %v3498 = vpop.xlane.xlu0 %3497
      %v3499 = vsel %vm3114, %v3035, -inf
      %v3500 = vmax.f32 %v3034, %v3499
      %3501 = vmax.xlane.f32.xlu0 %v3500
      %v3502 = vpop.xlane.xlu0 %3501
      %v3503 = vsel %vm3114, %v3037, -inf
      %v3504 = vmax.f32 %v3036, %v3503
      %3505 = vmax.xlane.f32.xlu0 %v3504
      %v3506 = vpop.xlane.xlu0 %3505
      %v3507 = vsel %vm3114, %v3039, -inf
      %v3508 = vmax.f32 %v3038, %v3507
      %3509 = vmax.xlane.f32.xlu0 %v3508
      %v3510 = vpop.xlane.xlu0 %3509
      %v3511 = vsel %vm3114, %v3041, -inf
      %v3512 = vmax.f32 %v3040, %v3511
      %3513 = vmax.xlane.f32.xlu0 %v3512
      %v3514 = vpop.xlane.xlu0 %3513
      %v3515 = vsel %vm3114, %v3043, -inf
      %v3516 = vmax.f32 %v3042, %v3515
      %3517 = vmax.xlane.f32.xlu0 %v3516
      %v3518 = vpop.xlane.xlu0 %3517
      %v3519 = vsel %vm3114, %v3045, -inf
      %v3520 = vmax.f32 %v3044, %v3519
      %3521 = vmax.xlane.f32.xlu0 %v3520
      %v3522 = vpop.xlane.xlu0 %3521
      %v3523 = vsel %vm3114, %v3047, -inf
      %v3524 = vmax.f32 %v3046, %v3523
      %3525 = vmax.xlane.f32.xlu0 %v3524
      %v3526 = vpop.xlane.xlu0 %3525
      %v3527 = vsel %vm3114, %v3049, -inf
      %v3528 = vmax.f32 %v3048, %v3527
      %3529 = vmax.xlane.f32.xlu0 %v3528
      %v3530 = vpop.xlane.xlu0 %3529
      %v3531 = vsel %vm3114, %v3051, -inf
      %v3532 = vmax.f32 %v3050, %v3531
      %3533 = vmax.xlane.f32.xlu0 %v3532
      %v3534 = vpop.xlane.xlu0 %3533
      %v3535 = vsel %vm3114, %v3053, -inf
      %v3536 = vmax.f32 %v3052, %v3535
      %3537 = vmax.xlane.f32.xlu0 %v3536
      %v3538 = vpop.xlane.xlu0 %3537
      %v3539 = vsel %vm3114, %v3055, -inf
      %v3540 = vmax.f32 %v3054, %v3539
      %3541 = vmax.xlane.f32.xlu0 %v3540
      %v3542 = vpop.xlane.xlu0 %3541
      %v3543 = vsel %vm3114, %v3057, -inf
      %v3544 = vmax.f32 %v3056, %v3543
      %3545 = vmax.xlane.f32.xlu0 %v3544
      %v3546 = vpop.xlane.xlu0 %3545
      %v3547 = vsel %vm3114, %v3059, -inf
      %v3548 = vmax.f32 %v3058, %v3547
      %3549 = vmax.xlane.f32.xlu0 %v3548
      %v3550 = vpop.xlane.xlu0 %3549
      %v3551 = vsel %vm3114, %v3061, -inf
      %v3552 = vmax.f32 %v3060, %v3551
      %3553 = vmax.xlane.f32.xlu0 %v3552
      %v3554 = vpop.xlane.xlu0 %3553
      %v3555 = vsel %vm3114, %v3063, -inf
      %v3556 = vmax.f32 %v3062, %v3555
      %3557 = vmax.xlane.f32.xlu0 %v3556
      %v3558 = vpop.xlane.xlu0 %3557
      %v3559 = vsel %vm3114, %v3065, -inf
      %v3560 = vmax.f32 %v3064, %v3559
      %3561 = vmax.xlane.f32.xlu0 %v3560
      %v3562 = vpop.xlane.xlu0 %3561
      %v3563 = vsel %vm3114, %v3067, -inf
      %v3564 = vmax.f32 %v3066, %v3563
      %3565 = vmax.xlane.f32.xlu0 %v3564
      %v3566 = vpop.xlane.xlu0 %3565
      %v3567 = vsel %vm3114, %v3069, -inf
      %v3568 = vmax.f32 %v3068, %v3567
      %3569 = vmax.xlane.f32.xlu0 %v3568
      %v3570 = vpop.xlane.xlu0 %3569
      %v3571 = vsel %vm3114, %v3071, -inf
      %v3572 = vmax.f32 %v3070, %v3571
      %3573 = vmax.xlane.f32.xlu0 %v3572
      %v3574 = vpop.xlane.xlu0 %3573
      %v3575 = vsel %vm3114, %v3073, -inf
      %v3576 = vmax.f32 %v3072, %v3575
      %3577 = vmax.xlane.f32.xlu0 %v3576
      %v3578 = vpop.xlane.xlu0 %3577
      %v3579 = vsel %vm3114, %v3075, -inf
      %v3580 = vmax.f32 %v3074, %v3579
      %3581 = vmax.xlane.f32.xlu0 %v3580
      %v3582 = vpop.xlane.xlu0 %3581
      %v3583 = vsel %vm3114, %v3077, -inf
      %v3584 = vmax.f32 %v3076, %v3583
      %3585 = vmax.xlane.f32.xlu0 %v3584
      %v3586 = vpop.xlane.xlu0 %3585
      %v3587 = vsel %vm3114, %v3079, -inf
      %v3588 = vmax.f32 %v3078, %v3587
      %3589 = vmax.xlane.f32.xlu0 %v3588
      %v3590 = vpop.xlane.xlu0 %3589
      %v3591 = vsel %vm3114, %v3081, -inf
      %v3592 = vmax.f32 %v3080, %v3591
      %3593 = vmax.xlane.f32.xlu0 %v3592
      %v3594 = vpop.xlane.xlu0 %3593
      %v3595 = vsel %vm3114, %v3083, -inf
      %v3596 = vmax.f32 %v3082, %v3595
      %3597 = vmax.xlane.f32.xlu0 %v3596
      %v3598 = vpop.xlane.xlu0 %3597
      %v3599 = vsel %vm3114, %v3085, -inf
      %v3600 = vmax.f32 %v3084, %v3599
      %3601 = vmax.xlane.f32.xlu0 %v3600
      %v3602 = vpop.xlane.xlu0 %3601
      %v3603 = vsel %vm3114, %v3087, -inf
      %v3604 = vmax.f32 %v3086, %v3603
      %3605 = vmax.xlane.f32.xlu0 %v3604
      %v3606 = vpop.xlane.xlu0 %3605
      %v3607 = vsel %vm3114, %v3089, -inf
      %v3608 = vmax.f32 %v3088, %v3607
      %3609 = vmax.xlane.f32.xlu0 %v3608
      %v3610 = vpop.xlane.xlu0 %3609
      %v3611 = vsel %vm3114, %v3091, -inf
      %v3612 = vmax.f32 %v3090, %v3611
      %3613 = vmax.xlane.f32.xlu0 %v3612
      %v3614 = vpop.xlane.xlu0 %3613
      %v3615 = vsel %vm3114, %v3093, -inf
      %v3616 = vmax.f32 %v3092, %v3615
      %3617 = vmax.xlane.f32.xlu0 %v3616
      %v3618 = vpop.xlane.xlu0 %3617
      %v3619 = vsel %vm3114, %v3095, -inf
      %v3620 = vmax.f32 %v3094, %v3619
      %3621 = vmax.xlane.f32.xlu0 %v3620
      %v3622 = vpop.xlane.xlu0 %3621
      %v3623 = vsel %vm3114, %v3097, -inf
      %v3624 = vmax.f32 %v3096, %v3623
      %3625 = vmax.xlane.f32.xlu0 %v3624
      %v3626 = vpop.xlane.xlu0 %3625
      %v3627 = vsel %vm3114, %v3099, -inf
      %v3628 = vmax.f32 %v3098, %v3627
      %3629 = vmax.xlane.f32.xlu0 %v3628
      %v3630 = vpop.xlane.xlu0 %3629
      %v3631 = vsel %vm3114, %v3101, -inf
      %v3632 = vmax.f32 %v3100, %v3631
      %3633 = vmax.xlane.f32.xlu0 %v3632
      %v3634 = vpop.xlane.xlu0 %3633
      %v3635 = vsel %vm3114, %v3103, -inf
      %v3636 = vmax.f32 %v3102, %v3635
      %3637 = vmax.xlane.f32.xlu0 %v3636
      %v3638 = vpop.xlane.xlu0 %3637
      %v3639 = vsel %vm3114, %v3105, -inf
      %v3640 = vmax.f32 %v3104, %v3639
      %3641 = vmax.xlane.f32.xlu0 %v3640
      %v3642 = vpop.xlane.xlu0 %3641
      %v3643 = vsel %vm3114, %v3107, -inf
      %v3644 = vmax.f32 %v3106, %v3643
      %3645 = vmax.xlane.f32.xlu0 %v3644
      %v3646 = vpop.xlane.xlu0 %3645
      %v3647 = vsel %vm3114, %v3109, -inf
      %v3648 = vmax.f32 %v3108, %v3647
      %3649 = vmax.xlane.f32.xlu0 %v3648
      %v3650 = vpop.xlane.xlu0 %3649
      %v3651 = vsel %vm3114, %v3111, -inf
      %v3652 = vmax.f32 %v3110, %v3651
      %3653 = vmax.xlane.f32.xlu0 %v3652
      %v3654 = vpop.xlane.xlu0 %3653
      %v3655 = vsel %vm3114, %v3113, -inf
      %v3656 = vmax.f32 %v3112, %v3655
      %3657 = vmax.xlane.f32.xlu0 %v3656
      %v3658 = vpop.xlane.xlu0 %3657
      %v3659 = vsub.f32 %v2842, %v3118
      %v3660 = vsub.f32 %v2843, %v3118
      %v3661 = vsub.f32 %v2844, %v3122
      %v3662 = vsub.f32 %v2845, %v3122
      %v3663 = vsub.f32 %v2846, %v3126
      %v3664 = vsub.f32 %v2847, %v3126
      %v3665 = vsub.f32 %v2848, %v3130
      %v3666 = vsub.f32 %v2849, %v3130
      %v3667 = vsub.f32 %v2850, %v3134
      %v3668 = vsub.f32 %v2851, %v3134
      %v3669 = vsub.f32 %v2852, %v3138
      %v3670 = vsub.f32 %v2853, %v3138
      %v3671 = vsub.f32 %v2854, %v3142
      %v3672 = vsub.f32 %v2855, %v3142
      %v3673 = vsub.f32 %v2856, %v3146
      %v3674 = vsub.f32 %v2857, %v3146
      %v3675 = vsub.f32 %v2858, %v3150
      %v3676 = vsub.f32 %v2859, %v3150
      %v3677 = vsub.f32 %v2860, %v3154
      %v3678 = vsub.f32 %v2861, %v3154
      %v3679 = vsub.f32 %v2862, %v3158
      %v3680 = vsub.f32 %v2863, %v3158
      %v3681 = vsub.f32 %v2864, %v3162
      %v3682 = vsub.f32 %v2865, %v3162
      %v3683 = vsub.f32 %v2866, %v3166
      %v3684 = vsub.f32 %v2867, %v3166
      %v3685 = vsub.f32 %v2868, %v3170
      %v3686 = vsub.f32 %v2869, %v3170
      %v3687 = vsub.f32 %v2870, %v3174
      %v3688 = vsub.f32 %v2871, %v3174
      %v3689 = vsub.f32 %v2872, %v3178
      %v3690 = vsub.f32 %v2873, %v3178
      %v3691 = vsub.f32 %v2874, %v3182
      %v3692 = vsub.f32 %v2875, %v3182
      %v3693 = vsub.f32 %v2876, %v3186
      %v3694 = vsub.f32 %v2877, %v3186
      %v3695 = vsub.f32 %v2878, %v3190
      %v3696 = vsub.f32 %v2879, %v3190
      %v3697 = vsub.f32 %v2880, %v3194
      %v3698 = vsub.f32 %v2881, %v3194
      %v3699 = vsub.f32 %v2882, %v3198
      %v3700 = vsub.f32 %v2883, %v3198
      %v3701 = vsub.f32 %v2884, %v3202
      %v3702 = vsub.f32 %v2885, %v3202
      %v3703 = vsub.f32 %v2886, %v3206
      %v3704 = vsub.f32 %v2887, %v3206
      %v3705 = vsub.f32 %v2888, %v3210
      %v3706 = vsub.f32 %v2889, %v3210
      %v3707 = vsub.f32 %v2890, %v3214
      %v3708 = vsub.f32 %v2891, %v3214
      %v3709 = vsub.f32 %v2892, %v3218
      %v3710 = vsub.f32 %v2893, %v3218
      %v3711 = vsub.f32 %v2894, %v3222
      %v3712 = vsub.f32 %v2895, %v3222
      %v3713 = vsub.f32 %v2896, %v3226
      %v3714 = vsub.f32 %v2897, %v3226
      %v3715 = vsub.f32 %v2898, %v3230
      %v3716 = vsub.f32 %v2899, %v3230
      %v3717 = vsub.f32 %v2900, %v3234
      %v3718 = vsub.f32 %v2901, %v3234
      %v3719 = vsub.f32 %v2902, %v3238
      %v3720 = vsub.f32 %v2903, %v3238
      %v3721 = vsub.f32 %v2904, %v3242
      %v3722 = vsub.f32 %v2905, %v3242
      %v3723 = vsub.f32 %v2906, %v3246
      %v3724 = vsub.f32 %v2907, %v3246
      %v3725 = vsub.f32 %v2908, %v3250
      %v3726 = vsub.f32 %v2909, %v3250
      %v3727 = vsub.f32 %v2910, %v3254
      %v3728 = vsub.f32 %v2911, %v3254
      %v3729 = vsub.f32 %v2912, %v3258
      %v3730 = vsub.f32 %v2913, %v3258
      %v3731 = vsub.f32 %v2914, %v3262
      %v3732 = vsub.f32 %v2915, %v3262
      %v3733 = vsub.f32 %v2916, %v3266
      %v3734 = vsub.f32 %v2917, %v3266
      %v3735 = vsub.f32 %v2918, %v3270
      %v3736 = vsub.f32 %v2919, %v3270
      %v3737 = vsub.f32 %v2920, %v3274
      %v3738 = vsub.f32 %v2921, %v3274
      %v3739 = vsub.f32 %v2922, %v3278
      %v3740 = vsub.f32 %v2923, %v3278
      %v3741 = vsub.f32 %v2924, %v3282
      %v3742 = vsub.f32 %v2925, %v3282
      %v3743 = vsub.f32 %v2926, %v3286
      %v3744 = vsub.f32 %v2927, %v3286
      %v3745 = vsub.f32 %v2928, %v3290
      %v3746 = vsub.f32 %v2929, %v3290
      %v3747 = vsub.f32 %v2930, %v3294
      %v3748 = vsub.f32 %v2931, %v3294
      %v3749 = vsub.f32 %v2932, %v3298
      %v3750 = vsub.f32 %v2933, %v3298
      %v3751 = vsub.f32 %v2934, %v3302
      %v3752 = vsub.f32 %v2935, %v3302
      %v3753 = vsub.f32 %v2936, %v3306
      %v3754 = vsub.f32 %v2937, %v3306
      %v3755 = vsub.f32 %v2938, %v3310
      %v3756 = vsub.f32 %v2939, %v3310
      %v3757 = vsub.f32 %v2940, %v3314
      %v3758 = vsub.f32 %v2941, %v3314
      %v3759 = vsub.f32 %v2942, %v3318
      %v3760 = vsub.f32 %v2943, %v3318
      %v3761 = vsub.f32 %v2944, %v3322
      %v3762 = vsub.f32 %v2945, %v3322
      %v3763 = vsub.f32 %v2946, %v3326
      %v3764 = vsub.f32 %v2947, %v3326
      %v3765 = vsub.f32 %v2948, %v3330
      %v3766 = vsub.f32 %v2949, %v3330
      %v3767 = vsub.f32 %v2950, %v3334
      %v3768 = vsub.f32 %v2951, %v3334
      %v3769 = vsub.f32 %v2952, %v3338
      %v3770 = vsub.f32 %v2953, %v3338
      %v3771 = vsub.f32 %v2954, %v3342
      %v3772 = vsub.f32 %v2955, %v3342
      %v3773 = vsub.f32 %v2956, %v3346
      %v3774 = vsub.f32 %v2957, %v3346
      %v3775 = vsub.f32 %v2958, %v3350
      %v3776 = vsub.f32 %v2959, %v3350
      %v3777 = vsub.f32 %v2960, %v3354
      %v3778 = vsub.f32 %v2961, %v3354
      %v3779 = vsub.f32 %v2962, %v3358
      %v3780 = vsub.f32 %v2963, %v3358
      %v3781 = vsub.f32 %v2964, %v3362
      %v3782 = vsub.f32 %v2965, %v3362
      %v3783 = vsub.f32 %v2966, %v3366
      %v3784 = vsub.f32 %v2967, %v3366
      %v3785 = vsub.f32 %v2968, %v3370
      %v3786 = vsub.f32 %v2969, %v3370
      %v3787 = vsub.f32 %v2970, %v3374
      %v3788 = vsub.f32 %v2971, %v3374
      %v3789 = vsub.f32 %v2972, %v3378
      %v3790 = vsub.f32 %v2973, %v3378
      %v3791 = vsub.f32 %v2974, %v3382
      %v3792 = vsub.f32 %v2975, %v3382
      %v3793 = vsub.f32 %v2976, %v3386
      %v3794 = vsub.f32 %v2977, %v3386
      %v3795 = vsub.f32 %v2978, %v3390
      %v3796 = vsub.f32 %v2979, %v3390
      %v3797 = vsub.f32 %v2980, %v3394
      %v3798 = vsub.f32 %v2981, %v3394
      %v3799 = vsub.f32 %v2982, %v3398
      %v3800 = vsub.f32 %v2983, %v3398
      %v3801 = vsub.f32 %v2984, %v3402
      %v3802 = vsub.f32 %v2985, %v3402
      %v3803 = vsub.f32 %v2986, %v3406
      %v3804 = vsub.f32 %v2987, %v3406
      %v3805 = vsub.f32 %v2988, %v3410
      %v3806 = vsub.f32 %v2989, %v3410
      %v3807 = vsub.f32 %v2990, %v3414
      %v3808 = vsub.f32 %v2991, %v3414
      %v3809 = vsub.f32 %v2992, %v3418
      %v3810 = vsub.f32 %v2993, %v3418
      %v3811 = vsub.f32 %v2994, %v3422
      %v3812 = vsub.f32 %v2995, %v3422
      %v3813 = vsub.f32 %v2996, %v3426
      %v3814 = vsub.f32 %v2997, %v3426
      %v3815 = vsub.f32 %v2998, %v3430
      %v3816 = vsub.f32 %v2999, %v3430
      %v3817 = vsub.f32 %v3000, %v3434
      %v3818 = vsub.f32 %v3001, %v3434
      %v3819 = vsub.f32 %v3002, %v3438
      %v3820 = vsub.f32 %v3003, %v3438
      %v3821 = vsub.f32 %v3004, %v3442
      %v3822 = vsub.f32 %v3005, %v3442
      %v3823 = vsub.f32 %v3006, %v3446
      %v3824 = vsub.f32 %v3007, %v3446
      %v3825 = vsub.f32 %v3008, %v3450
      %v3826 = vsub.f32 %v3009, %v3450
      %v3827 = vsub.f32 %v3010, %v3454
      %v3828 = vsub.f32 %v3011, %v3454
      %v3829 = vsub.f32 %v3012, %v3458
      %v3830 = vsub.f32 %v3013, %v3458
      %v3831 = vsub.f32 %v3014, %v3462
      %v3832 = vsub.f32 %v3015, %v3462
      %v3833 = vsub.f32 %v3016, %v3466
      %v3834 = vsub.f32 %v3017, %v3466
      %v3835 = vsub.f32 %v3018, %v3470
      %v3836 = vsub.f32 %v3019, %v3470
      %v3837 = vsub.f32 %v3020, %v3474
      %v3838 = vsub.f32 %v3021, %v3474
      %v3839 = vsub.f32 %v3022, %v3478
      %v3840 = vsub.f32 %v3023, %v3478
      %v3841 = vsub.f32 %v3024, %v3482
      %v3842 = vsub.f32 %v3025, %v3482
      %v3843 = vsub.f32 %v3026, %v3486
      %v3844 = vsub.f32 %v3027, %v3486
      %v3845 = vsub.f32 %v3028, %v3490
      %v3846 = vsub.f32 %v3029, %v3490
      %v3847 = vsub.f32 %v3030, %v3494
      %v3848 = vsub.f32 %v3031, %v3494
      %v3849 = vsub.f32 %v3032, %v3498
      %v3850 = vsub.f32 %v3033, %v3498
      %v3851 = vsub.f32 %v3034, %v3502
      %v3852 = vsub.f32 %v3035, %v3502
      %v3853 = vsub.f32 %v3036, %v3506
      %v3854 = vsub.f32 %v3037, %v3506
      %v3855 = vsub.f32 %v3038, %v3510
      %v3856 = vsub.f32 %v3039, %v3510
      %v3857 = vsub.f32 %v3040, %v3514
      %v3858 = vsub.f32 %v3041, %v3514
      %v3859 = vsub.f32 %v3042, %v3518
      %v3860 = vsub.f32 %v3043, %v3518
      %v3861 = vsub.f32 %v3044, %v3522
      %v3862 = vsub.f32 %v3045, %v3522
      %v3863 = vsub.f32 %v3046, %v3526
      %v3864 = vsub.f32 %v3047, %v3526
      %v3865 = vsub.f32 %v3048, %v3530
      %v3866 = vsub.f32 %v3049, %v3530
      %v3867 = vsub.f32 %v3050, %v3534
      %v3868 = vsub.f32 %v3051, %v3534
      %v3869 = vsub.f32 %v3052, %v3538
      %v3870 = vsub.f32 %v3053, %v3538
      %v3871 = vsub.f32 %v3054, %v3542
      %v3872 = vsub.f32 %v3055, %v3542
      %v3873 = vsub.f32 %v3056, %v3546
      %v3874 = vsub.f32 %v3057, %v3546
      %v3875 = vsub.f32 %v3058, %v3550
      %v3876 = vsub.f32 %v3059, %v3550
      %v3877 = vsub.f32 %v3060, %v3554
      %v3878 = vsub.f32 %v3061, %v3554
      %v3879 = vsub.f32 %v3062, %v3558
      %v3880 = vsub.f32 %v3063, %v3558
      %v3881 = vsub.f32 %v3064, %v3562
      %v3882 = vsub.f32 %v3065, %v3562
      %v3883 = vsub.f32 %v3066, %v3566
      %v3884 = vsub.f32 %v3067, %v3566
      %v3885 = vsub.f32 %v3068, %v3570
      %v3886 = vsub.f32 %v3069, %v3570
      %v3887 = vsub.f32 %v3070, %v3574
      %v3888 = vsub.f32 %v3071, %v3574
      %v3889 = vsub.f32 %v3072, %v3578
      %v3890 = vsub.f32 %v3073, %v3578
      %v3891 = vsub.f32 %v3074, %v3582
      %v3892 = vsub.f32 %v3075, %v3582
      %v3893 = vsub.f32 %v3076, %v3586
      %v3894 = vsub.f32 %v3077, %v3586
      %v3895 = vsub.f32 %v3078, %v3590
      %v3896 = vsub.f32 %v3079, %v3590
      %v3897 = vsub.f32 %v3080, %v3594
      %v3898 = vsub.f32 %v3081, %v3594
      %v3899 = vsub.f32 %v3082, %v3598
      %v3900 = vsub.f32 %v3083, %v3598
      %v3901 = vsub.f32 %v3084, %v3602
      %v3902 = vsub.f32 %v3085, %v3602
      %v3903 = vsub.f32 %v3086, %v3606
      %v3904 = vsub.f32 %v3087, %v3606
      %v3905 = vsub.f32 %v3088, %v3610
      %v3906 = vsub.f32 %v3089, %v3610
      %v3907 = vsub.f32 %v3090, %v3614
      %v3908 = vsub.f32 %v3091, %v3614
      %v3909 = vsub.f32 %v3092, %v3618
      %v3910 = vsub.f32 %v3093, %v3618
      %v3911 = vsub.f32 %v3094, %v3622
      %v3912 = vsub.f32 %v3095, %v3622
      %v3913 = vsub.f32 %v3096, %v3626
      %v3914 = vsub.f32 %v3097, %v3626
      %v3915 = vsub.f32 %v3098, %v3630
      %v3916 = vsub.f32 %v3099, %v3630
      %v3917 = vsub.f32 %v3100, %v3634
      %v3918 = vsub.f32 %v3101, %v3634
      %v3919 = vsub.f32 %v3102, %v3638
      %v3920 = vsub.f32 %v3103, %v3638
      %v3921 = vsub.f32 %v3104, %v3642
      %v3922 = vsub.f32 %v3105, %v3642
      %v3923 = vsub.f32 %v3106, %v3646
      %v3924 = vsub.f32 %v3107, %v3646
      %v3925 = vsub.f32 %v3108, %v3650
      %v3926 = vsub.f32 %v3109, %v3650
      %v3927 = vsub.f32 %v3110, %v3654
      %v3928 = vsub.f32 %v3111, %v3654
      %v3929 = vsub.f32 %v3112, %v3658
      %v3930 = vsub.f32 %v3113, %v3658
      %v3931 = vmul.f32 %v3659, 1.442695
      %v3932 = vpow.pop %v3931
      %v3933 = vmul.f32 %v3660, 1.442695
      %v3934 = vpow.pop %v3933
      %v3935 = vmul.f32 %v3661, 1.442695
      %v3936 = vpow.pop %v3935
      %v3937 = vmul.f32 %v3662, 1.442695
      %v3938 = vpow.pop %v3937
      %v3939 = vmul.f32 %v3663, 1.442695
      %v3940 = vpow.pop %v3939
      %v3941 = vmul.f32 %v3664, 1.442695
      %v3942 = vpow.pop %v3941
      %v3943 = vmul.f32 %v3665, 1.442695
      %v3944 = vpow.pop %v3943
      %v3945 = vmul.f32 %v3666, 1.442695
      %v3946 = vpow.pop %v3945
      %v3947 = vmul.f32 %v3667, 1.442695
      %v3948 = vpow.pop %v3947
      %v3949 = vmul.f32 %v3668, 1.442695
      %v3950 = vpow.pop %v3949
      %v3951 = vmul.f32 %v3669, 1.442695
      %v3952 = vpow.pop %v3951
      %v3953 = vmul.f32 %v3670, 1.442695
      %v3954 = vpow.pop %v3953
      %v3955 = vmul.f32 %v3671, 1.442695
      %v3956 = vpow.pop %v3955
      %v3957 = vmul.f32 %v3672, 1.442695
      %v3958 = vpow.pop %v3957
      %v3959 = vmul.f32 %v3673, 1.442695
      %v3960 = vpow.pop %v3959
      %v3961 = vmul.f32 %v3674, 1.442695
      %v3962 = vpow.pop %v3961
      %v3963 = vmul.f32 %v3675, 1.442695
      %v3964 = vpow.pop %v3963
      %v3965 = vmul.f32 %v3676, 1.442695
      %v3966 = vpow.pop %v3965
      %v3967 = vmul.f32 %v3677, 1.442695
      %v3968 = vpow.pop %v3967
      %v3969 = vmul.f32 %v3678, 1.442695
      %v3970 = vpow.pop %v3969
      %v3971 = vmul.f32 %v3679, 1.442695
      %v3972 = vpow.pop %v3971
      %v3973 = vmul.f32 %v3680, 1.442695
      %v3974 = vpow.pop %v3973
      %v3975 = vmul.f32 %v3681, 1.442695
      %v3976 = vpow.pop %v3975
      %v3977 = vmul.f32 %v3682, 1.442695
      %v3978 = vpow.pop %v3977
      %v3979 = vmul.f32 %v3683, 1.442695
      %v3980 = vpow.pop %v3979
      %v3981 = vmul.f32 %v3684, 1.442695
      %v3982 = vpow.pop %v3981
      %v3983 = vmul.f32 %v3685, 1.442695
      %v3984 = vpow.pop %v3983
      %v3985 = vmul.f32 %v3686, 1.442695
      %v3986 = vpow.pop %v3985
      %v3987 = vmul.f32 %v3687, 1.442695
      %v3988 = vpow.pop %v3987
      %v3989 = vmul.f32 %v3688, 1.442695
      %v3990 = vpow.pop %v3989
      %v3991 = vmul.f32 %v3689, 1.442695
      %v3992 = vpow.pop %v3991
      %v3993 = vmul.f32 %v3690, 1.442695
      %v3994 = vpow.pop %v3993
      %v3995 = vmul.f32 %v3691, 1.442695
      %v3996 = vpow.pop %v3995
      %v3997 = vmul.f32 %v3692, 1.442695
      %v3998 = vpow.pop %v3997
      %v3999 = vmul.f32 %v3693, 1.442695
      %v4000 = vpow.pop %v3999
      %v4001 = vmul.f32 %v3694, 1.442695
      %v4002 = vpow.pop %v4001
      %v4003 = vmul.f32 %v3695, 1.442695
      %v4004 = vpow.pop %v4003
      %v4005 = vmul.f32 %v3696, 1.442695
      %v4006 = vpow.pop %v4005
      %v4007 = vmul.f32 %v3697, 1.442695
      %v4008 = vpow.pop %v4007
      %v4009 = vmul.f32 %v3698, 1.442695
      %v4010 = vpow.pop %v4009
      %v4011 = vmul.f32 %v3699, 1.442695
      %v4012 = vpow.pop %v4011
      %v4013 = vmul.f32 %v3700, 1.442695
      %v4014 = vpow.pop %v4013
      %v4015 = vmul.f32 %v3701, 1.442695
      %v4016 = vpow.pop %v4015
      %v4017 = vmul.f32 %v3702, 1.442695
      %v4018 = vpow.pop %v4017
      %v4019 = vmul.f32 %v3703, 1.442695
      %v4020 = vpow.pop %v4019
      %v4021 = vmul.f32 %v3704, 1.442695
      %v4022 = vpow.pop %v4021
      %v4023 = vmul.f32 %v3705, 1.442695
      %v4024 = vpow.pop %v4023
      %v4025 = vmul.f32 %v3706, 1.442695
      %v4026 = vpow.pop %v4025
      %v4027 = vmul.f32 %v3707, 1.442695
      %v4028 = vpow.pop %v4027
      %v4029 = vmul.f32 %v3708, 1.442695
      %v4030 = vpow.pop %v4029
      %v4031 = vmul.f32 %v3709, 1.442695
      %v4032 = vpow.pop %v4031
      %v4033 = vmul.f32 %v3710, 1.442695
      %v4034 = vpow.pop %v4033
      %v4035 = vmul.f32 %v3711, 1.442695
      %v4036 = vpow.pop %v4035
      %v4037 = vmul.f32 %v3712, 1.442695
      %v4038 = vpow.pop %v4037
      %v4039 = vmul.f32 %v3713, 1.442695
      %v4040 = vpow.pop %v4039
      %v4041 = vmul.f32 %v3714, 1.442695
      %v4042 = vpow.pop %v4041
      %v4043 = vmul.f32 %v3715, 1.442695
      %v4044 = vpow.pop %v4043
      %v4045 = vmul.f32 %v3716, 1.442695
      %v4046 = vpow.pop %v4045
      %v4047 = vmul.f32 %v3717, 1.442695
      %v4048 = vpow.pop %v4047
      %v4049 = vmul.f32 %v3718, 1.442695
      %v4050 = vpow.pop %v4049
      %v4051 = vmul.f32 %v3719, 1.442695
      %v4052 = vpow.pop %v4051
      %v4053 = vmul.f32 %v3720, 1.442695
      %v4054 = vpow.pop %v4053
      %v4055 = vmul.f32 %v3721, 1.442695
      %v4056 = vpow.pop %v4055
      %v4057 = vmul.f32 %v3722, 1.442695
      %v4058 = vpow.pop %v4057
      %v4059 = vmul.f32 %v3723, 1.442695
      %v4060 = vpow.pop %v4059
      %v4061 = vmul.f32 %v3724, 1.442695
      %v4062 = vpow.pop %v4061
      %v4063 = vmul.f32 %v3725, 1.442695
      %v4064 = vpow.pop %v4063
      %v4065 = vmul.f32 %v3726, 1.442695
      %v4066 = vpow.pop %v4065
      %v4067 = vmul.f32 %v3727, 1.442695
      %v4068 = vpow.pop %v4067
      %v4069 = vmul.f32 %v3728, 1.442695
      %v4070 = vpow.pop %v4069
      %v4071 = vmul.f32 %v3729, 1.442695
      %v4072 = vpow.pop %v4071
      %v4073 = vmul.f32 %v3730, 1.442695
      %v4074 = vpow.pop %v4073
      %v4075 = vmul.f32 %v3731, 1.442695
      %v4076 = vpow.pop %v4075
      %v4077 = vmul.f32 %v3732, 1.442695
      %v4078 = vpow.pop %v4077
      %v4079 = vmul.f32 %v3733, 1.442695
      %v4080 = vpow.pop %v4079
      %v4081 = vmul.f32 %v3734, 1.442695
      %v4082 = vpow.pop %v4081
      %v4083 = vmul.f32 %v3735, 1.442695
      %v4084 = vpow.pop %v4083
      %v4085 = vmul.f32 %v3736, 1.442695
      %v4086 = vpow.pop %v4085
      %v4087 = vmul.f32 %v3737, 1.442695
      %v4088 = vpow.pop %v4087
      %v4089 = vmul.f32 %v3738, 1.442695
      %v4090 = vpow.pop %v4089
      %v4091 = vmul.f32 %v3739, 1.442695
      %v4092 = vpow.pop %v4091
      %v4093 = vmul.f32 %v3740, 1.442695
      %v4094 = vpow.pop %v4093
      %v4095 = vmul.f32 %v3741, 1.442695
      %v4096 = vpow.pop %v4095
      %v4097 = vmul.f32 %v3742, 1.442695
      %v4098 = vpow.pop %v4097
      %v4099 = vmul.f32 %v3743, 1.442695
      %v4100 = vpow.pop %v4099
      %v4101 = vmul.f32 %v3744, 1.442695
      %v4102 = vpow.pop %v4101
      %v4103 = vmul.f32 %v3745, 1.442695
      %v4104 = vpow.pop %v4103
      %v4105 = vmul.f32 %v3746, 1.442695
      %v4106 = vpow.pop %v4105
      %v4107 = vmul.f32 %v3747, 1.442695
      %v4108 = vpow.pop %v4107
      %v4109 = vmul.f32 %v3748, 1.442695
      %v4110 = vpow.pop %v4109
      %v4111 = vmul.f32 %v3749, 1.442695
      %v4112 = vpow.pop %v4111
      %v4113 = vmul.f32 %v3750, 1.442695
      %v4114 = vpow.pop %v4113
      %v4115 = vmul.f32 %v3751, 1.442695
      %v4116 = vpow.pop %v4115
      %v4117 = vmul.f32 %v3752, 1.442695
      %v4118 = vpow.pop %v4117
      %v4119 = vmul.f32 %v3753, 1.442695
      %v4120 = vpow.pop %v4119
      %v4121 = vmul.f32 %v3754, 1.442695
      %v4122 = vpow.pop %v4121
      %v4123 = vmul.f32 %v3755, 1.442695
      %v4124 = vpow.pop %v4123
      %v4125 = vmul.f32 %v3756, 1.442695
      %v4126 = vpow.pop %v4125
      %v4127 = vmul.f32 %v3757, 1.442695
      %v4128 = vpow.pop %v4127
      %v4129 = vmul.f32 %v3758, 1.442695
      %v4130 = vpow.pop %v4129
      %v4131 = vmul.f32 %v3759, 1.442695
      %v4132 = vpow.pop %v4131
      %v4133 = vmul.f32 %v3760, 1.442695
      %v4134 = vpow.pop %v4133
      %v4135 = vmul.f32 %v3761, 1.442695
      %v4136 = vpow.pop %v4135
      %v4137 = vmul.f32 %v3762, 1.442695
      %v4138 = vpow.pop %v4137
      %v4139 = vmul.f32 %v3763, 1.442695
      %v4140 = vpow.pop %v4139
      %v4141 = vmul.f32 %v3764, 1.442695
      %v4142 = vpow.pop %v4141
      %v4143 = vmul.f32 %v3765, 1.442695
      %v4144 = vpow.pop %v4143
      %v4145 = vmul.f32 %v3766, 1.442695
      %v4146 = vpow.pop %v4145
      %v4147 = vmul.f32 %v3767, 1.442695
      %v4148 = vpow.pop %v4147
      %v4149 = vmul.f32 %v3768, 1.442695
      %v4150 = vpow.pop %v4149
      %v4151 = vmul.f32 %v3769, 1.442695
      %v4152 = vpow.pop %v4151
      %v4153 = vmul.f32 %v3770, 1.442695
      %v4154 = vpow.pop %v4153
      %v4155 = vmul.f32 %v3771, 1.442695
      %v4156 = vpow.pop %v4155
      %v4157 = vmul.f32 %v3772, 1.442695
      %v4158 = vpow.pop %v4157
      %v4159 = vmul.f32 %v3773, 1.442695
      %v4160 = vpow.pop %v4159
      %v4161 = vmul.f32 %v3774, 1.442695
      %v4162 = vpow.pop %v4161
      %v4163 = vmul.f32 %v3775, 1.442695
      %v4164 = vpow.pop %v4163
      %v4165 = vmul.f32 %v3776, 1.442695
      %v4166 = vpow.pop %v4165
      %v4167 = vmul.f32 %v3777, 1.442695
      %v4168 = vpow.pop %v4167
      %v4169 = vmul.f32 %v3778, 1.442695
      %v4170 = vpow.pop %v4169
      %v4171 = vmul.f32 %v3779, 1.442695
      %v4172 = vpow.pop %v4171
      %v4173 = vmul.f32 %v3780, 1.442695
      %v4174 = vpow.pop %v4173
      %v4175 = vmul.f32 %v3781, 1.442695
      %v4176 = vpow.pop %v4175
      %v4177 = vmul.f32 %v3782, 1.442695
      %v4178 = vpow.pop %v4177
      %v4179 = vmul.f32 %v3783, 1.442695
      %v4180 = vpow.pop %v4179
      %v4181 = vmul.f32 %v3784, 1.442695
      %v4182 = vpow.pop %v4181
      %v4183 = vmul.f32 %v3785, 1.442695
      %v4184 = vpow.pop %v4183
      %v4185 = vmul.f32 %v3786, 1.442695
      %v4186 = vpow.pop %v4185
      %v4187 = vmul.f32 %v3787, 1.442695
      %v4188 = vpow.pop %v4187
      %v4189 = vmul.f32 %v3788, 1.442695
      %v4190 = vpow.pop %v4189
      %v4191 = vmul.f32 %v3789, 1.442695
      %v4192 = vpow.pop %v4191
      %v4193 = vmul.f32 %v3790, 1.442695
      %v4194 = vpow.pop %v4193
      %v4195 = vmul.f32 %v3791, 1.442695
      %v4196 = vpow.pop %v4195
      %v4197 = vmul.f32 %v3792, 1.442695
      %v4198 = vpow.pop %v4197
      %v4199 = vmul.f32 %v3793, 1.442695
      %v4200 = vpow.pop %v4199
      %v4201 = vmul.f32 %v3794, 1.442695
      %v4202 = vpow.pop %v4201
      %v4203 = vmul.f32 %v3795, 1.442695
      %v4204 = vpow.pop %v4203
      %v4205 = vmul.f32 %v3796, 1.442695
      %v4206 = vpow.pop %v4205
      %v4207 = vmul.f32 %v3797, 1.442695
      %v4208 = vpow.pop %v4207
      %v4209 = vmul.f32 %v3798, 1.442695
      %v4210 = vpow.pop %v4209
      %v4211 = vmul.f32 %v3799, 1.442695
      %v4212 = vpow.pop %v4211
      %v4213 = vmul.f32 %v3800, 1.442695
      %v4214 = vpow.pop %v4213
      %v4215 = vmul.f32 %v3801, 1.442695
      %v4216 = vpow.pop %v4215
      %v4217 = vmul.f32 %v3802, 1.442695
      %v4218 = vpow.pop %v4217
      %v4219 = vmul.f32 %v3803, 1.442695
      %v4220 = vpow.pop %v4219
      %v4221 = vmul.f32 %v3804, 1.442695
      %v4222 = vpow.pop %v4221
      %v4223 = vmul.f32 %v3805, 1.442695
      %v4224 = vpow.pop %v4223
      %v4225 = vmul.f32 %v3806, 1.442695
      %v4226 = vpow.pop %v4225
      %v4227 = vmul.f32 %v3807, 1.442695
      %v4228 = vpow.pop %v4227
      %v4229 = vmul.f32 %v3808, 1.442695
      %v4230 = vpow.pop %v4229
      %v4231 = vmul.f32 %v3809, 1.442695
      %v4232 = vpow.pop %v4231
      %v4233 = vmul.f32 %v3810, 1.442695
      %v4234 = vpow.pop %v4233
      %v4235 = vmul.f32 %v3811, 1.442695
      %v4236 = vpow.pop %v4235
      %v4237 = vmul.f32 %v3812, 1.442695
      %v4238 = vpow.pop %v4237
      %v4239 = vmul.f32 %v3813, 1.442695
      %v4240 = vpow.pop %v4239
      %v4241 = vmul.f32 %v3814, 1.442695
      %v4242 = vpow.pop %v4241
      %v4243 = vmul.f32 %v3815, 1.442695
      %v4244 = vpow.pop %v4243
      %v4245 = vmul.f32 %v3816, 1.442695
      %v4246 = vpow.pop %v4245
      %v4247 = vmul.f32 %v3817, 1.442695
      %v4248 = vpow.pop %v4247
      %v4249 = vmul.f32 %v3818, 1.442695
      %v4250 = vpow.pop %v4249
      %v4251 = vmul.f32 %v3819, 1.442695
      %v4252 = vpow.pop %v4251
      %v4253 = vmul.f32 %v3820, 1.442695
      %v4254 = vpow.pop %v4253
      %v4255 = vmul.f32 %v3821, 1.442695
      %v4256 = vpow.pop %v4255
      %v4257 = vmul.f32 %v3822, 1.442695
      %v4258 = vpow.pop %v4257
      %v4259 = vmul.f32 %v3823, 1.442695
      %v4260 = vpow.pop %v4259
      %v4261 = vmul.f32 %v3824, 1.442695
      %v4262 = vpow.pop %v4261
      %v4263 = vmul.f32 %v3825, 1.442695
      %v4264 = vpow.pop %v4263
      %v4265 = vmul.f32 %v3826, 1.442695
      %v4266 = vpow.pop %v4265
      %v4267 = vmul.f32 %v3827, 1.442695
      %v4268 = vpow.pop %v4267
      %v4269 = vmul.f32 %v3828, 1.442695
      %v4270 = vpow.pop %v4269
      %v4271 = vmul.f32 %v3829, 1.442695
      %v4272 = vpow.pop %v4271
      %v4273 = vmul.f32 %v3830, 1.442695
      %v4274 = vpow.pop %v4273
      %v4275 = vmul.f32 %v3831, 1.442695
      %v4276 = vpow.pop %v4275
      %v4277 = vmul.f32 %v3832, 1.442695
      %v4278 = vpow.pop %v4277
      %v4279 = vmul.f32 %v3833, 1.442695
      %v4280 = vpow.pop %v4279
      %v4281 = vmul.f32 %v3834, 1.442695
      %v4282 = vpow.pop %v4281
      %v4283 = vmul.f32 %v3835, 1.442695
      %v4284 = vpow.pop %v4283
      %v4285 = vmul.f32 %v3836, 1.442695
      %v4286 = vpow.pop %v4285
      %v4287 = vmul.f32 %v3837, 1.442695
      %v4288 = vpow.pop %v4287
      %v4289 = vmul.f32 %v3838, 1.442695
      %v4290 = vpow.pop %v4289
      %v4291 = vmul.f32 %v3839, 1.442695
      %v4292 = vpow.pop %v4291
      %v4293 = vmul.f32 %v3840, 1.442695
      %v4294 = vpow.pop %v4293
      %v4295 = vmul.f32 %v3841, 1.442695
      %v4296 = vpow.pop %v4295
      %v4297 = vmul.f32 %v3842, 1.442695
      %v4298 = vpow.pop %v4297
      %v4299 = vmul.f32 %v3843, 1.442695
      %v4300 = vpow.pop %v4299
      %v4301 = vmul.f32 %v3844, 1.442695
      %v4302 = vpow.pop %v4301
      %v4303 = vmul.f32 %v3845, 1.442695
      %v4304 = vpow.pop %v4303
      %v4305 = vmul.f32 %v3846, 1.442695
      %v4306 = vpow.pop %v4305
      %v4307 = vmul.f32 %v3847, 1.442695
      %v4308 = vpow.pop %v4307
      %v4309 = vmul.f32 %v3848, 1.442695
      %v4310 = vpow.pop %v4309
      %v4311 = vmul.f32 %v3849, 1.442695
      %v4312 = vpow.pop %v4311
      %v4313 = vmul.f32 %v3850, 1.442695
      %v4314 = vpow.pop %v4313
      %v4315 = vmul.f32 %v3851, 1.442695
      %v4316 = vpow.pop %v4315
      %v4317 = vmul.f32 %v3852, 1.442695
      %v4318 = vpow.pop %v4317
      %v4319 = vmul.f32 %v3853, 1.442695
      %v4320 = vpow.pop %v4319
      %v4321 = vmul.f32 %v3854, 1.442695
      %v4322 = vpow.pop %v4321
      %v4323 = vmul.f32 %v3855, 1.442695
      %v4324 = vpow.pop %v4323
      %v4325 = vmul.f32 %v3856, 1.442695
      %v4326 = vpow.pop %v4325
      %v4327 = vmul.f32 %v3857, 1.442695
      %v4328 = vpow.pop %v4327
      %v4329 = vmul.f32 %v3858, 1.442695
      %v4330 = vpow.pop %v4329
      %v4331 = vmul.f32 %v3859, 1.442695
      %v4332 = vpow.pop %v4331
      %v4333 = vmul.f32 %v3860, 1.442695
      %v4334 = vpow.pop %v4333
      %v4335 = vmul.f32 %v3861, 1.442695
      %v4336 = vpow.pop %v4335
      %v4337 = vmul.f32 %v3862, 1.442695
      %v4338 = vpow.pop %v4337
      %v4339 = vmul.f32 %v3863, 1.442695
      %v4340 = vpow.pop %v4339
      %v4341 = vmul.f32 %v3864, 1.442695
      %v4342 = vpow.pop %v4341
      %v4343 = vmul.f32 %v3865, 1.442695
      %v4344 = vpow.pop %v4343
      %v4345 = vmul.f32 %v3866, 1.442695
      %v4346 = vpow.pop %v4345
      %v4347 = vmul.f32 %v3867, 1.442695
      %v4348 = vpow.pop %v4347
      %v4349 = vmul.f32 %v3868, 1.442695
      %v4350 = vpow.pop %v4349
      %v4351 = vmul.f32 %v3869, 1.442695
      %v4352 = vpow.pop %v4351
      %v4353 = vmul.f32 %v3870, 1.442695
      %v4354 = vpow.pop %v4353
      %v4355 = vmul.f32 %v3871, 1.442695
      %v4356 = vpow.pop %v4355
      %v4357 = vmul.f32 %v3872, 1.442695
      %v4358 = vpow.pop %v4357
      %v4359 = vmul.f32 %v3873, 1.442695
      %v4360 = vpow.pop %v4359
      %v4361 = vmul.f32 %v3874, 1.442695
      %v4362 = vpow.pop %v4361
      %v4363 = vmul.f32 %v3875, 1.442695
      %v4364 = vpow.pop %v4363
      %v4365 = vmul.f32 %v3876, 1.442695
      %v4366 = vpow.pop %v4365
      %v4367 = vmul.f32 %v3877, 1.442695
      %v4368 = vpow.pop %v4367
      %v4369 = vmul.f32 %v3878, 1.442695
      %v4370 = vpow.pop %v4369
      %v4371 = vmul.f32 %v3879, 1.442695
      %v4372 = vpow.pop %v4371
      %v4373 = vmul.f32 %v3880, 1.442695
      %v4374 = vpow.pop %v4373
      %v4375 = vmul.f32 %v3881, 1.442695
      %v4376 = vpow.pop %v4375
      %v4377 = vmul.f32 %v3882, 1.442695
      %v4378 = vpow.pop %v4377
      %v4379 = vmul.f32 %v3883, 1.442695
      %v4380 = vpow.pop %v4379
      %v4381 = vmul.f32 %v3884, 1.442695
      %v4382 = vpow.pop %v4381
      %v4383 = vmul.f32 %v3885, 1.442695
      %v4384 = vpow.pop %v4383
      %v4385 = vmul.f32 %v3886, 1.442695
      %v4386 = vpow.pop %v4385
      %v4387 = vmul.f32 %v3887, 1.442695
      %v4388 = vpow.pop %v4387
      %v4389 = vmul.f32 %v3888, 1.442695
      %v4390 = vpow.pop %v4389
      %v4391 = vmul.f32 %v3889, 1.442695
      %v4392 = vpow.pop %v4391
      %v4393 = vmul.f32 %v3890, 1.442695
      %v4394 = vpow.pop %v4393
      %v4395 = vmul.f32 %v3891, 1.442695
      %v4396 = vpow.pop %v4395
      %v4397 = vmul.f32 %v3892, 1.442695
      %v4398 = vpow.pop %v4397
      %v4399 = vmul.f32 %v3893, 1.442695
      %v4400 = vpow.pop %v4399
      %v4401 = vmul.f32 %v3894, 1.442695
      %v4402 = vpow.pop %v4401
      %v4403 = vmul.f32 %v3895, 1.442695
      %v4404 = vpow.pop %v4403
      %v4405 = vmul.f32 %v3896, 1.442695
      %v4406 = vpow.pop %v4405
      %v4407 = vmul.f32 %v3897, 1.442695
      %v4408 = vpow.pop %v4407
      %v4409 = vmul.f32 %v3898, 1.442695
      %v4410 = vpow.pop %v4409
      %v4411 = vmul.f32 %v3899, 1.442695
      %v4412 = vpow.pop %v4411
      %v4413 = vmul.f32 %v3900, 1.442695
      %v4414 = vpow.pop %v4413
      %v4415 = vmul.f32 %v3901, 1.442695
      %v4416 = vpow.pop %v4415
      %v4417 = vmul.f32 %v3902, 1.442695
      %v4418 = vpow.pop %v4417
      %v4419 = vmul.f32 %v3903, 1.442695
      %v4420 = vpow.pop %v4419
      %v4421 = vmul.f32 %v3904, 1.442695
      %v4422 = vpow.pop %v4421
      %v4423 = vmul.f32 %v3905, 1.442695
      %v4424 = vpow.pop %v4423
      %v4425 = vmul.f32 %v3906, 1.442695
      %v4426 = vpow.pop %v4425
      %v4427 = vmul.f32 %v3907, 1.442695
      %v4428 = vpow.pop %v4427
      %v4429 = vmul.f32 %v3908, 1.442695
      %v4430 = vpow.pop %v4429
      %v4431 = vmul.f32 %v3909, 1.442695
      %v4432 = vpow.pop %v4431
      %v4433 = vmul.f32 %v3910, 1.442695
      %v4434 = vpow.pop %v4433
      %v4435 = vmul.f32 %v3911, 1.442695
      %v4436 = vpow.pop %v4435
      %v4437 = vmul.f32 %v3912, 1.442695
      %v4438 = vpow.pop %v4437
      %v4439 = vmul.f32 %v3913, 1.442695
      %v4440 = vpow.pop %v4439
      %v4441 = vmul.f32 %v3914, 1.442695
      %v4442 = vpow.pop %v4441
      %v4443 = vmul.f32 %v3915, 1.442695
      %v4444 = vpow.pop %v4443
      %v4445 = vmul.f32 %v3916, 1.442695
      %v4446 = vpow.pop %v4445
      %v4447 = vmul.f32 %v3917, 1.442695
      %v4448 = vpow.pop %v4447
      %v4449 = vmul.f32 %v3918, 1.442695
      %v4450 = vpow.pop %v4449
      %v4451 = vmul.f32 %v3919, 1.442695
      %v4452 = vpow.pop %v4451
      %v4453 = vmul.f32 %v3920, 1.442695
      %v4454 = vpow.pop %v4453
      %v4455 = vmul.f32 %v3921, 1.442695
      %v4456 = vpow.pop %v4455
      %v4457 = vmul.f32 %v3922, 1.442695
      %v4458 = vpow.pop %v4457
      %v4459 = vmul.f32 %v3923, 1.442695
      %v4460 = vpow.pop %v4459
      %v4461 = vmul.f32 %v3924, 1.442695
      %v4462 = vpow.pop %v4461
      %v4463 = vmul.f32 %v3925, 1.442695
      %v4464 = vpow.pop %v4463
      %v4465 = vmul.f32 %v3926, 1.442695
      %v4466 = vpow.pop %v4465
      %v4467 = vmul.f32 %v3927, 1.442695
      %v4468 = vpow.pop %v4467
      %v4469 = vmul.f32 %v3928, 1.442695
      %v4470 = vpow.pop %v4469
      %v4471 = vmul.f32 %v3929, 1.442695
      %v4472 = vpow.pop %v4471
      %v4473 = vmul.f32 %v3930, 1.442695
      %v4474 = vpow.pop %v4473
      %v4475 = vsel %vm3114, %v3934, 0.0
      %v4476 = vadd.f32 %v3932, %v4475
      %4477 = vadd.xlane.f32.xlu0 %v4476
      %v4478 = vpop.xlane.xlu0 %4477
      %v4479 = vsel %vm3114, %v3938, 0.0
      %v4480 = vadd.f32 %v3936, %v4479
      %4481 = vadd.xlane.f32.xlu0 %v4480
      %v4482 = vpop.xlane.xlu0 %4481
      %v4483 = vsel %vm3114, %v3942, 0.0
      %v4484 = vadd.f32 %v3940, %v4483
      %4485 = vadd.xlane.f32.xlu0 %v4484
      %v4486 = vpop.xlane.xlu0 %4485
      %v4487 = vsel %vm3114, %v3946, 0.0
      %v4488 = vadd.f32 %v3944, %v4487
      %4489 = vadd.xlane.f32.xlu0 %v4488
      %v4490 = vpop.xlane.xlu0 %4489
      %v4491 = vsel %vm3114, %v3950, 0.0
      %v4492 = vadd.f32 %v3948, %v4491
      %4493 = vadd.xlane.f32.xlu0 %v4492
      %v4494 = vpop.xlane.xlu0 %4493
      %v4495 = vsel %vm3114, %v3954, 0.0
      %v4496 = vadd.f32 %v3952, %v4495
      %4497 = vadd.xlane.f32.xlu0 %v4496
      %v4498 = vpop.xlane.xlu0 %4497
      %v4499 = vsel %vm3114, %v3958, 0.0
      %v4500 = vadd.f32 %v3956, %v4499
      %4501 = vadd.xlane.f32.xlu0 %v4500
      %v4502 = vpop.xlane.xlu0 %4501
      %v4503 = vsel %vm3114, %v3962, 0.0
      %v4504 = vadd.f32 %v3960, %v4503
      %4505 = vadd.xlane.f32.xlu0 %v4504
      %v4506 = vpop.xlane.xlu0 %4505
      %v4507 = vsel %vm3114, %v3966, 0.0
      %v4508 = vadd.f32 %v3964, %v4507
      %4509 = vadd.xlane.f32.xlu0 %v4508
      %v4510 = vpop.xlane.xlu0 %4509
      %v4511 = vsel %vm3114, %v3970, 0.0
      %v4512 = vadd.f32 %v3968, %v4511
      %4513 = vadd.xlane.f32.xlu0 %v4512
      %v4514 = vpop.xlane.xlu0 %4513
      %v4515 = vsel %vm3114, %v3974, 0.0
      %v4516 = vadd.f32 %v3972, %v4515
      %4517 = vadd.xlane.f32.xlu0 %v4516
      %v4518 = vpop.xlane.xlu0 %4517
      %v4519 = vsel %vm3114, %v3978, 0.0
      %v4520 = vadd.f32 %v3976, %v4519
      %4521 = vadd.xlane.f32.xlu0 %v4520
      %v4522 = vpop.xlane.xlu0 %4521
      %v4523 = vsel %vm3114, %v3982, 0.0
      %v4524 = vadd.f32 %v3980, %v4523
      %4525 = vadd.xlane.f32.xlu0 %v4524
      %v4526 = vpop.xlane.xlu0 %4525
      %v4527 = vsel %vm3114, %v3986, 0.0
      %v4528 = vadd.f32 %v3984, %v4527
      %4529 = vadd.xlane.f32.xlu0 %v4528
      %v4530 = vpop.xlane.xlu0 %4529
      %v4531 = vsel %vm3114, %v3990, 0.0
      %v4532 = vadd.f32 %v3988, %v4531
      %4533 = vadd.xlane.f32.xlu0 %v4532
      %v4534 = vpop.xlane.xlu0 %4533
      %v4535 = vsel %vm3114, %v3994, 0.0
      %v4536 = vadd.f32 %v3992, %v4535
      %4537 = vadd.xlane.f32.xlu0 %v4536
      %v4538 = vpop.xlane.xlu0 %4537
      %v4539 = vsel %vm3114, %v3998, 0.0
      %v4540 = vadd.f32 %v3996, %v4539
      %4541 = vadd.xlane.f32.xlu0 %v4540
      %v4542 = vpop.xlane.xlu0 %4541
      %v4543 = vsel %vm3114, %v4002, 0.0
      %v4544 = vadd.f32 %v4000, %v4543
      %4545 = vadd.xlane.f32.xlu0 %v4544
      %v4546 = vpop.xlane.xlu0 %4545
      %v4547 = vsel %vm3114, %v4006, 0.0
      %v4548 = vadd.f32 %v4004, %v4547
      %4549 = vadd.xlane.f32.xlu0 %v4548
      %v4550 = vpop.xlane.xlu0 %4549
      %v4551 = vsel %vm3114, %v4010, 0.0
      %v4552 = vadd.f32 %v4008, %v4551
      %4553 = vadd.xlane.f32.xlu0 %v4552
      %v4554 = vpop.xlane.xlu0 %4553
      %v4555 = vsel %vm3114, %v4014, 0.0
      %v4556 = vadd.f32 %v4012, %v4555
      %4557 = vadd.xlane.f32.xlu0 %v4556
      %v4558 = vpop.xlane.xlu0 %4557
      %v4559 = vsel %vm3114, %v4018, 0.0
      %v4560 = vadd.f32 %v4016, %v4559
      %4561 = vadd.xlane.f32.xlu0 %v4560
      %v4562 = vpop.xlane.xlu0 %4561
      %v4563 = vsel %vm3114, %v4022, 0.0
      %v4564 = vadd.f32 %v4020, %v4563
      %4565 = vadd.xlane.f32.xlu0 %v4564
      %v4566 = vpop.xlane.xlu0 %4565
      %v4567 = vsel %vm3114, %v4026, 0.0
      %v4568 = vadd.f32 %v4024, %v4567
      %4569 = vadd.xlane.f32.xlu0 %v4568
      %v4570 = vpop.xlane.xlu0 %4569
      %v4571 = vsel %vm3114, %v4030, 0.0
      %v4572 = vadd.f32 %v4028, %v4571
      %4573 = vadd.xlane.f32.xlu0 %v4572
      %v4574 = vpop.xlane.xlu0 %4573
      %v4575 = vsel %vm3114, %v4034, 0.0
      %v4576 = vadd.f32 %v4032, %v4575
      %4577 = vadd.xlane.f32.xlu0 %v4576
      %v4578 = vpop.xlane.xlu0 %4577
      %v4579 = vsel %vm3114, %v4038, 0.0
      %v4580 = vadd.f32 %v4036, %v4579
      %4581 = vadd.xlane.f32.xlu0 %v4580
      %v4582 = vpop.xlane.xlu0 %4581
      %v4583 = vsel %vm3114, %v4042, 0.0
      %v4584 = vadd.f32 %v4040, %v4583
      %4585 = vadd.xlane.f32.xlu0 %v4584
      %v4586 = vpop.xlane.xlu0 %4585
      %v4587 = vsel %vm3114, %v4046, 0.0
      %v4588 = vadd.f32 %v4044, %v4587
      %4589 = vadd.xlane.f32.xlu0 %v4588
      %v4590 = vpop.xlane.xlu0 %4589
      %v4591 = vsel %vm3114, %v4050, 0.0
      %v4592 = vadd.f32 %v4048, %v4591
      %4593 = vadd.xlane.f32.xlu0 %v4592
      %v4594 = vpop.xlane.xlu0 %4593
      %v4595 = vsel %vm3114, %v4054, 0.0
      %v4596 = vadd.f32 %v4052, %v4595
      %4597 = vadd.xlane.f32.xlu0 %v4596
      %v4598 = vpop.xlane.xlu0 %4597
      %v4599 = vsel %vm3114, %v4058, 0.0
      %v4600 = vadd.f32 %v4056, %v4599
      %4601 = vadd.xlane.f32.xlu0 %v4600
      %v4602 = vpop.xlane.xlu0 %4601
      %v4603 = vsel %vm3114, %v4062, 0.0
      %v4604 = vadd.f32 %v4060, %v4603
      %4605 = vadd.xlane.f32.xlu0 %v4604
      %v4606 = vpop.xlane.xlu0 %4605
      %v4607 = vsel %vm3114, %v4066, 0.0
      %v4608 = vadd.f32 %v4064, %v4607
      %4609 = vadd.xlane.f32.xlu0 %v4608
      %v4610 = vpop.xlane.xlu0 %4609
      %v4611 = vsel %vm3114, %v4070, 0.0
      %v4612 = vadd.f32 %v4068, %v4611
      %4613 = vadd.xlane.f32.xlu0 %v4612
      %v4614 = vpop.xlane.xlu0 %4613
      %v4615 = vsel %vm3114, %v4074, 0.0
      %v4616 = vadd.f32 %v4072, %v4615
      %4617 = vadd.xlane.f32.xlu0 %v4616
      %v4618 = vpop.xlane.xlu0 %4617
      %v4619 = vsel %vm3114, %v4078, 0.0
      %v4620 = vadd.f32 %v4076, %v4619
      %4621 = vadd.xlane.f32.xlu0 %v4620
      %v4622 = vpop.xlane.xlu0 %4621
      %v4623 = vsel %vm3114, %v4082, 0.0
      %v4624 = vadd.f32 %v4080, %v4623
      %4625 = vadd.xlane.f32.xlu0 %v4624
      %v4626 = vpop.xlane.xlu0 %4625
      %v4627 = vsel %vm3114, %v4086, 0.0
      %v4628 = vadd.f32 %v4084, %v4627
      %4629 = vadd.xlane.f32.xlu0 %v4628
      %v4630 = vpop.xlane.xlu0 %4629
      %v4631 = vsel %vm3114, %v4090, 0.0
      %v4632 = vadd.f32 %v4088, %v4631
      %4633 = vadd.xlane.f32.xlu0 %v4632
      %v4634 = vpop.xlane.xlu0 %4633
      %v4635 = vsel %vm3114, %v4094, 0.0
      %v4636 = vadd.f32 %v4092, %v4635
      %4637 = vadd.xlane.f32.xlu0 %v4636
      %v4638 = vpop.xlane.xlu0 %4637
      %v4639 = vsel %vm3114, %v4098, 0.0
      %v4640 = vadd.f32 %v4096, %v4639
      %4641 = vadd.xlane.f32.xlu0 %v4640
      %v4642 = vpop.xlane.xlu0 %4641
      %v4643 = vsel %vm3114, %v4102, 0.0
      %v4644 = vadd.f32 %v4100, %v4643
      %4645 = vadd.xlane.f32.xlu0 %v4644
      %v4646 = vpop.xlane.xlu0 %4645
      %v4647 = vsel %vm3114, %v4106, 0.0
      %v4648 = vadd.f32 %v4104, %v4647
      %4649 = vadd.xlane.f32.xlu0 %v4648
      %v4650 = vpop.xlane.xlu0 %4649
      %v4651 = vsel %vm3114, %v4110, 0.0
      %v4652 = vadd.f32 %v4108, %v4651
      %4653 = vadd.xlane.f32.xlu0 %v4652
      %v4654 = vpop.xlane.xlu0 %4653
      %v4655 = vsel %vm3114, %v4114, 0.0
      %v4656 = vadd.f32 %v4112, %v4655
      %4657 = vadd.xlane.f32.xlu0 %v4656
      %v4658 = vpop.xlane.xlu0 %4657
      %v4659 = vsel %vm3114, %v4118, 0.0
      %v4660 = vadd.f32 %v4116, %v4659
      %4661 = vadd.xlane.f32.xlu0 %v4660
      %v4662 = vpop.xlane.xlu0 %4661
      %v4663 = vsel %vm3114, %v4122, 0.0
      %v4664 = vadd.f32 %v4120, %v4663
      %4665 = vadd.xlane.f32.xlu0 %v4664
      %v4666 = vpop.xlane.xlu0 %4665
      %v4667 = vsel %vm3114, %v4126, 0.0
      %v4668 = vadd.f32 %v4124, %v4667
      %4669 = vadd.xlane.f32.xlu0 %v4668
      %v4670 = vpop.xlane.xlu0 %4669
      %v4671 = vsel %vm3114, %v4130, 0.0
      %v4672 = vadd.f32 %v4128, %v4671
      %4673 = vadd.xlane.f32.xlu0 %v4672
      %v4674 = vpop.xlane.xlu0 %4673
      %v4675 = vsel %vm3114, %v4134, 0.0
      %v4676 = vadd.f32 %v4132, %v4675
      %4677 = vadd.xlane.f32.xlu0 %v4676
      %v4678 = vpop.xlane.xlu0 %4677
      %v4679 = vsel %vm3114, %v4138, 0.0
      %v4680 = vadd.f32 %v4136, %v4679
      %4681 = vadd.xlane.f32.xlu0 %v4680
      %v4682 = vpop.xlane.xlu0 %4681
      %v4683 = vsel %vm3114, %v4142, 0.0
      %v4684 = vadd.f32 %v4140, %v4683
      %4685 = vadd.xlane.f32.xlu0 %v4684
      %v4686 = vpop.xlane.xlu0 %4685
      %v4687 = vsel %vm3114, %v4146, 0.0
      %v4688 = vadd.f32 %v4144, %v4687
      %4689 = vadd.xlane.f32.xlu0 %v4688
      %v4690 = vpop.xlane.xlu0 %4689
      %v4691 = vsel %vm3114, %v4150, 0.0
      %v4692 = vadd.f32 %v4148, %v4691
      %4693 = vadd.xlane.f32.xlu0 %v4692
      %v4694 = vpop.xlane.xlu0 %4693
      %v4695 = vsel %vm3114, %v4154, 0.0
      %v4696 = vadd.f32 %v4152, %v4695
      %4697 = vadd.xlane.f32.xlu0 %v4696
      %v4698 = vpop.xlane.xlu0 %4697
      %v4699 = vsel %vm3114, %v4158, 0.0
      %v4700 = vadd.f32 %v4156, %v4699
      %4701 = vadd.xlane.f32.xlu0 %v4700
      %v4702 = vpop.xlane.xlu0 %4701
      %v4703 = vsel %vm3114, %v4162, 0.0
      %v4704 = vadd.f32 %v4160, %v4703
      %4705 = vadd.xlane.f32.xlu0 %v4704
      %v4706 = vpop.xlane.xlu0 %4705
      %v4707 = vsel %vm3114, %v4166, 0.0
      %v4708 = vadd.f32 %v4164, %v4707
      %4709 = vadd.xlane.f32.xlu0 %v4708
      %v4710 = vpop.xlane.xlu0 %4709
      %v4711 = vsel %vm3114, %v4170, 0.0
      %v4712 = vadd.f32 %v4168, %v4711
      %4713 = vadd.xlane.f32.xlu0 %v4712
      %v4714 = vpop.xlane.xlu0 %4713
      %v4715 = vsel %vm3114, %v4174, 0.0
      %v4716 = vadd.f32 %v4172, %v4715
      %4717 = vadd.xlane.f32.xlu0 %v4716
      %v4718 = vpop.xlane.xlu0 %4717
      %v4719 = vsel %vm3114, %v4178, 0.0
      %v4720 = vadd.f32 %v4176, %v4719
      %4721 = vadd.xlane.f32.xlu0 %v4720
      %v4722 = vpop.xlane.xlu0 %4721
      %v4723 = vsel %vm3114, %v4182, 0.0
      %v4724 = vadd.f32 %v4180, %v4723
      %4725 = vadd.xlane.f32.xlu0 %v4724
      %v4726 = vpop.xlane.xlu0 %4725
      %v4727 = vsel %vm3114, %v4186, 0.0
      %v4728 = vadd.f32 %v4184, %v4727
      %4729 = vadd.xlane.f32.xlu0 %v4728
      %v4730 = vpop.xlane.xlu0 %4729
      %v4731 = vsel %vm3114, %v4190, 0.0
      %v4732 = vadd.f32 %v4188, %v4731
      %4733 = vadd.xlane.f32.xlu0 %v4732
      %v4734 = vpop.xlane.xlu0 %4733
      %v4735 = vsel %vm3114, %v4194, 0.0
      %v4736 = vadd.f32 %v4192, %v4735
      %4737 = vadd.xlane.f32.xlu0 %v4736
      %v4738 = vpop.xlane.xlu0 %4737
      %v4739 = vsel %vm3114, %v4198, 0.0
      %v4740 = vadd.f32 %v4196, %v4739
      %4741 = vadd.xlane.f32.xlu0 %v4740
      %v4742 = vpop.xlane.xlu0 %4741
      %v4743 = vsel %vm3114, %v4202, 0.0
      %v4744 = vadd.f32 %v4200, %v4743
      %4745 = vadd.xlane.f32.xlu0 %v4744
      %v4746 = vpop.xlane.xlu0 %4745
      %v4747 = vsel %vm3114, %v4206, 0.0
      %v4748 = vadd.f32 %v4204, %v4747
      %4749 = vadd.xlane.f32.xlu0 %v4748
      %v4750 = vpop.xlane.xlu0 %4749
      %v4751 = vsel %vm3114, %v4210, 0.0
      %v4752 = vadd.f32 %v4208, %v4751
      %4753 = vadd.xlane.f32.xlu0 %v4752
      %v4754 = vpop.xlane.xlu0 %4753
      %v4755 = vsel %vm3114, %v4214, 0.0
      %v4756 = vadd.f32 %v4212, %v4755
      %4757 = vadd.xlane.f32.xlu0 %v4756
      %v4758 = vpop.xlane.xlu0 %4757
      %v4759 = vsel %vm3114, %v4218, 0.0
      %v4760 = vadd.f32 %v4216, %v4759
      %4761 = vadd.xlane.f32.xlu0 %v4760
      %v4762 = vpop.xlane.xlu0 %4761
      %v4763 = vsel %vm3114, %v4222, 0.0
      %v4764 = vadd.f32 %v4220, %v4763
      %4765 = vadd.xlane.f32.xlu0 %v4764
      %v4766 = vpop.xlane.xlu0 %4765
      %v4767 = vsel %vm3114, %v4226, 0.0
      %v4768 = vadd.f32 %v4224, %v4767
      %4769 = vadd.xlane.f32.xlu0 %v4768
      %v4770 = vpop.xlane.xlu0 %4769
      %v4771 = vsel %vm3114, %v4230, 0.0
      %v4772 = vadd.f32 %v4228, %v4771
      %4773 = vadd.xlane.f32.xlu0 %v4772
      %v4774 = vpop.xlane.xlu0 %4773
      %v4775 = vsel %vm3114, %v4234, 0.0
      %v4776 = vadd.f32 %v4232, %v4775
      %4777 = vadd.xlane.f32.xlu0 %v4776
      %v4778 = vpop.xlane.xlu0 %4777
      %v4779 = vsel %vm3114, %v4238, 0.0
      %v4780 = vadd.f32 %v4236, %v4779
      %4781 = vadd.xlane.f32.xlu0 %v4780
      %v4782 = vpop.xlane.xlu0 %4781
      %v4783 = vsel %vm3114, %v4242, 0.0
      %v4784 = vadd.f32 %v4240, %v4783
      %4785 = vadd.xlane.f32.xlu0 %v4784
      %v4786 = vpop.xlane.xlu0 %4785
      %v4787 = vsel %vm3114, %v4246, 0.0
      %v4788 = vadd.f32 %v4244, %v4787
      %4789 = vadd.xlane.f32.xlu0 %v4788
      %v4790 = vpop.xlane.xlu0 %4789
      %v4791 = vsel %vm3114, %v4250, 0.0
      %v4792 = vadd.f32 %v4248, %v4791
      %4793 = vadd.xlane.f32.xlu0 %v4792
      %v4794 = vpop.xlane.xlu0 %4793
      %v4795 = vsel %vm3114, %v4254, 0.0
      %v4796 = vadd.f32 %v4252, %v4795
      %4797 = vadd.xlane.f32.xlu0 %v4796
      %v4798 = vpop.xlane.xlu0 %4797
      %v4799 = vsel %vm3114, %v4258, 0.0
      %v4800 = vadd.f32 %v4256, %v4799
      %4801 = vadd.xlane.f32.xlu0 %v4800
      %v4802 = vpop.xlane.xlu0 %4801
      %v4803 = vsel %vm3114, %v4262, 0.0
      %v4804 = vadd.f32 %v4260, %v4803
      %4805 = vadd.xlane.f32.xlu0 %v4804
      %v4806 = vpop.xlane.xlu0 %4805
      %v4807 = vsel %vm3114, %v4266, 0.0
      %v4808 = vadd.f32 %v4264, %v4807
      %4809 = vadd.xlane.f32.xlu0 %v4808
      %v4810 = vpop.xlane.xlu0 %4809
      %v4811 = vsel %vm3114, %v4270, 0.0
      %v4812 = vadd.f32 %v4268, %v4811
      %4813 = vadd.xlane.f32.xlu0 %v4812
      %v4814 = vpop.xlane.xlu0 %4813
      %v4815 = vsel %vm3114, %v4274, 0.0
      %v4816 = vadd.f32 %v4272, %v4815
      %4817 = vadd.xlane.f32.xlu0 %v4816
      %v4818 = vpop.xlane.xlu0 %4817
      %v4819 = vsel %vm3114, %v4278, 0.0
      %v4820 = vadd.f32 %v4276, %v4819
      %4821 = vadd.xlane.f32.xlu0 %v4820
      %v4822 = vpop.xlane.xlu0 %4821
      %v4823 = vsel %vm3114, %v4282, 0.0
      %v4824 = vadd.f32 %v4280, %v4823
      %4825 = vadd.xlane.f32.xlu0 %v4824
      %v4826 = vpop.xlane.xlu0 %4825
      %v4827 = vsel %vm3114, %v4286, 0.0
      %v4828 = vadd.f32 %v4284, %v4827
      %4829 = vadd.xlane.f32.xlu0 %v4828
      %v4830 = vpop.xlane.xlu0 %4829
      %v4831 = vsel %vm3114, %v4290, 0.0
      %v4832 = vadd.f32 %v4288, %v4831
      %4833 = vadd.xlane.f32.xlu0 %v4832
      %v4834 = vpop.xlane.xlu0 %4833
      %v4835 = vsel %vm3114, %v4294, 0.0
      %v4836 = vadd.f32 %v4292, %v4835
      %4837 = vadd.xlane.f32.xlu0 %v4836
      %v4838 = vpop.xlane.xlu0 %4837
      %v4839 = vsel %vm3114, %v4298, 0.0
      %v4840 = vadd.f32 %v4296, %v4839
      %4841 = vadd.xlane.f32.xlu0 %v4840
      %v4842 = vpop.xlane.xlu0 %4841
      %v4843 = vsel %vm3114, %v4302, 0.0
      %v4844 = vadd.f32 %v4300, %v4843
      %4845 = vadd.xlane.f32.xlu0 %v4844
      %v4846 = vpop.xlane.xlu0 %4845
      %v4847 = vsel %vm3114, %v4306, 0.0
      %v4848 = vadd.f32 %v4304, %v4847
      %4849 = vadd.xlane.f32.xlu0 %v4848
      %v4850 = vpop.xlane.xlu0 %4849
      %v4851 = vsel %vm3114, %v4310, 0.0
      %v4852 = vadd.f32 %v4308, %v4851
      %4853 = vadd.xlane.f32.xlu0 %v4852
      %v4854 = vpop.xlane.xlu0 %4853
      %v4855 = vsel %vm3114, %v4314, 0.0
      %v4856 = vadd.f32 %v4312, %v4855
      %4857 = vadd.xlane.f32.xlu0 %v4856
      %v4858 = vpop.xlane.xlu0 %4857
      %v4859 = vsel %vm3114, %v4318, 0.0
      %v4860 = vadd.f32 %v4316, %v4859
      %4861 = vadd.xlane.f32.xlu0 %v4860
      %v4862 = vpop.xlane.xlu0 %4861
      %v4863 = vsel %vm3114, %v4322, 0.0
      %v4864 = vadd.f32 %v4320, %v4863
      %4865 = vadd.xlane.f32.xlu0 %v4864
      %v4866 = vpop.xlane.xlu0 %4865
      %v4867 = vsel %vm3114, %v4326, 0.0
      %v4868 = vadd.f32 %v4324, %v4867
      %4869 = vadd.xlane.f32.xlu0 %v4868
      %v4870 = vpop.xlane.xlu0 %4869
      %v4871 = vsel %vm3114, %v4330, 0.0
      %v4872 = vadd.f32 %v4328, %v4871
      %4873 = vadd.xlane.f32.xlu0 %v4872
      %v4874 = vpop.xlane.xlu0 %4873
      %v4875 = vsel %vm3114, %v4334, 0.0
      %v4876 = vadd.f32 %v4332, %v4875
      %4877 = vadd.xlane.f32.xlu0 %v4876
      %v4878 = vpop.xlane.xlu0 %4877
      %v4879 = vsel %vm3114, %v4338, 0.0
      %v4880 = vadd.f32 %v4336, %v4879
      %4881 = vadd.xlane.f32.xlu0 %v4880
      %v4882 = vpop.xlane.xlu0 %4881
      %v4883 = vsel %vm3114, %v4342, 0.0
      %v4884 = vadd.f32 %v4340, %v4883
      %4885 = vadd.xlane.f32.xlu0 %v4884
      %v4886 = vpop.xlane.xlu0 %4885
      %v4887 = vsel %vm3114, %v4346, 0.0
      %v4888 = vadd.f32 %v4344, %v4887
      %4889 = vadd.xlane.f32.xlu0 %v4888
      %v4890 = vpop.xlane.xlu0 %4889
      %v4891 = vsel %vm3114, %v4350, 0.0
      %v4892 = vadd.f32 %v4348, %v4891
      %4893 = vadd.xlane.f32.xlu0 %v4892
      %v4894 = vpop.xlane.xlu0 %4893
      %v4895 = vsel %vm3114, %v4354, 0.0
      %v4896 = vadd.f32 %v4352, %v4895
      %4897 = vadd.xlane.f32.xlu0 %v4896
      %v4898 = vpop.xlane.xlu0 %4897
      %v4899 = vsel %vm3114, %v4358, 0.0
      %v4900 = vadd.f32 %v4356, %v4899
      %4901 = vadd.xlane.f32.xlu0 %v4900
      %v4902 = vpop.xlane.xlu0 %4901
      %v4903 = vsel %vm3114, %v4362, 0.0
      %v4904 = vadd.f32 %v4360, %v4903
      %4905 = vadd.xlane.f32.xlu0 %v4904
      %v4906 = vpop.xlane.xlu0 %4905
      %v4907 = vsel %vm3114, %v4366, 0.0
      %v4908 = vadd.f32 %v4364, %v4907
      %4909 = vadd.xlane.f32.xlu0 %v4908
      %v4910 = vpop.xlane.xlu0 %4909
      %v4911 = vsel %vm3114, %v4370, 0.0
      %v4912 = vadd.f32 %v4368, %v4911
      %4913 = vadd.xlane.f32.xlu0 %v4912
      %v4914 = vpop.xlane.xlu0 %4913
      %v4915 = vsel %vm3114, %v4374, 0.0
      %v4916 = vadd.f32 %v4372, %v4915
      %4917 = vadd.xlane.f32.xlu0 %v4916
      %v4918 = vpop.xlane.xlu0 %4917
      %v4919 = vsel %vm3114, %v4378, 0.0
      %v4920 = vadd.f32 %v4376, %v4919
      %4921 = vadd.xlane.f32.xlu0 %v4920
      %v4922 = vpop.xlane.xlu0 %4921
      %v4923 = vsel %vm3114, %v4382, 0.0
      %v4924 = vadd.f32 %v4380, %v4923
      %4925 = vadd.xlane.f32.xlu0 %v4924
      %v4926 = vpop.xlane.xlu0 %4925
      %v4927 = vsel %vm3114, %v4386, 0.0
      %v4928 = vadd.f32 %v4384, %v4927
      %4929 = vadd.xlane.f32.xlu0 %v4928
      %v4930 = vpop.xlane.xlu0 %4929
      %v4931 = vsel %vm3114, %v4390, 0.0
      %v4932 = vadd.f32 %v4388, %v4931
      %4933 = vadd.xlane.f32.xlu0 %v4932
      %v4934 = vpop.xlane.xlu0 %4933
      %v4935 = vsel %vm3114, %v4394, 0.0
      %v4936 = vadd.f32 %v4392, %v4935
      %4937 = vadd.xlane.f32.xlu0 %v4936
      %v4938 = vpop.xlane.xlu0 %4937
      %v4939 = vsel %vm3114, %v4398, 0.0
      %v4940 = vadd.f32 %v4396, %v4939
      %4941 = vadd.xlane.f32.xlu0 %v4940
      %v4942 = vpop.xlane.xlu0 %4941
      %v4943 = vsel %vm3114, %v4402, 0.0
      %v4944 = vadd.f32 %v4400, %v4943
      %4945 = vadd.xlane.f32.xlu0 %v4944
      %v4946 = vpop.xlane.xlu0 %4945
      %v4947 = vsel %vm3114, %v4406, 0.0
      %v4948 = vadd.f32 %v4404, %v4947
      %4949 = vadd.xlane.f32.xlu0 %v4948
      %v4950 = vpop.xlane.xlu0 %4949
      %v4951 = vsel %vm3114, %v4410, 0.0
      %v4952 = vadd.f32 %v4408, %v4951
      %4953 = vadd.xlane.f32.xlu0 %v4952
      %v4954 = vpop.xlane.xlu0 %4953
      %v4955 = vsel %vm3114, %v4414, 0.0
      %v4956 = vadd.f32 %v4412, %v4955
      %4957 = vadd.xlane.f32.xlu0 %v4956
      %v4958 = vpop.xlane.xlu0 %4957
      %v4959 = vsel %vm3114, %v4418, 0.0
      %v4960 = vadd.f32 %v4416, %v4959
      %4961 = vadd.xlane.f32.xlu0 %v4960
      %v4962 = vpop.xlane.xlu0 %4961
      %v4963 = vsel %vm3114, %v4422, 0.0
      %v4964 = vadd.f32 %v4420, %v4963
      %4965 = vadd.xlane.f32.xlu0 %v4964
      %v4966 = vpop.xlane.xlu0 %4965
      %v4967 = vsel %vm3114, %v4426, 0.0
      %v4968 = vadd.f32 %v4424, %v4967
      %4969 = vadd.xlane.f32.xlu0 %v4968
      %v4970 = vpop.xlane.xlu0 %4969
      %v4971 = vsel %vm3114, %v4430, 0.0
      %v4972 = vadd.f32 %v4428, %v4971
      %4973 = vadd.xlane.f32.xlu0 %v4972
      %v4974 = vpop.xlane.xlu0 %4973
      %v4975 = vsel %vm3114, %v4434, 0.0
      %v4976 = vadd.f32 %v4432, %v4975
      %4977 = vadd.xlane.f32.xlu0 %v4976
      %v4978 = vpop.xlane.xlu0 %4977
      %v4979 = vsel %vm3114, %v4438, 0.0
      %v4980 = vadd.f32 %v4436, %v4979
      %4981 = vadd.xlane.f32.xlu0 %v4980
      %v4982 = vpop.xlane.xlu0 %4981
      %v4983 = vsel %vm3114, %v4442, 0.0
      %v4984 = vadd.f32 %v4440, %v4983
      %4985 = vadd.xlane.f32.xlu0 %v4984
      %v4986 = vpop.xlane.xlu0 %4985
      %v4987 = vsel %vm3114, %v4446, 0.0
      %v4988 = vadd.f32 %v4444, %v4987
      %4989 = vadd.xlane.f32.xlu0 %v4988
      %v4990 = vpop.xlane.xlu0 %4989
      %v4991 = vsel %vm3114, %v4450, 0.0
      %v4992 = vadd.f32 %v4448, %v4991
      %4993 = vadd.xlane.f32.xlu0 %v4992
      %v4994 = vpop.xlane.xlu0 %4993
      %v4995 = vsel %vm3114, %v4454, 0.0
      %v4996 = vadd.f32 %v4452, %v4995
      %4997 = vadd.xlane.f32.xlu0 %v4996
      %v4998 = vpop.xlane.xlu0 %4997
      %v4999 = vsel %vm3114, %v4458, 0.0
      %v5000 = vadd.f32 %v4456, %v4999
      %5001 = vadd.xlane.f32.xlu0 %v5000
      %v5002 = vpop.xlane.xlu0 %5001
      %v5003 = vsel %vm3114, %v4462, 0.0
      %v5004 = vadd.f32 %v4460, %v5003
      %5005 = vadd.xlane.f32.xlu0 %v5004
      %v5006 = vpop.xlane.xlu0 %5005
      %v5007 = vsel %vm3114, %v4466, 0.0
      %v5008 = vadd.f32 %v4464, %v5007
      %5009 = vadd.xlane.f32.xlu0 %v5008
      %v5010 = vpop.xlane.xlu0 %5009
      %v5011 = vsel %vm3114, %v4470, 0.0
      %v5012 = vadd.f32 %v4468, %v5011
      %5013 = vadd.xlane.f32.xlu0 %v5012
      %v5014 = vpop.xlane.xlu0 %5013
      %v5015 = vsel %vm3114, %v4474, 0.0
      %v5016 = vadd.f32 %v4472, %v5015
      %5017 = vadd.xlane.f32.xlu0 %v5016
      %v5018 = vpop.xlane.xlu0 %5017
      %v5019 = vpack.c.bf16 %v3936, %v3932
      %v5020 = vpack.c.bf16 %v3938, %v3934
      %v5021 = vpack.c.bf16 %v3944, %v3940
      %v5022 = vpack.c.bf16 %v3946, %v3942
      %v5023 = vpack.c.bf16 %v3952, %v3948
      %v5024 = vpack.c.bf16 %v3954, %v3950
      %v5025 = vpack.c.bf16 %v3960, %v3956
      %v5026 = vpack.c.bf16 %v3962, %v3958
      %v5027 = vpack.c.bf16 %v3968, %v3964
      %v5028 = vpack.c.bf16 %v3970, %v3966
      %v5029 = vpack.c.bf16 %v3976, %v3972
      %v5030 = vpack.c.bf16 %v3978, %v3974
      %v5031 = vpack.c.bf16 %v3984, %v3980
      %v5032 = vpack.c.bf16 %v3986, %v3982
      %v5033 = vpack.c.bf16 %v3992, %v3988
      %v5034 = vpack.c.bf16 %v3994, %v3990
      %v5035 = vpack.c.bf16 %v4000, %v3996
      %v5036 = vpack.c.bf16 %v4002, %v3998
      %v5037 = vpack.c.bf16 %v4008, %v4004
      %v5038 = vpack.c.bf16 %v4010, %v4006
      %v5039 = vpack.c.bf16 %v4016, %v4012
      %v5040 = vpack.c.bf16 %v4018, %v4014
      %v5041 = vpack.c.bf16 %v4024, %v4020
      %v5042 = vpack.c.bf16 %v4026, %v4022
      %v5043 = vpack.c.bf16 %v4032, %v4028
      %v5044 = vpack.c.bf16 %v4034, %v4030
      %v5045 = vpack.c.bf16 %v4040, %v4036
      %v5046 = vpack.c.bf16 %v4042, %v4038
      %v5047 = vpack.c.bf16 %v4048, %v4044
      %v5048 = vpack.c.bf16 %v4050, %v4046
      %v5049 = vpack.c.bf16 %v4056, %v4052
      %v5050 = vpack.c.bf16 %v4058, %v4054
      %v5051 = vpack.c.bf16 %v4064, %v4060
      %v5052 = vpack.c.bf16 %v4066, %v4062
      %v5053 = vpack.c.bf16 %v4072, %v4068
      %v5054 = vpack.c.bf16 %v4074, %v4070
      %v5055 = vpack.c.bf16 %v4080, %v4076
      %v5056 = vpack.c.bf16 %v4082, %v4078
      %v5057 = vpack.c.bf16 %v4088, %v4084
      %v5058 = vpack.c.bf16 %v4090, %v4086
      %v5059 = vpack.c.bf16 %v4096, %v4092
      %v5060 = vpack.c.bf16 %v4098, %v4094
      %v5061 = vpack.c.bf16 %v4104, %v4100
      %v5062 = vpack.c.bf16 %v4106, %v4102
      %v5063 = vpack.c.bf16 %v4112, %v4108
      %v5064 = vpack.c.bf16 %v4114, %v4110
      %v5065 = vpack.c.bf16 %v4120, %v4116
      %v5066 = vpack.c.bf16 %v4122, %v4118
      %v5067 = vpack.c.bf16 %v4128, %v4124
      %v5068 = vpack.c.bf16 %v4130, %v4126
      %v5069 = vpack.c.bf16 %v4136, %v4132
      %v5070 = vpack.c.bf16 %v4138, %v4134
      %v5071 = vpack.c.bf16 %v4144, %v4140
      %v5072 = vpack.c.bf16 %v4146, %v4142
      %v5073 = vpack.c.bf16 %v4152, %v4148
      %v5074 = vpack.c.bf16 %v4154, %v4150
      %v5075 = vpack.c.bf16 %v4160, %v4156
      %v5076 = vpack.c.bf16 %v4162, %v4158
      %v5077 = vpack.c.bf16 %v4168, %v4164
      %v5078 = vpack.c.bf16 %v4170, %v4166
      %v5079 = vpack.c.bf16 %v4176, %v4172
      %v5080 = vpack.c.bf16 %v4178, %v4174
      %v5081 = vpack.c.bf16 %v4184, %v4180
      %v5082 = vpack.c.bf16 %v4186, %v4182
      %v5083 = vpack.c.bf16 %v4192, %v4188
      %v5084 = vpack.c.bf16 %v4194, %v4190
      %v5085 = vpack.c.bf16 %v4200, %v4196
      %v5086 = vpack.c.bf16 %v4202, %v4198
      %v5087 = vpack.c.bf16 %v4208, %v4204
      %v5088 = vpack.c.bf16 %v4210, %v4206
      %v5089 = vpack.c.bf16 %v4216, %v4212
      %v5090 = vpack.c.bf16 %v4218, %v4214
      %v5091 = vpack.c.bf16 %v4224, %v4220
      %v5092 = vpack.c.bf16 %v4226, %v4222
      %v5093 = vpack.c.bf16 %v4232, %v4228
      %v5094 = vpack.c.bf16 %v4234, %v4230
      %v5095 = vpack.c.bf16 %v4240, %v4236
      %v5096 = vpack.c.bf16 %v4242, %v4238
      %v5097 = vpack.c.bf16 %v4248, %v4244
      %v5098 = vpack.c.bf16 %v4250, %v4246
      %v5099 = vpack.c.bf16 %v4256, %v4252
      %v5100 = vpack.c.bf16 %v4258, %v4254
      %v5101 = vpack.c.bf16 %v4264, %v4260
      %v5102 = vpack.c.bf16 %v4266, %v4262
      %v5103 = vpack.c.bf16 %v4272, %v4268
      %v5104 = vpack.c.bf16 %v4274, %v4270
      %v5105 = vpack.c.bf16 %v4280, %v4276
      %v5106 = vpack.c.bf16 %v4282, %v4278
      %v5107 = vpack.c.bf16 %v4288, %v4284
      %v5108 = vpack.c.bf16 %v4290, %v4286
      %v5109 = vpack.c.bf16 %v4296, %v4292
      %v5110 = vpack.c.bf16 %v4298, %v4294
      %v5111 = vpack.c.bf16 %v4304, %v4300
      %v5112 = vpack.c.bf16 %v4306, %v4302
      %v5113 = vpack.c.bf16 %v4312, %v4308
      %v5114 = vpack.c.bf16 %v4314, %v4310
      %v5115 = vpack.c.bf16 %v4320, %v4316
      %v5116 = vpack.c.bf16 %v4322, %v4318
      %v5117 = vpack.c.bf16 %v4328, %v4324
      %v5118 = vpack.c.bf16 %v4330, %v4326
      %v5119 = vpack.c.bf16 %v4336, %v4332
      %v5120 = vpack.c.bf16 %v4338, %v4334
      %v5121 = vpack.c.bf16 %v4344, %v4340
      %v5122 = vpack.c.bf16 %v4346, %v4342
      %v5123 = vpack.c.bf16 %v4352, %v4348
      %v5124 = vpack.c.bf16 %v4354, %v4350
      %v5125 = vpack.c.bf16 %v4360, %v4356
      %v5126 = vpack.c.bf16 %v4362, %v4358
      %v5127 = vpack.c.bf16 %v4368, %v4364
      %v5128 = vpack.c.bf16 %v4370, %v4366
      %v5129 = vpack.c.bf16 %v4376, %v4372
      %v5130 = vpack.c.bf16 %v4378, %v4374
      %v5131 = vpack.c.bf16 %v4384, %v4380
      %v5132 = vpack.c.bf16 %v4386, %v4382
      %v5133 = vpack.c.bf16 %v4392, %v4388
      %v5134 = vpack.c.bf16 %v4394, %v4390
      %v5135 = vpack.c.bf16 %v4400, %v4396
      %v5136 = vpack.c.bf16 %v4402, %v4398
      %v5137 = vpack.c.bf16 %v4408, %v4404
      %v5138 = vpack.c.bf16 %v4410, %v4406
      %v5139 = vpack.c.bf16 %v4416, %v4412
      %v5140 = vpack.c.bf16 %v4418, %v4414
      %v5141 = vpack.c.bf16 %v4424, %v4420
      %v5142 = vpack.c.bf16 %v4426, %v4422
      %v5143 = vpack.c.bf16 %v4432, %v4428
      %v5144 = vpack.c.bf16 %v4434, %v4430
      %v5145 = vpack.c.bf16 %v4440, %v4436
      %v5146 = vpack.c.bf16 %v4442, %v4438
      %v5147 = vpack.c.bf16 %v4448, %v4444
      %v5148 = vpack.c.bf16 %v4450, %v4446
      %v5149 = vpack.c.bf16 %v4456, %v4452
      %v5150 = vpack.c.bf16 %v4458, %v4454
      %v5151 = vpack.c.bf16 %v4464, %v4460
      %v5152 = vpack.c.bf16 %v4466, %v4462
      %v5153 = vpack.c.bf16 %v4472, %v4468
      %v5154 = vpack.c.bf16 %v4474, %v4470
      %5155 = vrot.lane.b32.xlu0 %v800, 64
      %v5156 = vpop.permute.xlu0 %5155
      %5157 = vrot.lane.b32.xlu0 %v801, 64
      %v5158 = vpop.permute.xlu0 %5157
      %5159 = vrot.lane.b32.xlu0 %v802, 64
      %v5160 = vpop.permute.xlu0 %5159
      %5161 = vrot.lane.b32.xlu0 %v803, 64
      %v5162 = vpop.permute.xlu0 %5161
      %5163 = vrot.lane.b32.xlu0 %v804, 64
      %v5164 = vpop.permute.xlu0 %5163
      %5165 = vrot.lane.b32.xlu0 %v805, 64
      %v5166 = vpop.permute.xlu0 %5165
      %5167 = vrot.lane.b32.xlu0 %v806, 64
      %v5168 = vpop.permute.xlu0 %5167
      %5169 = vrot.lane.b32.xlu0 %v807, 64
      %v5170 = vpop.permute.xlu0 %5169
      %5171 = vrot.lane.b32.xlu0 %v808, 64
      %v5172 = vpop.permute.xlu0 %5171
      %v5182 = vsel %vm3114, %v5020, 0
      %v5185 = vsel %vm3114, %v5022, 0
      %v5188 = vsel %vm3114, %v5024, 0
      %v5191 = vsel %vm3114, %v5026, 0
      %v5194 = vsel %vm3114, %v5028, 0
      %v5197 = vsel %vm3114, %v5030, 0
      %v5200 = vsel %vm3114, %v5032, 0
      %v5203 = vsel %vm3114, %v5034, 0
      %v5206 = vsel %vm3114, %v5036, 0
      %v5209 = vsel %vm3114, %v5038, 0
      %v5212 = vsel %vm3114, %v5040, 0
      %v5215 = vsel %vm3114, %v5042, 0
      %v5218 = vsel %vm3114, %v5044, 0
      %v5221 = vsel %vm3114, %v5046, 0
      %v5224 = vsel %vm3114, %v5048, 0
      %v5227 = vsel %vm3114, %v5050, 0
      %v5230 = vsel %vm3114, %v5052, 0
      %v5233 = vsel %vm3114, %v5054, 0
      %v5236 = vsel %vm3114, %v5056, 0
      %v5239 = vsel %vm3114, %v5058, 0
      %v5242 = vsel %vm3114, %v5060, 0
      %v5245 = vsel %vm3114, %v5062, 0
      %v5248 = vsel %vm3114, %v5064, 0
      %v5251 = vsel %vm3114, %v5066, 0
      %v5254 = vsel %vm3114, %v5068, 0
      %v5257 = vsel %vm3114, %v5070, 0
      %v5260 = vsel %vm3114, %v5072, 0
      %v5263 = vsel %vm3114, %v5074, 0
      %v5266 = vsel %vm3114, %v5076, 0
      %v5269 = vsel %vm3114, %v5078, 0
      %v5272 = vsel %vm3114, %v5080, 0
      %v5275 = vsel %vm3114, %v5082, 0
      %v5278 = vsel %vm3114, %v5084, 0
      %v5281 = vsel %vm3114, %v5086, 0
      %v5284 = vsel %vm3114, %v5088, 0
      %v5287 = vsel %vm3114, %v5090, 0
      %v5290 = vsel %vm3114, %v5092, 0
      %v5293 = vsel %vm3114, %v5094, 0
      %v5296 = vsel %vm3114, %v5096, 0
      %v5299 = vsel %vm3114, %v5098, 0
      %v5302 = vsel %vm3114, %v5100, 0
      %v5305 = vsel %vm3114, %v5102, 0
      %v5308 = vsel %vm3114, %v5104, 0
      %v5311 = vsel %vm3114, %v5106, 0
      %v5314 = vsel %vm3114, %v5108, 0
      %v5317 = vsel %vm3114, %v5110, 0
      %v5320 = vsel %vm3114, %v5112, 0
      %v5323 = vsel %vm3114, %v5114, 0
      %v5326 = vsel %vm3114, %v5116, 0
      %v5329 = vsel %vm3114, %v5118, 0
      %v5332 = vsel %vm3114, %v5120, 0
      %v5335 = vsel %vm3114, %v5122, 0
      %v5338 = vsel %vm3114, %v5124, 0
      %v5341 = vsel %vm3114, %v5126, 0
      %v5344 = vsel %vm3114, %v5128, 0
      %v5347 = vsel %vm3114, %v5130, 0
      %v5350 = vsel %vm3114, %v5132, 0
      %v5353 = vsel %vm3114, %v5134, 0
      %v5356 = vsel %vm3114, %v5136, 0
      %v5359 = vsel %vm3114, %v5138, 0
      %v5362 = vsel %vm3114, %v5140, 0
      %v5365 = vsel %vm3114, %v5142, 0
      %v5368 = vsel %vm3114, %v5144, 0
      %v5371 = vsel %vm3114, %v5146, 0
      %v5374 = vsel %vm3114, %v5148, 0
      %v5377 = vsel %vm3114, %v5150, 0
      %v5380 = vsel %vm3114, %v5152, 0
      %v5383 = vsel %vm3114, %v5154, 0
      %vm5385 = vcmask 1043456
      %v5387 = vsel %vm5385, %v5172, 0
      %5389 = vmatprep.subr.bf16.mxu0 0
      %5390 = vmatpush1.bf16.msra.mxu0 %v5156
      %5391 = vmatprep.subr.bf16.mxu0 0
      %5392 = vmatpush1.bf16.msra.mxu0 %v5158
      %5393 = vmatprep.subr.bf16.mxu0 0
      %5394 = vmatpush1.bf16.msra.mxu0 %v5160
      %5395 = vmatprep.subr.bf16.mxu0 0
      %5396 = vmatpush1.bf16.msra.mxu0 %v5162
      %5397 = vmatprep.subr.bf16.mxu0 0
      %5398 = vmatpush1.bf16.msra.mxu0 %v5164
      %5399 = vmatprep.subr.bf16.mxu0 0
      %5400 = vmatpush1.bf16.msra.mxu0 %v5166
      %5401 = vmatprep.subr.bf16.mxu0 0
      %5402 = vmatpush1.bf16.msra.mxu0 %v5168
      %5403 = vmatprep.subr.bf16.mxu0 0
      %5404 = vmatpush1.bf16.msra.mxu0 %v5170
      %5405 = vmatprep.subr.bf16.mxu0 0
      %5406 = vmatpush1.bf16.msra.mxu0 %v5387
      %5407 = vmatprep.subr.bf16.mxu0 0
      %5408 = vmatpush1.bf16.msra.mxu0 0
      %5409 = vmatprep.subr.bf16.mxu0 0
      %5410 = vmatpush1.bf16.msra.mxu0 0
      %5411 = vmatprep.subr.bf16.mxu0 0
      %5412 = vmatpush1.bf16.msra.mxu0 0
      %5413 = vmatprep.subr.bf16.mxu0 0
      %5414 = vmatpush1.bf16.msra.mxu0 0
      %5415 = vmatprep.subr.bf16.mxu0 0
      %5416 = vmatpush1.bf16.msra.mxu0 0
      %5417 = vmatprep.subr.bf16.mxu0 0
      %5418 = vmatpush1.bf16.msra.mxu0 0
      %5419 = vmatprep.subr.bf16.mxu0 0
      %5420 = vmatpush1.bf16.msra.mxu0 0
      %5421 = vmatprep.mubr.bf16.mxu0 %v5182
      %5422 = vmatmul.mubr.bf16.gmra.mrb[0].mxu0 %v5019
      %v5423 = vpop.f32.mrb[0].mxu0
      %v5424 = vadd.f32 0.0, %v5423
      %v5425 = vpop.f32.mrb[0].mxu0
      %v5426 = vpop.f32.mrb[0].mxu0
      %v5427 = vadd.f32 0.0, %v5426
      %v5428 = vpop.f32.mrb[0].mxu0
      %5429 = vmatprep.mubr.bf16.mxu0 %v5185
      %5430 = vmatmul.mubr.bf16.gmra.mrb[0].mxu0 %v5021
      %v5431 = vpop.f32.mrb[0].mxu0
      %v5432 = vadd.f32 0.0, %v5431
      %v5433 = vpop.f32.mrb[0].mxu0
      %v5434 = vpop.f32.mrb[0].mxu0
      %v5435 = vadd.f32 0.0, %v5434
      %v5436 = vpop.f32.mrb[0].mxu0
      %5437 = vmatprep.mubr.bf16.mxu0 %v5188
      %5438 = vmatmul.mubr.bf16.gmra.mrb[0].mxu0 %v5023
      %v5439 = vpop.f32.mrb[0].mxu0
      %v5440 = vadd.f32 0.0, %v5439
      %v5441 = vpop.f32.mrb[0].mxu0
      %v5442 = vpop.f32.mrb[0].mxu0
      %v5443 = vadd.f32 0.0, %v5442
      %v5444 = vpop.f32.mrb[0].mxu0
      %5445 = vmatprep.mubr.bf16.mxu0 %v5191
      %5446 = vmatmul.mubr.bf16.gmra.mrb[0].mxu0 %v5025
      %v5447 = vpop.f32.mrb[0].mxu0
      %v5448 = vadd.f32 0.0, %v5447
      %v5449 = vpop.f32.mrb[0].mxu0
      %v5450 = vpop.f32.mrb[0].mxu0
      %v5451 = vadd.f32 0.0, %v5450
      %v5452 = vpop.f32.mrb[0].mxu0
      %5453 = vmatprep.mubr.bf16.mxu0 %v5194
      %5454 = vmatmul.mubr.bf16.gmra.mrb[0].mxu0 %v5027
      %v5455 = vpop.f32.mrb[0].mxu0
      %v5456 = vadd.f32 0.0, %v5455
      %v5457 = vpop.f32.mrb[0].mxu0
      %v5458 = vpop.f32.mrb[0].mxu0
      %v5459 = vadd.f32 0.0, %v5458
      %v5460 = vpop.f32.mrb[0].mxu0
      %5461 = vmatprep.mubr.bf16.mxu0 %v5197
      %5462 = vmatmul.mubr.bf16.gmra.mrb[0].mxu0 %v5029
      %v5463 = vpop.f32.mrb[0].mxu0
      %v5464 = vadd.f32 0.0, %v5463
      %v5465 = vpop.f32.mrb[0].mxu0
      %v5466 = vpop.f32.mrb[0].mxu0
      %v5467 = vadd.f32 0.0, %v5466
      %v5468 = vpop.f32.mrb[0].mxu0
      %5469 = vmatprep.mubr.bf16.mxu0 %v5200
      %5470 = vmatmul.mubr.bf16.gmra.mrb[0].mxu0 %v5031
      %v5471 = vpop.f32.mrb[0].mxu0
      %v5472 = vadd.f32 0.0, %v5471
      %v5473 = vpop.f32.mrb[0].mxu0
      %v5474 = vpop.f32.mrb[0].mxu0
      %v5475 = vadd.f32 0.0, %v5474
      %v5476 = vpop.f32.mrb[0].mxu0
      %5477 = vmatprep.mubr.bf16.mxu0 %v5203
      %5478 = vmatmul.mubr.bf16.gmra.mrb[0].mxu0 %v5033
      %v5479 = vpop.f32.mrb[0].mxu0
      %v5480 = vadd.f32 0.0, %v5479
      %v5481 = vpop.f32.mrb[0].mxu0
      %v5482 = vpop.f32.mrb[0].mxu0
      %v5483 = vadd.f32 0.0, %v5482
      %v5484 = vpop.f32.mrb[0].mxu0
      %5485 = vmatprep.mubr.bf16.mxu0 %v5206
      %5486 = vmatmul.mubr.bf16.gmra.mrb[0].mxu0 %v5035
      %v5487 = vpop.f32.mrb[0].mxu0
      %v5488 = vadd.f32 0.0, %v5487
      %v5489 = vpop.f32.mrb[0].mxu0
      %v5490 = vpop.f32.mrb[0].mxu0
      %v5491 = vadd.f32 0.0, %v5490
      %v5492 = vpop.f32.mrb[0].mxu0
      %5493 = vmatprep.mubr.bf16.mxu0 %v5209
      %5494 = vmatmul.mubr.bf16.gmra.mrb[0].mxu0 %v5037
      %v5495 = vpop.f32.mrb[0].mxu0
      %v5496 = vadd.f32 0.0, %v5495
      %v5497 = vpop.f32.mrb[0].mxu0
      %v5498 = vpop.f32.mrb[0].mxu0
      %v5499 = vadd.f32 0.0, %v5498
      %v5500 = vpop.f32.mrb[0].mxu0
      %5501 = vmatprep.mubr.bf16.mxu0 %v5212
      %5502 = vmatmul.mubr.bf16.gmra.mrb[0].mxu0 %v5039
      %v5503 = vpop.f32.mrb[0].mxu0
      %v5504 = vadd.f32 0.0, %v5503
      %v5505 = vpop.f32.mrb[0].mxu0
      %v5506 = vpop.f32.mrb[0].mxu0
      %v5507 = vadd.f32 0.0, %v5506
      %v5508 = vpop.f32.mrb[0].mxu0
      %5509 = vmatprep.mubr.bf16.mxu0 %v5215
      %5510 = vmatmul.mubr.bf16.gmra.mrb[0].mxu0 %v5041
      %v5511 = vpop.f32.mrb[0].mxu0
      %v5512 = vadd.f32 0.0, %v5511
      %v5513 = vpop.f32.mrb[0].mxu0
      %v5514 = vpop.f32.mrb[0].mxu0
      %v5515 = vadd.f32 0.0, %v5514
      %v5516 = vpop.f32.mrb[0].mxu0
      %5517 = vmatprep.mubr.bf16.mxu0 %v5218
      %5518 = vmatmul.mubr.bf16.gmra.mrb[0].mxu0 %v5043
      %v5519 = vpop.f32.mrb[0].mxu0
      %v5520 = vadd.f32 0.0, %v5519
      %v5521 = vpop.f32.mrb[0].mxu0
      %v5522 = vpop.f32.mrb[0].mxu0
      %v5523 = vadd.f32 0.0, %v5522
      %v5524 = vpop.f32.mrb[0].mxu0
      %5525 = vmatprep.mubr.bf16.mxu0 %v5221
      %5526 = vmatmul.mubr.bf16.gmra.mrb[0].mxu0 %v5045
      %v5527 = vpop.f32.mrb[0].mxu0
      %v5528 = vadd.f32 0.0, %v5527
      %v5529 = vpop.f32.mrb[0].mxu0
      %v5530 = vpop.f32.mrb[0].mxu0
      %v5531 = vadd.f32 0.0, %v5530
      %v5532 = vpop.f32.mrb[0].mxu0
      %5533 = vmatprep.mubr.bf16.mxu0 %v5224
      %5534 = vmatmul.mubr.bf16.gmra.mrb[0].mxu0 %v5047
      %v5535 = vpop.f32.mrb[0].mxu0
      %v5536 = vadd.f32 0.0, %v5535
      %v5537 = vpop.f32.mrb[0].mxu0
      %v5538 = vpop.f32.mrb[0].mxu0
      %v5539 = vadd.f32 0.0, %v5538
      %v5540 = vpop.f32.mrb[0].mxu0
      %5541 = vmatprep.mubr.bf16.mxu0 %v5227
      %5542 = vmatmul.mubr.bf16.gmra.mrb[0].mxu0 %v5049
      %v5543 = vpop.f32.mrb[0].mxu0
      %v5544 = vadd.f32 0.0, %v5543
      %v5545 = vpop.f32.mrb[0].mxu0
      %v5546 = vpop.f32.mrb[0].mxu0
      %v5547 = vadd.f32 0.0, %v5546
      %v5548 = vpop.f32.mrb[0].mxu0
      %5549 = vmatprep.mubr.bf16.mxu0 %v5230
      %5550 = vmatmul.mubr.bf16.gmra.mrb[0].mxu0 %v5051
      %v5551 = vpop.f32.mrb[0].mxu0
      %v5552 = vadd.f32 0.0, %v5551
      %v5553 = vpop.f32.mrb[0].mxu0
      %v5554 = vpop.f32.mrb[0].mxu0
      %v5555 = vadd.f32 0.0, %v5554
      %v5556 = vpop.f32.mrb[0].mxu0
      %5557 = vmatprep.mubr.bf16.mxu0 %v5233
      %5558 = vmatmul.mubr.bf16.gmra.mrb[0].mxu0 %v5053
      %v5559 = vpop.f32.mrb[0].mxu0
      %v5560 = vadd.f32 0.0, %v5559
      %v5561 = vpop.f32.mrb[0].mxu0
      %v5562 = vpop.f32.mrb[0].mxu0
      %v5563 = vadd.f32 0.0, %v5562
      %v5564 = vpop.f32.mrb[0].mxu0
      %5565 = vmatprep.mubr.bf16.mxu0 %v5236
      %5566 = vmatmul.mubr.bf16.gmra.mrb[0].mxu0 %v5055
      %v5567 = vpop.f32.mrb[0].mxu0
      %v5568 = vadd.f32 0.0, %v5567
      %v5569 = vpop.f32.mrb[0].mxu0
      %v5570 = vpop.f32.mrb[0].mxu0
      %v5571 = vadd.f32 0.0, %v5570
      %v5572 = vpop.f32.mrb[0].mxu0
      %5573 = vmatprep.mubr.bf16.mxu0 %v5239
      %5574 = vmatmul.mubr.bf16.gmra.mrb[0].mxu0 %v5057
      %v5575 = vpop.f32.mrb[0].mxu0
      %v5576 = vadd.f32 0.0, %v5575
      %v5577 = vpop.f32.mrb[0].mxu0
      %v5578 = vpop.f32.mrb[0].mxu0
      %v5579 = vadd.f32 0.0, %v5578
      %v5580 = vpop.f32.mrb[0].mxu0
      %5581 = vmatprep.mubr.bf16.mxu0 %v5242
      %5582 = vmatmul.mubr.bf16.gmra.mrb[0].mxu0 %v5059
      %v5583 = vpop.f32.mrb[0].mxu0
      %v5584 = vadd.f32 0.0, %v5583
      %v5585 = vpop.f32.mrb[0].mxu0
      %v5586 = vpop.f32.mrb[0].mxu0
      %v5587 = vadd.f32 0.0, %v5586
      %v5588 = vpop.f32.mrb[0].mxu0
      %5589 = vmatprep.mubr.bf16.mxu0 %v5245
      %5590 = vmatmul.mubr.bf16.gmra.mrb[0].mxu0 %v5061
      %v5591 = vpop.f32.mrb[0].mxu0
      %v5592 = vadd.f32 0.0, %v5591
      %v5593 = vpop.f32.mrb[0].mxu0
      %v5594 = vpop.f32.mrb[0].mxu0
      %v5595 = vadd.f32 0.0, %v5594
      %v5596 = vpop.f32.mrb[0].mxu0
      %5597 = vmatprep.mubr.bf16.mxu0 %v5248
      %5598 = vmatmul.mubr.bf16.gmra.mrb[0].mxu0 %v5063
      %v5599 = vpop.f32.mrb[0].mxu0
      %v5600 = vadd.f32 0.0, %v5599
      %v5601 = vpop.f32.mrb[0].mxu0
      %v5602 = vpop.f32.mrb[0].mxu0
      %v5603 = vadd.f32 0.0, %v5602
      %v5604 = vpop.f32.mrb[0].mxu0
      %5605 = vmatprep.mubr.bf16.mxu0 %v5251
      %5606 = vmatmul.mubr.bf16.gmra.mrb[0].mxu0 %v5065
      %v5607 = vpop.f32.mrb[0].mxu0
      %v5608 = vadd.f32 0.0, %v5607
      %v5609 = vpop.f32.mrb[0].mxu0
      %v5610 = vpop.f32.mrb[0].mxu0
      %v5611 = vadd.f32 0.0, %v5610
      %v5612 = vpop.f32.mrb[0].mxu0
      %5613 = vmatprep.mubr.bf16.mxu0 %v5254
      %5614 = vmatmul.mubr.bf16.gmra.mrb[0].mxu0 %v5067
      %v5615 = vpop.f32.mrb[0].mxu0
      %v5616 = vadd.f32 0.0, %v5615
      %v5617 = vpop.f32.mrb[0].mxu0
      %v5618 = vpop.f32.mrb[0].mxu0
      %v5619 = vadd.f32 0.0, %v5618
      %v5620 = vpop.f32.mrb[0].mxu0
      %5621 = vmatprep.mubr.bf16.mxu0 %v5257
      %5622 = vmatmul.mubr.bf16.gmra.mrb[0].mxu0 %v5069
      %v5623 = vpop.f32.mrb[0].mxu0
      %v5624 = vadd.f32 0.0, %v5623
      %v5625 = vpop.f32.mrb[0].mxu0
      %v5626 = vpop.f32.mrb[0].mxu0
      %v5627 = vadd.f32 0.0, %v5626
      %v5628 = vpop.f32.mrb[0].mxu0
      %5629 = vmatprep.mubr.bf16.mxu0 %v5260
      %5630 = vmatmul.mubr.bf16.gmra.mrb[0].mxu0 %v5071
      %v5631 = vpop.f32.mrb[0].mxu0
      %v5632 = vadd.f32 0.0, %v5631
      %v5633 = vpop.f32.mrb[0].mxu0
      %v5634 = vpop.f32.mrb[0].mxu0
      %v5635 = vadd.f32 0.0, %v5634
      %v5636 = vpop.f32.mrb[0].mxu0
      %5637 = vmatprep.mubr.bf16.mxu0 %v5263
      %5638 = vmatmul.mubr.bf16.gmra.mrb[0].mxu0 %v5073
      %v5639 = vpop.f32.mrb[0].mxu0
      %v5640 = vadd.f32 0.0, %v5639
      %v5641 = vpop.f32.mrb[0].mxu0
      %v5642 = vpop.f32.mrb[0].mxu0
      %v5643 = vadd.f32 0.0, %v5642
      %v5644 = vpop.f32.mrb[0].mxu0
      %5645 = vmatprep.mubr.bf16.mxu0 %v5266
      %5646 = vmatmul.mubr.bf16.gmra.mrb[0].mxu0 %v5075
      %v5647 = vpop.f32.mrb[0].mxu0
      %v5648 = vadd.f32 0.0, %v5647
      %v5649 = vpop.f32.mrb[0].mxu0
      %v5650 = vpop.f32.mrb[0].mxu0
      %v5651 = vadd.f32 0.0, %v5650
      %v5652 = vpop.f32.mrb[0].mxu0
      %5653 = vmatprep.mubr.bf16.mxu0 %v5269
      %5654 = vmatmul.mubr.bf16.gmra.mrb[0].mxu0 %v5077
      %v5655 = vpop.f32.mrb[0].mxu0
      %v5656 = vadd.f32 0.0, %v5655
      %v5657 = vpop.f32.mrb[0].mxu0
      %v5658 = vpop.f32.mrb[0].mxu0
      %v5659 = vadd.f32 0.0, %v5658
      %v5660 = vpop.f32.mrb[0].mxu0
      %5661 = vmatprep.mubr.bf16.mxu0 %v5272
      %5662 = vmatmul.mubr.bf16.gmra.mrb[0].mxu0 %v5079
      %v5663 = vpop.f32.mrb[0].mxu0
      %v5664 = vadd.f32 0.0, %v5663
      %v5665 = vpop.f32.mrb[0].mxu0
      %v5666 = vpop.f32.mrb[0].mxu0
      %v5667 = vadd.f32 0.0, %v5666
      %v5668 = vpop.f32.mrb[0].mxu0
      %5669 = vmatprep.mubr.bf16.mxu0 %v5275
      %5670 = vmatmul.mubr.bf16.gmra.mrb[0].mxu0 %v5081
      %v5671 = vpop.f32.mrb[0].mxu0
      %v5672 = vadd.f32 0.0, %v5671
      %v5673 = vpop.f32.mrb[0].mxu0
      %v5674 = vpop.f32.mrb[0].mxu0
      %v5675 = vadd.f32 0.0, %v5674
      %v5676 = vpop.f32.mrb[0].mxu0
      %5677 = vmatprep.mubr.bf16.mxu0 %v5278
      %5678 = vmatmul.mubr.bf16.gmra.mrb[0].mxu0 %v5083
      %v5679 = vpop.f32.mrb[0].mxu0
      %v5680 = vadd.f32 0.0, %v5679
      %v5681 = vpop.f32.mrb[0].mxu0
      %v5682 = vpop.f32.mrb[0].mxu0
      %v5683 = vadd.f32 0.0, %v5682
      %v5684 = vpop.f32.mrb[0].mxu0
      %5685 = vmatprep.mubr.bf16.mxu0 %v5281
      %5686 = vmatmul.mubr.bf16.gmra.mrb[0].mxu0 %v5085
      %v5687 = vpop.f32.mrb[0].mxu0
      %v5688 = vadd.f32 0.0, %v5687
      %v5689 = vpop.f32.mrb[0].mxu0
      %v5690 = vpop.f32.mrb[0].mxu0
      %v5691 = vadd.f32 0.0, %v5690
      %v5692 = vpop.f32.mrb[0].mxu0
      %5693 = vmatprep.mubr.bf16.mxu0 %v5284
      %5694 = vmatmul.mubr.bf16.gmra.mrb[0].mxu0 %v5087
      %v5695 = vpop.f32.mrb[0].mxu0
      %v5696 = vadd.f32 0.0, %v5695
      %v5697 = vpop.f32.mrb[0].mxu0
      %v5698 = vpop.f32.mrb[0].mxu0
      %v5699 = vadd.f32 0.0, %v5698
      %v5700 = vpop.f32.mrb[0].mxu0
      %5701 = vmatprep.mubr.bf16.mxu0 %v5287
      %5702 = vmatmul.mubr.bf16.gmra.mrb[0].mxu0 %v5089
      %v5703 = vpop.f32.mrb[0].mxu0
      %v5704 = vadd.f32 0.0, %v5703
      %v5705 = vpop.f32.mrb[0].mxu0
      %v5706 = vpop.f32.mrb[0].mxu0
      %v5707 = vadd.f32 0.0, %v5706
      %v5708 = vpop.f32.mrb[0].mxu0
      %5709 = vmatprep.mubr.bf16.mxu0 %v5290
      %5710 = vmatmul.mubr.bf16.gmra.mrb[0].mxu0 %v5091
      %v5711 = vpop.f32.mrb[0].mxu0
      %v5712 = vadd.f32 0.0, %v5711
      %v5713 = vpop.f32.mrb[0].mxu0
      %v5714 = vpop.f32.mrb[0].mxu0
      %v5715 = vadd.f32 0.0, %v5714
      %v5716 = vpop.f32.mrb[0].mxu0
      %5717 = vmatprep.mubr.bf16.mxu0 %v5293
      %5718 = vmatmul.mubr.bf16.gmra.mrb[0].mxu0 %v5093
      %v5719 = vpop.f32.mrb[0].mxu0
      %v5720 = vadd.f32 0.0, %v5719
      %v5721 = vpop.f32.mrb[0].mxu0
      %v5722 = vpop.f32.mrb[0].mxu0
      %v5723 = vadd.f32 0.0, %v5722
      %v5724 = vpop.f32.mrb[0].mxu0
      %5725 = vmatprep.mubr.bf16.mxu0 %v5296
      %5726 = vmatmul.mubr.bf16.gmra.mrb[0].mxu0 %v5095
      %v5727 = vpop.f32.mrb[0].mxu0
      %v5728 = vadd.f32 0.0, %v5727
      %v5729 = vpop.f32.mrb[0].mxu0
      %v5730 = vpop.f32.mrb[0].mxu0
      %v5731 = vadd.f32 0.0, %v5730
      %v5732 = vpop.f32.mrb[0].mxu0
      %5733 = vmatprep.mubr.bf16.mxu0 %v5299
      %5734 = vmatmul.mubr.bf16.gmra.mrb[0].mxu0 %v5097
      %v5735 = vpop.f32.mrb[0].mxu0
      %v5736 = vadd.f32 0.0, %v5735
      %v5737 = vpop.f32.mrb[0].mxu0
      %v5738 = vpop.f32.mrb[0].mxu0
      %v5739 = vadd.f32 0.0, %v5738
      %v5740 = vpop.f32.mrb[0].mxu0
      %5741 = vmatprep.mubr.bf16.mxu0 %v5302
      %5742 = vmatmul.mubr.bf16.gmra.mrb[0].mxu0 %v5099
      %v5743 = vpop.f32.mrb[0].mxu0
      %v5744 = vadd.f32 0.0, %v5743
      %v5745 = vpop.f32.mrb[0].mxu0
      %v5746 = vpop.f32.mrb[0].mxu0
      %v5747 = vadd.f32 0.0, %v5746
      %v5748 = vpop.f32.mrb[0].mxu0
      %5749 = vmatprep.mubr.bf16.mxu0 %v5305
      %5750 = vmatmul.mubr.bf16.gmra.mrb[0].mxu0 %v5101
      %v5751 = vpop.f32.mrb[0].mxu0
      %v5752 = vadd.f32 0.0, %v5751
      %v5753 = vpop.f32.mrb[0].mxu0
      %v5754 = vpop.f32.mrb[0].mxu0
      %v5755 = vadd.f32 0.0, %v5754
      %v5756 = vpop.f32.mrb[0].mxu0
      %5757 = vmatprep.mubr.bf16.mxu0 %v5308
      %5758 = vmatmul.mubr.bf16.gmra.mrb[0].mxu0 %v5103
      %v5759 = vpop.f32.mrb[0].mxu0
      %v5760 = vadd.f32 0.0, %v5759
      %v5761 = vpop.f32.mrb[0].mxu0
      %v5762 = vpop.f32.mrb[0].mxu0
      %v5763 = vadd.f32 0.0, %v5762
      %v5764 = vpop.f32.mrb[0].mxu0
      %5765 = vmatprep.mubr.bf16.mxu0 %v5311
      %5766 = vmatmul.mubr.bf16.gmra.mrb[0].mxu0 %v5105
      %v5767 = vpop.f32.mrb[0].mxu0
      %v5768 = vadd.f32 0.0, %v5767
      %v5769 = vpop.f32.mrb[0].mxu0
      %v5770 = vpop.f32.mrb[0].mxu0
      %v5771 = vadd.f32 0.0, %v5770
      %v5772 = vpop.f32.mrb[0].mxu0
      %5773 = vmatprep.mubr.bf16.mxu0 %v5314
      %5774 = vmatmul.mubr.bf16.gmra.mrb[0].mxu0 %v5107
      %v5775 = vpop.f32.mrb[0].mxu0
      %v5776 = vadd.f32 0.0, %v5775
      %v5777 = vpop.f32.mrb[0].mxu0
      %v5778 = vpop.f32.mrb[0].mxu0
      %v5779 = vadd.f32 0.0, %v5778
      %v5780 = vpop.f32.mrb[0].mxu0
      %5781 = vmatprep.mubr.bf16.mxu0 %v5317
      %5782 = vmatmul.mubr.bf16.gmra.mrb[0].mxu0 %v5109
      %v5783 = vpop.f32.mrb[0].mxu0
      %v5784 = vadd.f32 0.0, %v5783
      %v5785 = vpop.f32.mrb[0].mxu0
      %v5786 = vpop.f32.mrb[0].mxu0
      %v5787 = vadd.f32 0.0, %v5786
      %v5788 = vpop.f32.mrb[0].mxu0
      %5789 = vmatprep.mubr.bf16.mxu0 %v5320
      %5790 = vmatmul.mubr.bf16.gmra.mrb[0].mxu0 %v5111
      %v5791 = vpop.f32.mrb[0].mxu0
      %v5792 = vadd.f32 0.0, %v5791
      %v5793 = vpop.f32.mrb[0].mxu0
      %v5794 = vpop.f32.mrb[0].mxu0
      %v5795 = vadd.f32 0.0, %v5794
      %v5796 = vpop.f32.mrb[0].mxu0
      %5797 = vmatprep.mubr.bf16.mxu0 %v5323
      %5798 = vmatmul.mubr.bf16.gmra.mrb[0].mxu0 %v5113
      %v5799 = vpop.f32.mrb[0].mxu0
      %v5800 = vadd.f32 0.0, %v5799
      %v5801 = vpop.f32.mrb[0].mxu0
      %v5802 = vpop.f32.mrb[0].mxu0
      %v5803 = vadd.f32 0.0, %v5802
      %v5804 = vpop.f32.mrb[0].mxu0
      %5805 = vmatprep.mubr.bf16.mxu0 %v5326
      %5806 = vmatmul.mubr.bf16.gmra.mrb[0].mxu0 %v5115
      %v5807 = vpop.f32.mrb[0].mxu0
      %v5808 = vadd.f32 0.0, %v5807
      %v5809 = vpop.f32.mrb[0].mxu0
      %v5810 = vpop.f32.mrb[0].mxu0
      %v5811 = vadd.f32 0.0, %v5810
      %v5812 = vpop.f32.mrb[0].mxu0
      %5813 = vmatprep.mubr.bf16.mxu0 %v5329
      %5814 = vmatmul.mubr.bf16.gmra.mrb[0].mxu0 %v5117
      %v5815 = vpop.f32.mrb[0].mxu0
      %v5816 = vadd.f32 0.0, %v5815
      %v5817 = vpop.f32.mrb[0].mxu0
      %v5818 = vpop.f32.mrb[0].mxu0
      %v5819 = vadd.f32 0.0, %v5818
      %v5820 = vpop.f32.mrb[0].mxu0
      %5821 = vmatprep.mubr.bf16.mxu0 %v5332
      %5822 = vmatmul.mubr.bf16.gmra.mrb[0].mxu0 %v5119
      %v5823 = vpop.f32.mrb[0].mxu0
      %v5824 = vadd.f32 0.0, %v5823
      %v5825 = vpop.f32.mrb[0].mxu0
      %v5826 = vpop.f32.mrb[0].mxu0
      %v5827 = vadd.f32 0.0, %v5826
      %v5828 = vpop.f32.mrb[0].mxu0
      %5829 = vmatprep.mubr.bf16.mxu0 %v5335
      %5830 = vmatmul.mubr.bf16.gmra.mrb[0].mxu0 %v5121
      %v5831 = vpop.f32.mrb[0].mxu0
      %v5832 = vadd.f32 0.0, %v5831
      %v5833 = vpop.f32.mrb[0].mxu0
      %v5834 = vpop.f32.mrb[0].mxu0
      %v5835 = vadd.f32 0.0, %v5834
      %v5836 = vpop.f32.mrb[0].mxu0
      %5837 = vmatprep.mubr.bf16.mxu0 %v5338
      %5838 = vmatmul.mubr.bf16.gmra.mrb[0].mxu0 %v5123
      %v5839 = vpop.f32.mrb[0].mxu0
      %v5840 = vadd.f32 0.0, %v5839
      %v5841 = vpop.f32.mrb[0].mxu0
      %v5842 = vpop.f32.mrb[0].mxu0
      %v5843 = vadd.f32 0.0, %v5842
      %v5844 = vpop.f32.mrb[0].mxu0
      %5845 = vmatprep.mubr.bf16.mxu0 %v5341
      %5846 = vmatmul.mubr.bf16.gmra.mrb[0].mxu0 %v5125
      %v5847 = vpop.f32.mrb[0].mxu0
      %v5848 = vadd.f32 0.0, %v5847
      %v5849 = vpop.f32.mrb[0].mxu0
      %v5850 = vpop.f32.mrb[0].mxu0
      %v5851 = vadd.f32 0.0, %v5850
      %v5852 = vpop.f32.mrb[0].mxu0
      %5853 = vmatprep.mubr.bf16.mxu0 %v5344
      %5854 = vmatmul.mubr.bf16.gmra.mrb[0].mxu0 %v5127
      %v5855 = vpop.f32.mrb[0].mxu0
      %v5856 = vadd.f32 0.0, %v5855
      %v5857 = vpop.f32.mrb[0].mxu0
      %v5858 = vpop.f32.mrb[0].mxu0
      %v5859 = vadd.f32 0.0, %v5858
      %v5860 = vpop.f32.mrb[0].mxu0
      %5861 = vmatprep.mubr.bf16.mxu0 %v5347
      %5862 = vmatmul.mubr.bf16.gmra.mrb[0].mxu0 %v5129
      %v5863 = vpop.f32.mrb[0].mxu0
      %v5864 = vadd.f32 0.0, %v5863
      %v5865 = vpop.f32.mrb[0].mxu0
      %v5866 = vpop.f32.mrb[0].mxu0
      %v5867 = vadd.f32 0.0, %v5866
      %v5868 = vpop.f32.mrb[0].mxu0
      %5869 = vmatprep.mubr.bf16.mxu0 %v5350
      %5870 = vmatmul.mubr.bf16.gmra.mrb[0].mxu0 %v5131
      %v5871 = vpop.f32.mrb[0].mxu0
      %v5872 = vadd.f32 0.0, %v5871
      %v5873 = vpop.f32.mrb[0].mxu0
      %v5874 = vpop.f32.mrb[0].mxu0
      %v5875 = vadd.f32 0.0, %v5874
      %v5876 = vpop.f32.mrb[0].mxu0
      %5877 = vmatprep.mubr.bf16.mxu0 %v5353
      %5878 = vmatmul.mubr.bf16.gmra.mrb[0].mxu0 %v5133
      %v5879 = vpop.f32.mrb[0].mxu0
      %v5880 = vadd.f32 0.0, %v5879
      %v5881 = vpop.f32.mrb[0].mxu0
      %v5882 = vpop.f32.mrb[0].mxu0
      %v5883 = vadd.f32 0.0, %v5882
      %v5884 = vpop.f32.mrb[0].mxu0
      %5885 = vmatprep.mubr.bf16.mxu0 %v5356
      %5886 = vmatmul.mubr.bf16.gmra.mrb[0].mxu0 %v5135
      %v5887 = vpop.f32.mrb[0].mxu0
      %v5888 = vadd.f32 0.0, %v5887
      %v5889 = vpop.f32.mrb[0].mxu0
      %v5890 = vpop.f32.mrb[0].mxu0
      %v5891 = vadd.f32 0.0, %v5890
      %v5892 = vpop.f32.mrb[0].mxu0
      %5893 = vmatprep.mubr.bf16.mxu0 %v5359
      %5894 = vmatmul.mubr.bf16.gmra.mrb[0].mxu0 %v5137
      %v5895 = vpop.f32.mrb[0].mxu0
      %v5896 = vadd.f32 0.0, %v5895
      %v5897 = vpop.f32.mrb[0].mxu0
      %v5898 = vpop.f32.mrb[0].mxu0
      %v5899 = vadd.f32 0.0, %v5898
      %v5900 = vpop.f32.mrb[0].mxu0
      %5901 = vmatprep.mubr.bf16.mxu0 %v5362
      %5902 = vmatmul.mubr.bf16.gmra.mrb[0].mxu0 %v5139
      %v5903 = vpop.f32.mrb[0].mxu0
      %v5904 = vadd.f32 0.0, %v5903
      %v5905 = vpop.f32.mrb[0].mxu0
      %v5906 = vpop.f32.mrb[0].mxu0
      %v5907 = vadd.f32 0.0, %v5906
      %v5908 = vpop.f32.mrb[0].mxu0
      %5909 = vmatprep.mubr.bf16.mxu0 %v5365
      %5910 = vmatmul.mubr.bf16.gmra.mrb[0].mxu0 %v5141
      %v5911 = vpop.f32.mrb[0].mxu0
      %v5912 = vadd.f32 0.0, %v5911
      %v5913 = vpop.f32.mrb[0].mxu0
      %v5914 = vpop.f32.mrb[0].mxu0
      %v5915 = vadd.f32 0.0, %v5914
      %v5916 = vpop.f32.mrb[0].mxu0
      %5917 = vmatprep.mubr.bf16.mxu0 %v5368
      %5918 = vmatmul.mubr.bf16.gmra.mrb[0].mxu0 %v5143
      %v5919 = vpop.f32.mrb[0].mxu0
      %v5920 = vadd.f32 0.0, %v5919
      %v5921 = vpop.f32.mrb[0].mxu0
      %v5922 = vpop.f32.mrb[0].mxu0
      %v5923 = vadd.f32 0.0, %v5922
      %v5924 = vpop.f32.mrb[0].mxu0
      %5925 = vmatprep.mubr.bf16.mxu0 %v5371
      %5926 = vmatmul.mubr.bf16.gmra.mrb[0].mxu0 %v5145
      %v5927 = vpop.f32.mrb[0].mxu0
      %v5928 = vadd.f32 0.0, %v5927
      %v5929 = vpop.f32.mrb[0].mxu0
      %v5930 = vpop.f32.mrb[0].mxu0
      %v5931 = vadd.f32 0.0, %v5930
      %v5932 = vpop.f32.mrb[0].mxu0
      %5933 = vmatprep.mubr.bf16.mxu0 %v5374
      %5934 = vmatmul.mubr.bf16.gmra.mrb[0].mxu0 %v5147
      %v5935 = vpop.f32.mrb[0].mxu0
      %v5936 = vadd.f32 0.0, %v5935
      %v5937 = vpop.f32.mrb[0].mxu0
      %v5938 = vpop.f32.mrb[0].mxu0
      %v5939 = vadd.f32 0.0, %v5938
      %v5940 = vpop.f32.mrb[0].mxu0
      %5941 = vmatprep.mubr.bf16.mxu0 %v5377
      %5942 = vmatmul.mubr.bf16.gmra.mrb[0].mxu0 %v5149
      %v5943 = vpop.f32.mrb[0].mxu0
      %v5944 = vadd.f32 0.0, %v5943
      %v5945 = vpop.f32.mrb[0].mxu0
      %v5946 = vpop.f32.mrb[0].mxu0
      %v5947 = vadd.f32 0.0, %v5946
      %v5948 = vpop.f32.mrb[0].mxu0
      %5949 = vmatprep.mubr.bf16.mxu0 %v5380
      %5950 = vmatmul.mubr.bf16.gmra.mrb[0].mxu0 %v5151
      %v5951 = vpop.f32.mrb[0].mxu0
      %v5952 = vadd.f32 0.0, %v5951
      %v5953 = vpop.f32.mrb[0].mxu0
      %v5954 = vpop.f32.mrb[0].mxu0
      %v5955 = vadd.f32 0.0, %v5954
      %v5956 = vpop.f32.mrb[0].mxu0
      %5957 = vmatprep.mubr.bf16.mxu0 %v5383
      %5958 = vmatmul.mubr.bf16.gmra.mrb[0].mxu0 %v5153
      %v5959 = vpop.f32.mrb[0].mxu0
      %v5960 = vadd.f32 0.0, %v5959
      %v5961 = vpop.f32.mrb[0].mxu0
      %v5962 = vpop.f32.mrb[0].mxu0
      %v5963 = vadd.f32 0.0, %v5962
      %v5964 = vpop.f32.mrb[0].mxu0
      %5965 = vdwg.mxu0
      %v5966 = vrcp.pop %v4478
      %v5967 = vrcp.pop %v4482
      %v5968 = vrcp.pop %v4486
      %v5969 = vrcp.pop %v4490
      %v5970 = vrcp.pop %v4494
      %v5971 = vrcp.pop %v4498
      %v5972 = vrcp.pop %v4502
      %v5973 = vrcp.pop %v4506
      %v5974 = vrcp.pop %v4510
      %v5975 = vrcp.pop %v4514
      %v5976 = vrcp.pop %v4518
      %v5977 = vrcp.pop %v4522
      %v5978 = vrcp.pop %v4526
      %v5979 = vrcp.pop %v4530
      %v5980 = vrcp.pop %v4534
      %v5981 = vrcp.pop %v4538
      %v5982 = vrcp.pop %v4542
      %v5983 = vrcp.pop %v4546
      %v5984 = vrcp.pop %v4550
      %v5985 = vrcp.pop %v4554
      %v5986 = vrcp.pop %v4558
      %v5987 = vrcp.pop %v4562
      %v5988 = vrcp.pop %v4566
      %v5989 = vrcp.pop %v4570
      %v5990 = vrcp.pop %v4574
      %v5991 = vrcp.pop %v4578
      %v5992 = vrcp.pop %v4582
      %v5993 = vrcp.pop %v4586
      %v5994 = vrcp.pop %v4590
      %v5995 = vrcp.pop %v4594
      %v5996 = vrcp.pop %v4598
      %v5997 = vrcp.pop %v4602
      %v5998 = vrcp.pop %v4606
      %v5999 = vrcp.pop %v4610
      %v6000 = vrcp.pop %v4614
      %v6001 = vrcp.pop %v4618
      %v6002 = vrcp.pop %v4622
      %v6003 = vrcp.pop %v4626
      %v6004 = vrcp.pop %v4630
      %v6005 = vrcp.pop %v4634
      %v6006 = vrcp.pop %v4638
      %v6007 = vrcp.pop %v4642
      %v6008 = vrcp.pop %v4646
      %v6009 = vrcp.pop %v4650
      %v6010 = vrcp.pop %v4654
      %v6011 = vrcp.pop %v4658
      %v6012 = vrcp.pop %v4662
      %v6013 = vrcp.pop %v4666
      %v6014 = vrcp.pop %v4670
      %v6015 = vrcp.pop %v4674
      %v6016 = vrcp.pop %v4678
      %v6017 = vrcp.pop %v4682
      %v6018 = vrcp.pop %v4686
      %v6019 = vrcp.pop %v4690
      %v6020 = vrcp.pop %v4694
      %v6021 = vrcp.pop %v4698
      %v6022 = vrcp.pop %v4702
      %v6023 = vrcp.pop %v4706
      %v6024 = vrcp.pop %v4710
      %v6025 = vrcp.pop %v4714
      %v6026 = vrcp.pop %v4718
      %v6027 = vrcp.pop %v4722
      %v6028 = vrcp.pop %v4726
      %v6029 = vrcp.pop %v4730
      %v6030 = vrcp.pop %v4734
      %v6031 = vrcp.pop %v4738
      %v6032 = vrcp.pop %v4742
      %v6033 = vrcp.pop %v4746
      %v6034 = vrcp.pop %v4750
      %v6035 = vrcp.pop %v4754
      %v6036 = vrcp.pop %v4758
      %v6037 = vrcp.pop %v4762
      %v6038 = vrcp.pop %v4766
      %v6039 = vrcp.pop %v4770
      %v6040 = vrcp.pop %v4774
      %v6041 = vrcp.pop %v4778
      %v6042 = vrcp.pop %v4782
      %v6043 = vrcp.pop %v4786
      %v6044 = vrcp.pop %v4790
      %v6045 = vrcp.pop %v4794
      %v6046 = vrcp.pop %v4798
      %v6047 = vrcp.pop %v4802
      %v6048 = vrcp.pop %v4806
      %v6049 = vrcp.pop %v4810
      %v6050 = vrcp.pop %v4814
      %v6051 = vrcp.pop %v4818
      %v6052 = vrcp.pop %v4822
      %v6053 = vrcp.pop %v4826
      %v6054 = vrcp.pop %v4830
      %v6055 = vrcp.pop %v4834
      %v6056 = vrcp.pop %v4838
      %v6057 = vrcp.pop %v4842
      %v6058 = vrcp.pop %v4846
      %v6059 = vrcp.pop %v4850
      %v6060 = vrcp.pop %v4854
      %v6061 = vrcp.pop %v4858
      %v6062 = vrcp.pop %v4862
      %v6063 = vrcp.pop %v4866
      %v6064 = vrcp.pop %v4870
      %v6065 = vrcp.pop %v4874
      %v6066 = vrcp.pop %v4878
      %v6067 = vrcp.pop %v4882
      %v6068 = vrcp.pop %v4886
      %v6069 = vrcp.pop %v4890
      %v6070 = vrcp.pop %v4894
      %v6071 = vrcp.pop %v4898
      %v6072 = vrcp.pop %v4902
      %v6073 = vrcp.pop %v4906
      %v6074 = vrcp.pop %v4910
      %v6075 = vrcp.pop %v4914
      %v6076 = vrcp.pop %v4918
      %v6077 = vrcp.pop %v4922
      %v6078 = vrcp.pop %v4926
      %v6079 = vrcp.pop %v4930
      %v6080 = vrcp.pop %v4934
      %v6081 = vrcp.pop %v4938
      %v6082 = vrcp.pop %v4942
      %v6083 = vrcp.pop %v4946
      %v6084 = vrcp.pop %v4950
      %v6085 = vrcp.pop %v4954
      %v6086 = vrcp.pop %v4958
      %v6087 = vrcp.pop %v4962
      %v6088 = vrcp.pop %v4966
      %v6089 = vrcp.pop %v4970
      %v6090 = vrcp.pop %v4974
      %v6091 = vrcp.pop %v4978
      %v6092 = vrcp.pop %v4982
      %v6093 = vrcp.pop %v4986
      %v6094 = vrcp.pop %v4990
      %v6095 = vrcp.pop %v4994
      %v6096 = vrcp.pop %v4998
      %v6097 = vrcp.pop %v5002
      %v6098 = vrcp.pop %v5006
      %v6099 = vrcp.pop %v5010
      %v6100 = vrcp.pop %v5014
      %v6101 = vrcp.pop %v5018
      %v6102 = vmul.f32 %v5424, %v5966
      %v6103 = vmul.f32 %v5427, %v5967
      %v6104 = vmul.f32 %v5432, %v5968
      %v6105 = vmul.f32 %v5435, %v5969
      %v6106 = vmul.f32 %v5440, %v5970
      %v6107 = vmul.f32 %v5443, %v5971
      %v6108 = vmul.f32 %v5448, %v5972
      %v6109 = vmul.f32 %v5451, %v5973
      %v6110 = vmul.f32 %v5456, %v5974
      %v6111 = vmul.f32 %v5459, %v5975
      %v6112 = vmul.f32 %v5464, %v5976
      %v6113 = vmul.f32 %v5467, %v5977
      %v6114 = vmul.f32 %v5472, %v5978
      %v6115 = vmul.f32 %v5475, %v5979
      %v6116 = vmul.f32 %v5480, %v5980
      %v6117 = vmul.f32 %v5483, %v5981
      %v6118 = vmul.f32 %v5488, %v5982
      %v6119 = vmul.f32 %v5491, %v5983
      %v6120 = vmul.f32 %v5496, %v5984
      %v6121 = vmul.f32 %v5499, %v5985
      %v6122 = vmul.f32 %v5504, %v5986
      %v6123 = vmul.f32 %v5507, %v5987
      %v6124 = vmul.f32 %v5512, %v5988
      %v6125 = vmul.f32 %v5515, %v5989
      %v6126 = vmul.f32 %v5520, %v5990
      %v6127 = vmul.f32 %v5523, %v5991
      %v6128 = vmul.f32 %v5528, %v5992
      %v6129 = vmul.f32 %v5531, %v5993
      %v6130 = vmul.f32 %v5536, %v5994
      %v6131 = vmul.f32 %v5539, %v5995
      %v6132 = vmul.f32 %v5544, %v5996
      %v6133 = vmul.f32 %v5547, %v5997
      %v6134 = vmul.f32 %v5552, %v5998
      %v6135 = vmul.f32 %v5555, %v5999
      %v6136 = vmul.f32 %v5560, %v6000
      %v6137 = vmul.f32 %v5563, %v6001
      %v6138 = vmul.f32 %v5568, %v6002
      %v6139 = vmul.f32 %v5571, %v6003
      %v6140 = vmul.f32 %v5576, %v6004
      %v6141 = vmul.f32 %v5579, %v6005
      %v6142 = vmul.f32 %v5584, %v6006
      %v6143 = vmul.f32 %v5587, %v6007
      %v6144 = vmul.f32 %v5592, %v6008
      %v6145 = vmul.f32 %v5595, %v6009
      %v6146 = vmul.f32 %v5600, %v6010
      %v6147 = vmul.f32 %v5603, %v6011
      %v6148 = vmul.f32 %v5608, %v6012
      %v6149 = vmul.f32 %v5611, %v6013
      %v6150 = vmul.f32 %v5616, %v6014
      %v6151 = vmul.f32 %v5619, %v6015
      %v6152 = vmul.f32 %v5624, %v6016
      %v6153 = vmul.f32 %v5627, %v6017
      %v6154 = vmul.f32 %v5632, %v6018
      %v6155 = vmul.f32 %v5635, %v6019
      %v6156 = vmul.f32 %v5640, %v6020
      %v6157 = vmul.f32 %v5643, %v6021
      %v6158 = vmul.f32 %v5648, %v6022
      %v6159 = vmul.f32 %v5651, %v6023
      %v6160 = vmul.f32 %v5656, %v6024
      %v6161 = vmul.f32 %v5659, %v6025
      %v6162 = vmul.f32 %v5664, %v6026
      %v6163 = vmul.f32 %v5667, %v6027
      %v6164 = vmul.f32 %v5672, %v6028
      %v6165 = vmul.f32 %v5675, %v6029
      %v6166 = vmul.f32 %v5680, %v6030
      %v6167 = vmul.f32 %v5683, %v6031
      %v6168 = vmul.f32 %v5688, %v6032
      %v6169 = vmul.f32 %v5691, %v6033
      %v6170 = vmul.f32 %v5696, %v6034
      %v6171 = vmul.f32 %v5699, %v6035
      %v6172 = vmul.f32 %v5704, %v6036
      %v6173 = vmul.f32 %v5707, %v6037
      %v6174 = vmul.f32 %v5712, %v6038
      %v6175 = vmul.f32 %v5715, %v6039
      %v6176 = vmul.f32 %v5720, %v6040
      %v6177 = vmul.f32 %v5723, %v6041
      %v6178 = vmul.f32 %v5728, %v6042
      %v6179 = vmul.f32 %v5731, %v6043
      %v6180 = vmul.f32 %v5736, %v6044
      %v6181 = vmul.f32 %v5739, %v6045
      %v6182 = vmul.f32 %v5744, %v6046
      %v6183 = vmul.f32 %v5747, %v6047
      %v6184 = vmul.f32 %v5752, %v6048
      %v6185 = vmul.f32 %v5755, %v6049
      %v6186 = vmul.f32 %v5760, %v6050
      %v6187 = vmul.f32 %v5763, %v6051
      %v6188 = vmul.f32 %v5768, %v6052
      %v6189 = vmul.f32 %v5771, %v6053
      %v6190 = vmul.f32 %v5776, %v6054
      %v6191 = vmul.f32 %v5779, %v6055
      %v6192 = vmul.f32 %v5784, %v6056
      %v6193 = vmul.f32 %v5787, %v6057
      %v6194 = vmul.f32 %v5792, %v6058
      %v6195 = vmul.f32 %v5795, %v6059
      %v6196 = vmul.f32 %v5800, %v6060
      %v6197 = vmul.f32 %v5803, %v6061
      %v6198 = vmul.f32 %v5808, %v6062
      %v6199 = vmul.f32 %v5811, %v6063
      %v6200 = vmul.f32 %v5816, %v6064
      %v6201 = vmul.f32 %v5819, %v6065
      %v6202 = vmul.f32 %v5824, %v6066
      %v6203 = vmul.f32 %v5827, %v6067
      %v6204 = vmul.f32 %v5832, %v6068
      %v6205 = vmul.f32 %v5835, %v6069
      %v6206 = vmul.f32 %v5840, %v6070
      %v6207 = vmul.f32 %v5843, %v6071
      %v6208 = vmul.f32 %v5848, %v6072
      %v6209 = vmul.f32 %v5851, %v6073
      %v6210 = vmul.f32 %v5856, %v6074
      %v6211 = vmul.f32 %v5859, %v6075
      %v6212 = vmul.f32 %v5864, %v6076
      %v6213 = vmul.f32 %v5867, %v6077
      %v6214 = vmul.f32 %v5872, %v6078
      %v6215 = vmul.f32 %v5875, %v6079
      %v6216 = vmul.f32 %v5880, %v6080
      %v6217 = vmul.f32 %v5883, %v6081
      %v6218 = vmul.f32 %v5888, %v6082
      %v6219 = vmul.f32 %v5891, %v6083
      %v6220 = vmul.f32 %v5896, %v6084
      %v6221 = vmul.f32 %v5899, %v6085
      %v6222 = vmul.f32 %v5904, %v6086
      %v6223 = vmul.f32 %v5907, %v6087
      %v6224 = vmul.f32 %v5912, %v6088
      %v6225 = vmul.f32 %v5915, %v6089
      %v6226 = vmul.f32 %v5920, %v6090
      %v6227 = vmul.f32 %v5923, %v6091
      %v6228 = vmul.f32 %v5928, %v6092
      %v6229 = vmul.f32 %v5931, %v6093
      %v6230 = vmul.f32 %v5936, %v6094
      %v6231 = vmul.f32 %v5939, %v6095
      %v6232 = vmul.f32 %v5944, %v6096
      %v6233 = vmul.f32 %v5947, %v6097
      %v6234 = vmul.f32 %v5952, %v6098
      %v6235 = vmul.f32 %v5955, %v6099
      %v6236 = vmul.f32 %v5960, %v6100
      %v6237 = vmul.f32 %v5963, %v6101
      %v6238 = vmul.f32 %v6102, %v813
      %v6239 = vmul.f32 %v6103, %v813
      %v6240 = vmul.f32 %v6104, %v813
      %v6241 = vmul.f32 %v6105, %v813
      %v6242 = vmul.f32 %v6106, %v813
      %v6243 = vmul.f32 %v6107, %v813
      %v6244 = vmul.f32 %v6108, %v813
      %v6245 = vmul.f32 %v6109, %v813
      %v6246 = vmul.f32 %v6110, %v813
      %v6247 = vmul.f32 %v6111, %v813
      %v6248 = vmul.f32 %v6112, %v813
      %v6249 = vmul.f32 %v6113, %v813
      %v6250 = vmul.f32 %v6114, %v813
      %v6251 = vmul.f32 %v6115, %v813
      %v6252 = vmul.f32 %v6116, %v813
      %v6253 = vmul.f32 %v6117, %v813
      %v6254 = vmul.f32 %v6118, %v813
      %v6255 = vadd.f32 %v6238, 0.0
      %v6256 = vadd.f32 %v6239, 0.0
      %v6257 = vadd.f32 %v6240, 0.0
      %v6258 = vadd.f32 %v6241, 0.0
      %v6259 = vadd.f32 %v6242, 0.0
      %v6260 = vadd.f32 %v6243, 0.0
      %v6261 = vadd.f32 %v6244, 0.0
      %v6262 = vadd.f32 %v6245, 0.0
      %v6263 = vadd.f32 %v6246, 0.0
      %v6264 = vadd.f32 %v6247, 0.0
      %v6265 = vadd.f32 %v6248, 0.0
      %v6266 = vadd.f32 %v6249, 0.0
      %v6267 = vadd.f32 %v6250, 0.0
      %v6268 = vadd.f32 %v6251, 0.0
      %v6269 = vadd.f32 %v6252, 0.0
      %v6270 = vadd.f32 %v6253, 0.0
      %v6271 = vadd.f32 %v6254, 0.0
      %v6272 = vmul.f32 %v6119, %v834
      %v6273 = vmul.f32 %v6120, %v834
      %v6274 = vmul.f32 %v6121, %v834
      %v6275 = vmul.f32 %v6122, %v834
      %v6276 = vmul.f32 %v6123, %v834
      %v6277 = vmul.f32 %v6124, %v834
      %v6278 = vmul.f32 %v6125, %v834
      %v6279 = vmul.f32 %v6126, %v834
      %v6280 = vmul.f32 %v6127, %v834
      %v6281 = vmul.f32 %v6128, %v834
      %v6282 = vmul.f32 %v6129, %v834
      %v6283 = vmul.f32 %v6130, %v834
      %v6284 = vmul.f32 %v6131, %v834
      %v6285 = vmul.f32 %v6132, %v834
      %v6286 = vmul.f32 %v6133, %v834
      %v6287 = vmul.f32 %v6134, %v834
      %v6288 = vmul.f32 %v6135, %v834
      %v6289 = vadd.f32 %v6255, %v6272
      %v6290 = vadd.f32 %v6256, %v6273
      %v6291 = vadd.f32 %v6257, %v6274
      %v6292 = vadd.f32 %v6258, %v6275
      %v6293 = vadd.f32 %v6259, %v6276
      %v6294 = vadd.f32 %v6260, %v6277
      %v6295 = vadd.f32 %v6261, %v6278
      %v6296 = vadd.f32 %v6262, %v6279
      %v6297 = vadd.f32 %v6263, %v6280
      %v6298 = vadd.f32 %v6264, %v6281
      %v6299 = vadd.f32 %v6265, %v6282
      %v6300 = vadd.f32 %v6266, %v6283
      %v6301 = vadd.f32 %v6267, %v6284
      %v6302 = vadd.f32 %v6268, %v6285
      %v6303 = vadd.f32 %v6269, %v6286
      %v6304 = vadd.f32 %v6270, %v6287
      %v6305 = vadd.f32 %v6271, %v6288
      %v6306 = vmul.f32 %v6136, %v855
      %v6307 = vmul.f32 %v6137, %v855
      %v6308 = vmul.f32 %v6138, %v855
      %v6309 = vmul.f32 %v6139, %v855
      %v6310 = vmul.f32 %v6140, %v855
      %v6311 = vmul.f32 %v6141, %v855
      %v6312 = vmul.f32 %v6142, %v855
      %v6313 = vmul.f32 %v6143, %v855
      %v6314 = vmul.f32 %v6144, %v855
      %v6315 = vmul.f32 %v6145, %v855
      %v6316 = vmul.f32 %v6146, %v855
      %v6317 = vmul.f32 %v6147, %v855
      %v6318 = vmul.f32 %v6148, %v855
      %v6319 = vmul.f32 %v6149, %v855
      %v6320 = vmul.f32 %v6150, %v855
      %v6321 = vmul.f32 %v6151, %v855
      %v6322 = vmul.f32 %v6152, %v855
      %v6323 = vadd.f32 %v6289, %v6306
      %v6324 = vadd.f32 %v6290, %v6307
      %v6325 = vadd.f32 %v6291, %v6308
      %v6326 = vadd.f32 %v6292, %v6309
      %v6327 = vadd.f32 %v6293, %v6310
      %v6328 = vadd.f32 %v6294, %v6311
      %v6329 = vadd.f32 %v6295, %v6312
      %v6330 = vadd.f32 %v6296, %v6313
      %v6331 = vadd.f32 %v6297, %v6314
      %v6332 = vadd.f32 %v6298, %v6315
      %v6333 = vadd.f32 %v6299, %v6316
      %v6334 = vadd.f32 %v6300, %v6317
      %v6335 = vadd.f32 %v6301, %v6318
      %v6336 = vadd.f32 %v6302, %v6319
      %v6337 = vadd.f32 %v6303, %v6320
      %v6338 = vadd.f32 %v6304, %v6321
      %v6339 = vadd.f32 %v6305, %v6322
      %v6340 = vmul.f32 %v6153, %v876
      %v6341 = vmul.f32 %v6154, %v876
      %v6342 = vmul.f32 %v6155, %v876
      %v6343 = vmul.f32 %v6156, %v876
      %v6344 = vmul.f32 %v6157, %v876
      %v6345 = vmul.f32 %v6158, %v876
      %v6346 = vmul.f32 %v6159, %v876
      %v6347 = vmul.f32 %v6160, %v876
      %v6348 = vmul.f32 %v6161, %v876
      %v6349 = vmul.f32 %v6162, %v876
      %v6350 = vmul.f32 %v6163, %v876
      %v6351 = vmul.f32 %v6164, %v876
      %v6352 = vmul.f32 %v6165, %v876
      %v6353 = vmul.f32 %v6166, %v876
      %v6354 = vmul.f32 %v6167, %v876
      %v6355 = vmul.f32 %v6168, %v876
      %v6356 = vmul.f32 %v6169, %v876
      %v6357 = vadd.f32 %v6323, %v6340
      %v6358 = vadd.f32 %v6324, %v6341
      %v6359 = vadd.f32 %v6325, %v6342
      %v6360 = vadd.f32 %v6326, %v6343
      %v6361 = vadd.f32 %v6327, %v6344
      %v6362 = vadd.f32 %v6328, %v6345
      %v6363 = vadd.f32 %v6329, %v6346
      %v6364 = vadd.f32 %v6330, %v6347
      %v6365 = vadd.f32 %v6331, %v6348
      %v6366 = vadd.f32 %v6332, %v6349
      %v6367 = vadd.f32 %v6333, %v6350
      %v6368 = vadd.f32 %v6334, %v6351
      %v6369 = vadd.f32 %v6335, %v6352
      %v6370 = vadd.f32 %v6336, %v6353
      %v6371 = vadd.f32 %v6337, %v6354
      %v6372 = vadd.f32 %v6338, %v6355
      %v6373 = vadd.f32 %v6339, %v6356
      %v6374 = vmul.f32 %v6170, %v897
      %v6375 = vmul.f32 %v6171, %v897
      %v6376 = vmul.f32 %v6172, %v897
      %v6377 = vmul.f32 %v6173, %v897
      %v6378 = vmul.f32 %v6174, %v897
      %v6379 = vmul.f32 %v6175, %v897
      %v6380 = vmul.f32 %v6176, %v897
      %v6381 = vmul.f32 %v6177, %v897
      %v6382 = vmul.f32 %v6178, %v897
      %v6383 = vmul.f32 %v6179, %v897
      %v6384 = vmul.f32 %v6180, %v897
      %v6385 = vmul.f32 %v6181, %v897
      %v6386 = vmul.f32 %v6182, %v897
      %v6387 = vmul.f32 %v6183, %v897
      %v6388 = vmul.f32 %v6184, %v897
      %v6389 = vmul.f32 %v6185, %v897
      %v6390 = vmul.f32 %v6186, %v897
      %v6391 = vadd.f32 %v6357, %v6374
      %v6392 = vadd.f32 %v6358, %v6375
      %v6393 = vadd.f32 %v6359, %v6376
      %v6394 = vadd.f32 %v6360, %v6377
      %v6395 = vadd.f32 %v6361, %v6378
      %v6396 = vadd.f32 %v6362, %v6379
      %v6397 = vadd.f32 %v6363, %v6380
      %v6398 = vadd.f32 %v6364, %v6381
      %v6399 = vadd.f32 %v6365, %v6382
      %v6400 = vadd.f32 %v6366, %v6383
      %v6401 = vadd.f32 %v6367, %v6384
      %v6402 = vadd.f32 %v6368, %v6385
      %v6403 = vadd.f32 %v6369, %v6386
      %v6404 = vadd.f32 %v6370, %v6387
      %v6405 = vadd.f32 %v6371, %v6388
      %v6406 = vadd.f32 %v6372, %v6389
      %v6407 = vadd.f32 %v6373, %v6390
      %v6408 = vmul.f32 %v6187, %v918
      %v6409 = vmul.f32 %v6188, %v918
      %v6410 = vmul.f32 %v6189, %v918
      %v6411 = vmul.f32 %v6190, %v918
      %v6412 = vmul.f32 %v6191, %v918
      %v6413 = vmul.f32 %v6192, %v918
      %v6414 = vmul.f32 %v6193, %v918
      %v6415 = vmul.f32 %v6194, %v918
      %v6416 = vmul.f32 %v6195, %v918
      %v6417 = vmul.f32 %v6196, %v918
      %v6418 = vmul.f32 %v6197, %v918
      %v6419 = vmul.f32 %v6198, %v918
      %v6420 = vmul.f32 %v6199, %v918
      %v6421 = vmul.f32 %v6200, %v918
      %v6422 = vmul.f32 %v6201, %v918
      %v6423 = vmul.f32 %v6202, %v918
      %v6424 = vmul.f32 %v6203, %v918
      %v6425 = vadd.f32 %v6391, %v6408
      %v6426 = vadd.f32 %v6392, %v6409
      %v6427 = vadd.f32 %v6393, %v6410
      %v6428 = vadd.f32 %v6394, %v6411
      %v6429 = vadd.f32 %v6395, %v6412
      %v6430 = vadd.f32 %v6396, %v6413
      %v6431 = vadd.f32 %v6397, %v6414
      %v6432 = vadd.f32 %v6398, %v6415
      %v6433 = vadd.f32 %v6399, %v6416
      %v6434 = vadd.f32 %v6400, %v6417
      %v6435 = vadd.f32 %v6401, %v6418
      %v6436 = vadd.f32 %v6402, %v6419
      %v6437 = vadd.f32 %v6403, %v6420
      %v6438 = vadd.f32 %v6404, %v6421
      %v6439 = vadd.f32 %v6405, %v6422
      %v6440 = vadd.f32 %v6406, %v6423
      %v6441 = vadd.f32 %v6407, %v6424
      %v6442 = vmul.f32 %v6204, %v939
      %v6443 = vmul.f32 %v6205, %v939
      %v6444 = vmul.f32 %v6206, %v939
      %v6445 = vmul.f32 %v6207, %v939
      %v6446 = vmul.f32 %v6208, %v939
      %v6447 = vmul.f32 %v6209, %v939
      %v6448 = vmul.f32 %v6210, %v939
      %v6449 = vmul.f32 %v6211, %v939
      %v6450 = vmul.f32 %v6212, %v939
      %v6451 = vmul.f32 %v6213, %v939
      %v6452 = vmul.f32 %v6214, %v939
      %v6453 = vmul.f32 %v6215, %v939
      %v6454 = vmul.f32 %v6216, %v939
      %v6455 = vmul.f32 %v6217, %v939
      %v6456 = vmul.f32 %v6218, %v939
      %v6457 = vmul.f32 %v6219, %v939
      %v6458 = vmul.f32 %v6220, %v939
      %v6459 = vadd.f32 %v6425, %v6442
      %v6460 = vadd.f32 %v6426, %v6443
      %v6461 = vadd.f32 %v6427, %v6444
      %v6462 = vadd.f32 %v6428, %v6445
      %v6463 = vadd.f32 %v6429, %v6446
      %v6464 = vadd.f32 %v6430, %v6447
      %v6465 = vadd.f32 %v6431, %v6448
      %v6466 = vadd.f32 %v6432, %v6449
      %v6467 = vadd.f32 %v6433, %v6450
      %v6468 = vadd.f32 %v6434, %v6451
      %v6469 = vadd.f32 %v6435, %v6452
      %v6470 = vadd.f32 %v6436, %v6453
      %v6471 = vadd.f32 %v6437, %v6454
      %v6472 = vadd.f32 %v6438, %v6455
      %v6473 = vadd.f32 %v6439, %v6456
      %v6474 = vadd.f32 %v6440, %v6457
      %v6475 = vadd.f32 %v6441, %v6458
      %v6476 = vmul.f32 %v6221, %v960
      %v6477 = vmul.f32 %v6222, %v960
      %v6478 = vmul.f32 %v6223, %v960
      %v6479 = vmul.f32 %v6224, %v960
      %v6480 = vmul.f32 %v6225, %v960
      %v6481 = vmul.f32 %v6226, %v960
      %v6482 = vmul.f32 %v6227, %v960
      %v6483 = vmul.f32 %v6228, %v960
      %v6484 = vmul.f32 %v6229, %v960
      %v6485 = vmul.f32 %v6230, %v960
      %v6486 = vmul.f32 %v6231, %v960
      %v6487 = vmul.f32 %v6232, %v960
      %v6488 = vmul.f32 %v6233, %v960
      %v6489 = vmul.f32 %v6234, %v960
      %v6490 = vmul.f32 %v6235, %v960
      %v6491 = vmul.f32 %v6236, %v960
      %v6492 = vmul.f32 %v6237, %v960
      %v6493 = vadd.f32 %v6459, %v6476
      %v6494 = vadd.f32 %v6460, %v6477
      %v6495 = vadd.f32 %v6461, %v6478
      %v6496 = vadd.f32 %v6462, %v6479
      %v6497 = vadd.f32 %v6463, %v6480
      %v6498 = vadd.f32 %v6464, %v6481
      %v6499 = vadd.f32 %v6465, %v6482
      %v6500 = vadd.f32 %v6466, %v6483
      %v6501 = vadd.f32 %v6467, %v6484
      %v6502 = vadd.f32 %v6468, %v6485
      %v6503 = vadd.f32 %v6469, %v6486
      %v6504 = vadd.f32 %v6470, %v6487
      %v6505 = vadd.f32 %v6471, %v6488
      %v6506 = vadd.f32 %v6472, %v6489
      %v6507 = vadd.f32 %v6473, %v6490
      %v6508 = vadd.f32 %v6474, %v6491
      %v6509 = vadd.f32 %v6475, %v6492
      %v6510 = vpack.c.bf16 %v6494, %v6493
      %v6511 = vpack.c.bf16 %v6496, %v6495
      %v6512 = vpack.c.bf16 %v6498, %v6497
      %v6513 = vpack.c.bf16 %v6500, %v6499
      %v6514 = vpack.c.bf16 %v6502, %v6501
      %v6515 = vpack.c.bf16 %v6504, %v6503
      %v6516 = vpack.c.bf16 %v6506, %v6505
      %v6517 = vpack.c.bf16 %v6508, %v6507
      %v6518 = vpack.c.bf16 %v6509, %v6509
      %v6519 = vld [vmem:[%s6] sm:$0xf]
      %v6520 = vld [vmem:[%s6 + $0x4] sm:$0xf]
      %v6521 = vld [vmem:[%s6 + $0x8] sm:$0xf]
      %v6522 = vld [vmem:[%s6 + $0xc] sm:$0xf]
      %v6523 = vlaneseq
      %v6524 = vshrl.u32 %v6523, 7
      %v6525 = vsub.s32 2, %v6524
      %v6526 = vrot.slane %v378, %v6525
      %v6531 = vunpack.c.l.b16 %v6519
      %v6532 = vunpack.c.l.b16 %v6520
      %v6533 = vunpack.c.l.b16 %v6521
      %v6534 = vunpack.c.l.b16 %v6522
      %v6535 = vpack.c.b16 %v6532, %v6531
      %v6536 = vpack.c.b16 %v6534, %v6533
      %v6540 = vsel %vm379, %v6510, 0
      %v6543 = vsel %vm379, %v6511, 0
      %v6546 = vsel %vm379, %v6512, 0
      %v6549 = vsel %vm379, %v6513, 0
      %v6552 = vsel %vm379, %v6514, 0
      %v6555 = vsel %vm379, %v6515, 0
      %v6558 = vsel %vm379, %v6516, 0
      %v6561 = vsel %vm379, %v6517, 0
      %v6564 = vsel %vm379, %v6518, 0
      %6566 = vmatprep.subr.bf16.mxu0 0
      %6567 = vmatpush1.bf16.msra.mxu0 %v6535
      %6568 = vmatprep.subr.bf16.mxu0 0
      %6569 = vmatpush1.bf16.msra.mxu0 %v6536
      %6570 = vmatprep.subr.bf16.mxu0 0
      %6571 = vmatpush1.bf16.msra.mxu0 0
      %6572 = vmatprep.subr.bf16.mxu0 0
      %6573 = vmatpush1.bf16.msra.mxu0 0
      %6574 = vmatprep.subr.bf16.mxu0 0
      %6575 = vmatpush1.bf16.msra.mxu0 0
      %6576 = vmatprep.subr.bf16.mxu0 0
      %6577 = vmatpush1.bf16.msra.mxu0 0
      %6578 = vmatprep.subr.bf16.mxu0 0
      %6579 = vmatpush1.bf16.msra.mxu0 0
      %6580 = vmatprep.subr.bf16.mxu0 0
      %6581 = vmatpush1.bf16.msra.mxu0 0
      %6582 = vmatprep.subr.bf16.mxu0 0
      %6583 = vmatpush1.bf16.msra.mxu0 0
      %6584 = vmatprep.subr.bf16.mxu0 0
      %6585 = vmatpush1.bf16.msra.mxu0 0
      %6586 = vmatprep.subr.bf16.mxu0 0
      %6587 = vmatpush1.bf16.msra.mxu0 0
      %6588 = vmatprep.subr.bf16.mxu0 0
      %6589 = vmatpush1.bf16.msra.mxu0 0
      %6590 = vmatprep.subr.bf16.mxu0 0
      %6591 = vmatpush1.bf16.msra.mxu0 0
      %6592 = vmatprep.subr.bf16.mxu0 0
      %6593 = vmatpush1.bf16.msra.mxu0 0
      %6594 = vmatprep.subr.bf16.mxu0 0
      %6595 = vmatpush1.bf16.msra.mxu0 0
      %6596 = vmatprep.subr.bf16.mxu0 0
      %6597 = vmatpush1.bf16.msra.mxu0 0
      %6598 = vmatprep.mubr.bf16.mxu0 0
      %6599 = vmatmul.mubr.bf16.gmra.mrb[0].mxu0 %v6540
      %v6600 = vpop.f32.mrb[0].mxu0
      %v6601 = vadd.f32 %v6526, %v6600
      %v6602 = vpop.f32.mrb[0].mxu0
      %v6603 = vpop.f32.mrb[0].mxu0
      %v6604 = vadd.f32 %v6526, %v6603
      %v6605 = vpop.f32.mrb[0].mxu0
      %6606 = vmatprep.mubr.bf16.mxu0 0
      %6607 = vmatmul.mubr.bf16.gmra.mrb[0].mxu0 %v6543
      %v6608 = vpop.f32.mrb[0].mxu0
      %v6609 = vadd.f32 %v6526, %v6608
      %v6610 = vpop.f32.mrb[0].mxu0
      %v6611 = vpop.f32.mrb[0].mxu0
      %v6612 = vadd.f32 %v6526, %v6611
      %v6613 = vpop.f32.mrb[0].mxu0
      %6614 = vmatprep.mubr.bf16.mxu0 0
      %6615 = vmatmul.mubr.bf16.gmra.mrb[0].mxu0 %v6546
      %v6616 = vpop.f32.mrb[0].mxu0
      %v6617 = vadd.f32 %v6526, %v6616
      %v6618 = vpop.f32.mrb[0].mxu0
      %v6619 = vpop.f32.mrb[0].mxu0
      %v6620 = vadd.f32 %v6526, %v6619
      %v6621 = vpop.f32.mrb[0].mxu0
      %6622 = vmatprep.mubr.bf16.mxu0 0
      %6623 = vmatmul.mubr.bf16.gmra.mrb[0].mxu0 %v6549
      %v6624 = vpop.f32.mrb[0].mxu0
      %v6625 = vadd.f32 %v6526, %v6624
      %v6626 = vpop.f32.mrb[0].mxu0
      %v6627 = vpop.f32.mrb[0].mxu0
      %v6628 = vadd.f32 %v6526, %v6627
      %v6629 = vpop.f32.mrb[0].mxu0
      %6630 = vmatprep.mubr.bf16.mxu0 0
      %6631 = vmatmul.mubr.bf16.gmra.mrb[0].mxu0 %v6552
      %v6632 = vpop.f32.mrb[0].mxu0
      %v6633 = vadd.f32 %v6526, %v6632
      %v6634 = vpop.f32.mrb[0].mxu0
      %v6635 = vpop.f32.mrb[0].mxu0
      %v6636 = vadd.f32 %v6526, %v6635
      %v6637 = vpop.f32.mrb[0].mxu0
      %6638 = vmatprep.mubr.bf16.mxu0 0
      %6639 = vmatmul.mubr.bf16.gmra.mrb[0].mxu0 %v6555
      %v6640 = vpop.f32.mrb[0].mxu0
      %v6641 = vadd.f32 %v6526, %v6640
      %v6642 = vpop.f32.mrb[0].mxu0
      %v6643 = vpop.f32.mrb[0].mxu0
      %v6644 = vadd.f32 %v6526, %v6643
      %v6645 = vpop.f32.mrb[0].mxu0
      %6646 = vmatprep.mubr.bf16.mxu0 0
      %6647 = vmatmul.mubr.bf16.gmra.mrb[0].mxu0 %v6558
      %v6648 = vpop.f32.mrb[0].mxu0
      %v6649 = vadd.f32 %v6526, %v6648
      %v6650 = vpop.f32.mrb[0].mxu0
      %v6651 = vpop.f32.mrb[0].mxu0
      %v6652 = vadd.f32 %v6526, %v6651
      %v6653 = vpop.f32.mrb[0].mxu0
      %6654 = vmatprep.mubr.bf16.mxu0 0
      %6655 = vmatmul.mubr.bf16.gmra.mrb[0].mxu0 %v6561
      %v6656 = vpop.f32.mrb[0].mxu0
      %v6657 = vadd.f32 %v6526, %v6656
      %v6658 = vpop.f32.mrb[0].mxu0
      %v6659 = vpop.f32.mrb[0].mxu0
      %v6660 = vadd.f32 %v6526, %v6659
      %v6661 = vpop.f32.mrb[0].mxu0
      %6662 = vmatprep.mubr.bf16.mxu0 0
      %6663 = vmatmul.mubr.bf16.gmra.mrb[0].mxu0 %v6564
      %v6664 = vpop.f32.mrb[0].mxu0
      %v6665 = vadd.f32 %v6526, %v6664
      %v6666 = vpop.f32.mrb[0].mxu0
      %v6667 = vpop.f32.mrb[0].mxu0
      %v6668 = vpop.f32.mrb[0].mxu0
      %6669 = vdwg.mxu0
      %v6670 = vlaneseq
      %v6671 = vshrl.u32 %v6670, 7
      %v6672 = vsub.s32 3, %v6671
      %v6673 = vrot.slane %v378, %v6672
      %v6674 = vmul.f32 %v6673, %v6601
      %v6675 = vmul.f32 %v6673, %v6604
      %v6676 = vmul.f32 %v6673, %v6609
      %v6677 = vmul.f32 %v6673, %v6612
      %v6678 = vmul.f32 %v6673, %v6617
      %v6679 = vmul.f32 %v6673, %v6620
      %v6680 = vmul.f32 %v6673, %v6625
      %v6681 = vmul.f32 %v6673, %v6628
      %v6682 = vmul.f32 %v6673, %v6633
      %v6683 = vmul.f32 %v6673, %v6636
      %v6684 = vmul.f32 %v6673, %v6641
      %v6685 = vmul.f32 %v6673, %v6644
      %v6686 = vmul.f32 %v6673, %v6649
      %v6687 = vmul.f32 %v6673, %v6652
      %v6688 = vmul.f32 %v6673, %v6657
      %v6689 = vmul.f32 %v6673, %v6660
      %v6690 = vmul.f32 %v6673, %v6665
      %v6691 = vadd.f32 %v361, %v6674
      %v6692 = vadd.f32 %v362, %v6675
      %v6693 = vadd.f32 %v363, %v6676
      %v6694 = vadd.f32 %v364, %v6677
      %v6695 = vadd.f32 %v365, %v6678
      %v6696 = vadd.f32 %v366, %v6679
      %v6697 = vadd.f32 %v367, %v6680
      %v6698 = vadd.f32 %v368, %v6681
      %v6699 = vadd.f32 %v369, %v6682
      %v6700 = vadd.f32 %v370, %v6683
      %v6701 = vadd.f32 %v371, %v6684
      %v6702 = vadd.f32 %v372, %v6685
      %v6703 = vadd.f32 %v373, %v6686
      %v6704 = vadd.f32 %v374, %v6687
      %v6705 = vadd.f32 %v375, %v6688
      %v6706 = vadd.f32 %v376, %v6689
      %v6707 = vadd.f32 %v377, %v6690
      %v6708 = vsel %vm379, %v6691, 0.0
      %6709 = vadd.xlane.f32.xlu0 %v6708
      %v6710 = vpop.xlane.xlu0 %6709
      %v6711 = vsel %vm379, %v6692, 0.0
      %6712 = vadd.xlane.f32.xlu0 %v6711
      %v6713 = vpop.xlane.xlu0 %6712
      %v6714 = vsel %vm379, %v6693, 0.0
      %6715 = vadd.xlane.f32.xlu0 %v6714
      %v6716 = vpop.xlane.xlu0 %6715
      %v6717 = vsel %vm379, %v6694, 0.0
      %6718 = vadd.xlane.f32.xlu0 %v6717
      %v6719 = vpop.xlane.xlu0 %6718
      %v6720 = vsel %vm379, %v6695, 0.0
      %6721 = vadd.xlane.f32.xlu0 %v6720
      %v6722 = vpop.xlane.xlu0 %6721
      %v6723 = vsel %vm379, %v6696, 0.0
      %6724 = vadd.xlane.f32.xlu0 %v6723
      %v6725 = vpop.xlane.xlu0 %6724
      %v6726 = vsel %vm379, %v6697, 0.0
      %6727 = vadd.xlane.f32.xlu0 %v6726
      %v6728 = vpop.xlane.xlu0 %6727
      %v6729 = vsel %vm379, %v6698, 0.0
      %6730 = vadd.xlane.f32.xlu0 %v6729
      %v6731 = vpop.xlane.xlu0 %6730
      %v6732 = vsel %vm379, %v6699, 0.0
      %6733 = vadd.xlane.f32.xlu0 %v6732
      %v6734 = vpop.xlane.xlu0 %6733
      %v6735 = vsel %vm379, %v6700, 0.0
      %6736 = vadd.xlane.f32.xlu0 %v6735
      %v6737 = vpop.xlane.xlu0 %6736
      %v6738 = vsel %vm379, %v6701, 0.0
      %6739 = vadd.xlane.f32.xlu0 %v6738
      %v6740 = vpop.xlane.xlu0 %6739
      %v6741 = vsel %vm379, %v6702, 0.0
      %6742 = vadd.xlane.f32.xlu0 %v6741
      %v6743 = vpop.xlane.xlu0 %6742
      %v6744 = vsel %vm379, %v6703, 0.0
      %6745 = vadd.xlane.f32.xlu0 %v6744
      %v6746 = vpop.xlane.xlu0 %6745
      %v6747 = vsel %vm379, %v6704, 0.0
      %6748 = vadd.xlane.f32.xlu0 %v6747
      %v6749 = vpop.xlane.xlu0 %6748
      %v6750 = vsel %vm379, %v6705, 0.0
      %6751 = vadd.xlane.f32.xlu0 %v6750
      %v6752 = vpop.xlane.xlu0 %6751
      %v6753 = vsel %vm379, %v6706, 0.0
      %6754 = vadd.xlane.f32.xlu0 %v6753
      %v6755 = vpop.xlane.xlu0 %6754
      %v6756 = vsel %vm379, %v6707, 0.0
      %6757 = vadd.xlane.f32.xlu0 %v6756
      %v6758 = vpop.xlane.xlu0 %6757
      %v6759 = vmul.f32 %v6710, %v431
      %v6760 = vmul.f32 %v6713, %v431
      %v6761 = vmul.f32 %v6716, %v431
      %v6762 = vmul.f32 %v6719, %v431
      %v6763 = vmul.f32 %v6722, %v431
      %v6764 = vmul.f32 %v6725, %v431
      %v6765 = vmul.f32 %v6728, %v431
      %v6766 = vmul.f32 %v6731, %v431
      %v6767 = vmul.f32 %v6734, %v431
      %v6768 = vmul.f32 %v6737, %v431
      %v6769 = vmul.f32 %v6740, %v431
      %v6770 = vmul.f32 %v6743, %v431
      %v6771 = vmul.f32 %v6746, %v431
      %v6772 = vmul.f32 %v6749, %v431
      %v6773 = vmul.f32 %v6752, %v431
      %v6774 = vmul.f32 %v6755, %v431
      %v6775 = vmul.f32 %v6758, %v431
      %v6776 = vsub.f32 %v6691, %v6759
      %v6777 = vsub.f32 %v6692, %v6760
      %v6778 = vsub.f32 %v6693, %v6761
      %v6779 = vsub.f32 %v6694, %v6762
      %v6780 = vsub.f32 %v6695, %v6763
      %v6781 = vsub.f32 %v6696, %v6764
      %v6782 = vsub.f32 %v6697, %v6765
      %v6783 = vsub.f32 %v6698, %v6766
      %v6784 = vsub.f32 %v6699, %v6767
      %v6785 = vsub.f32 %v6700, %v6768
      %v6786 = vsub.f32 %v6701, %v6769
      %v6787 = vsub.f32 %v6702, %v6770
      %v6788 = vsub.f32 %v6703, %v6771
      %v6789 = vsub.f32 %v6704, %v6772
      %v6790 = vsub.f32 %v6705, %v6773
      %v6791 = vsub.f32 %v6706, %v6774
      %v6792 = vsub.f32 %v6707, %v6775
      %v6793 = vmul.f32 %v6776, %v6776
      %v6794 = vmul.f32 %v6777, %v6777
      %v6795 = vmul.f32 %v6778, %v6778
      %v6796 = vmul.f32 %v6779, %v6779
      %v6797 = vmul.f32 %v6780, %v6780
      %v6798 = vmul.f32 %v6781, %v6781
      %v6799 = vmul.f32 %v6782, %v6782
      %v6800 = vmul.f32 %v6783, %v6783
      %v6801 = vmul.f32 %v6784, %v6784
      %v6802 = vmul.f32 %v6785, %v6785
      %v6803 = vmul.f32 %v6786, %v6786
      %v6804 = vmul.f32 %v6787, %v6787
      %v6805 = vmul.f32 %v6788, %v6788
      %v6806 = vmul.f32 %v6789, %v6789
      %v6807 = vmul.f32 %v6790, %v6790
      %v6808 = vmul.f32 %v6791, %v6791
      %v6809 = vmul.f32 %v6792, %v6792
      %v6810 = vsel %vm379, %v6793, 0.0
      %6811 = vadd.xlane.f32.xlu0 %v6810
      %v6812 = vpop.xlane.xlu0 %6811
      %v6813 = vsel %vm379, %v6794, 0.0
      %6814 = vadd.xlane.f32.xlu0 %v6813
      %v6815 = vpop.xlane.xlu0 %6814
      %v6816 = vsel %vm379, %v6795, 0.0
      %6817 = vadd.xlane.f32.xlu0 %v6816
      %v6818 = vpop.xlane.xlu0 %6817
      %v6819 = vsel %vm379, %v6796, 0.0
      %6820 = vadd.xlane.f32.xlu0 %v6819
      %v6821 = vpop.xlane.xlu0 %6820
      %v6822 = vsel %vm379, %v6797, 0.0
      %6823 = vadd.xlane.f32.xlu0 %v6822
      %v6824 = vpop.xlane.xlu0 %6823
      %v6825 = vsel %vm379, %v6798, 0.0
      %6826 = vadd.xlane.f32.xlu0 %v6825
      %v6827 = vpop.xlane.xlu0 %6826
      %v6828 = vsel %vm379, %v6799, 0.0
      %6829 = vadd.xlane.f32.xlu0 %v6828
      %v6830 = vpop.xlane.xlu0 %6829
      %v6831 = vsel %vm379, %v6800, 0.0
      %6832 = vadd.xlane.f32.xlu0 %v6831
      %v6833 = vpop.xlane.xlu0 %6832
      %v6834 = vsel %vm379, %v6801, 0.0
      %6835 = vadd.xlane.f32.xlu0 %v6834
      %v6836 = vpop.xlane.xlu0 %6835
      %v6837 = vsel %vm379, %v6802, 0.0
      %6838 = vadd.xlane.f32.xlu0 %v6837
      %v6839 = vpop.xlane.xlu0 %6838
      %v6840 = vsel %vm379, %v6803, 0.0
      %6841 = vadd.xlane.f32.xlu0 %v6840
      %v6842 = vpop.xlane.xlu0 %6841
      %v6843 = vsel %vm379, %v6804, 0.0
      %6844 = vadd.xlane.f32.xlu0 %v6843
      %v6845 = vpop.xlane.xlu0 %6844
      %v6846 = vsel %vm379, %v6805, 0.0
      %6847 = vadd.xlane.f32.xlu0 %v6846
      %v6848 = vpop.xlane.xlu0 %6847
      %v6849 = vsel %vm379, %v6806, 0.0
      %6850 = vadd.xlane.f32.xlu0 %v6849
      %v6851 = vpop.xlane.xlu0 %6850
      %v6852 = vsel %vm379, %v6807, 0.0
      %6853 = vadd.xlane.f32.xlu0 %v6852
      %v6854 = vpop.xlane.xlu0 %6853
      %v6855 = vsel %vm379, %v6808, 0.0
      %6856 = vadd.xlane.f32.xlu0 %v6855
      %v6857 = vpop.xlane.xlu0 %6856
      %v6858 = vsel %vm379, %v6809, 0.0
      %6859 = vadd.xlane.f32.xlu0 %v6858
      %v6860 = vpop.xlane.xlu0 %6859
      %v6861 = vmul.f32 %v6812, %v431
      %v6862 = vmul.f32 %v6815, %v431
      %v6863 = vmul.f32 %v6818, %v431
      %v6864 = vmul.f32 %v6821, %v431
      %v6865 = vmul.f32 %v6824, %v431
      %v6866 = vmul.f32 %v6827, %v431
      %v6867 = vmul.f32 %v6830, %v431
      %v6868 = vmul.f32 %v6833, %v431
      %v6869 = vmul.f32 %v6836, %v431
      %v6870 = vmul.f32 %v6839, %v431
      %v6871 = vmul.f32 %v6842, %v431
      %v6872 = vmul.f32 %v6845, %v431
      %v6873 = vmul.f32 %v6848, %v431
      %v6874 = vmul.f32 %v6851, %v431
      %v6875 = vmul.f32 %v6854, %v431
      %v6876 = vmul.f32 %v6857, %v431
      %v6877 = vmul.f32 %v6860, %v431
      %v6878 = vadd.f32 %v6861, 1e-05
      %v6879 = vadd.f32 %v6862, 1e-05
      %v6880 = vadd.f32 %v6863, 1e-05
      %v6881 = vadd.f32 %v6864, 1e-05
      %v6882 = vadd.f32 %v6865, 1e-05
      %v6883 = vadd.f32 %v6866, 1e-05
      %v6884 = vadd.f32 %v6867, 1e-05
      %v6885 = vadd.f32 %v6868, 1e-05
      %v6886 = vadd.f32 %v6869, 1e-05
      %v6887 = vadd.f32 %v6870, 1e-05
      %v6888 = vadd.f32 %v6871, 1e-05
      %v6889 = vadd.f32 %v6872, 1e-05
      %v6890 = vadd.f32 %v6873, 1e-05
      %v6891 = vadd.f32 %v6874, 1e-05
      %v6892 = vadd.f32 %v6875, 1e-05
      %v6893 = vadd.f32 %v6876, 1e-05
      %v6894 = vadd.f32 %v6877, 1e-05
      %v6895 = vrsqrt.pop %v6878
      %v6896 = vrsqrt.pop %v6879
      %v6897 = vrsqrt.pop %v6880
      %v6898 = vrsqrt.pop %v6881
      %v6899 = vrsqrt.pop %v6882
      %v6900 = vrsqrt.pop %v6883
      %v6901 = vrsqrt.pop %v6884
      %v6902 = vrsqrt.pop %v6885
      %v6903 = vrsqrt.pop %v6886
      %v6904 = vrsqrt.pop %v6887
      %v6905 = vrsqrt.pop %v6888
      %v6906 = vrsqrt.pop %v6889
      %v6907 = vrsqrt.pop %v6890
      %v6908 = vrsqrt.pop %v6891
      %v6909 = vrsqrt.pop %v6892
      %v6910 = vrsqrt.pop %v6893
      %v6911 = vrsqrt.pop %v6894
      %v6912 = vmul.f32 %v6776, %v6895
      %v6913 = vmul.f32 %v6777, %v6896
      %v6914 = vmul.f32 %v6778, %v6897
      %v6915 = vmul.f32 %v6779, %v6898
      %v6916 = vmul.f32 %v6780, %v6899
      %v6917 = vmul.f32 %v6781, %v6900
      %v6918 = vmul.f32 %v6782, %v6901
      %v6919 = vmul.f32 %v6783, %v6902
      %v6920 = vmul.f32 %v6784, %v6903
      %v6921 = vmul.f32 %v6785, %v6904
      %v6922 = vmul.f32 %v6786, %v6905
      %v6923 = vmul.f32 %v6787, %v6906
      %v6924 = vmul.f32 %v6788, %v6907
      %v6925 = vmul.f32 %v6789, %v6908
      %v6926 = vmul.f32 %v6790, %v6909
      %v6927 = vmul.f32 %v6791, %v6910
      %v6928 = vmul.f32 %v6792, %v6911
      %v6929 = vlaneseq
      %v6930 = vshrl.u32 %v6929, 7
      %v6931 = vsub.s32 4, %v6930
      %v6932 = vrot.slane %v378, %v6931
      %v6933 = vmul.f32 %v6912, %v6932
      %v6934 = vmul.f32 %v6913, %v6932
      %v6935 = vmul.f32 %v6914, %v6932
      %v6936 = vmul.f32 %v6915, %v6932
      %v6937 = vmul.f32 %v6916, %v6932
      %v6938 = vmul.f32 %v6917, %v6932
      %v6939 = vmul.f32 %v6918, %v6932
      %v6940 = vmul.f32 %v6919, %v6932
      %v6941 = vmul.f32 %v6920, %v6932
      %v6942 = vmul.f32 %v6921, %v6932
      %v6943 = vmul.f32 %v6922, %v6932
      %v6944 = vmul.f32 %v6923, %v6932
      %v6945 = vmul.f32 %v6924, %v6932
      %v6946 = vmul.f32 %v6925, %v6932
      %v6947 = vmul.f32 %v6926, %v6932
      %v6948 = vmul.f32 %v6927, %v6932
      %v6949 = vmul.f32 %v6928, %v6932
      %v6950 = vlaneseq
      %v6951 = vshrl.u32 %v6950, 7
      %v6952 = vsub.s32 5, %v6951
      %v6953 = vrot.slane %v378, %v6952
      %v6954 = vadd.f32 %v6933, %v6953
      %v6955 = vadd.f32 %v6934, %v6953
      %v6956 = vadd.f32 %v6935, %v6953
      %v6957 = vadd.f32 %v6936, %v6953
      %v6958 = vadd.f32 %v6937, %v6953
      %v6959 = vadd.f32 %v6938, %v6953
      %v6960 = vadd.f32 %v6939, %v6953
      %v6961 = vadd.f32 %v6940, %v6953
      %v6962 = vadd.f32 %v6941, %v6953
      %v6963 = vadd.f32 %v6942, %v6953
      %v6964 = vadd.f32 %v6943, %v6953
      %v6965 = vadd.f32 %v6944, %v6953
      %v6966 = vadd.f32 %v6945, %v6953
      %v6967 = vadd.f32 %v6946, %v6953
      %v6968 = vadd.f32 %v6947, %v6953
      %v6969 = vadd.f32 %v6948, %v6953
      %v6970 = vadd.f32 %v6949, %v6953
      %v6971 = vpack.c.bf16 %v6955, %v6954
      %v6972 = vpack.c.bf16 %v6957, %v6956
      %v6973 = vpack.c.bf16 %v6959, %v6958
      %v6974 = vpack.c.bf16 %v6961, %v6960
      %v6975 = vpack.c.bf16 %v6963, %v6962
      %v6976 = vpack.c.bf16 %v6965, %v6964
      %v6977 = vpack.c.bf16 %v6967, %v6966
      %v6978 = vpack.c.bf16 %v6969, %v6968
      %v6979 = vpack.c.bf16 %v6970, %v6970
      %v6980 = vld [vmem:[%s7] sm:$0xf]
      %v6981 = vld [vmem:[%s7 + $0x4] sm:$0xf]
      %v6982 = vld [vmem:[%s7 + $0x8] sm:$0xf]
      %v6983 = vld [vmem:[%s7 + $0xc] sm:$0xf]
      %v6984 = vld [vmem:[%s8] sm:$0x1]
      %v6986 = vlaneseq
      %v6987 = vshrl.u32 %v6986, 7
      %v6988 = vsub.s32 0, %v6987
      %v6989 = vrot.slane %v6984, %v6988
      %v6995 = vunpack.c.l.b16 %v6980
      %v6996 = vunpack.c.l.b16 %v6981
      %v6997 = vunpack.c.l.b16 %v6982
      %v6998 = vunpack.c.l.b16 %v6983
      %v6999 = vpack.c.b16 %v6996, %v6995
      %v7000 = vpack.c.b16 %v6998, %v6997
      %v7004 = vsel %vm379, %v6971, 0
      %v7007 = vsel %vm379, %v6972, 0
      %v7010 = vsel %vm379, %v6973, 0
      %v7013 = vsel %vm379, %v6974, 0
      %v7016 = vsel %vm379, %v6975, 0
      %v7019 = vsel %vm379, %v6976, 0
      %v7022 = vsel %vm379, %v6977, 0
      %v7025 = vsel %vm379, %v6978, 0
      %v7028 = vsel %vm379, %v6979, 0
      %7030 = vmatprep.subr.bf16.mxu0 0
      %7031 = vmatpush1.bf16.msra.mxu0 %v6999
      %7032 = vmatprep.subr.bf16.mxu0 0
      %7033 = vmatpush1.bf16.msra.mxu0 %v7000
      %7034 = vmatprep.subr.bf16.mxu0 0
      %7035 = vmatpush1.bf16.msra.mxu0 0
      %7036 = vmatprep.subr.bf16.mxu0 0
      %7037 = vmatpush1.bf16.msra.mxu0 0
      %7038 = vmatprep.subr.bf16.mxu0 0
      %7039 = vmatpush1.bf16.msra.mxu0 0
      %7040 = vmatprep.subr.bf16.mxu0 0
      %7041 = vmatpush1.bf16.msra.mxu0 0
      %7042 = vmatprep.subr.bf16.mxu0 0
      %7043 = vmatpush1.bf16.msra.mxu0 0
      %7044 = vmatprep.subr.bf16.mxu0 0
      %7045 = vmatpush1.bf16.msra.mxu0 0
      %7046 = vmatprep.subr.bf16.mxu0 0
      %7047 = vmatpush1.bf16.msra.mxu0 0
      %7048 = vmatprep.subr.bf16.mxu0 0
      %7049 = vmatpush1.bf16.msra.mxu0 0
      %7050 = vmatprep.subr.bf16.mxu0 0
      %7051 = vmatpush1.bf16.msra.mxu0 0
      %7052 = vmatprep.subr.bf16.mxu0 0
      %7053 = vmatpush1.bf16.msra.mxu0 0
      %7054 = vmatprep.subr.bf16.mxu0 0
      %7055 = vmatpush1.bf16.msra.mxu0 0
      %7056 = vmatprep.subr.bf16.mxu0 0
      %7057 = vmatpush1.bf16.msra.mxu0 0
      %7058 = vmatprep.subr.bf16.mxu0 0
      %7059 = vmatpush1.bf16.msra.mxu0 0
      %7060 = vmatprep.subr.bf16.mxu0 0
      %7061 = vmatpush1.bf16.msra.mxu0 0
      %7062 = vmatprep.mubr.bf16.mxu0 0
      %7063 = vmatmul.mubr.bf16.gmra.mrb[0].mxu0 %v7004
      %v7064 = vpop.f32.mrb[0].mxu0
      %v7065 = vadd.f32 %v6989, %v7064
      %v7066 = vpop.f32.mrb[0].mxu0
      %v7067 = vpop.f32.mrb[0].mxu0
      %v7068 = vadd.f32 %v6989, %v7067
      %v7069 = vpop.f32.mrb[0].mxu0
      %7070 = vmatprep.mubr.bf16.mxu0 0
      %7071 = vmatmul.mubr.bf16.gmra.mrb[0].mxu0 %v7007
      %v7072 = vpop.f32.mrb[0].mxu0
      %v7073 = vadd.f32 %v6989, %v7072
      %v7074 = vpop.f32.mrb[0].mxu0
      %v7075 = vpop.f32.mrb[0].mxu0
      %v7076 = vadd.f32 %v6989, %v7075
      %v7077 = vpop.f32.mrb[0].mxu0
      %7078 = vmatprep.mubr.bf16.mxu0 0
      %7079 = vmatmul.mubr.bf16.gmra.mrb[0].mxu0 %v7010
      %v7080 = vpop.f32.mrb[0].mxu0
      %v7081 = vadd.f32 %v6989, %v7080
      %v7082 = vpop.f32.mrb[0].mxu0
      %v7083 = vpop.f32.mrb[0].mxu0
      %v7084 = vadd.f32 %v6989, %v7083
      %v7085 = vpop.f32.mrb[0].mxu0
      %7086 = vmatprep.mubr.bf16.mxu0 0
      %7087 = vmatmul.mubr.bf16.gmra.mrb[0].mxu0 %v7013
      %v7088 = vpop.f32.mrb[0].mxu0
      %v7089 = vadd.f32 %v6989, %v7088
      %v7090 = vpop.f32.mrb[0].mxu0
      %v7091 = vpop.f32.mrb[0].mxu0
      %v7092 = vadd.f32 %v6989, %v7091
      %v7093 = vpop.f32.mrb[0].mxu0
      %7094 = vmatprep.mubr.bf16.mxu0 0
      %7095 = vmatmul.mubr.bf16.gmra.mrb[0].mxu0 %v7016
      %v7096 = vpop.f32.mrb[0].mxu0
      %v7097 = vadd.f32 %v6989, %v7096
      %v7098 = vpop.f32.mrb[0].mxu0
      %v7099 = vpop.f32.mrb[0].mxu0
      %v7100 = vadd.f32 %v6989, %v7099
      %v7101 = vpop.f32.mrb[0].mxu0
      %7102 = vmatprep.mubr.bf16.mxu0 0
      %7103 = vmatmul.mubr.bf16.gmra.mrb[0].mxu0 %v7019
      %v7104 = vpop.f32.mrb[0].mxu0
      %v7105 = vadd.f32 %v6989, %v7104
      %v7106 = vpop.f32.mrb[0].mxu0
      %v7107 = vpop.f32.mrb[0].mxu0
      %v7108 = vadd.f32 %v6989, %v7107
      %v7109 = vpop.f32.mrb[0].mxu0
      %7110 = vmatprep.mubr.bf16.mxu0 0
      %7111 = vmatmul.mubr.bf16.gmra.mrb[0].mxu0 %v7022
      %v7112 = vpop.f32.mrb[0].mxu0
      %v7113 = vadd.f32 %v6989, %v7112
      %v7114 = vpop.f32.mrb[0].mxu0
      %v7115 = vpop.f32.mrb[0].mxu0
      %v7116 = vadd.f32 %v6989, %v7115
      %v7117 = vpop.f32.mrb[0].mxu0
      %7118 = vmatprep.mubr.bf16.mxu0 0
      %7119 = vmatmul.mubr.bf16.gmra.mrb[0].mxu0 %v7025
      %v7120 = vpop.f32.mrb[0].mxu0
      %v7121 = vadd.f32 %v6989, %v7120
      %v7122 = vpop.f32.mrb[0].mxu0
      %v7123 = vpop.f32.mrb[0].mxu0
      %v7124 = vadd.f32 %v6989, %v7123
      %v7125 = vpop.f32.mrb[0].mxu0
      %7126 = vmatprep.mubr.bf16.mxu0 0
      %7127 = vmatmul.mubr.bf16.gmra.mrb[0].mxu0 %v7028
      %v7128 = vpop.f32.mrb[0].mxu0
      %v7129 = vadd.f32 %v6989, %v7128
      %v7130 = vpop.f32.mrb[0].mxu0
      %v7131 = vpop.f32.mrb[0].mxu0
      %v7132 = vpop.f32.mrb[0].mxu0
      %7133 = vdwg.mxu0
      %v7134 = vmul.f32 %v7065, 0.5
      %v7135 = vmul.f32 %v7068, 0.5
      %v7136 = vmul.f32 %v7073, 0.5
      %v7137 = vmul.f32 %v7076, 0.5
      %v7138 = vmul.f32 %v7081, 0.5
      %v7139 = vmul.f32 %v7084, 0.5
      %v7140 = vmul.f32 %v7089, 0.5
      %v7141 = vmul.f32 %v7092, 0.5
      %v7142 = vmul.f32 %v7097, 0.5
      %v7143 = vmul.f32 %v7100, 0.5
      %v7144 = vmul.f32 %v7105, 0.5
      %v7145 = vmul.f32 %v7108, 0.5
      %v7146 = vmul.f32 %v7113, 0.5
      %v7147 = vmul.f32 %v7116, 0.5
      %v7148 = vmul.f32 %v7121, 0.5
      %v7149 = vmul.f32 %v7124, 0.5
      %v7150 = vmul.f32 %v7129, 0.5
      %v7151 = vmul.f32 %v7065, 0.70710677
      %v7152 = vmul.f32 %v7068, 0.70710677
      %v7153 = vmul.f32 %v7073, 0.70710677
      %v7154 = vmul.f32 %v7076, 0.70710677
      %v7155 = vmul.f32 %v7081, 0.70710677
      %v7156 = vmul.f32 %v7084, 0.70710677
      %v7157 = vmul.f32 %v7089, 0.70710677
      %v7158 = vmul.f32 %v7092, 0.70710677
      %v7159 = vmul.f32 %v7097, 0.70710677
      %v7160 = vmul.f32 %v7100, 0.70710677
      %v7161 = vmul.f32 %v7105, 0.70710677
      %v7162 = vmul.f32 %v7108, 0.70710677
      %v7163 = vmul.f32 %v7113, 0.70710677
      %v7164 = vmul.f32 %v7116, 0.70710677
      %v7165 = vmul.f32 %v7121, 0.70710677
      %v7166 = vmul.f32 %v7124, 0.70710677
      %v7167 = vmul.f32 %v7129, 0.70710677
      %v7168 = verf.f32.pop %v7151
      %v7169 = verf.f32.pop %v7152
      %v7170 = verf.f32.pop %v7153
      %v7171 = verf.f32.pop %v7154
      %v7172 = verf.f32.pop %v7155
      %v7173 = verf.f32.pop %v7156
      %v7174 = verf.f32.pop %v7157
      %v7175 = verf.f32.pop %v7158
      %v7176 = verf.f32.pop %v7159
      %v7177 = verf.f32.pop %v7160
      %v7178 = verf.f32.pop %v7161
      %v7179 = verf.f32.pop %v7162
      %v7180 = verf.f32.pop %v7163
      %v7181 = verf.f32.pop %v7164
      %v7182 = verf.f32.pop %v7165
      %v7183 = verf.f32.pop %v7166
      %v7184 = verf.f32.pop %v7167
      %v7185 = vadd.f32 %v7168, 1.0
      %v7186 = vadd.f32 %v7169, 1.0
      %v7187 = vadd.f32 %v7170, 1.0
      %v7188 = vadd.f32 %v7171, 1.0
      %v7189 = vadd.f32 %v7172, 1.0
      %v7190 = vadd.f32 %v7173, 1.0
      %v7191 = vadd.f32 %v7174, 1.0
      %v7192 = vadd.f32 %v7175, 1.0
      %v7193 = vadd.f32 %v7176, 1.0
      %v7194 = vadd.f32 %v7177, 1.0
      %v7195 = vadd.f32 %v7178, 1.0
      %v7196 = vadd.f32 %v7179, 1.0
      %v7197 = vadd.f32 %v7180, 1.0
      %v7198 = vadd.f32 %v7181, 1.0
      %v7199 = vadd.f32 %v7182, 1.0
      %v7200 = vadd.f32 %v7183, 1.0
      %v7201 = vadd.f32 %v7184, 1.0
      %v7202 = vmul.f32 %v7134, %v7185
      %v7203 = vmul.f32 %v7135, %v7186
      %v7204 = vmul.f32 %v7136, %v7187
      %v7205 = vmul.f32 %v7137, %v7188
      %v7206 = vmul.f32 %v7138, %v7189
      %v7207 = vmul.f32 %v7139, %v7190
      %v7208 = vmul.f32 %v7140, %v7191
      %v7209 = vmul.f32 %v7141, %v7192
      %v7210 = vmul.f32 %v7142, %v7193
      %v7211 = vmul.f32 %v7143, %v7194
      %v7212 = vmul.f32 %v7144, %v7195
      %v7213 = vmul.f32 %v7145, %v7196
      %v7214 = vmul.f32 %v7146, %v7197
      %v7215 = vmul.f32 %v7147, %v7198
      %v7216 = vmul.f32 %v7148, %v7199
      %v7217 = vmul.f32 %v7149, %v7200
      %v7218 = vmul.f32 %v7150, %v7201
      %v7219 = vpack.c.bf16 %v7203, %v7202
      %v7220 = vpack.c.bf16 %v7205, %v7204
      %v7221 = vpack.c.bf16 %v7207, %v7206
      %v7222 = vpack.c.bf16 %v7209, %v7208
      %v7223 = vpack.c.bf16 %v7211, %v7210
      %v7224 = vpack.c.bf16 %v7213, %v7212
      %v7225 = vpack.c.bf16 %v7215, %v7214
      %v7226 = vpack.c.bf16 %v7217, %v7216
      %v7227 = vpack.c.bf16 %v7218, %v7218
      %v7228 = vld [vmem:[%s9] sm:$0xf]
      %v7229 = vld [vmem:[%s9 + $0x4] sm:$0xf]
      %v7230 = vld [vmem:[%s9 + $0x8] sm:$0xf]
      %v7231 = vld [vmem:[%s9 + $0xc] sm:$0xf]
      %v7232 = vld [vmem:[%s9 + $0x10] sm:$0xf]
      %v7233 = vld [vmem:[%s9 + $0x14] sm:$0xf]
      %v7234 = vld [vmem:[%s9 + $0x18] sm:$0xf]
      %v7235 = vld [vmem:[%s9 + $0x1c] sm:$0xf]
      %v7236 = vld [vmem:[%s9 + $0x20] sm:$0xf]
      %v7237 = vld [vmem:[%s9 + $0x24] sm:$0xf]
      %v7238 = vld [vmem:[%s9 + $0x28] sm:$0xf]
      %v7239 = vld [vmem:[%s9 + $0x2c] sm:$0xf]
      %v7240 = vld [vmem:[%s9 + $0x30] sm:$0xf]
      %v7241 = vld [vmem:[%s9 + $0x34] sm:$0xf]
      %v7242 = vld [vmem:[%s9 + $0x38] sm:$0xf]
      %v7243 = vld [vmem:[%s9 + $0x3c] sm:$0xf]
      %v7244 = vlaneseq
      %v7245 = vshrl.u32 %v7244, 7
      %v7246 = vsub.s32 6, %v7245
      %v7247 = vrot.slane %v378, %v7246
      %v7264 = vunpack.c.l.b16 %v7228
      %v7265 = vunpack.c.l.b16 %v7229
      %v7266 = vunpack.c.l.b16 %v7230
      %v7267 = vunpack.c.l.b16 %v7231
      %v7268 = vunpack.c.l.b16 %v7232
      %v7269 = vunpack.c.l.b16 %v7233
      %v7270 = vunpack.c.l.b16 %v7234
      %v7271 = vunpack.c.l.b16 %v7235
      %v7272 = vunpack.c.l.b16 %v7236
      %v7273 = vunpack.c.l.b16 %v7237
      %v7274 = vunpack.c.l.b16 %v7238
      %v7275 = vunpack.c.l.b16 %v7239
      %v7276 = vunpack.c.l.b16 %v7240
      %v7277 = vunpack.c.l.b16 %v7241
      %v7278 = vunpack.c.l.b16 %v7242
      %v7279 = vunpack.c.l.b16 %v7243
      %v7280 = vpack.c.b16 %v7265, %v7264
      %v7281 = vpack.c.b16 %v7267, %v7266
      %v7282 = vpack.c.b16 %v7269, %v7268
      %v7283 = vpack.c.b16 %v7271, %v7270
      %v7284 = vpack.c.b16 %v7273, %v7272
      %v7285 = vpack.c.b16 %v7275, %v7274
      %v7286 = vpack.c.b16 %v7277, %v7276
      %v7287 = vpack.c.b16 %v7279, %v7278
      %7296 = vmatprep.subr.bf16.mxu0 0
      %7297 = vmatpush1.bf16.msra.mxu0 %v7280
      %7298 = vmatprep.subr.bf16.mxu0 0
      %7299 = vmatpush1.bf16.msra.mxu0 %v7281
      %7300 = vmatprep.subr.bf16.mxu0 0
      %7301 = vmatpush1.bf16.msra.mxu0 %v7282
      %7302 = vmatprep.subr.bf16.mxu0 0
      %7303 = vmatpush1.bf16.msra.mxu0 %v7283
      %7304 = vmatprep.subr.bf16.mxu0 0
      %7305 = vmatpush1.bf16.msra.mxu0 %v7284
      %7306 = vmatprep.subr.bf16.mxu0 0
      %7307 = vmatpush1.bf16.msra.mxu0 %v7285
      %7308 = vmatprep.subr.bf16.mxu0 0
      %7309 = vmatpush1.bf16.msra.mxu0 %v7286
      %7310 = vmatprep.subr.bf16.mxu0 0
      %7311 = vmatpush1.bf16.msra.mxu0 %v7287
      %7312 = vmatprep.subr.bf16.mxu0 0
      %7313 = vmatpush1.bf16.msra.mxu0 0
      %7314 = vmatprep.subr.bf16.mxu0 0
      %7315 = vmatpush1.bf16.msra.mxu0 0
      %7316 = vmatprep.subr.bf16.mxu0 0
      %7317 = vmatpush1.bf16.msra.mxu0 0
      %7318 = vmatprep.subr.bf16.mxu0 0
      %7319 = vmatpush1.bf16.msra.mxu0 0
      %7320 = vmatprep.subr.bf16.mxu0 0
      %7321 = vmatpush1.bf16.msra.mxu0 0
      %7322 = vmatprep.subr.bf16.mxu0 0
      %7323 = vmatpush1.bf16.msra.mxu0 0
      %7324 = vmatprep.subr.bf16.mxu0 0
      %7325 = vmatpush1.bf16.msra.mxu0 0
      %7326 = vmatprep.subr.bf16.mxu0 0
      %7327 = vmatpush1.bf16.msra.mxu0 0
      %7328 = vmatprep.mubr.bf16.mxu0 0
      %7329 = vmatmul.mubr.bf16.gmra.mrb[0].mxu0 %v7219
      %v7330 = vpop.f32.mrb[0].mxu0
      %v7331 = vadd.f32 %v7247, %v7330
      %v7332 = vpop.f32.mrb[0].mxu0
      %v7333 = vpop.f32.mrb[0].mxu0
      %v7334 = vadd.f32 %v7247, %v7333
      %v7335 = vpop.f32.mrb[0].mxu0
      %7336 = vmatprep.mubr.bf16.mxu0 0
      %7337 = vmatmul.mubr.bf16.gmra.mrb[0].mxu0 %v7220
      %v7338 = vpop.f32.mrb[0].mxu0
      %v7339 = vadd.f32 %v7247, %v7338
      %v7340 = vpop.f32.mrb[0].mxu0
      %v7341 = vpop.f32.mrb[0].mxu0
      %v7342 = vadd.f32 %v7247, %v7341
      %v7343 = vpop.f32.mrb[0].mxu0
      %7344 = vmatprep.mubr.bf16.mxu0 0
      %7345 = vmatmul.mubr.bf16.gmra.mrb[0].mxu0 %v7221
      %v7346 = vpop.f32.mrb[0].mxu0
      %v7347 = vadd.f32 %v7247, %v7346
      %v7348 = vpop.f32.mrb[0].mxu0
      %v7349 = vpop.f32.mrb[0].mxu0
      %v7350 = vadd.f32 %v7247, %v7349
      %v7351 = vpop.f32.mrb[0].mxu0
      %7352 = vmatprep.mubr.bf16.mxu0 0
      %7353 = vmatmul.mubr.bf16.gmra.mrb[0].mxu0 %v7222
      %v7354 = vpop.f32.mrb[0].mxu0
      %v7355 = vadd.f32 %v7247, %v7354
      %v7356 = vpop.f32.mrb[0].mxu0
      %v7357 = vpop.f32.mrb[0].mxu0
      %v7358 = vadd.f32 %v7247, %v7357
      %v7359 = vpop.f32.mrb[0].mxu0
      %7360 = vmatprep.mubr.bf16.mxu0 0
      %7361 = vmatmul.mubr.bf16.gmra.mrb[0].mxu0 %v7223
      %v7362 = vpop.f32.mrb[0].mxu0
      %v7363 = vadd.f32 %v7247, %v7362
      %v7364 = vpop.f32.mrb[0].mxu0
      %v7365 = vpop.f32.mrb[0].mxu0
      %v7366 = vadd.f32 %v7247, %v7365
      %v7367 = vpop.f32.mrb[0].mxu0
      %7368 = vmatprep.mubr.bf16.mxu0 0
      %7369 = vmatmul.mubr.bf16.gmra.mrb[0].mxu0 %v7224
      %v7370 = vpop.f32.mrb[0].mxu0
      %v7371 = vadd.f32 %v7247, %v7370
      %v7372 = vpop.f32.mrb[0].mxu0
      %v7373 = vpop.f32.mrb[0].mxu0
      %v7374 = vadd.f32 %v7247, %v7373
      %v7375 = vpop.f32.mrb[0].mxu0
      %7376 = vmatprep.mubr.bf16.mxu0 0
      %7377 = vmatmul.mubr.bf16.gmra.mrb[0].mxu0 %v7225
      %v7378 = vpop.f32.mrb[0].mxu0
      %v7379 = vadd.f32 %v7247, %v7378
      %v7380 = vpop.f32.mrb[0].mxu0
      %v7381 = vpop.f32.mrb[0].mxu0
      %v7382 = vadd.f32 %v7247, %v7381
      %v7383 = vpop.f32.mrb[0].mxu0
      %7384 = vmatprep.mubr.bf16.mxu0 0
      %7385 = vmatmul.mubr.bf16.gmra.mrb[0].mxu0 %v7226
      %v7386 = vpop.f32.mrb[0].mxu0
      %v7387 = vadd.f32 %v7247, %v7386
      %v7388 = vpop.f32.mrb[0].mxu0
      %v7389 = vpop.f32.mrb[0].mxu0
      %v7390 = vadd.f32 %v7247, %v7389
      %v7391 = vpop.f32.mrb[0].mxu0
      %7392 = vmatprep.mubr.bf16.mxu0 0
      %7393 = vmatmul.mubr.bf16.gmra.mrb[0].mxu0 %v7227
      %v7394 = vpop.f32.mrb[0].mxu0
      %v7395 = vadd.f32 %v7247, %v7394
      %v7396 = vpop.f32.mrb[0].mxu0
      %v7397 = vpop.f32.mrb[0].mxu0
      %v7398 = vpop.f32.mrb[0].mxu0
      %7399 = vdwg.mxu0
      %v7400 = vlaneseq
      %v7401 = vshrl.u32 %v7400, 7
      %v7402 = vsub.s32 7, %v7401
      %v7403 = vrot.slane %v378, %v7402
      %v7404 = vmul.f32 %v7403, %v7331
      %v7405 = vmul.f32 %v7403, %v7334
      %v7406 = vmul.f32 %v7403, %v7339
      %v7407 = vmul.f32 %v7403, %v7342
      %v7408 = vmul.f32 %v7403, %v7347
      %v7409 = vmul.f32 %v7403, %v7350
      %v7410 = vmul.f32 %v7403, %v7355
      %v7411 = vmul.f32 %v7403, %v7358
      %v7412 = vmul.f32 %v7403, %v7363
      %v7413 = vmul.f32 %v7403, %v7366
      %v7414 = vmul.f32 %v7403, %v7371
      %v7415 = vmul.f32 %v7403, %v7374
      %v7416 = vmul.f32 %v7403, %v7379
      %v7417 = vmul.f32 %v7403, %v7382
      %v7418 = vmul.f32 %v7403, %v7387
      %v7419 = vmul.f32 %v7403, %v7390
      %v7420 = vmul.f32 %v7403, %v7395
      %v7421 = vadd.f32 %v6691, %v7404
      %v7422 = vadd.f32 %v6692, %v7405
      %v7423 = vadd.f32 %v6693, %v7406
      %v7424 = vadd.f32 %v6694, %v7407
      %v7425 = vadd.f32 %v6695, %v7408
      %v7426 = vadd.f32 %v6696, %v7409
      %v7427 = vadd.f32 %v6697, %v7410
      %v7428 = vadd.f32 %v6698, %v7411
      %v7429 = vadd.f32 %v6699, %v7412
      %v7430 = vadd.f32 %v6700, %v7413
      %v7431 = vadd.f32 %v6701, %v7414
      %v7432 = vadd.f32 %v6702, %v7415
      %v7433 = vadd.f32 %v6703, %v7416
      %v7434 = vadd.f32 %v6704, %v7417
      %v7435 = vadd.f32 %v6705, %v7418
      %v7436 = vadd.f32 %v6706, %v7419
      %v7437 = vadd.f32 %v6707, %v7420
      %7438 = vst.msk [vmem:[%s359] sm:$0xff] %vm379, %v7421
      %7439 = vst.msk [vmem:[%s359 + $0x8] sm:$0xff] %vm379, %v7422
      %7440 = vst.msk [vmem:[%s359 + $0x10] sm:$0xff] %vm379, %v7423
      %7441 = vst.msk [vmem:[%s359 + $0x18] sm:$0xff] %vm379, %v7424
      %7442 = vst.msk [vmem:[%s359 + $0x20] sm:$0xff] %vm379, %v7425
      %7443 = vst.msk [vmem:[%s359 + $0x28] sm:$0xff] %vm379, %v7426
      %7444 = vst.msk [vmem:[%s359 + $0x30] sm:$0xff] %vm379, %v7427
      %7445 = vst.msk [vmem:[%s359 + $0x38] sm:$0xff] %vm379, %v7428
      %7446 = vst.msk [vmem:[%s359 + $0x40] sm:$0xff] %vm379, %v7429
      %7447 = vst.msk [vmem:[%s359 + $0x48] sm:$0xff] %vm379, %v7430
      %7448 = vst.msk [vmem:[%s359 + $0x50] sm:$0xff] %vm379, %v7431
      %7449 = vst.msk [vmem:[%s359 + $0x58] sm:$0xff] %vm379, %v7432
      %7450 = vst.msk [vmem:[%s359 + $0x60] sm:$0xff] %vm379, %v7433
      %7451 = vst.msk [vmem:[%s359 + $0x68] sm:$0xff] %vm379, %v7434
      %7452 = vst.msk [vmem:[%s359 + $0x70] sm:$0xff] %vm379, %v7435
      %7453 = vst.msk [vmem:[%s359 + $0x78] sm:$0xff] %vm379, %v7436
      %7454 = vst.msk [vmem:[%s359 + $0x80] sm:$0xff] %vm379, %v7437
      %p7455 = scmp.lt.s32.totalorder %s21, 1
      %s7456 = scalar_select %p7455, %s21, 1
      %s7457 = smul.addr %s7456, 17
      %s7458 = smul.addr %s7457, 8
      %s7459 = scalar_lea.vmem %s10, %s7458
      // Predicated region
      $region61: #{agformer_block.1} parent=59 // pred_check
        %p7460 = pneg %p254
      $region62: #{agformer_block.1} parent=59 // pred_check_branch
        %7462 = sbr.rel (%p7460) target = $region64
      $region63: #{agformer_block.1} parent=59 // pred_region
        _
      $region64: #{agformer_block.1} parent=59 // pred_fallthru
        _
    $region60: #{agformer_block.1} parent=5 // pred_fallthru
      _
    %p7463 = scmp.le.s32.totalorder 2, %s16
    // Predicated region
    $region65: #{agformer_block.1} parent=5 // pred_check
      %p7464 = pneg %p7463
    $region66: #{agformer_block.1} parent=5 // pred_check_branch
      %7466 = sbr.rel (%p7464) target = $region68
    $region67: #{agformer_block.1} parent=5 // pred_region
      %s7467 = ssub.s32 %s16, 2
      // Predicated region
      $region69: #{agformer_block.1} parent=67 // pred_check
        %p7468 = pneg %p260
      $region70: #{agformer_block.1} parent=67 // pred_check_branch
        %7470 = sbr.rel (%p7468) target = $region72
      $region71: #{agformer_block.1} parent=67 // pred_region
        %p7471 = scmp.lt.s32.totalorder %s22, 1
        %s7472 = scalar_select %p7471, %s22, 1
        %s7473 = smul.addr %s7472, 17
        %s7474 = smul.addr %s7473, 8
        %s7475 = scalar_lea.vmem %s10, %s7474
      $region72: #{agformer_block.1} parent=67 // pred_fallthru
        _
    $region68: #{agformer_block.1} parent=5 // pred_fallthru
      _
  $region6: #{agformer_block.1} parent=0 // loop_footer
    %s20 = sadd.s32 1, %s16
  $region7: #{agformer_block.1} parent=0 // loop_footer_branch
    %15 = sbr.rel target = $region3
  $region8: #{agformer_block.1} parent=0 // loop_exit
    _

</llo_original>
